<compile_context>
chip_gen: v7x
topology: tpu7x:2x2x1
jax: 0.10.0
libtpu: 0.0.40
codegen_flags: <defaults>
</compile_context>

<pallas_src>
import functools

import jax
import jax.numpy as jnp
from jax.experimental import pallas as pl
from jax.experimental.pallas import tpu as pltpu

LATENT_DIM = 32
IMG_SIZE = 16
CHANNELS = 3
NUM_CLASSES = 10   # label_emb(NUM_CLASSES, LATENT_DIM) is unused in forward()
C_PAD = 128        # every channel axis is padded to one full 128-lane register


# ----------------------------------------------------------------------------
# Pallas kernels
# ----------------------------------------------------------------------------
def _linear_bn_kernel(x_ref, w_ref, b_ref, g_ref, be_ref,
                      o_ref, sc_ref, sh_ref, *, n_pos, eps):
    """l1 matmul (+bias) and BN1 batch statistics folded to (scale, shift)."""
    out = (
        jnp.dot(x_ref[...].astype(jnp.bfloat16), w_ref[...],
                preferred_element_type=jnp.float32)
        + b_ref[...]
    )
    o_ref[...] = out

    # Columns are NHWC-ordered: col = pos*C + c, pos in [0, n_pos).  Per-channel
    # stats over (B, n_pos) == PyTorch BatchNorm2d training-mode stats (N,H,W).
    batch = out.shape[0]
    chans = g_ref.shape[1]
    count = float(batch * n_pos)
    mean = jnp.zeros((1, chans), jnp.float32)
    for p in range(n_pos):                              # 128-aligned lane slices
        mean = mean + jnp.sum(out[:, p * chans:(p + 1) * chans],
                              axis=0, keepdims=True)
    mean = mean / count
    var = jnp.zeros((1, chans), jnp.float32)
    for p in range(n_pos):
        d = out[:, p * chans:(p + 1) * chans] - mean
        var = var + jnp.sum(d * d, axis=0, keepdims=True)
    var = var / count                                   # biased, like torch
    scale = g_ref[...] * jax.lax.rsqrt(var + eps)
    sc_ref[...] = scale
    sh_ref[...] = be_ref[...] - mean * scale


def _conv_core(x_ref, isc_ref, ish_ref, w_ref, b_ref, pad_ref, *, in_leaky):
    """(folded BN apply [+LeakyReLU]) -> zero-pad -> im2col -> one long-K dot."""
    B, H, W, Cin = x_ref.shape
    y = x_ref[...] * isc_ref[...] + ish_ref[...]        # input BatchNorm (f32)
    if in_leaky is not None:
        y = jnp.where(y >= 0.0, y, in_leaky * y)        # LeakyReLU (f32, VPU)

    # Zero-padded canvas lives in a VMEM scratch; never touches HBM.
    pad_ref[...] = jnp.zeros_like(pad_ref)
    pad_ref[:, 1:H + 1, 1:W + 1, :] = y

    # 9 shifted views -> (B*H*W, 9*Cin) im2col matrix -> single bf16 MXU matmul.
    m = B * H * W
    taps = [
        pad_ref[:, dy:dy + H, dx:dx + W, :].reshape(m, Cin).astype(jnp.bfloat16)
        for dy in range(3) for dx in range(3)
    ]
    lhs = jnp.concatenate(taps, axis=1)                 # (M, 9*Cin), lane-aligned
    acc = jnp.dot(lhs, w_ref[...], preferred_element_type=jnp.float32)
    return acc + b_ref[...]


def _conv_bn_kernel(x_ref, isc_ref, ish_ref, w_ref, b_ref, g_ref, be_ref,
                    o_ref, osc_ref, osh_ref, pad_ref, *, in_leaky, out_eps):
    """Fused conv that also emits the *next* BatchNorm's folded scale/shift."""
    acc = _conv_core(x_ref, isc_ref, ish_ref, w_ref, b_ref, pad_ref,
                     in_leaky=in_leaky)
    o_ref[...] = acc
    mean = jnp.mean(acc, axis=0, keepdims=True)         # over N*H*W rows
    var = jnp.mean(jnp.square(acc - mean), axis=0, keepdims=True)
    scale = g_ref[...] * jax.lax.rsqrt(var + out_eps)
    osc_ref[...] = scale
    osh_ref[...] = be_ref[...] - mean * scale


def _conv_tanh_kernel(x_ref, isc_ref, ish_ref, w_ref, b_ref,
                      o_ref, pad_ref, *, in_leaky):
    acc = _conv_core(x_ref, isc_ref, ish_ref, w_ref, b_ref, pad_ref,
                     in_leaky=in_leaky)
    o_ref[...] = jnp.tanh(acc)


# ----------------------------------------------------------------------------
# Wrappers
# ----------------------------------------------------------------------------
def linear_bn(noise, w, b, gamma, beta, *, n_pos, eps):
    batch, k = noise.shape
    n = w.shape[1]
    c = gamma.shape[1]
    kern = functools.partial(_linear_bn_kernel, n_pos=n_pos, eps=eps)
    cost = pl.CostEstimate(
        flops=2 * batch * k * n, transcendentals=0,
        bytes_accessed=noise.size * 4 + w.size * 2 + b.size * 4 + batch * n * 4)
    return pl.pallas_call(
        kern,
        out_shape=(jax.ShapeDtypeStruct((batch, n), jnp.float32),
                   jax.ShapeDtypeStruct((1, c), jnp.float32),
                   jax.ShapeDtypeStruct((1, c), jnp.float32)),
        cost_estimate=cost,
    )(noise, w, b, gamma, beta)


def conv3x3_bn(x, in_scale, in_shift, w, b, gamma, beta, *, in_leaky, out_eps):
    batch, h, wd, cin = x.shape
    cout = w.shape[1]
    m = batch * h * wd
    kern = functools.partial(_conv_bn_kernel, in_leaky=in_leaky, out_eps=out_eps)
    cost = pl.CostEstimate(
        flops=2 * m * w.shape[0] * cout, transcendentals=0,
        bytes_accessed=x.size * 4 + w.size * 2 + m * cout * 4)
    out, osc, osh = pl.pallas_call(
        kern,
        out_shape=(jax.ShapeDtypeStruct((m, cout), jnp.float32),
                   jax.ShapeDtypeStruct((1, cout), jnp.float32),
                   jax.ShapeDtypeStruct((1, cout), jnp.float32)),
        scratch_shapes=[pltpu.VMEM((batch, h + 2, wd + 2, cin), jnp.float32)],
        cost_estimate=cost,
    )(x, in_scale, in_shift, w, b, gamma, beta)
    return out.reshape(batch, h, wd, cout), osc, osh


def conv3x3_tanh(x, in_scale, in_shift, w, b, *, in_leaky):
    batch, h, wd, cin = x.shape
    cout = w.shape[1]
    m = batch * h * wd
    kern = functools.partial(_conv_tanh_kernel, in_leaky=in_leaky)
    cost = pl.CostEstimate(
        flops=2 * m * w.shape[0] * cout, transcendentals=m * cout,
        bytes_accessed=x.size * 4 + w.size * 2 + m * cout * 4)
    out = pl.pallas_call(
        kern,
        out_shape=jax.ShapeDtypeStruct((m, cout), jnp.float32),
        scratch_shapes=[pltpu.VMEM((batch, h + 2, wd + 2, cin), jnp.float32)],
        cost_estimate=cost,
    )(x, in_scale, in_shift, w, b)
    return out.reshape(batch, h, wd, cout)


def upsample2x(x):
    # nn.Upsample(scale_factor=2), mode='nearest' (NHWC).  Kept as XLA glue.
    return jnp.repeat(jnp.repeat(x, 2, axis=1), 2, axis=2)


# ----------------------------------------------------------------------------
# Generator forward
# ----------------------------------------------------------------------------
def generator_forward(noise, params, init_size):
    batch = noise.shape[0]
    s = init_size

    # l1 (+ BN1 batch statistics folded into per-channel scale/shift).
    act0, sc1, sh1 = linear_bn(noise, params["l1_w"], params["l1_b"],
                               params["bn1_g"], params["bn1_b"],
                               n_pos=s * s, eps=1e-5)
    x = act0.reshape(batch, s, s, C_PAD)                # NHWC, no transpose

    # conv_blocks1: BN1 -> Upsample -> Conv(128,128) -> BN2 -> LeakyReLU
    # (BN1 applied inside the conv kernel; BN2 folded into its scale/shift outs.)
    x = upsample2x(x)
    x, sc2, sh2 = conv3x3_bn(x, sc1, sh1, params["c1_w"], params["c1_b"],
                             params["bn2_g"], params["bn2_b"],
                             in_leaky=None, out_eps=0.8)

    # conv_blocks2: Upsample -> Conv(128,64) -> BN3.  The LeakyReLU that ends
    # conv_blocks1 is applied to the conv input inside the kernel (it commutes
    # with nearest upsample).
    x = upsample2x(x)
    x, sc3, sh3 = conv3x3_bn(x, sc2, sh2, params["c2_w"], params["c2_b"],
                             params["bn3_g"], params["bn3_b"],
                             in_leaky=0.2, out_eps=0.8)

    # conv_blocks3: LeakyReLU -> Conv(64,channels) -> Tanh (Cout padded to 128).
    img = conv3x3_tanh(x, sc3, sh3, params["c3_w"], params["c3_b"], in_leaky=0.2)
    img = img[..., :CHANNELS]                           # drop the lane padding
    return jnp.transpose(img, (0, 3, 1, 2))             # NHWC -> NCHW


def init_params(key):
    s = IMG_SIZE // 4
    ks = jax.random.split(key, 8)

    def nrm(k, shape, scale):
        return scale * jax.random.normal(k, shape, dtype=jnp.float32)

    def conv_w(k, cin, cout, scale):
        # HWIO -> zero-pad channels to 128 -> im2col layout (9*128, 128), bf16.
        w = nrm(k, (3, 3, cin, cout), scale)
        w = jnp.pad(w, ((0, 0), (0, 0), (0, C_PAD - cin), (0, C_PAD - cout)))
        return w.reshape(9 * C_PAD, C_PAD).astype(jnp.bfloat16)

    def conv_b(k, cout, scale):
        return jnp.pad(nrm(k, (cout,), scale), (0, C_PAD - cout)).reshape(1, C_PAD)

    params = {
        # l1 weights stored with columns permuted to NHWC order so the (B, 2048)
        # matmul output reshapes straight to (B, s, s, 128).  (Porting a PyTorch
        # checkpoint is a one-time offline column permutation NCHW -> NHWC.)
        "l1_w": nrm(ks[0], (LATENT_DIM, s * s * C_PAD), 0.05).astype(jnp.bfloat16),
        "l1_b": nrm(ks[1], (s * s * C_PAD,), 0.01).reshape(1, -1),
        "bn1_g": jnp.ones((1, C_PAD), jnp.float32),
        "bn1_b": jnp.zeros((1, C_PAD), jnp.float32),
        "c1_w": conv_w(ks[2], 128, 128, 0.03),
        "c1_b": conv_b(ks[3], 128, 0.01),
        "bn2_g": jnp.ones((1, C_PAD), jnp.float32),
        "bn2_b": jnp.zeros((1, C_PAD), jnp.float32),
        "c2_w": conv_w(ks[4], 128, 64, 0.03),
        "c2_b": conv_b(ks[5], 64, 0.01),
        # BN3 has 64 real channels; padded lanes stay exactly zero end-to-end.
        "bn3_g": jnp.pad(jnp.ones((64,), jnp.float32),
                         (0, C_PAD - 64)).reshape(1, C_PAD),
        "bn3_b": jnp.zeros((1, C_PAD), jnp.float32),
        "c3_w": conv_w(ks[6], 64, CHANNELS, 0.05),
        "c3_b": conv_b(ks[7], CHANNELS, 0.01),
    }
    # TODO(synk): label_emb (nn.Embedding) is never used in Generator.forward(); omitted.
    return params, s


if __name__ == "__main__":
    key = jax.random.PRNGKey(0)
    pkey, nkey = jax.random.split(key)
    params, init_size = init_params(pkey)

    batch = 2
    noise = jax.random.normal(nkey, (batch, LATENT_DIM), dtype=jnp.float32)

    fwd = jax.jit(functools.partial(generator_forward, init_size=init_size))
    img = jax.block_until_ready(fwd(noise, params))

    assert img.shape == (batch, CHANNELS, IMG_SIZE, IMG_SIZE), img.shape
    assert bool(jnp.all(jnp.isfinite(img)))
    assert bool(jnp.all(jnp.abs(img) <= 1.0))           # tanh output range
    print("KERNEL_OK")
</pallas_src>

<mosaic_0001>
module attributes {stable_mosaic.version = 11 : i64} {
  func.func @_linear_bn_kernel(%arg0: memref<2x32xf32, #tpu.memory_space<vmem>>, %arg1: memref<32x2048xbf16, #tpu.memory_space<vmem>>, %arg2: memref<1x2048xf32, #tpu.memory_space<vmem>>, %arg3: memref<1x128xf32, #tpu.memory_space<vmem>>, %arg4: memref<1x128xf32, #tpu.memory_space<vmem>>, %arg5: memref<2x2048xf32, #tpu.memory_space<vmem>>, %arg6: memref<1x128xf32, #tpu.memory_space<vmem>>, %arg7: memref<1x128xf32, #tpu.memory_space<vmem>>) attributes {dimension_semantics = [], scalar_prefetch = 0 : i64, scratch_operands = 0 : i64, tpu.core_type = #tpu.core_type<tc>} {
    %c0 = arith.constant 0 : index
    %c0_0 = arith.constant 0 : index
    %0 = vector.load %arg0[%c0, %c0_0] : memref<2x32xf32, #tpu.memory_space<vmem>>, vector<2x32xf32>
    %1 = arith.truncf %0 : vector<2x32xf32> to vector<2x32xbf16>
    %c0_1 = arith.constant 0 : index
    %c0_2 = arith.constant 0 : index
    %2 = vector.load %arg1[%c0_1, %c0_2] : memref<32x2048xbf16, #tpu.memory_space<vmem>>, vector<32x2048xbf16>
    %cst = arith.constant dense<0.000000e+00> : vector<2x2048xf32>
    %3 = tpu.matmul %1, %2, %cst {dimension_numbers = #tpu.dot_dimension_numbers<[1], [0], [0], [1], [0, 0, 1, 1], [], []>} : vector<2x32xbf16>, vector<32x2048xbf16>, vector<2x2048xf32> -> vector<2x2048xf32>
    %c0_3 = arith.constant 0 : index
    %c0_4 = arith.constant 0 : index
    %4 = vector.load %arg2[%c0_3, %c0_4] : memref<1x2048xf32, #tpu.memory_space<vmem>>, vector<1x2048xf32>
    %5 = vector.broadcast %4 : vector<1x2048xf32> to vector<2x2048xf32>
    %6 = arith.addf %3, %5 : vector<2x2048xf32>
    %c0_5 = arith.constant 0 : index
    %c0_6 = arith.constant 0 : index
    %7 = vector.load %arg5[%c0_5, %c0_6] : memref<2x2048xf32, #tpu.memory_space<vmem>>, vector<2x2048xf32>
    tpu.vector_store %arg5[%c0_5, %c0_6], %6 {strides = array<i32>} : memref<2x2048xf32, #tpu.memory_space<vmem>>, vector<2x2048xf32>,
    %cst_7 = arith.constant 0.000000e+00 : f32
    %8 = vector.broadcast %cst_7 : f32 to vector<1x128xf32>
    %9 = vector.extract_strided_slice %6 {offsets = [0, 0], sizes = [2, 128], strides = [1, 1]} : vector<2x2048xf32> to vector<2x128xf32>
    %cst_8 = arith.constant dense<0.000000e+00> : vector<128xf32>
    %10 = vector.multi_reduction <add>, %9, %cst_8 [0] : vector<2x128xf32> to vector<128xf32>
    %11 = vector.shape_cast %10 : vector<128xf32> to vector<1x128xf32>
    %12 = arith.addf %8, %11 : vector<1x128xf32>
    %13 = vector.extract_strided_slice %6 {offsets = [0, 128], sizes = [2, 128], strides = [1, 1]} : vector<2x2048xf32> to vector<2x128xf32>
    %cst_9 = arith.constant dense<0.000000e+00> : vector<128xf32>
    %14 = vector.multi_reduction <add>, %13, %cst_9 [0] : vector<2x128xf32> to vector<128xf32>
    %15 = vector.shape_cast %14 : vector<128xf32> to vector<1x128xf32>
    %16 = arith.addf %12, %15 : vector<1x128xf32>
    %17 = vector.extract_strided_slice %6 {offsets = [0, 256], sizes = [2, 128], strides = [1, 1]} : vector<2x2048xf32> to vector<2x128xf32>
    %cst_10 = arith.constant dense<0.000000e+00> : vector<128xf32>
    %18 = vector.multi_reduction <add>, %17, %cst_10 [0] : vector<2x128xf32> to vector<128xf32>
    %19 = vector.shape_cast %18 : vector<128xf32> to vector<1x128xf32>
    %20 = arith.addf %16, %19 : vector<1x128xf32>
    %21 = vector.extract_strided_slice %6 {offsets = [0, 384], sizes = [2, 128], strides = [1, 1]} : vector<2x2048xf32> to vector<2x128xf32>
    %cst_11 = arith.constant dense<0.000000e+00> : vector<128xf32>
    %22 = vector.multi_reduction <add>, %21, %cst_11 [0] : vector<2x128xf32> to vector<128xf32>
    %23 = vector.shape_cast %22 : vector<128xf32> to vector<1x128xf32>
    %24 = arith.addf %20, %23 : vector<1x128xf32>
    %25 = vector.extract_strided_slice %6 {offsets = [0, 512], sizes = [2, 128], strides = [1, 1]} : vector<2x2048xf32> to vector<2x128xf32>
    %cst_12 = arith.constant dense<0.000000e+00> : vector<128xf32>
    %26 = vector.multi_reduction <add>, %25, %cst_12 [0] : vector<2x128xf32> to vector<128xf32>
    %27 = vector.shape_cast %26 : vector<128xf32> to vector<1x128xf32>
    %28 = arith.addf %24, %27 : vector<1x128xf32>
    %29 = vector.extract_strided_slice %6 {offsets = [0, 640], sizes = [2, 128], strides = [1, 1]} : vector<2x2048xf32> to vector<2x128xf32>
    %cst_13 = arith.constant dense<0.000000e+00> : vector<128xf32>
    %30 = vector.multi_reduction <add>, %29, %cst_13 [0] : vector<2x128xf32> to vector<128xf32>
    %31 = vector.shape_cast %30 : vector<128xf32> to vector<1x128xf32>
    %32 = arith.addf %28, %31 : vector<1x128xf32>
    %33 = vector.extract_strided_slice %6 {offsets = [0, 768], sizes = [2, 128], strides = [1, 1]} : vector<2x2048xf32> to vector<2x128xf32>
    %cst_14 = arith.constant dense<0.000000e+00> : vector<128xf32>
    %34 = vector.multi_reduction <add>, %33, %cst_14 [0] : vector<2x128xf32> to vector<128xf32>
    %35 = vector.shape_cast %34 : vector<128xf32> to vector<1x128xf32>
    %36 = arith.addf %32, %35 : vector<1x128xf32>
    %37 = vector.extract_strided_slice %6 {offsets = [0, 896], sizes = [2, 128], strides = [1, 1]} : vector<2x2048xf32> to vector<2x128xf32>
    %cst_15 = arith.constant dense<0.000000e+00> : vector<128xf32>
    %38 = vector.multi_reduction <add>, %37, %cst_15 [0] : vector<2x128xf32> to vector<128xf32>
    %39 = vector.shape_cast %38 : vector<128xf32> to vector<1x128xf32>
    %40 = arith.addf %36, %39 : vector<1x128xf32>
    %41 = vector.extract_strided_slice %6 {offsets = [0, 1024], sizes = [2, 128], strides = [1, 1]} : vector<2x2048xf32> to vector<2x128xf32>
    %cst_16 = arith.constant dense<0.000000e+00> : vector<128xf32>
    %42 = vector.multi_reduction <add>, %41, %cst_16 [0] : vector<2x128xf32> to vector<128xf32>
    %43 = vector.shape_cast %42 : vector<128xf32> to vector<1x128xf32>
    %44 = arith.addf %40, %43 : vector<1x128xf32>
    %45 = vector.extract_strided_slice %6 {offsets = [0, 1152], sizes = [2, 128], strides = [1, 1]} : vector<2x2048xf32> to vector<2x128xf32>
    %cst_17 = arith.constant dense<0.000000e+00> : vector<128xf32>
    %46 = vector.multi_reduction <add>, %45, %cst_17 [0] : vector<2x128xf32> to vector<128xf32>
    %47 = vector.shape_cast %46 : vector<128xf32> to vector<1x128xf32>
    %48 = arith.addf %44, %47 : vector<1x128xf32>
    %49 = vector.extract_strided_slice %6 {offsets = [0, 1280], sizes = [2, 128], strides = [1, 1]} : vector<2x2048xf32> to vector<2x128xf32>
    %cst_18 = arith.constant dense<0.000000e+00> : vector<128xf32>
    %50 = vector.multi_reduction <add>, %49, %cst_18 [0] : vector<2x128xf32> to vector<128xf32>
    %51 = vector.shape_cast %50 : vector<128xf32> to vector<1x128xf32>
    %52 = arith.addf %48, %51 : vector<1x128xf32>
    %53 = vector.extract_strided_slice %6 {offsets = [0, 1408], sizes = [2, 128], strides = [1, 1]} : vector<2x2048xf32> to vector<2x128xf32>
    %cst_19 = arith.constant dense<0.000000e+00> : vector<128xf32>
    %54 = vector.multi_reduction <add>, %53, %cst_19 [0] : vector<2x128xf32> to vector<128xf32>
    %55 = vector.shape_cast %54 : vector<128xf32> to vector<1x128xf32>
    %56 = arith.addf %52, %55 : vector<1x128xf32>
    %57 = vector.extract_strided_slice %6 {offsets = [0, 1536], sizes = [2, 128], strides = [1, 1]} : vector<2x2048xf32> to vector<2x128xf32>
    %cst_20 = arith.constant dense<0.000000e+00> : vector<128xf32>
    %58 = vector.multi_reduction <add>, %57, %cst_20 [0] : vector<2x128xf32> to vector<128xf32>
    %59 = vector.shape_cast %58 : vector<128xf32> to vector<1x128xf32>
    %60 = arith.addf %56, %59 : vector<1x128xf32>
    %61 = vector.extract_strided_slice %6 {offsets = [0, 1664], sizes = [2, 128], strides = [1, 1]} : vector<2x2048xf32> to vector<2x128xf32>
    %cst_21 = arith.constant dense<0.000000e+00> : vector<128xf32>
    %62 = vector.multi_reduction <add>, %61, %cst_21 [0] : vector<2x128xf32> to vector<128xf32>
    %63 = vector.shape_cast %62 : vector<128xf32> to vector<1x128xf32>
    %64 = arith.addf %60, %63 : vector<1x128xf32>
    %65 = vector.extract_strided_slice %6 {offsets = [0, 1792], sizes = [2, 128], strides = [1, 1]} : vector<2x2048xf32> to vector<2x128xf32>
    %cst_22 = arith.constant dense<0.000000e+00> : vector<128xf32>
    %66 = vector.multi_reduction <add>, %65, %cst_22 [0] : vector<2x128xf32> to vector<128xf32>
    %67 = vector.shape_cast %66 : vector<128xf32> to vector<1x128xf32>
    %68 = arith.addf %64, %67 : vector<1x128xf32>
    %69 = vector.extract_strided_slice %6 {offsets = [0, 1920], sizes = [2, 128], strides = [1, 1]} : vector<2x2048xf32> to vector<2x128xf32>
    %cst_23 = arith.constant dense<0.000000e+00> : vector<128xf32>
    %70 = vector.multi_reduction <add>, %69, %cst_23 [0] : vector<2x128xf32> to vector<128xf32>
    %71 = vector.shape_cast %70 : vector<128xf32> to vector<1x128xf32>
    %72 = arith.addf %68, %71 : vector<1x128xf32>
    %cst_24 = arith.constant 3.200000e+01 : f32
    %73 = vector.broadcast %cst_24 : f32 to vector<1x128xf32>
    %74 = arith.divf %72, %73 : vector<1x128xf32>
    %cst_25 = arith.constant 0.000000e+00 : f32
    %75 = vector.broadcast %cst_25 : f32 to vector<1x128xf32>
    %76 = vector.extract_strided_slice %6 {offsets = [0, 0], sizes = [2, 128], strides = [1, 1]} : vector<2x2048xf32> to vector<2x128xf32>
    %77 = vector.broadcast %74 : vector<1x128xf32> to vector<2x128xf32>
    %78 = arith.subf %76, %77 : vector<2x128xf32>
    %79 = arith.mulf %78, %78 : vector<2x128xf32>
    %cst_26 = arith.constant dense<0.000000e+00> : vector<128xf32>
    %80 = vector.multi_reduction <add>, %79, %cst_26 [0] : vector<2x128xf32> to vector<128xf32>
    %81 = vector.shape_cast %80 : vector<128xf32> to vector<1x128xf32>
    %82 = arith.addf %75, %81 : vector<1x128xf32>
    %83 = vector.extract_strided_slice %6 {offsets = [0, 128], sizes = [2, 128], strides = [1, 1]} : vector<2x2048xf32> to vector<2x128xf32>
    %84 = vector.broadcast %74 : vector<1x128xf32> to vector<2x128xf32>
    %85 = arith.subf %83, %84 : vector<2x128xf32>
    %86 = arith.mulf %85, %85 : vector<2x128xf32>
    %cst_27 = arith.constant dense<0.000000e+00> : vector<128xf32>
    %87 = vector.multi_reduction <add>, %86, %cst_27 [0] : vector<2x128xf32> to vector<128xf32>
    %88 = vector.shape_cast %87 : vector<128xf32> to vector<1x128xf32>
    %89 = arith.addf %82, %88 : vector<1x128xf32>
    %90 = vector.extract_strided_slice %6 {offsets = [0, 256], sizes = [2, 128], strides = [1, 1]} : vector<2x2048xf32> to vector<2x128xf32>
    %91 = vector.broadcast %74 : vector<1x128xf32> to vector<2x128xf32>
    %92 = arith.subf %90, %91 : vector<2x128xf32>
    %93 = arith.mulf %92, %92 : vector<2x128xf32>
    %cst_28 = arith.constant dense<0.000000e+00> : vector<128xf32>
    %94 = vector.multi_reduction <add>, %93, %cst_28 [0] : vector<2x128xf32> to vector<128xf32>
    %95 = vector.shape_cast %94 : vector<128xf32> to vector<1x128xf32>
    %96 = arith.addf %89, %95 : vector<1x128xf32>
    %97 = vector.extract_strided_slice %6 {offsets = [0, 384], sizes = [2, 128], strides = [1, 1]} : vector<2x2048xf32> to vector<2x128xf32>
    %98 = vector.broadcast %74 : vector<1x128xf32> to vector<2x128xf32>
    %99 = arith.subf %97, %98 : vector<2x128xf32>
    %100 = arith.mulf %99, %99 : vector<2x128xf32>
    %cst_29 = arith.constant dense<0.000000e+00> : vector<128xf32>
    %101 = vector.multi_reduction <add>, %100, %cst_29 [0] : vector<2x128xf32> to vector<128xf32>
    %102 = vector.shape_cast %101 : vector<128xf32> to vector<1x128xf32>
    %103 = arith.addf %96, %102 : vector<1x128xf32>
    %104 = vector.extract_strided_slice %6 {offsets = [0, 512], sizes = [2, 128], strides = [1, 1]} : vector<2x2048xf32> to vector<2x128xf32>
    %105 = vector.broadcast %74 : vector<1x128xf32> to vector<2x128xf32>
    %106 = arith.subf %104, %105 : vector<2x128xf32>
    %107 = arith.mulf %106, %106 : vector<2x128xf32>
    %cst_30 = arith.constant dense<0.000000e+00> : vector<128xf32>
    %108 = vector.multi_reduction <add>, %107, %cst_30 [0] : vector<2x128xf32> to vector<128xf32>
    %109 = vector.shape_cast %108 : vector<128xf32> to vector<1x128xf32>
    %110 = arith.addf %103, %109 : vector<1x128xf32>
    %111 = vector.extract_strided_slice %6 {offsets = [0, 640], sizes = [2, 128], strides = [1, 1]} : vector<2x2048xf32> to vector<2x128xf32>
    %112 = vector.broadcast %74 : vector<1x128xf32> to vector<2x128xf32>
    %113 = arith.subf %111, %112 : vector<2x128xf32>
    %114 = arith.mulf %113, %113 : vector<2x128xf32>
    %cst_31 = arith.constant dense<0.000000e+00> : vector<128xf32>
    %115 = vector.multi_reduction <add>, %114, %cst_31 [0] : vector<2x128xf32> to vector<128xf32>
    %116 = vector.shape_cast %115 : vector<128xf32> to vector<1x128xf32>
    %117 = arith.addf %110, %116 : vector<1x128xf32>
    %118 = vector.extract_strided_slice %6 {offsets = [0, 768], sizes = [2, 128], strides = [1, 1]} : vector<2x2048xf32> to vector<2x128xf32>
    %119 = vector.broadcast %74 : vector<1x128xf32> to vector<2x128xf32>
    %120 = arith.subf %118, %119 : vector<2x128xf32>
    %121 = arith.mulf %120, %120 : vector<2x128xf32>
    %cst_32 = arith.constant dense<0.000000e+00> : vector<128xf32>
    %122 = vector.multi_reduction <add>, %121, %cst_32 [0] : vector<2x128xf32> to vector<128xf32>
    %123 = vector.shape_cast %122 : vector<128xf32> to vector<1x128xf32>
    %124 = arith.addf %117, %123 : vector<1x128xf32>
    %125 = vector.extract_strided_slice %6 {offsets = [0, 896], sizes = [2, 128], strides = [1, 1]} : vector<2x2048xf32> to vector<2x128xf32>
    %126 = vector.broadcast %74 : vector<1x128xf32> to vector<2x128xf32>
    %127 = arith.subf %125, %126 : vector<2x128xf32>
    %128 = arith.mulf %127, %127 : vector<2x128xf32>
    %cst_33 = arith.constant dense<0.000000e+00> : vector<128xf32>
    %129 = vector.multi_reduction <add>, %128, %cst_33 [0] : vector<2x128xf32> to vector<128xf32>
    %130 = vector.shape_cast %129 : vector<128xf32> to vector<1x128xf32>
    %131 = arith.addf %124, %130 : vector<1x128xf32>
    %132 = vector.extract_strided_slice %6 {offsets = [0, 1024], sizes = [2, 128], strides = [1, 1]} : vector<2x2048xf32> to vector<2x128xf32>
    %133 = vector.broadcast %74 : vector<1x128xf32> to vector<2x128xf32>
    %134 = arith.subf %132, %133 : vector<2x128xf32>
    %135 = arith.mulf %134, %134 : vector<2x128xf32>
    %cst_34 = arith.constant dense<0.000000e+00> : vector<128xf32>
    %136 = vector.multi_reduction <add>, %135, %cst_34 [0] : vector<2x128xf32> to vector<128xf32>
    %137 = vector.shape_cast %136 : vector<128xf32> to vector<1x128xf32>
    %138 = arith.addf %131, %137 : vector<1x128xf32>
    %139 = vector.extract_strided_slice %6 {offsets = [0, 1152], sizes = [2, 128], strides = [1, 1]} : vector<2x2048xf32> to vector<2x128xf32>
    %140 = vector.broadcast %74 : vector<1x128xf32> to vector<2x128xf32>
    %141 = arith.subf %139, %140 : vector<2x128xf32>
    %142 = arith.mulf %141, %141 : vector<2x128xf32>
    %cst_35 = arith.constant dense<0.000000e+00> : vector<128xf32>
    %143 = vector.multi_reduction <add>, %142, %cst_35 [0] : vector<2x128xf32> to vector<128xf32>
    %144 = vector.shape_cast %143 : vector<128xf32> to vector<1x128xf32>
    %145 = arith.addf %138, %144 : vector<1x128xf32>
    %146 = vector.extract_strided_slice %6 {offsets = [0, 1280], sizes = [2, 128], strides = [1, 1]} : vector<2x2048xf32> to vector<2x128xf32>
    %147 = vector.broadcast %74 : vector<1x128xf32> to vector<2x128xf32>
    %148 = arith.subf %146, %147 : vector<2x128xf32>
    %149 = arith.mulf %148, %148 : vector<2x128xf32>
    %cst_36 = arith.constant dense<0.000000e+00> : vector<128xf32>
    %150 = vector.multi_reduction <add>, %149, %cst_36 [0] : vector<2x128xf32> to vector<128xf32>
    %151 = vector.shape_cast %150 : vector<128xf32> to vector<1x128xf32>
    %152 = arith.addf %145, %151 : vector<1x128xf32>
    %153 = vector.extract_strided_slice %6 {offsets = [0, 1408], sizes = [2, 128], strides = [1, 1]} : vector<2x2048xf32> to vector<2x128xf32>
    %154 = vector.broadcast %74 : vector<1x128xf32> to vector<2x128xf32>
    %155 = arith.subf %153, %154 : vector<2x128xf32>
    %156 = arith.mulf %155, %155 : vector<2x128xf32>
    %cst_37 = arith.constant dense<0.000000e+00> : vector<128xf32>
    %157 = vector.multi_reduction <add>, %156, %cst_37 [0] : vector<2x128xf32> to vector<128xf32>
    %158 = vector.shape_cast %157 : vector<128xf32> to vector<1x128xf32>
    %159 = arith.addf %152, %158 : vector<1x128xf32>
    %160 = vector.extract_strided_slice %6 {offsets = [0, 1536], sizes = [2, 128], strides = [1, 1]} : vector<2x2048xf32> to vector<2x128xf32>
    %161 = vector.broadcast %74 : vector<1x128xf32> to vector<2x128xf32>
    %162 = arith.subf %160, %161 : vector<2x128xf32>
    %163 = arith.mulf %162, %162 : vector<2x128xf32>
    %cst_38 = arith.constant dense<0.000000e+00> : vector<128xf32>
    %164 = vector.multi_reduction <add>, %163, %cst_38 [0] : vector<2x128xf32> to vector<128xf32>
    %165 = vector.shape_cast %164 : vector<128xf32> to vector<1x128xf32>
    %166 = arith.addf %159, %165 : vector<1x128xf32>
    %167 = vector.extract_strided_slice %6 {offsets = [0, 1664], sizes = [2, 128], strides = [1, 1]} : vector<2x2048xf32> to vector<2x128xf32>
    %168 = vector.broadcast %74 : vector<1x128xf32> to vector<2x128xf32>
    %169 = arith.subf %167, %168 : vector<2x128xf32>
    %170 = arith.mulf %169, %169 : vector<2x128xf32>
    %cst_39 = arith.constant dense<0.000000e+00> : vector<128xf32>
    %171 = vector.multi_reduction <add>, %170, %cst_39 [0] : vector<2x128xf32> to vector<128xf32>
    %172 = vector.shape_cast %171 : vector<128xf32> to vector<1x128xf32>
    %173 = arith.addf %166, %172 : vector<1x128xf32>
    %174 = vector.extract_strided_slice %6 {offsets = [0, 1792], sizes = [2, 128], strides = [1, 1]} : vector<2x2048xf32> to vector<2x128xf32>
    %175 = vector.broadcast %74 : vector<1x128xf32> to vector<2x128xf32>
    %176 = arith.subf %174, %175 : vector<2x128xf32>
    %177 = arith.mulf %176, %176 : vector<2x128xf32>
    %cst_40 = arith.constant dense<0.000000e+00> : vector<128xf32>
    %178 = vector.multi_reduction <add>, %177, %cst_40 [0] : vector<2x128xf32> to vector<128xf32>
    %179 = vector.shape_cast %178 : vector<128xf32> to vector<1x128xf32>
    %180 = arith.addf %173, %179 : vector<1x128xf32>
    %181 = vector.extract_strided_slice %6 {offsets = [0, 1920], sizes = [2, 128], strides = [1, 1]} : vector<2x2048xf32> to vector<2x128xf32>
    %182 = vector.broadcast %74 : vector<1x128xf32> to vector<2x128xf32>
    %183 = arith.subf %181, %182 : vector<2x128xf32>
    %184 = arith.mulf %183, %183 : vector<2x128xf32>
    %cst_41 = arith.constant dense<0.000000e+00> : vector<128xf32>
    %185 = vector.multi_reduction <add>, %184, %cst_41 [0] : vector<2x128xf32> to vector<128xf32>
    %186 = vector.shape_cast %185 : vector<128xf32> to vector<1x128xf32>
    %187 = arith.addf %180, %186 : vector<1x128xf32>
    %cst_42 = arith.constant 3.200000e+01 : f32
    %188 = vector.broadcast %cst_42 : f32 to vector<1x128xf32>
    %189 = arith.divf %187, %188 : vector<1x128xf32>
    %c0_43 = arith.constant 0 : index
    %c0_44 = arith.constant 0 : index
    %190 = vector.load %arg3[%c0_43, %c0_44] : memref<1x128xf32, #tpu.memory_space<vmem>>, vector<1x128xf32>
    %cst_45 = arith.constant 9.99999974E-6 : f32
    %191 = vector.broadcast %cst_45 : f32 to vector<1x128xf32>
    %192 = arith.addf %189, %191 : vector<1x128xf32>
    %193 = math.rsqrt %192 : vector<1x128xf32>
    %194 = arith.mulf %190, %193 : vector<1x128xf32>
    %c0_46 = arith.constant 0 : index
    %c0_47 = arith.constant 0 : index
    %195 = vector.load %arg6[%c0_46, %c0_47] : memref<1x128xf32, #tpu.memory_space<vmem>>, vector<1x128xf32>
    tpu.vector_store %arg6[%c0_46, %c0_47], %194 {strides = array<i32>} : memref<1x128xf32, #tpu.memory_space<vmem>>, vector<1x128xf32>,
    %c0_48 = arith.constant 0 : index
    %c0_49 = arith.constant 0 : index
    %196 = vector.load %arg4[%c0_48, %c0_49] : memref<1x128xf32, #tpu.memory_space<vmem>>, vector<1x128xf32>
    %197 = arith.mulf %74, %194 : vector<1x128xf32>
    %198 = arith.subf %196, %197 : vector<1x128xf32>
    %c0_50 = arith.constant 0 : index
    %c0_51 = arith.constant 0 : index
    %199 = vector.load %arg7[%c0_50, %c0_51] : memref<1x128xf32, #tpu.memory_space<vmem>>, vector<1x128xf32>
    tpu.vector_store %arg7[%c0_50, %c0_51], %198 {strides = array<i32>} : memref<1x128xf32, #tpu.memory_space<vmem>>, vector<1x128xf32>,
    return
  }
}

module attributes {stable_mosaic.version = 11 : i64} {
  func.func @_conv_bn_kernel(%arg0: memref<2x8x8x128xf32, #tpu.memory_space<vmem>>, %arg1: memref<1x128xf32, #tpu.memory_space<vmem>>, %arg2: memref<1x128xf32, #tpu.memory_space<vmem>>, %arg3: memref<1152x128xbf16, #tpu.memory_space<vmem>>, %arg4: memref<1x128xf32, #tpu.memory_space<vmem>>, %arg5: memref<1x128xf32, #tpu.memory_space<vmem>>, %arg6: memref<1x128xf32, #tpu.memory_space<vmem>>, %arg7: memref<128x128xf32, #tpu.memory_space<vmem>>, %arg8: memref<1x128xf32, #tpu.memory_space<vmem>>, %arg9: memref<1x128xf32, #tpu.memory_space<vmem>>, %arg10: memref<2x10x10x128xf32, #tpu.memory_space<vmem>>) attributes {dimension_semantics = [], scalar_prefetch = 0 : i64, scratch_operands = 1 : i64, tpu.core_type = #tpu.core_type<tc>} {
    %c0 = arith.constant 0 : index
    %c0_0 = arith.constant 0 : index
    %c0_1 = arith.constant 0 : index
    %c0_2 = arith.constant 0 : index
    %0 = vector.load %arg0[%c0, %c0_0, %c0_1, %c0_2] : memref<2x8x8x128xf32, #tpu.memory_space<vmem>>, vector<2x8x8x128xf32>
    %c0_3 = arith.constant 0 : index
    %c0_4 = arith.constant 0 : index
    %1 = vector.load %arg1[%c0_3, %c0_4] : memref<1x128xf32, #tpu.memory_space<vmem>>, vector<1x128xf32>
    %2 = vector.shape_cast %1 : vector<1x128xf32> to vector<1x1x1x128xf32>
    %3 = vector.broadcast %2 : vector<1x1x1x128xf32> to vector<2x8x8x128xf32>
    %4 = arith.mulf %0, %3 : vector<2x8x8x128xf32>
    %c0_5 = arith.constant 0 : index
    %c0_6 = arith.constant 0 : index
    %5 = vector.load %arg2[%c0_5, %c0_6] : memref<1x128xf32, #tpu.memory_space<vmem>>, vector<1x128xf32>
    %6 = vector.shape_cast %5 : vector<1x128xf32> to vector<1x1x1x128xf32>
    %7 = vector.broadcast %6 : vector<1x1x1x128xf32> to vector<2x8x8x128xf32>
    %8 = arith.addf %4, %7 : vector<2x8x8x128xf32>
    %cst = arith.constant 0.000000e+00 : f32
    %9 = vector.broadcast %cst : f32 to vector<2x10x10x128xf32>
    %c0_7 = arith.constant 0 : index
    %c0_8 = arith.constant 0 : index
    %c0_9 = arith.constant 0 : index
    %c0_10 = arith.constant 0 : index
    %10 = vector.load %arg10[%c0_7, %c0_8, %c0_9, %c0_10] : memref<2x10x10x128xf32, #tpu.memory_space<vmem>>, vector<2x10x10x128xf32>
    tpu.vector_store %arg10[%c0_7, %c0_8, %c0_9, %c0_10], %9 {strides = array<i32>} : memref<2x10x10x128xf32, #tpu.memory_space<vmem>>, vector<2x10x10x128xf32>,
    %c0_11 = arith.constant 0 : index
    %c1 = arith.constant 1 : index
    %c1_12 = arith.constant 1 : index
    %c0_13 = arith.constant 0 : index
    %11 = vector.load %arg10[%c0_11, %c1, %c1_12, %c0_13] : memref<2x10x10x128xf32, #tpu.memory_space<vmem>>, vector<2x8x8x128xf32>
    tpu.vector_store %arg10[%c0_11, %c1, %c1_12, %c0_13], %8 {strides = array<i32>} : memref<2x10x10x128xf32, #tpu.memory_space<vmem>>, vector<2x8x8x128xf32>,
    %c0_14 = arith.constant 0 : index
    %c0_15 = arith.constant 0 : index
    %c0_16 = arith.constant 0 : index
    %c0_17 = arith.constant 0 : index
    %12 = vector.load %arg10[%c0_14, %c0_15, %c0_16, %c0_17] : memref<2x10x10x128xf32, #tpu.memory_space<vmem>>, vector<2x8x8x128xf32>
    %13 = vector.shape_cast %12 : vector<2x8x8x128xf32> to vector<128x128xf32>
    %14 = arith.truncf %13 : vector<128x128xf32> to vector<128x128xbf16>
    %c0_18 = arith.constant 0 : index
    %c0_19 = arith.constant 0 : index
    %c1_20 = arith.constant 1 : index
    %c0_21 = arith.constant 0 : index
    %15 = vector.load %arg10[%c0_18, %c0_19, %c1_20, %c0_21] : memref<2x10x10x128xf32, #tpu.memory_space<vmem>>, vector<2x8x8x128xf32>
    %16 = vector.shape_cast %15 : vector<2x8x8x128xf32> to vector<128x128xf32>
    %17 = arith.truncf %16 : vector<128x128xf32> to vector<128x128xbf16>
    %c0_22 = arith.constant 0 : index
    %c0_23 = arith.constant 0 : index
    %c2 = arith.constant 2 : index
    %c0_24 = arith.constant 0 : index
    %18 = vector.load %arg10[%c0_22, %c0_23, %c2, %c0_24] : memref<2x10x10x128xf32, #tpu.memory_space<vmem>>, vector<2x8x8x128xf32>
    %19 = vector.shape_cast %18 : vector<2x8x8x128xf32> to vector<128x128xf32>
    %20 = arith.truncf %19 : vector<128x128xf32> to vector<128x128xbf16>
    %c0_25 = arith.constant 0 : index
    %c1_26 = arith.constant 1 : index
    %c0_27 = arith.constant 0 : index
    %c0_28 = arith.constant 0 : index
    %21 = vector.load %arg10[%c0_25, %c1_26, %c0_27, %c0_28] : memref<2x10x10x128xf32, #tpu.memory_space<vmem>>, vector<2x8x8x128xf32>
    %22 = vector.shape_cast %21 : vector<2x8x8x128xf32> to vector<128x128xf32>
    %23 = arith.truncf %22 : vector<128x128xf32> to vector<128x128xbf16>
    %c0_29 = arith.constant 0 : index
    %c1_30 = arith.constant 1 : index
    %c1_31 = arith.constant 1 : index
    %c0_32 = arith.constant 0 : index
    %24 = vector.load %arg10[%c0_29, %c1_30, %c1_31, %c0_32] : memref<2x10x10x128xf32, #tpu.memory_space<vmem>>, vector<2x8x8x128xf32>
    %25 = vector.shape_cast %24 : vector<2x8x8x128xf32> to vector<128x128xf32>
    %26 = arith.truncf %25 : vector<128x128xf32> to vector<128x128xbf16>
    %c0_33 = arith.constant 0 : index
    %c1_34 = arith.constant 1 : index
    %c2_35 = arith.constant 2 : index
    %c0_36 = arith.constant 0 : index
    %27 = vector.load %arg10[%c0_33, %c1_34, %c2_35, %c0_36] : memref<2x10x10x128xf32, #tpu.memory_space<vmem>>, vector<2x8x8x128xf32>
    %28 = vector.shape_cast %27 : vector<2x8x8x128xf32> to vector<128x128xf32>
    %29 = arith.truncf %28 : vector<128x128xf32> to vector<128x128xbf16>
    %c0_37 = arith.constant 0 : index
    %c2_38 = arith.constant 2 : index
    %c0_39 = arith.constant 0 : index
    %c0_40 = arith.constant 0 : index
    %30 = vector.load %arg10[%c0_37, %c2_38, %c0_39, %c0_40] : memref<2x10x10x128xf32, #tpu.memory_space<vmem>>, vector<2x8x8x128xf32>
    %31 = vector.shape_cast %30 : vector<2x8x8x128xf32> to vector<128x128xf32>
    %32 = arith.truncf %31 : vector<128x128xf32> to vector<128x128xbf16>
    %c0_41 = arith.constant 0 : index
    %c2_42 = arith.constant 2 : index
    %c1_43 = arith.constant 1 : index
    %c0_44 = arith.constant 0 : index
    %33 = vector.load %arg10[%c0_41, %c2_42, %c1_43, %c0_44] : memref<2x10x10x128xf32, #tpu.memory_space<vmem>>, vector<2x8x8x128xf32>
    %34 = vector.shape_cast %33 : vector<2x8x8x128xf32> to vector<128x128xf32>
    %35 = arith.truncf %34 : vector<128x128xf32> to vector<128x128xbf16>
    %c0_45 = arith.constant 0 : index
    %c2_46 = arith.constant 2 : index
    %c2_47 = arith.constant 2 : index
    %c0_48 = arith.constant 0 : index
    %36 = vector.load %arg10[%c0_45, %c2_46, %c2_47, %c0_48] : memref<2x10x10x128xf32, #tpu.memory_space<vmem>>, vector<2x8x8x128xf32>
    %37 = vector.shape_cast %36 : vector<2x8x8x128xf32> to vector<128x128xf32>
    %38 = arith.truncf %37 : vector<128x128xf32> to vector<128x128xbf16>
    %39 = tpu.concatenate %14, %17, %20, %23, %26, %29, %32, %35, %38 in 1 : vector<128x128xbf16>, vector<128x128xbf16>, vector<128x128xbf16>, vector<128x128xbf16>, vector<128x128xbf16>, vector<128x128xbf16>, vector<128x128xbf16>, vector<128x128xbf16>, vector<128x128xbf16> -> vector<128x1152xbf16>
    %c0_49 = arith.constant 0 : index
    %c0_50 = arith.constant 0 : index
    %40 = vector.load %arg3[%c0_49, %c0_50] : memref<1152x128xbf16, #tpu.memory_space<vmem>>, vector<1152x128xbf16>
    %cst_51 = arith.constant dense<0.000000e+00> : vector<128x128xf32>
    %41 = tpu.matmul %39, %40, %cst_51 {dimension_numbers = #tpu.dot_dimension_numbers<[1], [0], [0], [1], [0, 0, 1, 1], [], []>} : vector<128x1152xbf16>, vector<1152x128xbf16>, vector<128x128xf32> -> vector<128x128xf32>
    %c0_52 = arith.constant 0 : index
    %c0_53 = arith.constant 0 : index
    %42 = vector.load %arg4[%c0_52, %c0_53] : memref<1x128xf32, #tpu.memory_space<vmem>>, vector<1x128xf32>
    %43 = vector.broadcast %42 : vector<1x128xf32> to vector<128x128xf32>
    %44 = arith.addf %41, %43 : vector<128x128xf32>
    %c0_54 = arith.constant 0 : index
    %c0_55 = arith.constant 0 : index
    %45 = vector.load %arg7[%c0_54, %c0_55] : memref<128x128xf32, #tpu.memory_space<vmem>>, vector<128x128xf32>
    tpu.vector_store %arg7[%c0_54, %c0_55], %44 {strides = array<i32>} : memref<128x128xf32, #tpu.memory_space<vmem>>, vector<128x128xf32>,
    %cst_56 = arith.constant dense<0.000000e+00> : vector<128xf32>
    %46 = vector.multi_reduction <add>, %44, %cst_56 [0] : vector<128x128xf32> to vector<128xf32>
    %47 = vector.shape_cast %46 : vector<128xf32> to vector<1x128xf32>
    %cst_57 = arith.constant 1.280000e+02 : f32
    %48 = vector.broadcast %cst_57 : f32 to vector<1x128xf32>
    %49 = arith.divf %47, %48 : vector<1x128xf32>
    %50 = vector.broadcast %49 : vector<1x128xf32> to vector<128x128xf32>
    %51 = arith.subf %44, %50 : vector<128x128xf32>
    %52 = arith.mulf %51, %51 : vector<128x128xf32>
    %cst_58 = arith.constant dense<0.000000e+00> : vector<128xf32>
    %53 = vector.multi_reduction <add>, %52, %cst_58 [0] : vector<128x128xf32> to vector<128xf32>
    %54 = vector.shape_cast %53 : vector<128xf32> to vector<1x128xf32>
    %cst_59 = arith.constant 1.280000e+02 : f32
    %55 = vector.broadcast %cst_59 : f32 to vector<1x128xf32>
    %56 = arith.divf %54, %55 : vector<1x128xf32>
    %c0_60 = arith.constant 0 : index
    %c0_61 = arith.constant 0 : index
    %57 = vector.load %arg5[%c0_60, %c0_61] : memref<1x128xf32, #tpu.memory_space<vmem>>, vector<1x128xf32>
    %cst_62 = arith.constant 8.000000e-01 : f32
    %58 = vector.broadcast %cst_62 : f32 to vector<1x128xf32>
    %59 = arith.addf %56, %58 : vector<1x128xf32>
    %60 = math.rsqrt %59 : vector<1x128xf32>
    %61 = arith.mulf %57, %60 : vector<1x128xf32>
    %c0_63 = arith.constant 0 : index
    %c0_64 = arith.constant 0 : index
    %62 = vector.load %arg8[%c0_63, %c0_64] : memref<1x128xf32, #tpu.memory_space<vmem>>, vector<1x128xf32>
    tpu.vector_store %arg8[%c0_63, %c0_64], %61 {strides = array<i32>} : memref<1x128xf32, #tpu.memory_space<vmem>>, vector<1x128xf32>,
    %c0_65 = arith.constant 0 : index
    %c0_66 = arith.constant 0 : index
    %63 = vector.load %arg6[%c0_65, %c0_66] : memref<1x128xf32, #tpu.memory_space<vmem>>, vector<1x128xf32>
    %64 = arith.mulf %49, %61 : vector<1x128xf32>
    %65 = arith.subf %63, %64 : vector<1x128xf32>
    %c0_67 = arith.constant 0 : index
    %c0_68 = arith.constant 0 : index
    %66 = vector.load %arg9[%c0_67, %c0_68] : memref<1x128xf32, #tpu.memory_space<vmem>>, vector<1x128xf32>
    tpu.vector_store %arg9[%c0_67, %c0_68], %65 {strides = array<i32>} : memref<1x128xf32, #tpu.memory_space<vmem>>, vector<1x128xf32>,
    return
  }
}

module attributes {stable_mosaic.version = 11 : i64} {
  func.func @_conv_bn_kernel(%arg0: memref<2x16x16x128xf32, #tpu.memory_space<vmem>>, %arg1: memref<1x128xf32, #tpu.memory_space<vmem>>, %arg2: memref<1x128xf32, #tpu.memory_space<vmem>>, %arg3: memref<1152x128xbf16, #tpu.memory_space<vmem>>, %arg4: memref<1x128xf32, #tpu.memory_space<vmem>>, %arg5: memref<1x128xf32, #tpu.memory_space<vmem>>, %arg6: memref<1x128xf32, #tpu.memory_space<vmem>>, %arg7: memref<512x128xf32, #tpu.memory_space<vmem>>, %arg8: memref<1x128xf32, #tpu.memory_space<vmem>>, %arg9: memref<1x128xf32, #tpu.memory_space<vmem>>, %arg10: memref<2x18x18x128xf32, #tpu.memory_space<vmem>>) attributes {dimension_semantics = [], scalar_prefetch = 0 : i64, scratch_operands = 1 : i64, tpu.core_type = #tpu.core_type<tc>} {
    %c0 = arith.constant 0 : index
    %c0_0 = arith.constant 0 : index
    %c0_1 = arith.constant 0 : index
    %c0_2 = arith.constant 0 : index
    %0 = vector.load %arg0[%c0, %c0_0, %c0_1, %c0_2] : memref<2x16x16x128xf32, #tpu.memory_space<vmem>>, vector<2x16x16x128xf32>
    %c0_3 = arith.constant 0 : index
    %c0_4 = arith.constant 0 : index
    %1 = vector.load %arg1[%c0_3, %c0_4] : memref<1x128xf32, #tpu.memory_space<vmem>>, vector<1x128xf32>
    %2 = vector.shape_cast %1 : vector<1x128xf32> to vector<1x1x1x128xf32>
    %3 = vector.broadcast %2 : vector<1x1x1x128xf32> to vector<2x16x16x128xf32>
    %4 = arith.mulf %0, %3 : vector<2x16x16x128xf32>
    %c0_5 = arith.constant 0 : index
    %c0_6 = arith.constant 0 : index
    %5 = vector.load %arg2[%c0_5, %c0_6] : memref<1x128xf32, #tpu.memory_space<vmem>>, vector<1x128xf32>
    %6 = vector.shape_cast %5 : vector<1x128xf32> to vector<1x1x1x128xf32>
    %7 = vector.broadcast %6 : vector<1x1x1x128xf32> to vector<2x16x16x128xf32>
    %8 = arith.addf %4, %7 : vector<2x16x16x128xf32>
    %cst = arith.constant 0.000000e+00 : f32
    %9 = vector.broadcast %cst : f32 to vector<2x16x16x128xf32>
    %10 = arith.cmpf oge, %8, %9 : vector<2x16x16x128xf32>
    %cst_7 = arith.constant 2.000000e-01 : f32
    %11 = vector.broadcast %cst_7 : f32 to vector<2x16x16x128xf32>
    %12 = arith.mulf %11, %8 : vector<2x16x16x128xf32>
    %13 = arith.select %10, %8, %12 : vector<2x16x16x128xi1>, vector<2x16x16x128xf32>
    %cst_8 = arith.constant 0.000000e+00 : f32
    %14 = vector.broadcast %cst_8 : f32 to vector<2x18x18x128xf32>
    %c0_9 = arith.constant 0 : index
    %c0_10 = arith.constant 0 : index
    %c0_11 = arith.constant 0 : index
    %c0_12 = arith.constant 0 : index
    %15 = vector.load %arg10[%c0_9, %c0_10, %c0_11, %c0_12] : memref<2x18x18x128xf32, #tpu.memory_space<vmem>>, vector<2x18x18x128xf32>
    tpu.vector_store %arg10[%c0_9, %c0_10, %c0_11, %c0_12], %14 {strides = array<i32>} : memref<2x18x18x128xf32, #tpu.memory_space<vmem>>, vector<2x18x18x128xf32>,
    %c0_13 = arith.constant 0 : index
    %c1 = arith.constant 1 : index
    %c1_14 = arith.constant 1 : index
    %c0_15 = arith.constant 0 : index
    %16 = vector.load %arg10[%c0_13, %c1, %c1_14, %c0_15] : memref<2x18x18x128xf32, #tpu.memory_space<vmem>>, vector<2x16x16x128xf32>
    tpu.vector_store %arg10[%c0_13, %c1, %c1_14, %c0_15], %13 {strides = array<i32>} : memref<2x18x18x128xf32, #tpu.memory_space<vmem>>, vector<2x16x16x128xf32>,
    %c0_16 = arith.constant 0 : index
    %c0_17 = arith.constant 0 : index
    %c0_18 = arith.constant 0 : index
    %c0_19 = arith.constant 0 : index
    %17 = vector.load %arg10[%c0_16, %c0_17, %c0_18, %c0_19] : memref<2x18x18x128xf32, #tpu.memory_space<vmem>>, vector<2x16x16x128xf32>
    %18 = vector.shape_cast %17 : vector<2x16x16x128xf32> to vector<512x128xf32>
    %19 = arith.truncf %18 : vector<512x128xf32> to vector<512x128xbf16>
    %c0_20 = arith.constant 0 : index
    %c0_21 = arith.constant 0 : index
    %c1_22 = arith.constant 1 : index
    %c0_23 = arith.constant 0 : index
    %20 = vector.load %arg10[%c0_20, %c0_21, %c1_22, %c0_23] : memref<2x18x18x128xf32, #tpu.memory_space<vmem>>, vector<2x16x16x128xf32>
    %21 = vector.shape_cast %20 : vector<2x16x16x128xf32> to vector<512x128xf32>
    %22 = arith.truncf %21 : vector<512x128xf32> to vector<512x128xbf16>
    %c0_24 = arith.constant 0 : index
    %c0_25 = arith.constant 0 : index
    %c2 = arith.constant 2 : index
    %c0_26 = arith.constant 0 : index
    %23 = vector.load %arg10[%c0_24, %c0_25, %c2, %c0_26] : memref<2x18x18x128xf32, #tpu.memory_space<vmem>>, vector<2x16x16x128xf32>
    %24 = vector.shape_cast %23 : vector<2x16x16x128xf32> to vector<512x128xf32>
    %25 = arith.truncf %24 : vector<512x128xf32> to vector<512x128xbf16>
    %c0_27 = arith.constant 0 : index
    %c1_28 = arith.constant 1 : index
    %c0_29 = arith.constant 0 : index
    %c0_30 = arith.constant 0 : index
    %26 = vector.load %arg10[%c0_27, %c1_28, %c0_29, %c0_30] : memref<2x18x18x128xf32, #tpu.memory_space<vmem>>, vector<2x16x16x128xf32>
    %27 = vector.shape_cast %26 : vector<2x16x16x128xf32> to vector<512x128xf32>
    %28 = arith.truncf %27 : vector<512x128xf32> to vector<512x128xbf16>
    %c0_31 = arith.constant 0 : index
    %c1_32 = arith.constant 1 : index
    %c1_33 = arith.constant 1 : index
    %c0_34 = arith.constant 0 : index
    %29 = vector.load %arg10[%c0_31, %c1_32, %c1_33, %c0_34] : memref<2x18x18x128xf32, #tpu.memory_space<vmem>>, vector<2x16x16x128xf32>
    %30 = vector.shape_cast %29 : vector<2x16x16x128xf32> to vector<512x128xf32>
    %31 = arith.truncf %30 : vector<512x128xf32> to vector<512x128xbf16>
    %c0_35 = arith.constant 0 : index
    %c1_36 = arith.constant 1 : index
    %c2_37 = arith.constant 2 : index
    %c0_38 = arith.constant 0 : index
    %32 = vector.load %arg10[%c0_35, %c1_36, %c2_37, %c0_38] : memref<2x18x18x128xf32, #tpu.memory_space<vmem>>, vector<2x16x16x128xf32>
    %33 = vector.shape_cast %32 : vector<2x16x16x128xf32> to vector<512x128xf32>
    %34 = arith.truncf %33 : vector<512x128xf32> to vector<512x128xbf16>
    %c0_39 = arith.constant 0 : index
    %c2_40 = arith.constant 2 : index
    %c0_41 = arith.constant 0 : index
    %c0_42 = arith.constant 0 : index
    %35 = vector.load %arg10[%c0_39, %c2_40, %c0_41, %c0_42] : memref<2x18x18x128xf32, #tpu.memory_space<vmem>>, vector<2x16x16x128xf32>
    %36 = vector.shape_cast %35 : vector<2x16x16x128xf32> to vector<512x128xf32>
    %37 = arith.truncf %36 : vector<512x128xf32> to vector<512x128xbf16>
    %c0_43 = arith.constant 0 : index
    %c2_44 = arith.constant 2 : index
    %c1_45 = arith.constant 1 : index
    %c0_46 = arith.constant 0 : index
    %38 = vector.load %arg10[%c0_43, %c2_44, %c1_45, %c0_46] : memref<2x18x18x128xf32, #tpu.memory_space<vmem>>, vector<2x16x16x128xf32>
    %39 = vector.shape_cast %38 : vector<2x16x16x128xf32> to vector<512x128xf32>
    %40 = arith.truncf %39 : vector<512x128xf32> to vector<512x128xbf16>
    %c0_47 = arith.constant 0 : index
    %c2_48 = arith.constant 2 : index
    %c2_49 = arith.constant 2 : index
    %c0_50 = arith.constant 0 : index
    %41 = vector.load %arg10[%c0_47, %c2_48, %c2_49, %c0_50] : memref<2x18x18x128xf32, #tpu.memory_space<vmem>>, vector<2x16x16x128xf32>
    %42 = vector.shape_cast %41 : vector<2x16x16x128xf32> to vector<512x128xf32>
    %43 = arith.truncf %42 : vector<512x128xf32> to vector<512x128xbf16>
    %44 = tpu.concatenate %19, %22, %25, %28, %31, %34, %37, %40, %43 in 1 : vector<512x128xbf16>, vector<512x128xbf16>, vector<512x128xbf16>, vector<512x128xbf16>, vector<512x128xbf16>, vector<512x128xbf16>, vector<512x128xbf16>, vector<512x128xbf16>, vector<512x128xbf16> -> vector<512x1152xbf16>
    %c0_51 = arith.constant 0 : index
    %c0_52 = arith.constant 0 : index
    %45 = vector.load %arg3[%c0_51, %c0_52] : memref<1152x128xbf16, #tpu.memory_space<vmem>>, vector<1152x128xbf16>
    %cst_53 = arith.constant dense<0.000000e+00> : vector<512x128xf32>
    %46 = tpu.matmul %44, %45, %cst_53 {dimension_numbers = #tpu.dot_dimension_numbers<[1], [0], [0], [1], [0, 0, 1, 1], [], []>} : vector<512x1152xbf16>, vector<1152x128xbf16>, vector<512x128xf32> -> vector<512x128xf32>
    %c0_54 = arith.constant 0 : index
    %c0_55 = arith.constant 0 : index
    %47 = vector.load %arg4[%c0_54, %c0_55] : memref<1x128xf32, #tpu.memory_space<vmem>>, vector<1x128xf32>
    %48 = vector.broadcast %47 : vector<1x128xf32> to vector<512x128xf32>
    %49 = arith.addf %46, %48 : vector<512x128xf32>
    %c0_56 = arith.constant 0 : index
    %c0_57 = arith.constant 0 : index
    %50 = vector.load %arg7[%c0_56, %c0_57] : memref<512x128xf32, #tpu.memory_space<vmem>>, vector<512x128xf32>
    tpu.vector_store %arg7[%c0_56, %c0_57], %49 {strides = array<i32>} : memref<512x128xf32, #tpu.memory_space<vmem>>, vector<512x128xf32>,
    %cst_58 = arith.constant dense<0.000000e+00> : vector<128xf32>
    %51 = vector.multi_reduction <add>, %49, %cst_58 [0] : vector<512x128xf32> to vector<128xf32>
    %52 = vector.shape_cast %51 : vector<128xf32> to vector<1x128xf32>
    %cst_59 = arith.constant 5.120000e+02 : f32
    %53 = vector.broadcast %cst_59 : f32 to vector<1x128xf32>
    %54 = arith.divf %52, %53 : vector<1x128xf32>
    %55 = vector.broadcast %54 : vector<1x128xf32> to vector<512x128xf32>
    %56 = arith.subf %49, %55 : vector<512x128xf32>
    %57 = arith.mulf %56, %56 : vector<512x128xf32>
    %cst_60 = arith.constant dense<0.000000e+00> : vector<128xf32>
    %58 = vector.multi_reduction <add>, %57, %cst_60 [0] : vector<512x128xf32> to vector<128xf32>
    %59 = vector.shape_cast %58 : vector<128xf32> to vector<1x128xf32>
    %cst_61 = arith.constant 5.120000e+02 : f32
    %60 = vector.broadcast %cst_61 : f32 to vector<1x128xf32>
    %61 = arith.divf %59, %60 : vector<1x128xf32>
    %c0_62 = arith.constant 0 : index
    %c0_63 = arith.constant 0 : index
    %62 = vector.load %arg5[%c0_62, %c0_63] : memref<1x128xf32, #tpu.memory_space<vmem>>, vector<1x128xf32>
    %cst_64 = arith.constant 8.000000e-01 : f32
    %63 = vector.broadcast %cst_64 : f32 to vector<1x128xf32>
    %64 = arith.addf %61, %63 : vector<1x128xf32>
    %65 = math.rsqrt %64 : vector<1x128xf32>
    %66 = arith.mulf %62, %65 : vector<1x128xf32>
    %c0_65 = arith.constant 0 : index
    %c0_66 = arith.constant 0 : index
    %67 = vector.load %arg8[%c0_65, %c0_66] : memref<1x128xf32, #tpu.memory_space<vmem>>, vector<1x128xf32>
    tpu.vector_store %arg8[%c0_65, %c0_66], %66 {strides = array<i32>} : memref<1x128xf32, #tpu.memory_space<vmem>>, vector<1x128xf32>,
    %c0_67 = arith.constant 0 : index
    %c0_68 = arith.constant 0 : index
    %68 = vector.load %arg6[%c0_67, %c0_68] : memref<1x128xf32, #tpu.memory_space<vmem>>, vector<1x128xf32>
    %69 = arith.mulf %54, %66 : vector<1x128xf32>
    %70 = arith.subf %68, %69 : vector<1x128xf32>
    %c0_69 = arith.constant 0 : index
    %c0_70 = arith.constant 0 : index
    %71 = vector.load %arg9[%c0_69, %c0_70] : memref<1x128xf32, #tpu.memory_space<vmem>>, vector<1x128xf32>
    tpu.vector_store %arg9[%c0_69, %c0_70], %70 {strides = array<i32>} : memref<1x128xf32, #tpu.memory_space<vmem>>, vector<1x128xf32>,
    return
  }
}

module attributes {stable_mosaic.version = 11 : i64} {
  func.func @_conv_tanh_kernel(%arg0: memref<2x16x16x128xf32, #tpu.memory_space<vmem>>, %arg1: memref<1x128xf32, #tpu.memory_space<vmem>>, %arg2: memref<1x128xf32, #tpu.memory_space<vmem>>, %arg3: memref<1152x128xbf16, #tpu.memory_space<vmem>>, %arg4: memref<1x128xf32, #tpu.memory_space<vmem>>, %arg5: memref<512x128xf32, #tpu.memory_space<vmem>>, %arg6: memref<2x18x18x128xf32, #tpu.memory_space<vmem>>) attributes {dimension_semantics = [], scalar_prefetch = 0 : i64, scratch_operands = 1 : i64, tpu.core_type = #tpu.core_type<tc>} {
    %c0 = arith.constant 0 : index
    %c0_0 = arith.constant 0 : index
    %c0_1 = arith.constant 0 : index
    %c0_2 = arith.constant 0 : index
    %0 = vector.load %arg0[%c0, %c0_0, %c0_1, %c0_2] : memref<2x16x16x128xf32, #tpu.memory_space<vmem>>, vector<2x16x16x128xf32>
    %c0_3 = arith.constant 0 : index
    %c0_4 = arith.constant 0 : index
    %1 = vector.load %arg1[%c0_3, %c0_4] : memref<1x128xf32, #tpu.memory_space<vmem>>, vector<1x128xf32>
    %2 = vector.shape_cast %1 : vector<1x128xf32> to vector<1x1x1x128xf32>
    %3 = vector.broadcast %2 : vector<1x1x1x128xf32> to vector<2x16x16x128xf32>
    %4 = arith.mulf %0, %3 : vector<2x16x16x128xf32>
    %c0_5 = arith.constant 0 : index
    %c0_6 = arith.constant 0 : index
    %5 = vector.load %arg2[%c0_5, %c0_6] : memref<1x128xf32, #tpu.memory_space<vmem>>, vector<1x128xf32>
    %6 = vector.shape_cast %5 : vector<1x128xf32> to vector<1x1x1x128xf32>
    %7 = vector.broadcast %6 : vector<1x1x1x128xf32> to vector<2x16x16x128xf32>
    %8 = arith.addf %4, %7 : vector<2x16x16x128xf32>
    %cst = arith.constant 0.000000e+00 : f32
    %9 = vector.broadcast %cst : f32 to vector<2x16x16x128xf32>
    %10 = arith.cmpf oge, %8, %9 : vector<2x16x16x128xf32>
    %cst_7 = arith.constant 2.000000e-01 : f32
    %11 = vector.broadcast %cst_7 : f32 to vector<2x16x16x128xf32>
    %12 = arith.mulf %11, %8 : vector<2x16x16x128xf32>
    %13 = arith.select %10, %8, %12 : vector<2x16x16x128xi1>, vector<2x16x16x128xf32>
    %cst_8 = arith.constant 0.000000e+00 : f32
    %14 = vector.broadcast %cst_8 : f32 to vector<2x18x18x128xf32>
    %c0_9 = arith.constant 0 : index
    %c0_10 = arith.constant 0 : index
    %c0_11 = arith.constant 0 : index
    %c0_12 = arith.constant 0 : index
    %15 = vector.load %arg6[%c0_9, %c0_10, %c0_11, %c0_12] : memref<2x18x18x128xf32, #tpu.memory_space<vmem>>, vector<2x18x18x128xf32>
    tpu.vector_store %arg6[%c0_9, %c0_10, %c0_11, %c0_12], %14 {strides = array<i32>} : memref<2x18x18x128xf32, #tpu.memory_space<vmem>>, vector<2x18x18x128xf32>,
    %c0_13 = arith.constant 0 : index
    %c1 = arith.constant 1 : index
    %c1_14 = arith.constant 1 : index
    %c0_15 = arith.constant 0 : index
    %16 = vector.load %arg6[%c0_13, %c1, %c1_14, %c0_15] : memref<2x18x18x128xf32, #tpu.memory_space<vmem>>, vector<2x16x16x128xf32>
    tpu.vector_store %arg6[%c0_13, %c1, %c1_14, %c0_15], %13 {strides = array<i32>} : memref<2x18x18x128xf32, #tpu.memory_space<vmem>>, vector<2x16x16x128xf32>,
    %c0_16 = arith.constant 0 : index
    %c0_17 = arith.constant 0 : index
    %c0_18 = arith.constant 0 : index
    %c0_19 = arith.constant 0 : index
    %17 = vector.load %arg6[%c0_16, %c0_17, %c0_18, %c0_19] : memref<2x18x18x128xf32, #tpu.memory_space<vmem>>, vector<2x16x16x128xf32>
    %18 = vector.shape_cast %17 : vector<2x16x16x128xf32> to vector<512x128xf32>
    %19 = arith.truncf %18 : vector<512x128xf32> to vector<512x128xbf16>
    %c0_20 = arith.constant 0 : index
    %c0_21 = arith.constant 0 : index
    %c1_22 = arith.constant 1 : index
    %c0_23 = arith.constant 0 : index
    %20 = vector.load %arg6[%c0_20, %c0_21, %c1_22, %c0_23] : memref<2x18x18x128xf32, #tpu.memory_space<vmem>>, vector<2x16x16x128xf32>
    %21 = vector.shape_cast %20 : vector<2x16x16x128xf32> to vector<512x128xf32>
    %22 = arith.truncf %21 : vector<512x128xf32> to vector<512x128xbf16>
    %c0_24 = arith.constant 0 : index
    %c0_25 = arith.constant 0 : index
    %c2 = arith.constant 2 : index
    %c0_26 = arith.constant 0 : index
    %23 = vector.load %arg6[%c0_24, %c0_25, %c2, %c0_26] : memref<2x18x18x128xf32, #tpu.memory_space<vmem>>, vector<2x16x16x128xf32>
    %24 = vector.shape_cast %23 : vector<2x16x16x128xf32> to vector<512x128xf32>
    %25 = arith.truncf %24 : vector<512x128xf32> to vector<512x128xbf16>
    %c0_27 = arith.constant 0 : index
    %c1_28 = arith.constant 1 : index
    %c0_29 = arith.constant 0 : index
    %c0_30 = arith.constant 0 : index
    %26 = vector.load %arg6[%c0_27, %c1_28, %c0_29, %c0_30] : memref<2x18x18x128xf32, #tpu.memory_space<vmem>>, vector<2x16x16x128xf32>
    %27 = vector.shape_cast %26 : vector<2x16x16x128xf32> to vector<512x128xf32>
    %28 = arith.truncf %27 : vector<512x128xf32> to vector<512x128xbf16>
    %c0_31 = arith.constant 0 : index
    %c1_32 = arith.constant 1 : index
    %c1_33 = arith.constant 1 : index
    %c0_34 = arith.constant 0 : index
    %29 = vector.load %arg6[%c0_31, %c1_32, %c1_33, %c0_34] : memref<2x18x18x128xf32, #tpu.memory_space<vmem>>, vector<2x16x16x128xf32>
    %30 = vector.shape_cast %29 : vector<2x16x16x128xf32> to vector<512x128xf32>
    %31 = arith.truncf %30 : vector<512x128xf32> to vector<512x128xbf16>
    %c0_35 = arith.constant 0 : index
    %c1_36 = arith.constant 1 : index
    %c2_37 = arith.constant 2 : index
    %c0_38 = arith.constant 0 : index
    %32 = vector.load %arg6[%c0_35, %c1_36, %c2_37, %c0_38] : memref<2x18x18x128xf32, #tpu.memory_space<vmem>>, vector<2x16x16x128xf32>
    %33 = vector.shape_cast %32 : vector<2x16x16x128xf32> to vector<512x128xf32>
    %34 = arith.truncf %33 : vector<512x128xf32> to vector<512x128xbf16>
    %c0_39 = arith.constant 0 : index
    %c2_40 = arith.constant 2 : index
    %c0_41 = arith.constant 0 : index
    %c0_42 = arith.constant 0 : index
    %35 = vector.load %arg6[%c0_39, %c2_40, %c0_41, %c0_42] : memref<2x18x18x128xf32, #tpu.memory_space<vmem>>, vector<2x16x16x128xf32>
    %36 = vector.shape_cast %35 : vector<2x16x16x128xf32> to vector<512x128xf32>
    %37 = arith.truncf %36 : vector<512x128xf32> to vector<512x128xbf16>
    %c0_43 = arith.constant 0 : index
    %c2_44 = arith.constant 2 : index
    %c1_45 = arith.constant 1 : index
    %c0_46 = arith.constant 0 : index
    %38 = vector.load %arg6[%c0_43, %c2_44, %c1_45, %c0_46] : memref<2x18x18x128xf32, #tpu.memory_space<vmem>>, vector<2x16x16x128xf32>
    %39 = vector.shape_cast %38 : vector<2x16x16x128xf32> to vector<512x128xf32>
    %40 = arith.truncf %39 : vector<512x128xf32> to vector<512x128xbf16>
    %c0_47 = arith.constant 0 : index
    %c2_48 = arith.constant 2 : index
    %c2_49 = arith.constant 2 : index
    %c0_50 = arith.constant 0 : index
    %41 = vector.load %arg6[%c0_47, %c2_48, %c2_49, %c0_50] : memref<2x18x18x128xf32, #tpu.memory_space<vmem>>, vector<2x16x16x128xf32>
    %42 = vector.shape_cast %41 : vector<2x16x16x128xf32> to vector<512x128xf32>
    %43 = arith.truncf %42 : vector<512x128xf32> to vector<512x128xbf16>
    %44 = tpu.concatenate %19, %22, %25, %28, %31, %34, %37, %40, %43 in 1 : vector<512x128xbf16>, vector<512x128xbf16>, vector<512x128xbf16>, vector<512x128xbf16>, vector<512x128xbf16>, vector<512x128xbf16>, vector<512x128xbf16>, vector<512x128xbf16>, vector<512x128xbf16> -> vector<512x1152xbf16>
    %c0_51 = arith.constant 0 : index
    %c0_52 = arith.constant 0 : index
    %45 = vector.load %arg3[%c0_51, %c0_52] : memref<1152x128xbf16, #tpu.memory_space<vmem>>, vector<1152x128xbf16>
    %cst_53 = arith.constant dense<0.000000e+00> : vector<512x128xf32>
    %46 = tpu.matmul %44, %45, %cst_53 {dimension_numbers = #tpu.dot_dimension_numbers<[1], [0], [0], [1], [0, 0, 1, 1], [], []>} : vector<512x1152xbf16>, vector<1152x128xbf16>, vector<512x128xf32> -> vector<512x128xf32>
    %c0_54 = arith.constant 0 : index
    %c0_55 = arith.constant 0 : index
    %47 = vector.load %arg4[%c0_54, %c0_55] : memref<1x128xf32, #tpu.memory_space<vmem>>, vector<1x128xf32>
    %48 = vector.broadcast %47 : vector<1x128xf32> to vector<512x128xf32>
    %49 = arith.addf %46, %48 : vector<512x128xf32>
    %50 = math.tanh %49 : vector<512x128xf32>
    %c0_56 = arith.constant 0 : index
    %c0_57 = arith.constant 0 : index
    %51 = vector.load %arg5[%c0_56, %c0_57] : memref<512x128xf32, #tpu.memory_space<vmem>>, vector<512x128xf32>
    tpu.vector_store %arg5[%c0_56, %c0_57], %50 {strides = array<i32>} : memref<512x128xf32, #tpu.memory_space<vmem>>, vector<512x128xf32>,
    return
  }
}

</mosaic_0001>

<llo_original>
// kernel: generator_forward.4
$region0: #{generator_forward.4}
  #allocation0 [shape = 'u32[]', space=smem, size = 0x4, offset = 0x4, fixed_abs, tag = 'smem constant byte address 0x4 - core index']
  #allocation1 [shape = 'u32[144,128]{1,0:T(1,128)}', space=vmem, size = 0x12000, scoped, tag = 'internal scratch']
  %s0 = inlined_call_operand.hbm [shape: f32[2,32], index: 0, kind: input, shape index: {}]
  %s1 = inlined_call_operand.hbm [shape: bf16[32,2048], index: 1, kind: input, shape index: {}]
  %s2 = inlined_call_operand.vmem [shape: f32[1,2048], index: 2, kind: input, shape index: {}]
  %s3 = inlined_call_operand.hbm [shape: f32[1,128], index: 3, kind: input, shape index: {}]
  %s4 = inlined_call_operand.hbm [shape: f32[1,128], index: 4, kind: input, shape index: {}]
  %s5 = inlined_call_operand.vmem [shape: f32[2,2048], index: 5, kind: output, shape index: {0}]
  %s6 = inlined_call_operand.vmem [shape: f32[1,128], index: 6, kind: output, shape index: {1}]
  %s7 = inlined_call_operand.vmem [shape: f32[1,128], index: 7, kind: output, shape index: {2}]
  %8 = xla_tuple %s5, %s6, %s7
  %s9 = sld [smem:[#allocation0]]
  $region62: #{generator_forward.4} parent=0
    _
  %s11 = ssub.s32 1, %s9
  %s12 = scalar_select 0, %s11, %s9
  $region1: #{generator_forward.4} parent=0
    #allocation2 [shape = 'u8[1024]{0}', space=vmem, size = 0x400, scoped, tag = 'input window, operand 0, single buffered']
    #allocation3 [shape = 's32[1]{0}', space=sflag, size = 0x4, scoped, tag = 'scoped memory for generator_forward.4']
    #allocation4 [shape = 'u8[131072]{0}', space=vmem, size = 0x20000, scoped, tag = 'input window, operand 1, single buffered']
    #allocation5 [shape = 's32[1]{0}', space=sflag, size = 0x4, scoped, tag = 'scoped memory for generator_forward.4']
    #allocation6 [shape = 'u8[512]{0}', space=vmem, size = 0x400, scoped, tag = 'input window, operand 3, single buffered']
    #allocation7 [shape = 'u8[512]{0}', space=vmem, size = 0x400, scoped, tag = 'input window, operand 4, single buffered']
    #allocation8 [shape = 's32[1]{0}', space=sflag, size = 0x4, scoped, tag = 'scoped memory for generator_forward.4']
    %13 = vsyncpa [#allocation3], 0
    %14 = vsyncpa [#allocation5], 0
    %15 = vsyncpa [#allocation8], 0
    // Predicated region
    $region2: #{generator_forward.4} parent=1 // pred_check
      _
    $region3: #{generator_forward.4} parent=1 // pred_check_branch
      %17 = sbr.rel (0) target = $region5
    $region4: #{generator_forward.4} parent=1 // pred_region
      %s19 = ssub.s32 32, 32
      %20 = vsyncadd [#allocation3], %s19
      %s22 = sshll.u32 [#allocation2], 4
      %s23 = int_to_ptr.vmem [resolvable:$true] %s22
      %25 = dma.hbm_to_vmem [thread:$0]  %s0, 32, %s23, [#allocation3]
    $region5: #{generator_forward.4} parent=1 // pred_fallthru
      _
    // Predicated region
    $region6: #{generator_forward.4} parent=1 // pred_check
      _
    $region7: #{generator_forward.4} parent=1 // pred_check_branch
      %27 = sbr.rel (0) target = $region9
    $region8: #{generator_forward.4} parent=1 // pred_region
      %s29 = ssub.s32 4096, 4096
      %30 = vsyncadd [#allocation5], %s29
      %s31 = sshll.u32 [#allocation4], 4
      %s32 = int_to_ptr.vmem [resolvable:$true] %s31
      %37 = dma.hbm_to_vmem [thread:$0]  %s1, 4096, %s32, [#allocation5], 1024, 1024, 64
    $region9: #{generator_forward.4} parent=1 // pred_fallthru
      _
    // Predicated region
    $region10: #{generator_forward.4} parent=1 // pred_check
      _
    $region11: #{generator_forward.4} parent=1 // pred_check_branch
      %39 = sbr.rel (0) target = $region13
    $region12: #{generator_forward.4} parent=1 // pred_region
      _
    $region13: #{generator_forward.4} parent=1 // pred_fallthru
      _
    // Predicated region
    $region14: #{generator_forward.4} parent=1 // pred_check
      _
    $region15: #{generator_forward.4} parent=1 // pred_check_branch
      %41 = sbr.rel (0) target = $region17
    $region16: #{generator_forward.4} parent=1 // pred_region
      %s43 = ssub.s32 16, 16
      %44 = vsyncadd [#allocation5], %s43
      %s46 = sshll.u32 [#allocation6], 4
      %s47 = int_to_ptr.vmem [resolvable:$true] %s46
      %49 = dma.hbm_to_vmem [thread:$0]  %s3, 16, %s47, [#allocation5]
    $region17: #{generator_forward.4} parent=1 // pred_fallthru
      _
    // Predicated region
    $region18: #{generator_forward.4} parent=1 // pred_check
      _
    $region19: #{generator_forward.4} parent=1 // pred_check_branch
      %51 = sbr.rel (0) target = $region21
    $region20: #{generator_forward.4} parent=1 // pred_region
      %s53 = ssub.s32 16, 16
      %54 = vsyncadd [#allocation8], %s53
      %s56 = sshll.u32 [#allocation7], 4
      %s57 = int_to_ptr.vmem [resolvable:$true] %s56
      %59 = dma.hbm_to_vmem [thread:$0]  %s4, 16, %s57, [#allocation8]
    $region21: #{generator_forward.4} parent=1 // pred_fallthru
      _
    // Predicated region
    $region22: #{generator_forward.4} parent=1 // pred_check
      _
    $region23: #{generator_forward.4} parent=1 // pred_check_branch
      %61 = sbr.rel (0) target = $region25
    $region24: #{generator_forward.4} parent=1 // pred_region
      %62 = dma.done [#allocation3], 32
    $region25: #{generator_forward.4} parent=1 // pred_fallthru
      _
    // Predicated region
    $region26: #{generator_forward.4} parent=1 // pred_check
      _
    $region27: #{generator_forward.4} parent=1 // pred_check_branch
      %64 = sbr.rel (0) target = $region29
    $region28: #{generator_forward.4} parent=1 // pred_region
      %65 = dma.done [#allocation5], 4096
    $region29: #{generator_forward.4} parent=1 // pred_fallthru
      _
    // Predicated region
    $region30: #{generator_forward.4} parent=1 // pred_check
      _
    $region31: #{generator_forward.4} parent=1 // pred_check_branch
      %67 = sbr.rel (0) target = $region33
    $region32: #{generator_forward.4} parent=1 // pred_region
      %68 = dma.done [#allocation5], 16
    $region33: #{generator_forward.4} parent=1 // pred_fallthru
      _
    // Predicated region
    $region34: #{generator_forward.4} parent=1 // pred_check
      _
    $region35: #{generator_forward.4} parent=1 // pred_check_branch
      %70 = sbr.rel (0) target = $region37
    $region36: #{generator_forward.4} parent=1 // pred_region
      %71 = dma.done [#allocation8], 16
    $region37: #{generator_forward.4} parent=1 // pred_fallthru
      _
    %v73 = vld [vmem:[#allocation2] sm:$0x3]
    %v74 = vpack.c.bf16 %v73, %v73
    %v75 = vld [vmem:[#allocation4] sm:$0xff]
    %v76 = vld [vmem:[#allocation4 + $0x8] sm:$0xff]
    %v77 = vld [vmem:[#allocation4 + $0x10] sm:$0xff]
    %v78 = vld [vmem:[#allocation4 + $0x18] sm:$0xff]
    %v79 = vld [vmem:[#allocation4 + $0x20] sm:$0xff]
    %v80 = vld [vmem:[#allocation4 + $0x28] sm:$0xff]
    %v81 = vld [vmem:[#allocation4 + $0x30] sm:$0xff]
    %v82 = vld [vmem:[#allocation4 + $0x38] sm:$0xff]
    %v83 = vld [vmem:[#allocation4 + $0x40] sm:$0xff]
    %v84 = vld [vmem:[#allocation4 + $0x48] sm:$0xff]
    %v85 = vld [vmem:[#allocation4 + $0x50] sm:$0xff]
    %v86 = vld [vmem:[#allocation4 + $0x58] sm:$0xff]
    %v87 = vld [vmem:[#allocation4 + $0x60] sm:$0xff]
    %v88 = vld [vmem:[#allocation4 + $0x68] sm:$0xff]
    %v89 = vld [vmem:[#allocation4 + $0x70] sm:$0xff]
    %v90 = vld [vmem:[#allocation4 + $0x78] sm:$0xff]
    %v91 = vld [vmem:[#allocation4 + $0x80] sm:$0xff]
    %v92 = vld [vmem:[#allocation4 + $0x88] sm:$0xff]
    %v93 = vld [vmem:[#allocation4 + $0x90] sm:$0xff]
    %v94 = vld [vmem:[#allocation4 + $0x98] sm:$0xff]
    %v95 = vld [vmem:[#allocation4 + $0xa0] sm:$0xff]
    %v96 = vld [vmem:[#allocation4 + $0xa8] sm:$0xff]
    %v97 = vld [vmem:[#allocation4 + $0xb0] sm:$0xff]
    %v98 = vld [vmem:[#allocation4 + $0xb8] sm:$0xff]
    %v99 = vld [vmem:[#allocation4 + $0xc0] sm:$0xff]
    %v100 = vld [vmem:[#allocation4 + $0xc8] sm:$0xff]
    %v101 = vld [vmem:[#allocation4 + $0xd0] sm:$0xff]
    %v102 = vld [vmem:[#allocation4 + $0xd8] sm:$0xff]
    %v103 = vld [vmem:[#allocation4 + $0xe0] sm:$0xff]
    %v104 = vld [vmem:[#allocation4 + $0xe8] sm:$0xff]
    %v105 = vld [vmem:[#allocation4 + $0xf0] sm:$0xff]
    %v106 = vld [vmem:[#allocation4 + $0xf8] sm:$0xff]
    %v107 = vld [vmem:[%s2] sm:$0xff]
    %v108 = vld [vmem:[%s2 + $0x8] sm:$0xff]
    %v111 = vlaneseq
    %v112 = vshrl.u32 %v111, 7
    %v113 = vsub.s32 0, %v112
    %v114 = vrot.slane %v107, %v113
    %v115 = vlaneseq
    %v116 = vshrl.u32 %v115, 7
    %v117 = vsub.s32 1, %v116
    %v118 = vrot.slane %v107, %v117
    %v119 = vlaneseq
    %v120 = vshrl.u32 %v119, 7
    %v121 = vsub.s32 2, %v120
    %v122 = vrot.slane %v107, %v121
    %v123 = vlaneseq
    %v124 = vshrl.u32 %v123, 7
    %v125 = vsub.s32 3, %v124
    %v126 = vrot.slane %v107, %v125
    %v127 = vlaneseq
    %v128 = vshrl.u32 %v127, 7
    %v129 = vsub.s32 4, %v128
    %v130 = vrot.slane %v107, %v129
    %v131 = vlaneseq
    %v132 = vshrl.u32 %v131, 7
    %v133 = vsub.s32 5, %v132
    %v134 = vrot.slane %v107, %v133
    %v135 = vlaneseq
    %v136 = vshrl.u32 %v135, 7
    %v137 = vsub.s32 6, %v136
    %v138 = vrot.slane %v107, %v137
    %v139 = vlaneseq
    %v140 = vshrl.u32 %v139, 7
    %v141 = vsub.s32 7, %v140
    %v142 = vrot.slane %v107, %v141
    %v143 = vlaneseq
    %v144 = vshrl.u32 %v143, 7
    %v145 = vsub.s32 0, %v144
    %v146 = vrot.slane %v108, %v145
    %v147 = vlaneseq
    %v148 = vshrl.u32 %v147, 7
    %v149 = vsub.s32 1, %v148
    %v150 = vrot.slane %v108, %v149
    %v151 = vlaneseq
    %v152 = vshrl.u32 %v151, 7
    %v153 = vsub.s32 2, %v152
    %v154 = vrot.slane %v108, %v153
    %v155 = vlaneseq
    %v156 = vshrl.u32 %v155, 7
    %v157 = vsub.s32 3, %v156
    %v158 = vrot.slane %v108, %v157
    %v159 = vlaneseq
    %v160 = vshrl.u32 %v159, 7
    %v161 = vsub.s32 4, %v160
    %v162 = vrot.slane %v108, %v161
    %v163 = vlaneseq
    %v164 = vshrl.u32 %v163, 7
    %v165 = vsub.s32 5, %v164
    %v166 = vrot.slane %v108, %v165
    %v167 = vlaneseq
    %v168 = vshrl.u32 %v167, 7
    %v169 = vsub.s32 6, %v168
    %v170 = vrot.slane %v108, %v169
    %v171 = vlaneseq
    %v172 = vshrl.u32 %v171, 7
    %v173 = vsub.s32 7, %v172
    %v174 = vrot.slane %v108, %v173
    %v223 = vunpack.c.l.b16 %v75
    %v224 = vunpack.c.h.b16 %v75
    %v225 = vunpack.c.l.b16 %v76
    %v226 = vunpack.c.h.b16 %v76
    %v227 = vunpack.c.l.b16 %v77
    %v228 = vunpack.c.h.b16 %v77
    %v229 = vunpack.c.l.b16 %v78
    %v230 = vunpack.c.h.b16 %v78
    %v231 = vunpack.c.l.b16 %v79
    %v232 = vunpack.c.h.b16 %v79
    %v233 = vunpack.c.l.b16 %v80
    %v234 = vunpack.c.h.b16 %v80
    %v235 = vunpack.c.l.b16 %v81
    %v236 = vunpack.c.h.b16 %v81
    %v237 = vunpack.c.l.b16 %v82
    %v238 = vunpack.c.h.b16 %v82
    %v239 = vunpack.c.l.b16 %v83
    %v240 = vunpack.c.h.b16 %v83
    %v241 = vunpack.c.l.b16 %v84
    %v242 = vunpack.c.h.b16 %v84
    %v243 = vunpack.c.l.b16 %v85
    %v244 = vunpack.c.h.b16 %v85
    %v245 = vunpack.c.l.b16 %v86
    %v246 = vunpack.c.h.b16 %v86
    %v247 = vunpack.c.l.b16 %v87
    %v248 = vunpack.c.h.b16 %v87
    %v249 = vunpack.c.l.b16 %v88
    %v250 = vunpack.c.h.b16 %v88
    %v251 = vunpack.c.l.b16 %v89
    %v252 = vunpack.c.h.b16 %v89
    %v253 = vunpack.c.l.b16 %v90
    %v254 = vunpack.c.h.b16 %v90
    %v255 = vunpack.c.l.b16 %v91
    %v256 = vunpack.c.h.b16 %v91
    %v257 = vunpack.c.l.b16 %v92
    %v258 = vunpack.c.h.b16 %v92
    %v259 = vunpack.c.l.b16 %v93
    %v260 = vunpack.c.h.b16 %v93
    %v261 = vunpack.c.l.b16 %v94
    %v262 = vunpack.c.h.b16 %v94
    %v263 = vunpack.c.l.b16 %v95
    %v264 = vunpack.c.h.b16 %v95
    %v265 = vunpack.c.l.b16 %v96
    %v266 = vunpack.c.h.b16 %v96
    %v267 = vunpack.c.l.b16 %v97
    %v268 = vunpack.c.h.b16 %v97
    %v269 = vunpack.c.l.b16 %v98
    %v270 = vunpack.c.h.b16 %v98
    %v271 = vunpack.c.l.b16 %v99
    %v272 = vunpack.c.h.b16 %v99
    %v273 = vunpack.c.l.b16 %v100
    %v274 = vunpack.c.h.b16 %v100
    %v275 = vunpack.c.l.b16 %v101
    %v276 = vunpack.c.h.b16 %v101
    %v277 = vunpack.c.l.b16 %v102
    %v278 = vunpack.c.h.b16 %v102
    %v279 = vunpack.c.l.b16 %v103
    %v280 = vunpack.c.h.b16 %v103
    %v281 = vunpack.c.l.b16 %v104
    %v282 = vunpack.c.h.b16 %v104
    %v283 = vunpack.c.l.b16 %v105
    %v284 = vunpack.c.h.b16 %v105
    %v285 = vunpack.c.l.b16 %v106
    %v286 = vunpack.c.h.b16 %v106
    %v287 = vpack.c.b16 %v239, %v223
    %v288 = vpack.c.b16 %v240, %v224
    %v289 = vpack.c.b16 %v241, %v225
    %v290 = vpack.c.b16 %v242, %v226
    %v291 = vpack.c.b16 %v243, %v227
    %v292 = vpack.c.b16 %v244, %v228
    %v293 = vpack.c.b16 %v245, %v229
    %v294 = vpack.c.b16 %v246, %v230
    %v295 = vpack.c.b16 %v247, %v231
    %v296 = vpack.c.b16 %v248, %v232
    %v297 = vpack.c.b16 %v249, %v233
    %v298 = vpack.c.b16 %v250, %v234
    %v299 = vpack.c.b16 %v251, %v235
    %v300 = vpack.c.b16 %v252, %v236
    %v301 = vpack.c.b16 %v253, %v237
    %v302 = vpack.c.b16 %v254, %v238
    %v303 = vpack.c.b16 %v271, %v255
    %v304 = vpack.c.b16 %v272, %v256
    %v305 = vpack.c.b16 %v273, %v257
    %v306 = vpack.c.b16 %v274, %v258
    %v307 = vpack.c.b16 %v275, %v259
    %v308 = vpack.c.b16 %v276, %v260
    %v309 = vpack.c.b16 %v277, %v261
    %v310 = vpack.c.b16 %v278, %v262
    %v311 = vpack.c.b16 %v279, %v263
    %v312 = vpack.c.b16 %v280, %v264
    %v313 = vpack.c.b16 %v281, %v265
    %v314 = vpack.c.b16 %v282, %v266
    %v315 = vpack.c.b16 %v283, %v267
    %v316 = vpack.c.b16 %v284, %v268
    %v317 = vpack.c.b16 %v285, %v269
    %v318 = vpack.c.b16 %v286, %v270
    %vm351 = vcmask 261120
    %v353 = vsel %vm351, %v74, 0
    %355 = vmatprep.subr.bf16.mxu0 %v288
    %356 = vmatpush1.bf16.msra.mxu0 %v287
    %357 = vmatprep.subr.bf16.mxu0 %v304
    %358 = vmatpush1.bf16.msra.mxu0 %v303
    %359 = vmatprep.subr.bf16.mxu0 0
    %360 = vmatpush1.bf16.msra.mxu0 0
    %361 = vmatprep.subr.bf16.mxu0 0
    %362 = vmatpush1.bf16.msra.mxu0 0
    %363 = vmatprep.subr.bf16.mxu0 0
    %364 = vmatpush1.bf16.msra.mxu0 0
    %365 = vmatprep.subr.bf16.mxu0 0
    %366 = vmatpush1.bf16.msra.mxu0 0
    %367 = vmatprep.subr.bf16.mxu0 0
    %368 = vmatpush1.bf16.msra.mxu0 0
    %369 = vmatprep.subr.bf16.mxu0 0
    %370 = vmatpush1.bf16.msra.mxu0 0
    %371 = vmatprep.subr.bf16.mxu0 0
    %372 = vmatpush1.bf16.msra.mxu0 0
    %373 = vmatprep.subr.bf16.mxu0 0
    %374 = vmatpush1.bf16.msra.mxu0 0
    %375 = vmatprep.subr.bf16.mxu0 0
    %376 = vmatpush1.bf16.msra.mxu0 0
    %377 = vmatprep.subr.bf16.mxu0 0
    %378 = vmatpush1.bf16.msra.mxu0 0
    %379 = vmatprep.subr.bf16.mxu0 0
    %380 = vmatpush1.bf16.msra.mxu0 0
    %381 = vmatprep.subr.bf16.mxu0 0
    %382 = vmatpush1.bf16.msra.mxu0 0
    %383 = vmatprep.subr.bf16.mxu0 0
    %384 = vmatpush1.bf16.msra.mxu0 0
    %385 = vmatprep.subr.bf16.mxu0 0
    %386 = vmatpush1.bf16.msra.mxu0 0
    %387 = vmatprep.mubr.bf16.mxu0 0
    %388 = vmatmul.mubr.bf16.gmra.mrb[0].mxu0 %v353
    %v389 = vpop.f32.mrb[0].mxu0
    %v390 = vadd.f32 %v114, %v389
    %v391 = vpop.f32.mrb[0].mxu0
    %v392 = vadd.f32 %v118, %v391
    %v393 = vpop.f32.mrb[0].mxu0
    %v394 = vpop.f32.mrb[0].mxu0
    %395 = vdwg.mxu0
    %396 = vmatprep.subr.bf16.mxu0 %v290
    %397 = vmatpush1.bf16.msra.mxu0 %v289
    %398 = vmatprep.subr.bf16.mxu0 %v306
    %399 = vmatpush1.bf16.msra.mxu0 %v305
    %400 = vmatprep.subr.bf16.mxu0 0
    %401 = vmatpush1.bf16.msra.mxu0 0
    %402 = vmatprep.subr.bf16.mxu0 0
    %403 = vmatpush1.bf16.msra.mxu0 0
    %404 = vmatprep.subr.bf16.mxu0 0
    %405 = vmatpush1.bf16.msra.mxu0 0
    %406 = vmatprep.subr.bf16.mxu0 0
    %407 = vmatpush1.bf16.msra.mxu0 0
    %408 = vmatprep.subr.bf16.mxu0 0
    %409 = vmatpush1.bf16.msra.mxu0 0
    %410 = vmatprep.subr.bf16.mxu0 0
    %411 = vmatpush1.bf16.msra.mxu0 0
    %412 = vmatprep.subr.bf16.mxu0 0
    %413 = vmatpush1.bf16.msra.mxu0 0
    %414 = vmatprep.subr.bf16.mxu0 0
    %415 = vmatpush1.bf16.msra.mxu0 0
    %416 = vmatprep.subr.bf16.mxu0 0
    %417 = vmatpush1.bf16.msra.mxu0 0
    %418 = vmatprep.subr.bf16.mxu0 0
    %419 = vmatpush1.bf16.msra.mxu0 0
    %420 = vmatprep.subr.bf16.mxu0 0
    %421 = vmatpush1.bf16.msra.mxu0 0
    %422 = vmatprep.subr.bf16.mxu0 0
    %423 = vmatpush1.bf16.msra.mxu0 0
    %424 = vmatprep.subr.bf16.mxu0 0
    %425 = vmatpush1.bf16.msra.mxu0 0
    %426 = vmatprep.subr.bf16.mxu0 0
    %427 = vmatpush1.bf16.msra.mxu0 0
    %428 = vmatprep.mubr.bf16.mxu0 0
    %429 = vmatmul.mubr.bf16.gmra.mrb[0].mxu0 %v353
    %v430 = vpop.f32.mrb[0].mxu0
    %v431 = vadd.f32 %v122, %v430
    %v432 = vpop.f32.mrb[0].mxu0
    %v433 = vadd.f32 %v126, %v432
    %v434 = vpop.f32.mrb[0].mxu0
    %v435 = vpop.f32.mrb[0].mxu0
    %436 = vdwg.mxu0
    %437 = vmatprep.subr.bf16.mxu0 %v292
    %438 = vmatpush1.bf16.msra.mxu0 %v291
    %439 = vmatprep.subr.bf16.mxu0 %v308
    %440 = vmatpush1.bf16.msra.mxu0 %v307
    %441 = vmatprep.subr.bf16.mxu0 0
    %442 = vmatpush1.bf16.msra.mxu0 0
    %443 = vmatprep.subr.bf16.mxu0 0
    %444 = vmatpush1.bf16.msra.mxu0 0
    %445 = vmatprep.subr.bf16.mxu0 0
    %446 = vmatpush1.bf16.msra.mxu0 0
    %447 = vmatprep.subr.bf16.mxu0 0
    %448 = vmatpush1.bf16.msra.mxu0 0
    %449 = vmatprep.subr.bf16.mxu0 0
    %450 = vmatpush1.bf16.msra.mxu0 0
    %451 = vmatprep.subr.bf16.mxu0 0
    %452 = vmatpush1.bf16.msra.mxu0 0
    %453 = vmatprep.subr.bf16.mxu0 0
    %454 = vmatpush1.bf16.msra.mxu0 0
    %455 = vmatprep.subr.bf16.mxu0 0
    %456 = vmatpush1.bf16.msra.mxu0 0
    %457 = vmatprep.subr.bf16.mxu0 0
    %458 = vmatpush1.bf16.msra.mxu0 0
    %459 = vmatprep.subr.bf16.mxu0 0
    %460 = vmatpush1.bf16.msra.mxu0 0
    %461 = vmatprep.subr.bf16.mxu0 0
    %462 = vmatpush1.bf16.msra.mxu0 0
    %463 = vmatprep.subr.bf16.mxu0 0
    %464 = vmatpush1.bf16.msra.mxu0 0
    %465 = vmatprep.subr.bf16.mxu0 0
    %466 = vmatpush1.bf16.msra.mxu0 0
    %467 = vmatprep.subr.bf16.mxu0 0
    %468 = vmatpush1.bf16.msra.mxu0 0
    %469 = vmatprep.mubr.bf16.mxu0 0
    %470 = vmatmul.mubr.bf16.gmra.mrb[0].mxu0 %v353
    %v471 = vpop.f32.mrb[0].mxu0
    %v472 = vadd.f32 %v130, %v471
    %v473 = vpop.f32.mrb[0].mxu0
    %v474 = vadd.f32 %v134, %v473
    %v475 = vpop.f32.mrb[0].mxu0
    %v476 = vpop.f32.mrb[0].mxu0
    %477 = vdwg.mxu0
    %478 = vmatprep.subr.bf16.mxu0 %v294
    %479 = vmatpush1.bf16.msra.mxu0 %v293
    %480 = vmatprep.subr.bf16.mxu0 %v310
    %481 = vmatpush1.bf16.msra.mxu0 %v309
    %482 = vmatprep.subr.bf16.mxu0 0
    %483 = vmatpush1.bf16.msra.mxu0 0
    %484 = vmatprep.subr.bf16.mxu0 0
    %485 = vmatpush1.bf16.msra.mxu0 0
    %486 = vmatprep.subr.bf16.mxu0 0
    %487 = vmatpush1.bf16.msra.mxu0 0
    %488 = vmatprep.subr.bf16.mxu0 0
    %489 = vmatpush1.bf16.msra.mxu0 0
    %490 = vmatprep.subr.bf16.mxu0 0
    %491 = vmatpush1.bf16.msra.mxu0 0
    %492 = vmatprep.subr.bf16.mxu0 0
    %493 = vmatpush1.bf16.msra.mxu0 0
    %494 = vmatprep.subr.bf16.mxu0 0
    %495 = vmatpush1.bf16.msra.mxu0 0
    %496 = vmatprep.subr.bf16.mxu0 0
    %497 = vmatpush1.bf16.msra.mxu0 0
    %498 = vmatprep.subr.bf16.mxu0 0
    %499 = vmatpush1.bf16.msra.mxu0 0
    %500 = vmatprep.subr.bf16.mxu0 0
    %501 = vmatpush1.bf16.msra.mxu0 0
    %502 = vmatprep.subr.bf16.mxu0 0
    %503 = vmatpush1.bf16.msra.mxu0 0
    %504 = vmatprep.subr.bf16.mxu0 0
    %505 = vmatpush1.bf16.msra.mxu0 0
    %506 = vmatprep.subr.bf16.mxu0 0
    %507 = vmatpush1.bf16.msra.mxu0 0
    %508 = vmatprep.subr.bf16.mxu0 0
    %509 = vmatpush1.bf16.msra.mxu0 0
    %510 = vmatprep.mubr.bf16.mxu0 0
    %511 = vmatmul.mubr.bf16.gmra.mrb[0].mxu0 %v353
    %v512 = vpop.f32.mrb[0].mxu0
    %v513 = vadd.f32 %v138, %v512
    %v514 = vpop.f32.mrb[0].mxu0
    %v515 = vadd.f32 %v142, %v514
    %v516 = vpop.f32.mrb[0].mxu0
    %v517 = vpop.f32.mrb[0].mxu0
    %518 = vdwg.mxu0
    %519 = vmatprep.subr.bf16.mxu0 %v296
    %520 = vmatpush1.bf16.msra.mxu0 %v295
    %521 = vmatprep.subr.bf16.mxu0 %v312
    %522 = vmatpush1.bf16.msra.mxu0 %v311
    %523 = vmatprep.subr.bf16.mxu0 0
    %524 = vmatpush1.bf16.msra.mxu0 0
    %525 = vmatprep.subr.bf16.mxu0 0
    %526 = vmatpush1.bf16.msra.mxu0 0
    %527 = vmatprep.subr.bf16.mxu0 0
    %528 = vmatpush1.bf16.msra.mxu0 0
    %529 = vmatprep.subr.bf16.mxu0 0
    %530 = vmatpush1.bf16.msra.mxu0 0
    %531 = vmatprep.subr.bf16.mxu0 0
    %532 = vmatpush1.bf16.msra.mxu0 0
    %533 = vmatprep.subr.bf16.mxu0 0
    %534 = vmatpush1.bf16.msra.mxu0 0
    %535 = vmatprep.subr.bf16.mxu0 0
    %536 = vmatpush1.bf16.msra.mxu0 0
    %537 = vmatprep.subr.bf16.mxu0 0
    %538 = vmatpush1.bf16.msra.mxu0 0
    %539 = vmatprep.subr.bf16.mxu0 0
    %540 = vmatpush1.bf16.msra.mxu0 0
    %541 = vmatprep.subr.bf16.mxu0 0
    %542 = vmatpush1.bf16.msra.mxu0 0
    %543 = vmatprep.subr.bf16.mxu0 0
    %544 = vmatpush1.bf16.msra.mxu0 0
    %545 = vmatprep.subr.bf16.mxu0 0
    %546 = vmatpush1.bf16.msra.mxu0 0
    %547 = vmatprep.subr.bf16.mxu0 0
    %548 = vmatpush1.bf16.msra.mxu0 0
    %549 = vmatprep.subr.bf16.mxu0 0
    %550 = vmatpush1.bf16.msra.mxu0 0
    %551 = vmatprep.mubr.bf16.mxu0 0
    %552 = vmatmul.mubr.bf16.gmra.mrb[0].mxu0 %v353
    %v553 = vpop.f32.mrb[0].mxu0
    %v554 = vadd.f32 %v146, %v553
    %v555 = vpop.f32.mrb[0].mxu0
    %v556 = vadd.f32 %v150, %v555
    %v557 = vpop.f32.mrb[0].mxu0
    %v558 = vpop.f32.mrb[0].mxu0
    %559 = vdwg.mxu0
    %560 = vmatprep.subr.bf16.mxu0 %v298
    %561 = vmatpush1.bf16.msra.mxu0 %v297
    %562 = vmatprep.subr.bf16.mxu0 %v314
    %563 = vmatpush1.bf16.msra.mxu0 %v313
    %564 = vmatprep.subr.bf16.mxu0 0
    %565 = vmatpush1.bf16.msra.mxu0 0
    %566 = vmatprep.subr.bf16.mxu0 0
    %567 = vmatpush1.bf16.msra.mxu0 0
    %568 = vmatprep.subr.bf16.mxu0 0
    %569 = vmatpush1.bf16.msra.mxu0 0
    %570 = vmatprep.subr.bf16.mxu0 0
    %571 = vmatpush1.bf16.msra.mxu0 0
    %572 = vmatprep.subr.bf16.mxu0 0
    %573 = vmatpush1.bf16.msra.mxu0 0
    %574 = vmatprep.subr.bf16.mxu0 0
    %575 = vmatpush1.bf16.msra.mxu0 0
    %576 = vmatprep.subr.bf16.mxu0 0
    %577 = vmatpush1.bf16.msra.mxu0 0
    %578 = vmatprep.subr.bf16.mxu0 0
    %579 = vmatpush1.bf16.msra.mxu0 0
    %580 = vmatprep.subr.bf16.mxu0 0
    %581 = vmatpush1.bf16.msra.mxu0 0
    %582 = vmatprep.subr.bf16.mxu0 0
    %583 = vmatpush1.bf16.msra.mxu0 0
    %584 = vmatprep.subr.bf16.mxu0 0
    %585 = vmatpush1.bf16.msra.mxu0 0
    %586 = vmatprep.subr.bf16.mxu0 0
    %587 = vmatpush1.bf16.msra.mxu0 0
    %588 = vmatprep.subr.bf16.mxu0 0
    %589 = vmatpush1.bf16.msra.mxu0 0
    %590 = vmatprep.subr.bf16.mxu0 0
    %591 = vmatpush1.bf16.msra.mxu0 0
    %592 = vmatprep.mubr.bf16.mxu0 0
    %593 = vmatmul.mubr.bf16.gmra.mrb[0].mxu0 %v353
    %v594 = vpop.f32.mrb[0].mxu0
    %v595 = vadd.f32 %v154, %v594
    %v596 = vpop.f32.mrb[0].mxu0
    %v597 = vadd.f32 %v158, %v596
    %v598 = vpop.f32.mrb[0].mxu0
    %v599 = vpop.f32.mrb[0].mxu0
    %600 = vdwg.mxu0
    %601 = vmatprep.subr.bf16.mxu0 %v300
    %602 = vmatpush1.bf16.msra.mxu0 %v299
    %603 = vmatprep.subr.bf16.mxu0 %v316
    %604 = vmatpush1.bf16.msra.mxu0 %v315
    %605 = vmatprep.subr.bf16.mxu0 0
    %606 = vmatpush1.bf16.msra.mxu0 0
    %607 = vmatprep.subr.bf16.mxu0 0
    %608 = vmatpush1.bf16.msra.mxu0 0
    %609 = vmatprep.subr.bf16.mxu0 0
    %610 = vmatpush1.bf16.msra.mxu0 0
    %611 = vmatprep.subr.bf16.mxu0 0
    %612 = vmatpush1.bf16.msra.mxu0 0
    %613 = vmatprep.subr.bf16.mxu0 0
    %614 = vmatpush1.bf16.msra.mxu0 0
    %615 = vmatprep.subr.bf16.mxu0 0
    %616 = vmatpush1.bf16.msra.mxu0 0
    %617 = vmatprep.subr.bf16.mxu0 0
    %618 = vmatpush1.bf16.msra.mxu0 0
    %619 = vmatprep.subr.bf16.mxu0 0
    %620 = vmatpush1.bf16.msra.mxu0 0
    %621 = vmatprep.subr.bf16.mxu0 0
    %622 = vmatpush1.bf16.msra.mxu0 0
    %623 = vmatprep.subr.bf16.mxu0 0
    %624 = vmatpush1.bf16.msra.mxu0 0
    %625 = vmatprep.subr.bf16.mxu0 0
    %626 = vmatpush1.bf16.msra.mxu0 0
    %627 = vmatprep.subr.bf16.mxu0 0
    %628 = vmatpush1.bf16.msra.mxu0 0
    %629 = vmatprep.subr.bf16.mxu0 0
    %630 = vmatpush1.bf16.msra.mxu0 0
    %631 = vmatprep.subr.bf16.mxu0 0
    %632 = vmatpush1.bf16.msra.mxu0 0
    %633 = vmatprep.mubr.bf16.mxu0 0
    %634 = vmatmul.mubr.bf16.gmra.mrb[0].mxu0 %v353
    %v635 = vpop.f32.mrb[0].mxu0
    %v636 = vadd.f32 %v162, %v635
    %v637 = vpop.f32.mrb[0].mxu0
    %v638 = vadd.f32 %v166, %v637
    %v639 = vpop.f32.mrb[0].mxu0
    %v640 = vpop.f32.mrb[0].mxu0
    %641 = vdwg.mxu0
    %642 = vmatprep.subr.bf16.mxu0 %v302
    %643 = vmatpush1.bf16.msra.mxu0 %v301
    %644 = vmatprep.subr.bf16.mxu0 %v318
    %645 = vmatpush1.bf16.msra.mxu0 %v317
    %646 = vmatprep.subr.bf16.mxu0 0
    %647 = vmatpush1.bf16.msra.mxu0 0
    %648 = vmatprep.subr.bf16.mxu0 0
    %649 = vmatpush1.bf16.msra.mxu0 0
    %650 = vmatprep.subr.bf16.mxu0 0
    %651 = vmatpush1.bf16.msra.mxu0 0
    %652 = vmatprep.subr.bf16.mxu0 0
    %653 = vmatpush1.bf16.msra.mxu0 0
    %654 = vmatprep.subr.bf16.mxu0 0
    %655 = vmatpush1.bf16.msra.mxu0 0
    %656 = vmatprep.subr.bf16.mxu0 0
    %657 = vmatpush1.bf16.msra.mxu0 0
    %658 = vmatprep.subr.bf16.mxu0 0
    %659 = vmatpush1.bf16.msra.mxu0 0
    %660 = vmatprep.subr.bf16.mxu0 0
    %661 = vmatpush1.bf16.msra.mxu0 0
    %662 = vmatprep.subr.bf16.mxu0 0
    %663 = vmatpush1.bf16.msra.mxu0 0
    %664 = vmatprep.subr.bf16.mxu0 0
    %665 = vmatpush1.bf16.msra.mxu0 0
    %666 = vmatprep.subr.bf16.mxu0 0
    %667 = vmatpush1.bf16.msra.mxu0 0
    %668 = vmatprep.subr.bf16.mxu0 0
    %669 = vmatpush1.bf16.msra.mxu0 0
    %670 = vmatprep.subr.bf16.mxu0 0
    %671 = vmatpush1.bf16.msra.mxu0 0
    %672 = vmatprep.subr.bf16.mxu0 0
    %673 = vmatpush1.bf16.msra.mxu0 0
    %674 = vmatprep.mubr.bf16.mxu0 0
    %675 = vmatmul.mubr.bf16.gmra.mrb[0].mxu0 %v353
    %v676 = vpop.f32.mrb[0].mxu0
    %v677 = vadd.f32 %v170, %v676
    %v678 = vpop.f32.mrb[0].mxu0
    %v679 = vadd.f32 %v174, %v678
    %v680 = vpop.f32.mrb[0].mxu0
    %v681 = vpop.f32.mrb[0].mxu0
    %682 = vdwg.mxu0
    %v699 = vcombine.low %v390, %v392
    %v700 = vcombine.low %v431, %v433
    %v702 = vunpack.c.l.s4 1983009808
    %v703 = vunpack.c.0.s8 %v702
    %v704 = vlaneseq
    %v705 = vshrl.u32 %v704, 7
    %v706 = vsub.s32 %v703, %v705
    %v707 = vrot.slane %v699, %v706
    %v709 = vunpack.c.l.s4 1983009808
    %v710 = vunpack.c.0.s8 %v709
    %v711 = vlaneseq
    %v712 = vshrl.u32 %v711, 7
    %v713 = vsub.s32 %v710, %v712
    %v714 = vrot.slane %v700, %v713
    %v715 = vcombine.low %v707, %v714
    %v716 = vcombine.low %v472, %v474
    %v717 = vcombine.low %v513, %v515
    %v719 = vunpack.c.l.s4 1983009808
    %v720 = vunpack.c.0.s8 %v719
    %v721 = vlaneseq
    %v722 = vshrl.u32 %v721, 7
    %v723 = vsub.s32 %v720, %v722
    %v724 = vrot.slane %v716, %v723
    %v726 = vunpack.c.l.s4 1983009808
    %v727 = vunpack.c.0.s8 %v726
    %v728 = vlaneseq
    %v729 = vshrl.u32 %v728, 7
    %v730 = vsub.s32 %v727, %v729
    %v731 = vrot.slane %v717, %v730
    %v732 = vcombine.low %v724, %v731
    %v733 = vcombine.low %v554, %v556
    %v734 = vcombine.low %v595, %v597
    %v736 = vunpack.c.l.s4 1983009808
    %v737 = vunpack.c.0.s8 %v736
    %v738 = vlaneseq
    %v739 = vshrl.u32 %v738, 7
    %v740 = vsub.s32 %v737, %v739
    %v741 = vrot.slane %v733, %v740
    %v743 = vunpack.c.l.s4 1983009808
    %v744 = vunpack.c.0.s8 %v743
    %v745 = vlaneseq
    %v746 = vshrl.u32 %v745, 7
    %v747 = vsub.s32 %v744, %v746
    %v748 = vrot.slane %v734, %v747
    %v749 = vcombine.low %v741, %v748
    %v750 = vcombine.low %v636, %v638
    %v751 = vcombine.low %v677, %v679
    %v753 = vunpack.c.l.s4 1983009808
    %v754 = vunpack.c.0.s8 %v753
    %v755 = vlaneseq
    %v756 = vshrl.u32 %v755, 7
    %v757 = vsub.s32 %v754, %v756
    %v758 = vrot.slane %v750, %v757
    %v760 = vunpack.c.l.s4 1983009808
    %v761 = vunpack.c.0.s8 %v760
    %v762 = vlaneseq
    %v763 = vshrl.u32 %v762, 7
    %v764 = vsub.s32 %v761, %v763
    %v765 = vrot.slane %v751, %v764
    %v766 = vcombine.low %v758, %v765
    %771 = vst [vmem:[%s5] sm:$0xff] %v715
    %772 = vst [vmem:[%s5 + $0x8] sm:$0xff] %v732
    %773 = vst [vmem:[%s5 + $0x10] sm:$0xff] %v749
    %774 = vst [vmem:[%s5 + $0x18] sm:$0xff] %v766
    %vm775 = vcmask 1041408
    %v776 = vsel %vm775, %v390, 0.0
    %v777 = vrot.slane %v776, 4
    %v778 = vadd.f32 %v776, %v777
    %v779 = vrot.slane %v778, 2
    %v780 = vadd.f32 %v778, %v779
    %v781 = vrot.slane %v780, 1
    %v782 = vadd.f32 %v780, %v781
    %v783 = vadd.f32 %v782, 0.0
    %v784 = vsel %vm775, %v392, 0.0
    %v785 = vrot.slane %v784, 4
    %v786 = vadd.f32 %v784, %v785
    %v787 = vrot.slane %v786, 2
    %v788 = vadd.f32 %v786, %v787
    %v789 = vrot.slane %v788, 1
    %v790 = vadd.f32 %v788, %v789
    %v791 = vadd.f32 %v783, %v790
    %v792 = vsel %vm775, %v431, 0.0
    %v793 = vrot.slane %v792, 4
    %v794 = vadd.f32 %v792, %v793
    %v795 = vrot.slane %v794, 2
    %v796 = vadd.f32 %v794, %v795
    %v797 = vrot.slane %v796, 1
    %v798 = vadd.f32 %v796, %v797
    %v799 = vadd.f32 %v791, %v798
    %v800 = vsel %vm775, %v433, 0.0
    %v801 = vrot.slane %v800, 4
    %v802 = vadd.f32 %v800, %v801
    %v803 = vrot.slane %v802, 2
    %v804 = vadd.f32 %v802, %v803
    %v805 = vrot.slane %v804, 1
    %v806 = vadd.f32 %v804, %v805
    %v807 = vadd.f32 %v799, %v806
    %v808 = vsel %vm775, %v472, 0.0
    %v809 = vrot.slane %v808, 4
    %v810 = vadd.f32 %v808, %v809
    %v811 = vrot.slane %v810, 2
    %v812 = vadd.f32 %v810, %v811
    %v813 = vrot.slane %v812, 1
    %v814 = vadd.f32 %v812, %v813
    %v815 = vadd.f32 %v807, %v814
    %v816 = vsel %vm775, %v474, 0.0
    %v817 = vrot.slane %v816, 4
    %v818 = vadd.f32 %v816, %v817
    %v819 = vrot.slane %v818, 2
    %v820 = vadd.f32 %v818, %v819
    %v821 = vrot.slane %v820, 1
    %v822 = vadd.f32 %v820, %v821
    %v823 = vadd.f32 %v815, %v822
    %v824 = vsel %vm775, %v513, 0.0
    %v825 = vrot.slane %v824, 4
    %v826 = vadd.f32 %v824, %v825
    %v827 = vrot.slane %v826, 2
    %v828 = vadd.f32 %v826, %v827
    %v829 = vrot.slane %v828, 1
    %v830 = vadd.f32 %v828, %v829
    %v831 = vadd.f32 %v823, %v830
    %v832 = vsel %vm775, %v515, 0.0
    %v833 = vrot.slane %v832, 4
    %v834 = vadd.f32 %v832, %v833
    %v835 = vrot.slane %v834, 2
    %v836 = vadd.f32 %v834, %v835
    %v837 = vrot.slane %v836, 1
    %v838 = vadd.f32 %v836, %v837
    %v839 = vadd.f32 %v831, %v838
    %v840 = vsel %vm775, %v554, 0.0
    %v841 = vrot.slane %v840, 4
    %v842 = vadd.f32 %v840, %v841
    %v843 = vrot.slane %v842, 2
    %v844 = vadd.f32 %v842, %v843
    %v845 = vrot.slane %v844, 1
    %v846 = vadd.f32 %v844, %v845
    %v847 = vadd.f32 %v839, %v846
    %v848 = vsel %vm775, %v556, 0.0
    %v849 = vrot.slane %v848, 4
    %v850 = vadd.f32 %v848, %v849
    %v851 = vrot.slane %v850, 2
    %v852 = vadd.f32 %v850, %v851
    %v853 = vrot.slane %v852, 1
    %v854 = vadd.f32 %v852, %v853
    %v855 = vadd.f32 %v847, %v854
    %v856 = vsel %vm775, %v595, 0.0
    %v857 = vrot.slane %v856, 4
    %v858 = vadd.f32 %v856, %v857
    %v859 = vrot.slane %v858, 2
    %v860 = vadd.f32 %v858, %v859
    %v861 = vrot.slane %v860, 1
    %v862 = vadd.f32 %v860, %v861
    %v863 = vadd.f32 %v855, %v862
    %v864 = vsel %vm775, %v597, 0.0
    %v865 = vrot.slane %v864, 4
    %v866 = vadd.f32 %v864, %v865
    %v867 = vrot.slane %v866, 2
    %v868 = vadd.f32 %v866, %v867
    %v869 = vrot.slane %v868, 1
    %v870 = vadd.f32 %v868, %v869
    %v871 = vadd.f32 %v863, %v870
    %v872 = vsel %vm775, %v636, 0.0
    %v873 = vrot.slane %v872, 4
    %v874 = vadd.f32 %v872, %v873
    %v875 = vrot.slane %v874, 2
    %v876 = vadd.f32 %v874, %v875
    %v877 = vrot.slane %v876, 1
    %v878 = vadd.f32 %v876, %v877
    %v879 = vadd.f32 %v871, %v878
    %v880 = vsel %vm775, %v638, 0.0
    %v881 = vrot.slane %v880, 4
    %v882 = vadd.f32 %v880, %v881
    %v883 = vrot.slane %v882, 2
    %v884 = vadd.f32 %v882, %v883
    %v885 = vrot.slane %v884, 1
    %v886 = vadd.f32 %v884, %v885
    %v887 = vadd.f32 %v879, %v886
    %v888 = vsel %vm775, %v677, 0.0
    %v889 = vrot.slane %v888, 4
    %v890 = vadd.f32 %v888, %v889
    %v891 = vrot.slane %v890, 2
    %v892 = vadd.f32 %v890, %v891
    %v893 = vrot.slane %v892, 1
    %v894 = vadd.f32 %v892, %v893
    %v895 = vadd.f32 %v887, %v894
    %v896 = vsel %vm775, %v679, 0.0
    %v897 = vrot.slane %v896, 4
    %v898 = vadd.f32 %v896, %v897
    %v899 = vrot.slane %v898, 2
    %v900 = vadd.f32 %v898, %v899
    %v901 = vrot.slane %v900, 1
    %v902 = vadd.f32 %v900, %v901
    %v903 = vadd.f32 %v895, %v902
    %v904 = vrcp.pop 32.0
    %v905 = vmul.f32 %v903, %v904
    %v906 = vsub.f32 %v390, %v905
    %v907 = vmul.f32 %v906, %v906
    %v908 = vsel %vm775, %v907, 0.0
    %v909 = vrot.slane %v908, 4
    %v910 = vadd.f32 %v908, %v909
    %v911 = vrot.slane %v910, 2
    %v912 = vadd.f32 %v910, %v911
    %v913 = vrot.slane %v912, 1
    %v914 = vadd.f32 %v912, %v913
    %v915 = vadd.f32 %v914, 0.0
    %v916 = vsub.f32 %v392, %v905
    %v917 = vmul.f32 %v916, %v916
    %v918 = vsel %vm775, %v917, 0.0
    %v919 = vrot.slane %v918, 4
    %v920 = vadd.f32 %v918, %v919
    %v921 = vrot.slane %v920, 2
    %v922 = vadd.f32 %v920, %v921
    %v923 = vrot.slane %v922, 1
    %v924 = vadd.f32 %v922, %v923
    %v925 = vadd.f32 %v915, %v924
    %v926 = vsub.f32 %v431, %v905
    %v927 = vmul.f32 %v926, %v926
    %v928 = vsel %vm775, %v927, 0.0
    %v929 = vrot.slane %v928, 4
    %v930 = vadd.f32 %v928, %v929
    %v931 = vrot.slane %v930, 2
    %v932 = vadd.f32 %v930, %v931
    %v933 = vrot.slane %v932, 1
    %v934 = vadd.f32 %v932, %v933
    %v935 = vadd.f32 %v925, %v934
    %v936 = vsub.f32 %v433, %v905
    %v937 = vmul.f32 %v936, %v936
    %v938 = vsel %vm775, %v937, 0.0
    %v939 = vrot.slane %v938, 4
    %v940 = vadd.f32 %v938, %v939
    %v941 = vrot.slane %v940, 2
    %v942 = vadd.f32 %v940, %v941
    %v943 = vrot.slane %v942, 1
    %v944 = vadd.f32 %v942, %v943
    %v945 = vadd.f32 %v935, %v944
    %v946 = vsub.f32 %v472, %v905
    %v947 = vmul.f32 %v946, %v946
    %v948 = vsel %vm775, %v947, 0.0
    %v949 = vrot.slane %v948, 4
    %v950 = vadd.f32 %v948, %v949
    %v951 = vrot.slane %v950, 2
    %v952 = vadd.f32 %v950, %v951
    %v953 = vrot.slane %v952, 1
    %v954 = vadd.f32 %v952, %v953
    %v955 = vadd.f32 %v945, %v954
    %v956 = vsub.f32 %v474, %v905
    %v957 = vmul.f32 %v956, %v956
    %v958 = vsel %vm775, %v957, 0.0
    %v959 = vrot.slane %v958, 4
    %v960 = vadd.f32 %v958, %v959
    %v961 = vrot.slane %v960, 2
    %v962 = vadd.f32 %v960, %v961
    %v963 = vrot.slane %v962, 1
    %v964 = vadd.f32 %v962, %v963
    %v965 = vadd.f32 %v955, %v964
    %v966 = vsub.f32 %v513, %v905
    %v967 = vmul.f32 %v966, %v966
    %v968 = vsel %vm775, %v967, 0.0
    %v969 = vrot.slane %v968, 4
    %v970 = vadd.f32 %v968, %v969
    %v971 = vrot.slane %v970, 2
    %v972 = vadd.f32 %v970, %v971
    %v973 = vrot.slane %v972, 1
    %v974 = vadd.f32 %v972, %v973
    %v975 = vadd.f32 %v965, %v974
    %v976 = vsub.f32 %v515, %v905
    %v977 = vmul.f32 %v976, %v976
    %v978 = vsel %vm775, %v977, 0.0
    %v979 = vrot.slane %v978, 4
    %v980 = vadd.f32 %v978, %v979
    %v981 = vrot.slane %v980, 2
    %v982 = vadd.f32 %v980, %v981
    %v983 = vrot.slane %v982, 1
    %v984 = vadd.f32 %v982, %v983
    %v985 = vadd.f32 %v975, %v984
    %v986 = vsub.f32 %v554, %v905
    %v987 = vmul.f32 %v986, %v986
    %v988 = vsel %vm775, %v987, 0.0
    %v989 = vrot.slane %v988, 4
    %v990 = vadd.f32 %v988, %v989
    %v991 = vrot.slane %v990, 2
    %v992 = vadd.f32 %v990, %v991
    %v993 = vrot.slane %v992, 1
    %v994 = vadd.f32 %v992, %v993
    %v995 = vadd.f32 %v985, %v994
    %v996 = vsub.f32 %v556, %v905
    %v997 = vmul.f32 %v996, %v996
    %v998 = vsel %vm775, %v997, 0.0
    %v999 = vrot.slane %v998, 4
    %v1000 = vadd.f32 %v998, %v999
    %v1001 = vrot.slane %v1000, 2
    %v1002 = vadd.f32 %v1000, %v1001
    %v1003 = vrot.slane %v1002, 1
    %v1004 = vadd.f32 %v1002, %v1003
    %v1005 = vadd.f32 %v995, %v1004
    %v1006 = vsub.f32 %v595, %v905
    %v1007 = vmul.f32 %v1006, %v1006
    %v1008 = vsel %vm775, %v1007, 0.0
    %v1009 = vrot.slane %v1008, 4
    %v1010 = vadd.f32 %v1008, %v1009
    %v1011 = vrot.slane %v1010, 2
    %v1012 = vadd.f32 %v1010, %v1011
    %v1013 = vrot.slane %v1012, 1
    %v1014 = vadd.f32 %v1012, %v1013
    %v1015 = vadd.f32 %v1005, %v1014
    %v1016 = vsub.f32 %v597, %v905
    %v1017 = vmul.f32 %v1016, %v1016
    %v1018 = vsel %vm775, %v1017, 0.0
    %v1019 = vrot.slane %v1018, 4
    %v1020 = vadd.f32 %v1018, %v1019
    %v1021 = vrot.slane %v1020, 2
    %v1022 = vadd.f32 %v1020, %v1021
    %v1023 = vrot.slane %v1022, 1
    %v1024 = vadd.f32 %v1022, %v1023
    %v1025 = vadd.f32 %v1015, %v1024
    %v1026 = vsub.f32 %v636, %v905
    %v1027 = vmul.f32 %v1026, %v1026
    %v1028 = vsel %vm775, %v1027, 0.0
    %v1029 = vrot.slane %v1028, 4
    %v1030 = vadd.f32 %v1028, %v1029
    %v1031 = vrot.slane %v1030, 2
    %v1032 = vadd.f32 %v1030, %v1031
    %v1033 = vrot.slane %v1032, 1
    %v1034 = vadd.f32 %v1032, %v1033
    %v1035 = vadd.f32 %v1025, %v1034
    %v1036 = vsub.f32 %v638, %v905
    %v1037 = vmul.f32 %v1036, %v1036
    %v1038 = vsel %vm775, %v1037, 0.0
    %v1039 = vrot.slane %v1038, 4
    %v1040 = vadd.f32 %v1038, %v1039
    %v1041 = vrot.slane %v1040, 2
    %v1042 = vadd.f32 %v1040, %v1041
    %v1043 = vrot.slane %v1042, 1
    %v1044 = vadd.f32 %v1042, %v1043
    %v1045 = vadd.f32 %v1035, %v1044
    %v1046 = vsub.f32 %v677, %v905
    %v1047 = vmul.f32 %v1046, %v1046
    %v1048 = vsel %vm775, %v1047, 0.0
    %v1049 = vrot.slane %v1048, 4
    %v1050 = vadd.f32 %v1048, %v1049
    %v1051 = vrot.slane %v1050, 2
    %v1052 = vadd.f32 %v1050, %v1051
    %v1053 = vrot.slane %v1052, 1
    %v1054 = vadd.f32 %v1052, %v1053
    %v1055 = vadd.f32 %v1045, %v1054
    %v1056 = vsub.f32 %v679, %v905
    %v1057 = vmul.f32 %v1056, %v1056
    %v1058 = vsel %vm775, %v1057, 0.0
    %v1059 = vrot.slane %v1058, 4
    %v1060 = vadd.f32 %v1058, %v1059
    %v1061 = vrot.slane %v1060, 2
    %v1062 = vadd.f32 %v1060, %v1061
    %v1063 = vrot.slane %v1062, 1
    %v1064 = vadd.f32 %v1062, %v1063
    %v1065 = vadd.f32 %v1055, %v1064
    %v1066 = vmul.f32 %v1065, %v904
    %v1067 = vld [vmem:[#allocation6] sm:$0x1]
    %v1068 = vadd.f32 %v1066, 1e-05
    %v1069 = vrsqrt.pop %v1068
    %v1070 = vmul.f32 %v1067, %v1069
    %1071 = vst [vmem:[%s6] sm:$0x1] %v1070
    %v1072 = vld [vmem:[#allocation7] sm:$0x1]
    %v1073 = vmul.f32 %v905, %v1070
    %v1074 = vsub.f32 %v1072, %v1073
    %1075 = vst [vmem:[%s7] sm:$0x1] %v1074
    // Predicated region
    $region38: #{generator_forward.4} parent=1 // pred_check
      _
    $region39: #{generator_forward.4} parent=1 // pred_check_branch
      %1077 = sbr.rel (0) target = $region41
    $region40: #{generator_forward.4} parent=1 // pred_region
      _
    $region41: #{generator_forward.4} parent=1 // pred_fallthru
      _
    // Predicated region
    $region42: #{generator_forward.4} parent=1 // pred_check
      _
    $region43: #{generator_forward.4} parent=1 // pred_check_branch
      %1079 = sbr.rel (0) target = $region45
    $region44: #{generator_forward.4} parent=1 // pred_region
      _
    $region45: #{generator_forward.4} parent=1 // pred_fallthru
      _
    // Predicated region
    $region46: #{generator_forward.4} parent=1 // pred_check
      _
    $region47: #{generator_forward.4} parent=1 // pred_check_branch
      %1081 = sbr.rel (0) target = $region49
    $region48: #{generator_forward.4} parent=1 // pred_region
      _
    $region49: #{generator_forward.4} parent=1 // pred_fallthru
      _
    // Predicated region
    $region50: #{generator_forward.4} parent=1 // pred_check
      _
    $region51: #{generator_forward.4} parent=1 // pred_check_branch
      %1083 = sbr.rel (0) target = $region53
    $region52: #{generator_forward.4} parent=1 // pred_region
      _
    $region53: #{generator_forward.4} parent=1 // pred_fallthru
      _
    // Predicated region
    $region54: #{generator_forward.4} parent=1 // pred_check
      _
    $region55: #{generator_forward.4} parent=1 // pred_check_branch
      %1085 = sbr.rel (0) target = $region57
    $region56: #{generator_forward.4} parent=1 // pred_region
      _
    $region57: #{generator_forward.4} parent=1 // pred_fallthru
      _
    // Predicated region
    $region58: #{generator_forward.4} parent=1 // pred_check
      _
    $region59: #{generator_forward.4} parent=1 // pred_check_branch
      %1087 = sbr.rel (0) target = $region61
    $region60: #{generator_forward.4} parent=1 // pred_region
      _
    $region61: #{generator_forward.4} parent=1 // pred_fallthru
      _
    %1088 = vsyncpa [#allocation3], 1
    %1089 = vsyncpa [#allocation5], 1
    %1090 = vsyncpa [#allocation8], 1

// kernel: generator_forward.5
$region0: #{generator_forward.5}
  #allocation0 [shape = 'u32[]', space=smem, size = 0x4, offset = 0x4, fixed_abs, tag = 'smem constant byte address 0x4 - core index']
  #allocation1 [shape = 'u32[144,128]{1,0:T(1,128)}', space=vmem, size = 0x12000, scoped, tag = 'internal scratch']
  #allocation2 [shape = 'f32[2,10,10,128]{3,2,1,0:T(8,128)}', space=vmem, size = 0x28000, scoped, tag = 'scratch operand']
  %s0 = inlined_call_operand.vmem [shape: f32[2,8,8,128], index: 0, kind: input, shape index: {}]
  %s1 = inlined_call_operand.vmem [shape: f32[1,128], index: 1, kind: input, shape index: {}]
  %s2 = inlined_call_operand.vmem [shape: f32[1,128], index: 2, kind: input, shape index: {}]
  %s3 = inlined_call_operand.vmem [shape: bf16[1152,128], index: 3, kind: input, shape index: {}]
  %s4 = inlined_call_operand.vmem [shape: f32[1,128], index: 4, kind: input, shape index: {}]
  %s5 = inlined_call_operand.vmem [shape: f32[1,128], index: 5, kind: input, shape index: {}]
  %s6 = inlined_call_operand.vmem [shape: f32[1,128], index: 6, kind: input, shape index: {}]
  %s7 = inlined_call_operand.vmem [shape: f32[128,128], index: 7, kind: output, shape index: {0}]
  %s8 = inlined_call_operand.vmem [shape: f32[1,128], index: 8, kind: output, shape index: {1}]
  %s9 = inlined_call_operand.vmem [shape: f32[1,128], index: 9, kind: output, shape index: {2}]
  %10 = xla_tuple %s7, %s8, %s9
  %s11 = sld [smem:[#allocation0]]
  $region54: #{generator_forward.5} parent=0
    _
  %s13 = ssub.s32 1, %s11
  %s14 = scalar_select 0, %s13, %s11
  // Predicated region
  $region2: #{generator_forward.5} parent=0 // pred_check
    _
  $region3: #{generator_forward.5} parent=0 // pred_check_branch
    %16 = sbr.rel (0) target = $region5
  $region4: #{generator_forward.5} parent=0 // pred_region
    _
  $region5: #{generator_forward.5} parent=0 // pred_fallthru
    _
  // Predicated region
  $region6: #{generator_forward.5} parent=0 // pred_check
    _
  $region7: #{generator_forward.5} parent=0 // pred_check_branch
    %18 = sbr.rel (0) target = $region9
  $region8: #{generator_forward.5} parent=0 // pred_region
    _
  $region9: #{generator_forward.5} parent=0 // pred_fallthru
    _
  // Predicated region
  $region10: #{generator_forward.5} parent=0 // pred_check
    _
  $region11: #{generator_forward.5} parent=0 // pred_check_branch
    %20 = sbr.rel (0) target = $region13
  $region12: #{generator_forward.5} parent=0 // pred_region
    _
  $region13: #{generator_forward.5} parent=0 // pred_fallthru
    _
  // Predicated region
  $region14: #{generator_forward.5} parent=0 // pred_check
    _
  $region15: #{generator_forward.5} parent=0 // pred_check_branch
    %22 = sbr.rel (0) target = $region17
  $region16: #{generator_forward.5} parent=0 // pred_region
    _
  $region17: #{generator_forward.5} parent=0 // pred_fallthru
    _
  // Predicated region
  $region18: #{generator_forward.5} parent=0 // pred_check
    _
  $region19: #{generator_forward.5} parent=0 // pred_check_branch
    %24 = sbr.rel (0) target = $region21
  $region20: #{generator_forward.5} parent=0 // pred_region
    _
  $region21: #{generator_forward.5} parent=0 // pred_fallthru
    _
  // Predicated region
  $region22: #{generator_forward.5} parent=0 // pred_check
    _
  $region23: #{generator_forward.5} parent=0 // pred_check_branch
    %26 = sbr.rel (0) target = $region25
  $region24: #{generator_forward.5} parent=0 // pred_region
    _
  $region25: #{generator_forward.5} parent=0 // pred_fallthru
    _
  // Predicated region
  $region26: #{generator_forward.5} parent=0 // pred_check
    _
  $region27: #{generator_forward.5} parent=0 // pred_check_branch
    %28 = sbr.rel (0) target = $region29
  $region28: #{generator_forward.5} parent=0 // pred_region
    _
  $region29: #{generator_forward.5} parent=0 // pred_fallthru
    _
  %v30 = vld [vmem:[%s0] sm:$0xff]
  %v31 = vld [vmem:[%s0 + $0x8] sm:$0xff]
  %v32 = vld [vmem:[%s0 + $0x10] sm:$0xff]
  %v33 = vld [vmem:[%s0 + $0x18] sm:$0xff]
  %v34 = vld [vmem:[%s0 + $0x20] sm:$0xff]
  %v35 = vld [vmem:[%s0 + $0x28] sm:$0xff]
  %v36 = vld [vmem:[%s0 + $0x30] sm:$0xff]
  %v37 = vld [vmem:[%s0 + $0x38] sm:$0xff]
  %v38 = vld [vmem:[%s0 + $0x40] sm:$0xff]
  %v39 = vld [vmem:[%s0 + $0x48] sm:$0xff]
  %v40 = vld [vmem:[%s0 + $0x50] sm:$0xff]
  %v41 = vld [vmem:[%s0 + $0x58] sm:$0xff]
  %v42 = vld [vmem:[%s0 + $0x60] sm:$0xff]
  %v43 = vld [vmem:[%s0 + $0x68] sm:$0xff]
  %v44 = vld [vmem:[%s0 + $0x70] sm:$0xff]
  %v45 = vld [vmem:[%s0 + $0x78] sm:$0xff]
  %v46 = vld [vmem:[%s1] sm:$0x1]
  %v48 = vlaneseq
  %v49 = vshrl.u32 %v48, 7
  %v50 = vsub.s32 0, %v49
  %v51 = vrot.slane %v46, %v50
  %v53 = vmul.f32 %v30, %v51
  %v54 = vmul.f32 %v31, %v51
  %v55 = vmul.f32 %v32, %v51
  %v56 = vmul.f32 %v33, %v51
  %v57 = vmul.f32 %v34, %v51
  %v58 = vmul.f32 %v35, %v51
  %v59 = vmul.f32 %v36, %v51
  %v60 = vmul.f32 %v37, %v51
  %v61 = vmul.f32 %v38, %v51
  %v62 = vmul.f32 %v39, %v51
  %v63 = vmul.f32 %v40, %v51
  %v64 = vmul.f32 %v41, %v51
  %v65 = vmul.f32 %v42, %v51
  %v66 = vmul.f32 %v43, %v51
  %v67 = vmul.f32 %v44, %v51
  %v68 = vmul.f32 %v45, %v51
  %v69 = vld [vmem:[%s2] sm:$0x1]
  %v71 = vlaneseq
  %v72 = vshrl.u32 %v71, 7
  %v73 = vsub.s32 0, %v72
  %v74 = vrot.slane %v69, %v73
  %v76 = vadd.f32 %v53, %v74
  %v77 = vadd.f32 %v54, %v74
  %v78 = vadd.f32 %v55, %v74
  %v79 = vadd.f32 %v56, %v74
  %v80 = vadd.f32 %v57, %v74
  %v81 = vadd.f32 %v58, %v74
  %v82 = vadd.f32 %v59, %v74
  %v83 = vadd.f32 %v60, %v74
  %v84 = vadd.f32 %v61, %v74
  %v85 = vadd.f32 %v62, %v74
  %v86 = vadd.f32 %v63, %v74
  %v87 = vadd.f32 %v64, %v74
  %v88 = vadd.f32 %v65, %v74
  %v89 = vadd.f32 %v66, %v74
  %v90 = vadd.f32 %v67, %v74
  %v91 = vadd.f32 %v68, %v74
  %92 = vst [vmem:[#allocation2] sm:$0xff] 0.0
  %93 = vst [vmem:[#allocation2 + $0x8] sm:$0x3] 0.0
  %94 = vst [vmem:[#allocation2 + $0x10] sm:$0xff] 0.0
  %95 = vst [vmem:[#allocation2 + $0x18] sm:$0x3] 0.0
  %96 = vst [vmem:[#allocation2 + $0x20] sm:$0xff] 0.0
  %97 = vst [vmem:[#allocation2 + $0x28] sm:$0x3] 0.0
  %98 = vst [vmem:[#allocation2 + $0x30] sm:$0xff] 0.0
  %99 = vst [vmem:[#allocation2 + $0x38] sm:$0x3] 0.0
  %100 = vst [vmem:[#allocation2 + $0x40] sm:$0xff] 0.0
  %101 = vst [vmem:[#allocation2 + $0x48] sm:$0x3] 0.0
  %102 = vst [vmem:[#allocation2 + $0x50] sm:$0xff] 0.0
  %103 = vst [vmem:[#allocation2 + $0x58] sm:$0x3] 0.0
  %104 = vst [vmem:[#allocation2 + $0x60] sm:$0xff] 0.0
  %105 = vst [vmem:[#allocation2 + $0x68] sm:$0x3] 0.0
  %106 = vst [vmem:[#allocation2 + $0x70] sm:$0xff] 0.0
  %107 = vst [vmem:[#allocation2 + $0x78] sm:$0x3] 0.0
  %108 = vst [vmem:[#allocation2 + $0x80] sm:$0xff] 0.0
  %109 = vst [vmem:[#allocation2 + $0x88] sm:$0x3] 0.0
  %110 = vst [vmem:[#allocation2 + $0x90] sm:$0xff] 0.0
  %111 = vst [vmem:[#allocation2 + $0x98] sm:$0x3] 0.0
  %112 = vst [vmem:[#allocation2 + $0xa0] sm:$0xff] 0.0
  %113 = vst [vmem:[#allocation2 + $0xa8] sm:$0x3] 0.0
  %114 = vst [vmem:[#allocation2 + $0xb0] sm:$0xff] 0.0
  %115 = vst [vmem:[#allocation2 + $0xb8] sm:$0x3] 0.0
  %116 = vst [vmem:[#allocation2 + $0xc0] sm:$0xff] 0.0
  %117 = vst [vmem:[#allocation2 + $0xc8] sm:$0x3] 0.0
  %118 = vst [vmem:[#allocation2 + $0xd0] sm:$0xff] 0.0
  %119 = vst [vmem:[#allocation2 + $0xd8] sm:$0x3] 0.0
  %120 = vst [vmem:[#allocation2 + $0xe0] sm:$0xff] 0.0
  %121 = vst [vmem:[#allocation2 + $0xe8] sm:$0x3] 0.0
  %122 = vst [vmem:[#allocation2 + $0xf0] sm:$0xff] 0.0
  %123 = vst [vmem:[#allocation2 + $0xf8] sm:$0x3] 0.0
  %124 = vst [vmem:[#allocation2 + $0x100] sm:$0xff] 0.0
  %125 = vst [vmem:[#allocation2 + $0x108] sm:$0x3] 0.0
  %126 = vst [vmem:[#allocation2 + $0x110] sm:$0xff] 0.0
  %127 = vst [vmem:[#allocation2 + $0x118] sm:$0x3] 0.0
  %128 = vst [vmem:[#allocation2 + $0x120] sm:$0xff] 0.0
  %129 = vst [vmem:[#allocation2 + $0x128] sm:$0x3] 0.0
  %130 = vst [vmem:[#allocation2 + $0x130] sm:$0xff] 0.0
  %131 = vst [vmem:[#allocation2 + $0x138] sm:$0x3] 0.0
  %s132 = scalar_lea.vmem [#allocation2], 16
  %133 = vst [vmem:[%s132 + $0x1] sm:$0xff] %v76
  %134 = vst [vmem:[%s132 + $0x11] sm:$0xff] %v77
  %135 = vst [vmem:[%s132 + $0x21] sm:$0xff] %v78
  %136 = vst [vmem:[%s132 + $0x31] sm:$0xff] %v79
  %137 = vst [vmem:[%s132 + $0x41] sm:$0xff] %v80
  %138 = vst [vmem:[%s132 + $0x51] sm:$0xff] %v81
  %139 = vst [vmem:[%s132 + $0x61] sm:$0xff] %v82
  %140 = vst [vmem:[%s132 + $0x71] sm:$0xff] %v83
  %141 = vst [vmem:[%s132 + $0xa1] sm:$0xff] %v84
  %142 = vst [vmem:[%s132 + $0xb1] sm:$0xff] %v85
  %143 = vst [vmem:[%s132 + $0xc1] sm:$0xff] %v86
  %144 = vst [vmem:[%s132 + $0xd1] sm:$0xff] %v87
  %145 = vst [vmem:[%s132 + $0xe1] sm:$0xff] %v88
  %146 = vst [vmem:[%s132 + $0xf1] sm:$0xff] %v89
  %147 = vst [vmem:[%s132 + $0x101] sm:$0xff] %v90
  %148 = vst [vmem:[%s132 + $0x111] sm:$0xff] %v91
  %v149 = vld [vmem:[#allocation2] sm:$0xff]
  %v150 = vld [vmem:[#allocation2 + $0x10] sm:$0xff]
  %v151 = vld [vmem:[#allocation2 + $0x20] sm:$0xff]
  %v152 = vld [vmem:[#allocation2 + $0x30] sm:$0xff]
  %v153 = vld [vmem:[#allocation2 + $0x40] sm:$0xff]
  %v154 = vld [vmem:[#allocation2 + $0x50] sm:$0xff]
  %v155 = vld [vmem:[#allocation2 + $0x60] sm:$0xff]
  %v156 = vld [vmem:[#allocation2 + $0x70] sm:$0xff]
  %v157 = vld [vmem:[#allocation2 + $0xa0] sm:$0xff]
  %v158 = vld [vmem:[#allocation2 + $0xb0] sm:$0xff]
  %v159 = vld [vmem:[#allocation2 + $0xc0] sm:$0xff]
  %v160 = vld [vmem:[#allocation2 + $0xd0] sm:$0xff]
  %v161 = vld [vmem:[#allocation2 + $0xe0] sm:$0xff]
  %v162 = vld [vmem:[#allocation2 + $0xf0] sm:$0xff]
  %v163 = vld [vmem:[#allocation2 + $0x100] sm:$0xff]
  %v164 = vld [vmem:[#allocation2 + $0x110] sm:$0xff]
  %v165 = vpack.c.bf16 %v150, %v149
  %v166 = vpack.c.bf16 %v152, %v151
  %v167 = vpack.c.bf16 %v154, %v153
  %v168 = vpack.c.bf16 %v156, %v155
  %v169 = vpack.c.bf16 %v158, %v157
  %v170 = vpack.c.bf16 %v160, %v159
  %v171 = vpack.c.bf16 %v162, %v161
  %v172 = vpack.c.bf16 %v164, %v163
  %v173 = vld [vmem:[#allocation2 + $0x1] sm:$0xff]
  %v174 = vld [vmem:[#allocation2 + $0x11] sm:$0xff]
  %v175 = vld [vmem:[#allocation2 + $0x21] sm:$0xff]
  %v176 = vld [vmem:[#allocation2 + $0x31] sm:$0xff]
  %v177 = vld [vmem:[#allocation2 + $0x41] sm:$0xff]
  %v178 = vld [vmem:[#allocation2 + $0x51] sm:$0xff]
  %v179 = vld [vmem:[#allocation2 + $0x61] sm:$0xff]
  %v180 = vld [vmem:[#allocation2 + $0x71] sm:$0xff]
  %v181 = vld [vmem:[#allocation2 + $0xa1] sm:$0xff]
  %v182 = vld [vmem:[#allocation2 + $0xb1] sm:$0xff]
  %v183 = vld [vmem:[#allocation2 + $0xc1] sm:$0xff]
  %v184 = vld [vmem:[#allocation2 + $0xd1] sm:$0xff]
  %v185 = vld [vmem:[#allocation2 + $0xe1] sm:$0xff]
  %v186 = vld [vmem:[#allocation2 + $0xf1] sm:$0xff]
  %v187 = vld [vmem:[#allocation2 + $0x101] sm:$0xff]
  %v188 = vld [vmem:[#allocation2 + $0x111] sm:$0xff]
  %v189 = vpack.c.bf16 %v174, %v173
  %v190 = vpack.c.bf16 %v176, %v175
  %v191 = vpack.c.bf16 %v178, %v177
  %v192 = vpack.c.bf16 %v180, %v179
  %v193 = vpack.c.bf16 %v182, %v181
  %v194 = vpack.c.bf16 %v184, %v183
  %v195 = vpack.c.bf16 %v186, %v185
  %v196 = vpack.c.bf16 %v188, %v187
  %v197 = vld [vmem:[#allocation2 + $0x2] sm:$0xff]
  %v198 = vld [vmem:[#allocation2 + $0x12] sm:$0xff]
  %v199 = vld [vmem:[#allocation2 + $0x22] sm:$0xff]
  %v200 = vld [vmem:[#allocation2 + $0x32] sm:$0xff]
  %v201 = vld [vmem:[#allocation2 + $0x42] sm:$0xff]
  %v202 = vld [vmem:[#allocation2 + $0x52] sm:$0xff]
  %v203 = vld [vmem:[#allocation2 + $0x62] sm:$0xff]
  %v204 = vld [vmem:[#allocation2 + $0x72] sm:$0xff]
  %v205 = vld [vmem:[#allocation2 + $0xa2] sm:$0xff]
  %v206 = vld [vmem:[#allocation2 + $0xb2] sm:$0xff]
  %v207 = vld [vmem:[#allocation2 + $0xc2] sm:$0xff]
  %v208 = vld [vmem:[#allocation2 + $0xd2] sm:$0xff]
  %v209 = vld [vmem:[#allocation2 + $0xe2] sm:$0xff]
  %v210 = vld [vmem:[#allocation2 + $0xf2] sm:$0xff]
  %v211 = vld [vmem:[#allocation2 + $0x102] sm:$0xff]
  %v212 = vld [vmem:[#allocation2 + $0x112] sm:$0xff]
  %v213 = vpack.c.bf16 %v198, %v197
  %v214 = vpack.c.bf16 %v200, %v199
  %v215 = vpack.c.bf16 %v202, %v201
  %v216 = vpack.c.bf16 %v204, %v203
  %v217 = vpack.c.bf16 %v206, %v205
  %v218 = vpack.c.bf16 %v208, %v207
  %v219 = vpack.c.bf16 %v210, %v209
  %v220 = vpack.c.bf16 %v212, %v211
  %v221 = vld [vmem:[%s132] sm:$0xff]
  %v222 = vld [vmem:[%s132 + $0x10] sm:$0xff]
  %v223 = vld [vmem:[%s132 + $0x20] sm:$0xff]
  %v224 = vld [vmem:[%s132 + $0x30] sm:$0xff]
  %v225 = vld [vmem:[%s132 + $0x40] sm:$0xff]
  %v226 = vld [vmem:[%s132 + $0x50] sm:$0xff]
  %v227 = vld [vmem:[%s132 + $0x60] sm:$0xff]
  %v228 = vld [vmem:[%s132 + $0x70] sm:$0xff]
  %v229 = vld [vmem:[%s132 + $0xa0] sm:$0xff]
  %v230 = vld [vmem:[%s132 + $0xb0] sm:$0xff]
  %v231 = vld [vmem:[%s132 + $0xc0] sm:$0xff]
  %v232 = vld [vmem:[%s132 + $0xd0] sm:$0xff]
  %v233 = vld [vmem:[%s132 + $0xe0] sm:$0xff]
  %v234 = vld [vmem:[%s132 + $0xf0] sm:$0xff]
  %v235 = vld [vmem:[%s132 + $0x100] sm:$0xff]
  %v236 = vld [vmem:[%s132 + $0x110] sm:$0xff]
  %v237 = vpack.c.bf16 %v222, %v221
  %v238 = vpack.c.bf16 %v224, %v223
  %v239 = vpack.c.bf16 %v226, %v225
  %v240 = vpack.c.bf16 %v228, %v227
  %v241 = vpack.c.bf16 %v230, %v229
  %v242 = vpack.c.bf16 %v232, %v231
  %v243 = vpack.c.bf16 %v234, %v233
  %v244 = vpack.c.bf16 %v236, %v235
  %v245 = vld [vmem:[%s132 + $0x1] sm:$0xff]
  %v246 = vld [vmem:[%s132 + $0x11] sm:$0xff]
  %v247 = vld [vmem:[%s132 + $0x21] sm:$0xff]
  %v248 = vld [vmem:[%s132 + $0x31] sm:$0xff]
  %v249 = vld [vmem:[%s132 + $0x41] sm:$0xff]
  %v250 = vld [vmem:[%s132 + $0x51] sm:$0xff]
  %v251 = vld [vmem:[%s132 + $0x61] sm:$0xff]
  %v252 = vld [vmem:[%s132 + $0x71] sm:$0xff]
  %v253 = vld [vmem:[%s132 + $0xa1] sm:$0xff]
  %v254 = vld [vmem:[%s132 + $0xb1] sm:$0xff]
  %v255 = vld [vmem:[%s132 + $0xc1] sm:$0xff]
  %v256 = vld [vmem:[%s132 + $0xd1] sm:$0xff]
  %v257 = vld [vmem:[%s132 + $0xe1] sm:$0xff]
  %v258 = vld [vmem:[%s132 + $0xf1] sm:$0xff]
  %v259 = vld [vmem:[%s132 + $0x101] sm:$0xff]
  %v260 = vld [vmem:[%s132 + $0x111] sm:$0xff]
  %v261 = vpack.c.bf16 %v246, %v245
  %v262 = vpack.c.bf16 %v248, %v247
  %v263 = vpack.c.bf16 %v250, %v249
  %v264 = vpack.c.bf16 %v252, %v251
  %v265 = vpack.c.bf16 %v254, %v253
  %v266 = vpack.c.bf16 %v256, %v255
  %v267 = vpack.c.bf16 %v258, %v257
  %v268 = vpack.c.bf16 %v260, %v259
  %v269 = vld [vmem:[%s132 + $0x2] sm:$0xff]
  %v270 = vld [vmem:[%s132 + $0x12] sm:$0xff]
  %v271 = vld [vmem:[%s132 + $0x22] sm:$0xff]
  %v272 = vld [vmem:[%s132 + $0x32] sm:$0xff]
  %v273 = vld [vmem:[%s132 + $0x42] sm:$0xff]
  %v274 = vld [vmem:[%s132 + $0x52] sm:$0xff]
  %v275 = vld [vmem:[%s132 + $0x62] sm:$0xff]
  %v276 = vld [vmem:[%s132 + $0x72] sm:$0xff]
  %v277 = vld [vmem:[%s132 + $0xa2] sm:$0xff]
  %v278 = vld [vmem:[%s132 + $0xb2] sm:$0xff]
  %v279 = vld [vmem:[%s132 + $0xc2] sm:$0xff]
  %v280 = vld [vmem:[%s132 + $0xd2] sm:$0xff]
  %v281 = vld [vmem:[%s132 + $0xe2] sm:$0xff]
  %v282 = vld [vmem:[%s132 + $0xf2] sm:$0xff]
  %v283 = vld [vmem:[%s132 + $0x102] sm:$0xff]
  %v284 = vld [vmem:[%s132 + $0x112] sm:$0xff]
  %v285 = vpack.c.bf16 %v270, %v269
  %v286 = vpack.c.bf16 %v272, %v271
  %v287 = vpack.c.bf16 %v274, %v273
  %v288 = vpack.c.bf16 %v276, %v275
  %v289 = vpack.c.bf16 %v278, %v277
  %v290 = vpack.c.bf16 %v280, %v279
  %v291 = vpack.c.bf16 %v282, %v281
  %v292 = vpack.c.bf16 %v284, %v283
  %s293 = scalar_lea.vmem [#allocation2], 32
  %v294 = vld [vmem:[%s293] sm:$0xff]
  %v295 = vld [vmem:[%s293 + $0x10] sm:$0xff]
  %v296 = vld [vmem:[%s293 + $0x20] sm:$0xff]
  %v297 = vld [vmem:[%s293 + $0x30] sm:$0xff]
  %v298 = vld [vmem:[%s293 + $0x40] sm:$0xff]
  %v299 = vld [vmem:[%s293 + $0x50] sm:$0xff]
  %v300 = vld [vmem:[%s293 + $0x60] sm:$0xff]
  %v301 = vld [vmem:[%s293 + $0x70] sm:$0xff]
  %v302 = vld [vmem:[%s293 + $0xa0] sm:$0xff]
  %v303 = vld [vmem:[%s293 + $0xb0] sm:$0xff]
  %v304 = vld [vmem:[%s293 + $0xc0] sm:$0xff]
  %v305 = vld [vmem:[%s293 + $0xd0] sm:$0xff]
  %v306 = vld [vmem:[%s293 + $0xe0] sm:$0xff]
  %v307 = vld [vmem:[%s293 + $0xf0] sm:$0xff]
  %v308 = vld [vmem:[%s293 + $0x100] sm:$0xff]
  %v309 = vld [vmem:[%s293 + $0x110] sm:$0xff]
  %v310 = vpack.c.bf16 %v295, %v294
  %v311 = vpack.c.bf16 %v297, %v296
  %v312 = vpack.c.bf16 %v299, %v298
  %v313 = vpack.c.bf16 %v301, %v300
  %v314 = vpack.c.bf16 %v303, %v302
  %v315 = vpack.c.bf16 %v305, %v304
  %v316 = vpack.c.bf16 %v307, %v306
  %v317 = vpack.c.bf16 %v309, %v308
  %v318 = vld [vmem:[%s293 + $0x1] sm:$0xff]
  %v319 = vld [vmem:[%s293 + $0x11] sm:$0xff]
  %v320 = vld [vmem:[%s293 + $0x21] sm:$0xff]
  %v321 = vld [vmem:[%s293 + $0x31] sm:$0xff]
  %v322 = vld [vmem:[%s293 + $0x41] sm:$0xff]
  %v323 = vld [vmem:[%s293 + $0x51] sm:$0xff]
  %v324 = vld [vmem:[%s293 + $0x61] sm:$0xff]
  %v325 = vld [vmem:[%s293 + $0x71] sm:$0xff]
  %v326 = vld [vmem:[%s293 + $0xa1] sm:$0xff]
  %v327 = vld [vmem:[%s293 + $0xb1] sm:$0xff]
  %v328 = vld [vmem:[%s293 + $0xc1] sm:$0xff]
  %v329 = vld [vmem:[%s293 + $0xd1] sm:$0xff]
  %v330 = vld [vmem:[%s293 + $0xe1] sm:$0xff]
  %v331 = vld [vmem:[%s293 + $0xf1] sm:$0xff]
  %v332 = vld [vmem:[%s293 + $0x101] sm:$0xff]
  %v333 = vld [vmem:[%s293 + $0x111] sm:$0xff]
  %v334 = vpack.c.bf16 %v319, %v318
  %v335 = vpack.c.bf16 %v321, %v320
  %v336 = vpack.c.bf16 %v323, %v322
  %v337 = vpack.c.bf16 %v325, %v324
  %v338 = vpack.c.bf16 %v327, %v326
  %v339 = vpack.c.bf16 %v329, %v328
  %v340 = vpack.c.bf16 %v331, %v330
  %v341 = vpack.c.bf16 %v333, %v332
  %v342 = vld [vmem:[%s293 + $0x2] sm:$0xff]
  %v343 = vld [vmem:[%s293 + $0x12] sm:$0xff]
  %v344 = vld [vmem:[%s293 + $0x22] sm:$0xff]
  %v345 = vld [vmem:[%s293 + $0x32] sm:$0xff]
  %v346 = vld [vmem:[%s293 + $0x42] sm:$0xff]
  %v347 = vld [vmem:[%s293 + $0x52] sm:$0xff]
  %v348 = vld [vmem:[%s293 + $0x62] sm:$0xff]
  %v349 = vld [vmem:[%s293 + $0x72] sm:$0xff]
  %v350 = vld [vmem:[%s293 + $0xa2] sm:$0xff]
  %v351 = vld [vmem:[%s293 + $0xb2] sm:$0xff]
  %v352 = vld [vmem:[%s293 + $0xc2] sm:$0xff]
  %v353 = vld [vmem:[%s293 + $0xd2] sm:$0xff]
  %v354 = vld [vmem:[%s293 + $0xe2] sm:$0xff]
  %v355 = vld [vmem:[%s293 + $0xf2] sm:$0xff]
  %v356 = vld [vmem:[%s293 + $0x102] sm:$0xff]
  %v357 = vld [vmem:[%s293 + $0x112] sm:$0xff]
  %v358 = vpack.c.bf16 %v343, %v342
  %v359 = vpack.c.bf16 %v345, %v344
  %v360 = vpack.c.bf16 %v347, %v346
  %v361 = vpack.c.bf16 %v349, %v348
  %v362 = vpack.c.bf16 %v351, %v350
  %v363 = vpack.c.bf16 %v353, %v352
  %v364 = vpack.c.bf16 %v355, %v354
  %v365 = vpack.c.bf16 %v357, %v356
  %v366 = vld [vmem:[%s3] sm:$0xf]
  %v367 = vld [vmem:[%s3 + $0x4] sm:$0xf]
  %v368 = vld [vmem:[%s3 + $0x8] sm:$0xf]
  %v369 = vld [vmem:[%s3 + $0xc] sm:$0xf]
  %v370 = vld [vmem:[%s3 + $0x10] sm:$0xf]
  %v371 = vld [vmem:[%s3 + $0x14] sm:$0xf]
  %v372 = vld [vmem:[%s3 + $0x18] sm:$0xf]
  %v373 = vld [vmem:[%s3 + $0x1c] sm:$0xf]
  %v374 = vld [vmem:[%s3 + $0x20] sm:$0xf]
  %v375 = vld [vmem:[%s3 + $0x24] sm:$0xf]
  %v376 = vld [vmem:[%s3 + $0x28] sm:$0xf]
  %v377 = vld [vmem:[%s3 + $0x2c] sm:$0xf]
  %v378 = vld [vmem:[%s3 + $0x30] sm:$0xf]
  %v379 = vld [vmem:[%s3 + $0x34] sm:$0xf]
  %v380 = vld [vmem:[%s3 + $0x38] sm:$0xf]
  %v381 = vld [vmem:[%s3 + $0x3c] sm:$0xf]
  %v382 = vld [vmem:[%s3 + $0x40] sm:$0xf]
  %v383 = vld [vmem:[%s3 + $0x44] sm:$0xf]
  %v384 = vld [vmem:[%s3 + $0x48] sm:$0xf]
  %v385 = vld [vmem:[%s3 + $0x4c] sm:$0xf]
  %v386 = vld [vmem:[%s3 + $0x50] sm:$0xf]
  %v387 = vld [vmem:[%s3 + $0x54] sm:$0xf]
  %v388 = vld [vmem:[%s3 + $0x58] sm:$0xf]
  %v389 = vld [vmem:[%s3 + $0x5c] sm:$0xf]
  %v390 = vld [vmem:[%s3 + $0x60] sm:$0xf]
  %v391 = vld [vmem:[%s3 + $0x64] sm:$0xf]
  %v392 = vld [vmem:[%s3 + $0x68] sm:$0xf]
  %v393 = vld [vmem:[%s3 + $0x6c] sm:$0xf]
  %v394 = vld [vmem:[%s3 + $0x70] sm:$0xf]
  %v395 = vld [vmem:[%s3 + $0x74] sm:$0xf]
  %v396 = vld [vmem:[%s3 + $0x78] sm:$0xf]
  %v397 = vld [vmem:[%s3 + $0x7c] sm:$0xf]
  %v398 = vld [vmem:[%s3 + $0x80] sm:$0xf]
  %v399 = vld [vmem:[%s3 + $0x84] sm:$0xf]
  %v400 = vld [vmem:[%s3 + $0x88] sm:$0xf]
  %v401 = vld [vmem:[%s3 + $0x8c] sm:$0xf]
  %v402 = vld [vmem:[%s3 + $0x90] sm:$0xf]
  %v403 = vld [vmem:[%s3 + $0x94] sm:$0xf]
  %v404 = vld [vmem:[%s3 + $0x98] sm:$0xf]
  %v405 = vld [vmem:[%s3 + $0x9c] sm:$0xf]
  %v406 = vld [vmem:[%s3 + $0xa0] sm:$0xf]
  %v407 = vld [vmem:[%s3 + $0xa4] sm:$0xf]
  %v408 = vld [vmem:[%s3 + $0xa8] sm:$0xf]
  %v409 = vld [vmem:[%s3 + $0xac] sm:$0xf]
  %v410 = vld [vmem:[%s3 + $0xb0] sm:$0xf]
  %v411 = vld [vmem:[%s3 + $0xb4] sm:$0xf]
  %v412 = vld [vmem:[%s3 + $0xb8] sm:$0xf]
  %v413 = vld [vmem:[%s3 + $0xbc] sm:$0xf]
  %v414 = vld [vmem:[%s3 + $0xc0] sm:$0xf]
  %v415 = vld [vmem:[%s3 + $0xc4] sm:$0xf]
  %v416 = vld [vmem:[%s3 + $0xc8] sm:$0xf]
  %v417 = vld [vmem:[%s3 + $0xcc] sm:$0xf]
  %v418 = vld [vmem:[%s3 + $0xd0] sm:$0xf]
  %v419 = vld [vmem:[%s3 + $0xd4] sm:$0xf]
  %v420 = vld [vmem:[%s3 + $0xd8] sm:$0xf]
  %v421 = vld [vmem:[%s3 + $0xdc] sm:$0xf]
  %v422 = vld [vmem:[%s3 + $0xe0] sm:$0xf]
  %v423 = vld [vmem:[%s3 + $0xe4] sm:$0xf]
  %v424 = vld [vmem:[%s3 + $0xe8] sm:$0xf]
  %v425 = vld [vmem:[%s3 + $0xec] sm:$0xf]
  %v426 = vld [vmem:[%s3 + $0xf0] sm:$0xf]
  %v427 = vld [vmem:[%s3 + $0xf4] sm:$0xf]
  %v428 = vld [vmem:[%s3 + $0xf8] sm:$0xf]
  %v429 = vld [vmem:[%s3 + $0xfc] sm:$0xf]
  %v430 = vld [vmem:[%s3 + $0x100] sm:$0xf]
  %v431 = vld [vmem:[%s3 + $0x104] sm:$0xf]
  %v432 = vld [vmem:[%s3 + $0x108] sm:$0xf]
  %v433 = vld [vmem:[%s3 + $0x10c] sm:$0xf]
  %v434 = vld [vmem:[%s3 + $0x110] sm:$0xf]
  %v435 = vld [vmem:[%s3 + $0x114] sm:$0xf]
  %v436 = vld [vmem:[%s3 + $0x118] sm:$0xf]
  %v437 = vld [vmem:[%s3 + $0x11c] sm:$0xf]
  %v438 = vld [vmem:[%s3 + $0x120] sm:$0xf]
  %v439 = vld [vmem:[%s3 + $0x124] sm:$0xf]
  %v440 = vld [vmem:[%s3 + $0x128] sm:$0xf]
  %v441 = vld [vmem:[%s3 + $0x12c] sm:$0xf]
  %v442 = vld [vmem:[%s3 + $0x130] sm:$0xf]
  %v443 = vld [vmem:[%s3 + $0x134] sm:$0xf]
  %v444 = vld [vmem:[%s3 + $0x138] sm:$0xf]
  %v445 = vld [vmem:[%s3 + $0x13c] sm:$0xf]
  %v446 = vld [vmem:[%s3 + $0x140] sm:$0xf]
  %v447 = vld [vmem:[%s3 + $0x144] sm:$0xf]
  %v448 = vld [vmem:[%s3 + $0x148] sm:$0xf]
  %v449 = vld [vmem:[%s3 + $0x14c] sm:$0xf]
  %v450 = vld [vmem:[%s3 + $0x150] sm:$0xf]
  %v451 = vld [vmem:[%s3 + $0x154] sm:$0xf]
  %v452 = vld [vmem:[%s3 + $0x158] sm:$0xf]
  %v453 = vld [vmem:[%s3 + $0x15c] sm:$0xf]
  %v454 = vld [vmem:[%s3 + $0x160] sm:$0xf]
  %v455 = vld [vmem:[%s3 + $0x164] sm:$0xf]
  %v456 = vld [vmem:[%s3 + $0x168] sm:$0xf]
  %v457 = vld [vmem:[%s3 + $0x16c] sm:$0xf]
  %v458 = vld [vmem:[%s3 + $0x170] sm:$0xf]
  %v459 = vld [vmem:[%s3 + $0x174] sm:$0xf]
  %v460 = vld [vmem:[%s3 + $0x178] sm:$0xf]
  %v461 = vld [vmem:[%s3 + $0x17c] sm:$0xf]
  %v462 = vld [vmem:[%s3 + $0x180] sm:$0xf]
  %v463 = vld [vmem:[%s3 + $0x184] sm:$0xf]
  %v464 = vld [vmem:[%s3 + $0x188] sm:$0xf]
  %v465 = vld [vmem:[%s3 + $0x18c] sm:$0xf]
  %v466 = vld [vmem:[%s3 + $0x190] sm:$0xf]
  %v467 = vld [vmem:[%s3 + $0x194] sm:$0xf]
  %v468 = vld [vmem:[%s3 + $0x198] sm:$0xf]
  %v469 = vld [vmem:[%s3 + $0x19c] sm:$0xf]
  %v470 = vld [vmem:[%s3 + $0x1a0] sm:$0xf]
  %v471 = vld [vmem:[%s3 + $0x1a4] sm:$0xf]
  %v472 = vld [vmem:[%s3 + $0x1a8] sm:$0xf]
  %v473 = vld [vmem:[%s3 + $0x1ac] sm:$0xf]
  %v474 = vld [vmem:[%s3 + $0x1b0] sm:$0xf]
  %v475 = vld [vmem:[%s3 + $0x1b4] sm:$0xf]
  %v476 = vld [vmem:[%s3 + $0x1b8] sm:$0xf]
  %v477 = vld [vmem:[%s3 + $0x1bc] sm:$0xf]
  %v478 = vld [vmem:[%s3 + $0x1c0] sm:$0xf]
  %v479 = vld [vmem:[%s3 + $0x1c4] sm:$0xf]
  %v480 = vld [vmem:[%s3 + $0x1c8] sm:$0xf]
  %v481 = vld [vmem:[%s3 + $0x1cc] sm:$0xf]
  %v482 = vld [vmem:[%s3 + $0x1d0] sm:$0xf]
  %v483 = vld [vmem:[%s3 + $0x1d4] sm:$0xf]
  %v484 = vld [vmem:[%s3 + $0x1d8] sm:$0xf]
  %v485 = vld [vmem:[%s3 + $0x1dc] sm:$0xf]
  %v486 = vld [vmem:[%s3 + $0x1e0] sm:$0xf]
  %v487 = vld [vmem:[%s3 + $0x1e4] sm:$0xf]
  %v488 = vld [vmem:[%s3 + $0x1e8] sm:$0xf]
  %v489 = vld [vmem:[%s3 + $0x1ec] sm:$0xf]
  %v490 = vld [vmem:[%s3 + $0x1f0] sm:$0xf]
  %v491 = vld [vmem:[%s3 + $0x1f4] sm:$0xf]
  %v492 = vld [vmem:[%s3 + $0x1f8] sm:$0xf]
  %v493 = vld [vmem:[%s3 + $0x1fc] sm:$0xf]
  %v494 = vld [vmem:[%s3 + $0x200] sm:$0xf]
  %v495 = vld [vmem:[%s3 + $0x204] sm:$0xf]
  %v496 = vld [vmem:[%s3 + $0x208] sm:$0xf]
  %v497 = vld [vmem:[%s3 + $0x20c] sm:$0xf]
  %v498 = vld [vmem:[%s3 + $0x210] sm:$0xf]
  %v499 = vld [vmem:[%s3 + $0x214] sm:$0xf]
  %v500 = vld [vmem:[%s3 + $0x218] sm:$0xf]
  %v501 = vld [vmem:[%s3 + $0x21c] sm:$0xf]
  %v502 = vld [vmem:[%s3 + $0x220] sm:$0xf]
  %v503 = vld [vmem:[%s3 + $0x224] sm:$0xf]
  %v504 = vld [vmem:[%s3 + $0x228] sm:$0xf]
  %v505 = vld [vmem:[%s3 + $0x22c] sm:$0xf]
  %v506 = vld [vmem:[%s3 + $0x230] sm:$0xf]
  %v507 = vld [vmem:[%s3 + $0x234] sm:$0xf]
  %v508 = vld [vmem:[%s3 + $0x238] sm:$0xf]
  %v509 = vld [vmem:[%s3 + $0x23c] sm:$0xf]
  %v510 = vld [vmem:[%s4] sm:$0x1]
  %v512 = vlaneseq
  %v513 = vshrl.u32 %v512, 7
  %v514 = vsub.s32 0, %v513
  %v515 = vrot.slane %v510, %v514
  %v661 = vunpack.c.l.b16 %v366
  %v662 = vunpack.c.l.b16 %v367
  %v663 = vunpack.c.l.b16 %v368
  %v664 = vunpack.c.l.b16 %v369
  %v665 = vunpack.c.l.b16 %v370
  %v666 = vunpack.c.l.b16 %v371
  %v667 = vunpack.c.l.b16 %v372
  %v668 = vunpack.c.l.b16 %v373
  %v669 = vunpack.c.l.b16 %v374
  %v670 = vunpack.c.l.b16 %v375
  %v671 = vunpack.c.l.b16 %v376
  %v672 = vunpack.c.l.b16 %v377
  %v673 = vunpack.c.l.b16 %v378
  %v674 = vunpack.c.l.b16 %v379
  %v675 = vunpack.c.l.b16 %v380
  %v676 = vunpack.c.l.b16 %v381
  %v677 = vunpack.c.l.b16 %v382
  %v678 = vunpack.c.l.b16 %v383
  %v679 = vunpack.c.l.b16 %v384
  %v680 = vunpack.c.l.b16 %v385
  %v681 = vunpack.c.l.b16 %v386
  %v682 = vunpack.c.l.b16 %v387
  %v683 = vunpack.c.l.b16 %v388
  %v684 = vunpack.c.l.b16 %v389
  %v685 = vunpack.c.l.b16 %v390
  %v686 = vunpack.c.l.b16 %v391
  %v687 = vunpack.c.l.b16 %v392
  %v688 = vunpack.c.l.b16 %v393
  %v689 = vunpack.c.l.b16 %v394
  %v690 = vunpack.c.l.b16 %v395
  %v691 = vunpack.c.l.b16 %v396
  %v692 = vunpack.c.l.b16 %v397
  %v693 = vunpack.c.l.b16 %v398
  %v694 = vunpack.c.l.b16 %v399
  %v695 = vunpack.c.l.b16 %v400
  %v696 = vunpack.c.l.b16 %v401
  %v697 = vunpack.c.l.b16 %v402
  %v698 = vunpack.c.l.b16 %v403
  %v699 = vunpack.c.l.b16 %v404
  %v700 = vunpack.c.l.b16 %v405
  %v701 = vunpack.c.l.b16 %v406
  %v702 = vunpack.c.l.b16 %v407
  %v703 = vunpack.c.l.b16 %v408
  %v704 = vunpack.c.l.b16 %v409
  %v705 = vunpack.c.l.b16 %v410
  %v706 = vunpack.c.l.b16 %v411
  %v707 = vunpack.c.l.b16 %v412
  %v708 = vunpack.c.l.b16 %v413
  %v709 = vunpack.c.l.b16 %v414
  %v710 = vunpack.c.l.b16 %v415
  %v711 = vunpack.c.l.b16 %v416
  %v712 = vunpack.c.l.b16 %v417
  %v713 = vunpack.c.l.b16 %v418
  %v714 = vunpack.c.l.b16 %v419
  %v715 = vunpack.c.l.b16 %v420
  %v716 = vunpack.c.l.b16 %v421
  %v717 = vunpack.c.l.b16 %v422
  %v718 = vunpack.c.l.b16 %v423
  %v719 = vunpack.c.l.b16 %v424
  %v720 = vunpack.c.l.b16 %v425
  %v721 = vunpack.c.l.b16 %v426
  %v722 = vunpack.c.l.b16 %v427
  %v723 = vunpack.c.l.b16 %v428
  %v724 = vunpack.c.l.b16 %v429
  %v725 = vunpack.c.l.b16 %v430
  %v726 = vunpack.c.l.b16 %v431
  %v727 = vunpack.c.l.b16 %v432
  %v728 = vunpack.c.l.b16 %v433
  %v729 = vunpack.c.l.b16 %v434
  %v730 = vunpack.c.l.b16 %v435
  %v731 = vunpack.c.l.b16 %v436
  %v732 = vunpack.c.l.b16 %v437
  %v733 = vunpack.c.l.b16 %v438
  %v734 = vunpack.c.l.b16 %v439
  %v735 = vunpack.c.l.b16 %v440
  %v736 = vunpack.c.l.b16 %v441
  %v737 = vunpack.c.l.b16 %v442
  %v738 = vunpack.c.l.b16 %v443
  %v739 = vunpack.c.l.b16 %v444
  %v740 = vunpack.c.l.b16 %v445
  %v741 = vunpack.c.l.b16 %v446
  %v742 = vunpack.c.l.b16 %v447
  %v743 = vunpack.c.l.b16 %v448
  %v744 = vunpack.c.l.b16 %v449
  %v745 = vunpack.c.l.b16 %v450
  %v746 = vunpack.c.l.b16 %v451
  %v747 = vunpack.c.l.b16 %v452
  %v748 = vunpack.c.l.b16 %v453
  %v749 = vunpack.c.l.b16 %v454
  %v750 = vunpack.c.l.b16 %v455
  %v751 = vunpack.c.l.b16 %v456
  %v752 = vunpack.c.l.b16 %v457
  %v753 = vunpack.c.l.b16 %v458
  %v754 = vunpack.c.l.b16 %v459
  %v755 = vunpack.c.l.b16 %v460
  %v756 = vunpack.c.l.b16 %v461
  %v757 = vunpack.c.l.b16 %v462
  %v758 = vunpack.c.l.b16 %v463
  %v759 = vunpack.c.l.b16 %v464
  %v760 = vunpack.c.l.b16 %v465
  %v761 = vunpack.c.l.b16 %v466
  %v762 = vunpack.c.l.b16 %v467
  %v763 = vunpack.c.l.b16 %v468
  %v764 = vunpack.c.l.b16 %v469
  %v765 = vunpack.c.l.b16 %v470
  %v766 = vunpack.c.l.b16 %v471
  %v767 = vunpack.c.l.b16 %v472
  %v768 = vunpack.c.l.b16 %v473
  %v769 = vunpack.c.l.b16 %v474
  %v770 = vunpack.c.l.b16 %v475
  %v771 = vunpack.c.l.b16 %v476
  %v772 = vunpack.c.l.b16 %v477
  %v773 = vunpack.c.l.b16 %v478
  %v774 = vunpack.c.l.b16 %v479
  %v775 = vunpack.c.l.b16 %v480
  %v776 = vunpack.c.l.b16 %v481
  %v777 = vunpack.c.l.b16 %v482
  %v778 = vunpack.c.l.b16 %v483
  %v779 = vunpack.c.l.b16 %v484
  %v780 = vunpack.c.l.b16 %v485
  %v781 = vunpack.c.l.b16 %v486
  %v782 = vunpack.c.l.b16 %v487
  %v783 = vunpack.c.l.b16 %v488
  %v784 = vunpack.c.l.b16 %v489
  %v785 = vunpack.c.l.b16 %v490
  %v786 = vunpack.c.l.b16 %v491
  %v787 = vunpack.c.l.b16 %v492
  %v788 = vunpack.c.l.b16 %v493
  %v789 = vunpack.c.l.b16 %v494
  %v790 = vunpack.c.l.b16 %v495
  %v791 = vunpack.c.l.b16 %v496
  %v792 = vunpack.c.l.b16 %v497
  %v793 = vunpack.c.l.b16 %v498
  %v794 = vunpack.c.l.b16 %v499
  %v795 = vunpack.c.l.b16 %v500
  %v796 = vunpack.c.l.b16 %v501
  %v797 = vunpack.c.l.b16 %v502
  %v798 = vunpack.c.l.b16 %v503
  %v799 = vunpack.c.l.b16 %v504
  %v800 = vunpack.c.l.b16 %v505
  %v801 = vunpack.c.l.b16 %v506
  %v802 = vunpack.c.l.b16 %v507
  %v803 = vunpack.c.l.b16 %v508
  %v804 = vunpack.c.l.b16 %v509
  %v805 = vpack.c.b16 %v662, %v661
  %v806 = vpack.c.b16 %v664, %v663
  %v807 = vpack.c.b16 %v666, %v665
  %v808 = vpack.c.b16 %v668, %v667
  %v809 = vpack.c.b16 %v670, %v669
  %v810 = vpack.c.b16 %v672, %v671
  %v811 = vpack.c.b16 %v674, %v673
  %v812 = vpack.c.b16 %v676, %v675
  %v813 = vpack.c.b16 %v678, %v677
  %v814 = vpack.c.b16 %v680, %v679
  %v815 = vpack.c.b16 %v682, %v681
  %v816 = vpack.c.b16 %v684, %v683
  %v817 = vpack.c.b16 %v686, %v685
  %v818 = vpack.c.b16 %v688, %v687
  %v819 = vpack.c.b16 %v690, %v689
  %v820 = vpack.c.b16 %v692, %v691
  %v821 = vpack.c.b16 %v694, %v693
  %v822 = vpack.c.b16 %v696, %v695
  %v823 = vpack.c.b16 %v698, %v697
  %v824 = vpack.c.b16 %v700, %v699
  %v825 = vpack.c.b16 %v702, %v701
  %v826 = vpack.c.b16 %v704, %v703
  %v827 = vpack.c.b16 %v706, %v705
  %v828 = vpack.c.b16 %v708, %v707
  %v829 = vpack.c.b16 %v710, %v709
  %v830 = vpack.c.b16 %v712, %v711
  %v831 = vpack.c.b16 %v714, %v713
  %v832 = vpack.c.b16 %v716, %v715
  %v833 = vpack.c.b16 %v718, %v717
  %v834 = vpack.c.b16 %v720, %v719
  %v835 = vpack.c.b16 %v722, %v721
  %v836 = vpack.c.b16 %v724, %v723
  %v837 = vpack.c.b16 %v726, %v725
  %v838 = vpack.c.b16 %v728, %v727
  %v839 = vpack.c.b16 %v730, %v729
  %v840 = vpack.c.b16 %v732, %v731
  %v841 = vpack.c.b16 %v734, %v733
  %v842 = vpack.c.b16 %v736, %v735
  %v843 = vpack.c.b16 %v738, %v737
  %v844 = vpack.c.b16 %v740, %v739
  %v845 = vpack.c.b16 %v742, %v741
  %v846 = vpack.c.b16 %v744, %v743
  %v847 = vpack.c.b16 %v746, %v745
  %v848 = vpack.c.b16 %v748, %v747
  %v849 = vpack.c.b16 %v750, %v749
  %v850 = vpack.c.b16 %v752, %v751
  %v851 = vpack.c.b16 %v754, %v753
  %v852 = vpack.c.b16 %v756, %v755
  %v853 = vpack.c.b16 %v758, %v757
  %v854 = vpack.c.b16 %v760, %v759
  %v855 = vpack.c.b16 %v762, %v761
  %v856 = vpack.c.b16 %v764, %v763
  %v857 = vpack.c.b16 %v766, %v765
  %v858 = vpack.c.b16 %v768, %v767
  %v859 = vpack.c.b16 %v770, %v769
  %v860 = vpack.c.b16 %v772, %v771
  %v861 = vpack.c.b16 %v774, %v773
  %v862 = vpack.c.b16 %v776, %v775
  %v863 = vpack.c.b16 %v778, %v777
  %v864 = vpack.c.b16 %v780, %v779
  %v865 = vpack.c.b16 %v782, %v781
  %v866 = vpack.c.b16 %v784, %v783
  %v867 = vpack.c.b16 %v786, %v785
  %v868 = vpack.c.b16 %v788, %v787
  %v869 = vpack.c.b16 %v790, %v789
  %v870 = vpack.c.b16 %v792, %v791
  %v871 = vpack.c.b16 %v794, %v793
  %v872 = vpack.c.b16 %v796, %v795
  %v873 = vpack.c.b16 %v798, %v797
  %v874 = vpack.c.b16 %v800, %v799
  %v875 = vpack.c.b16 %v802, %v801
  %v876 = vpack.c.b16 %v804, %v803
  %949 = vmatprep.subr.bf16.mxu0 0
  %950 = vmatpush1.bf16.msra.mxu0 %v805
  %951 = vmatprep.subr.bf16.mxu0 0
  %952 = vmatpush1.bf16.msra.mxu0 %v806
  %953 = vmatprep.subr.bf16.mxu0 0
  %954 = vmatpush1.bf16.msra.mxu0 %v807
  %955 = vmatprep.subr.bf16.mxu0 0
  %956 = vmatpush1.bf16.msra.mxu0 %v808
  %957 = vmatprep.subr.bf16.mxu0 0
  %958 = vmatpush1.bf16.msra.mxu0 %v809
  %959 = vmatprep.subr.bf16.mxu0 0
  %960 = vmatpush1.bf16.msra.mxu0 %v810
  %961 = vmatprep.subr.bf16.mxu0 0
  %962 = vmatpush1.bf16.msra.mxu0 %v811
  %963 = vmatprep.subr.bf16.mxu0 0
  %964 = vmatpush1.bf16.msra.mxu0 %v812
  %965 = vmatprep.subr.bf16.mxu0 0
  %966 = vmatpush1.bf16.msra.mxu0 %v813
  %967 = vmatprep.subr.bf16.mxu0 0
  %968 = vmatpush1.bf16.msra.mxu0 %v814
  %969 = vmatprep.subr.bf16.mxu0 0
  %970 = vmatpush1.bf16.msra.mxu0 %v815
  %971 = vmatprep.subr.bf16.mxu0 0
  %972 = vmatpush1.bf16.msra.mxu0 %v816
  %973 = vmatprep.subr.bf16.mxu0 0
  %974 = vmatpush1.bf16.msra.mxu0 %v817
  %975 = vmatprep.subr.bf16.mxu0 0
  %976 = vmatpush1.bf16.msra.mxu0 %v818
  %977 = vmatprep.subr.bf16.mxu0 0
  %978 = vmatpush1.bf16.msra.mxu0 %v819
  %979 = vmatprep.subr.bf16.mxu0 0
  %980 = vmatpush1.bf16.msra.mxu0 %v820
  %981 = vmatprep.mubr.bf16.mxu0 %v189
  %982 = vmatmul.mubr.bf16.gmra.mrb[0].mxu0 %v165
  %v983 = vpop.f32.mrb[0].mxu0
  %v984 = vadd.f32 %v515, %v983
  %v985 = vpop.f32.mrb[0].mxu0
  %v986 = vpop.f32.mrb[0].mxu0
  %v987 = vadd.f32 %v515, %v986
  %v988 = vpop.f32.mrb[0].mxu0
  %989 = vmatprep.mubr.bf16.mxu0 %v190
  %990 = vmatmul.mubr.bf16.gmra.mrb[0].mxu0 %v166
  %v991 = vpop.f32.mrb[0].mxu0
  %v992 = vadd.f32 %v515, %v991
  %v993 = vpop.f32.mrb[0].mxu0
  %v994 = vpop.f32.mrb[0].mxu0
  %v995 = vadd.f32 %v515, %v994
  %v996 = vpop.f32.mrb[0].mxu0
  %997 = vmatprep.mubr.bf16.mxu0 %v191
  %998 = vmatmul.mubr.bf16.gmra.mrb[0].mxu0 %v167
  %v999 = vpop.f32.mrb[0].mxu0
  %v1000 = vadd.f32 %v515, %v999
  %v1001 = vpop.f32.mrb[0].mxu0
  %v1002 = vpop.f32.mrb[0].mxu0
  %v1003 = vadd.f32 %v515, %v1002
  %v1004 = vpop.f32.mrb[0].mxu0
  %1005 = vmatprep.mubr.bf16.mxu0 %v192
  %1006 = vmatmul.mubr.bf16.gmra.mrb[0].mxu0 %v168
  %v1007 = vpop.f32.mrb[0].mxu0
  %v1008 = vadd.f32 %v515, %v1007
  %v1009 = vpop.f32.mrb[0].mxu0
  %v1010 = vpop.f32.mrb[0].mxu0
  %v1011 = vadd.f32 %v515, %v1010
  %v1012 = vpop.f32.mrb[0].mxu0
  %1013 = vmatprep.mubr.bf16.mxu0 %v193
  %1014 = vmatmul.mubr.bf16.gmra.mrb[0].mxu0 %v169
  %v1015 = vpop.f32.mrb[0].mxu0
  %v1016 = vadd.f32 %v515, %v1015
  %v1017 = vpop.f32.mrb[0].mxu0
  %v1018 = vpop.f32.mrb[0].mxu0
  %v1019 = vadd.f32 %v515, %v1018
  %v1020 = vpop.f32.mrb[0].mxu0
  %1021 = vmatprep.mubr.bf16.mxu0 %v194
  %1022 = vmatmul.mubr.bf16.gmra.mrb[0].mxu0 %v170
  %v1023 = vpop.f32.mrb[0].mxu0
  %v1024 = vadd.f32 %v515, %v1023
  %v1025 = vpop.f32.mrb[0].mxu0
  %v1026 = vpop.f32.mrb[0].mxu0
  %v1027 = vadd.f32 %v515, %v1026
  %v1028 = vpop.f32.mrb[0].mxu0
  %1029 = vmatprep.mubr.bf16.mxu0 %v195
  %1030 = vmatmul.mubr.bf16.gmra.mrb[0].mxu0 %v171
  %v1031 = vpop.f32.mrb[0].mxu0
  %v1032 = vadd.f32 %v515, %v1031
  %v1033 = vpop.f32.mrb[0].mxu0
  %v1034 = vpop.f32.mrb[0].mxu0
  %v1035 = vadd.f32 %v515, %v1034
  %v1036 = vpop.f32.mrb[0].mxu0
  %1037 = vmatprep.mubr.bf16.mxu0 %v196
  %1038 = vmatmul.mubr.bf16.gmra.mrb[0].mxu0 %v172
  %v1039 = vpop.f32.mrb[0].mxu0
  %v1040 = vadd.f32 %v515, %v1039
  %v1041 = vpop.f32.mrb[0].mxu0
  %v1042 = vpop.f32.mrb[0].mxu0
  %v1043 = vadd.f32 %v515, %v1042
  %v1044 = vpop.f32.mrb[0].mxu0
  %1045 = vdwg.mxu0
  %1046 = vmatprep.subr.bf16.mxu0 0
  %1047 = vmatpush1.bf16.msra.mxu0 %v821
  %1048 = vmatprep.subr.bf16.mxu0 0
  %1049 = vmatpush1.bf16.msra.mxu0 %v822
  %1050 = vmatprep.subr.bf16.mxu0 0
  %1051 = vmatpush1.bf16.msra.mxu0 %v823
  %1052 = vmatprep.subr.bf16.mxu0 0
  %1053 = vmatpush1.bf16.msra.mxu0 %v824
  %1054 = vmatprep.subr.bf16.mxu0 0
  %1055 = vmatpush1.bf16.msra.mxu0 %v825
  %1056 = vmatprep.subr.bf16.mxu0 0
  %1057 = vmatpush1.bf16.msra.mxu0 %v826
  %1058 = vmatprep.subr.bf16.mxu0 0
  %1059 = vmatpush1.bf16.msra.mxu0 %v827
  %1060 = vmatprep.subr.bf16.mxu0 0
  %1061 = vmatpush1.bf16.msra.mxu0 %v828
  %1062 = vmatprep.subr.bf16.mxu0 0
  %1063 = vmatpush1.bf16.msra.mxu0 %v829
  %1064 = vmatprep.subr.bf16.mxu0 0
  %1065 = vmatpush1.bf16.msra.mxu0 %v830
  %1066 = vmatprep.subr.bf16.mxu0 0
  %1067 = vmatpush1.bf16.msra.mxu0 %v831
  %1068 = vmatprep.subr.bf16.mxu0 0
  %1069 = vmatpush1.bf16.msra.mxu0 %v832
  %1070 = vmatprep.subr.bf16.mxu0 0
  %1071 = vmatpush1.bf16.msra.mxu0 %v833
  %1072 = vmatprep.subr.bf16.mxu0 0
  %1073 = vmatpush1.bf16.msra.mxu0 %v834
  %1074 = vmatprep.subr.bf16.mxu0 0
  %1075 = vmatpush1.bf16.msra.mxu0 %v835
  %1076 = vmatprep.subr.bf16.mxu0 0
  %1077 = vmatpush1.bf16.msra.mxu0 %v836
  %1078 = vmatprep.mubr.bf16.mxu0 %v237
  %1079 = vmatmul.mubr.bf16.gmra.mrb[0].mxu0 %v213
  %v1080 = vpop.f32.mrb[0].mxu0
  %v1081 = vadd.f32 %v984, %v1080
  %v1082 = vpop.f32.mrb[0].mxu0
  %v1083 = vpop.f32.mrb[0].mxu0
  %v1084 = vadd.f32 %v987, %v1083
  %v1085 = vpop.f32.mrb[0].mxu0
  %1086 = vmatprep.mubr.bf16.mxu0 %v238
  %1087 = vmatmul.mubr.bf16.gmra.mrb[0].mxu0 %v214
  %v1088 = vpop.f32.mrb[0].mxu0
  %v1089 = vadd.f32 %v992, %v1088
  %v1090 = vpop.f32.mrb[0].mxu0
  %v1091 = vpop.f32.mrb[0].mxu0
  %v1092 = vadd.f32 %v995, %v1091
  %v1093 = vpop.f32.mrb[0].mxu0
  %1094 = vmatprep.mubr.bf16.mxu0 %v239
  %1095 = vmatmul.mubr.bf16.gmra.mrb[0].mxu0 %v215
  %v1096 = vpop.f32.mrb[0].mxu0
  %v1097 = vadd.f32 %v1000, %v1096
  %v1098 = vpop.f32.mrb[0].mxu0
  %v1099 = vpop.f32.mrb[0].mxu0
  %v1100 = vadd.f32 %v1003, %v1099
  %v1101 = vpop.f32.mrb[0].mxu0
  %1102 = vmatprep.mubr.bf16.mxu0 %v240
  %1103 = vmatmul.mubr.bf16.gmra.mrb[0].mxu0 %v216
  %v1104 = vpop.f32.mrb[0].mxu0
  %v1105 = vadd.f32 %v1008, %v1104
  %v1106 = vpop.f32.mrb[0].mxu0
  %v1107 = vpop.f32.mrb[0].mxu0
  %v1108 = vadd.f32 %v1011, %v1107
  %v1109 = vpop.f32.mrb[0].mxu0
  %1110 = vmatprep.mubr.bf16.mxu0 %v241
  %1111 = vmatmul.mubr.bf16.gmra.mrb[0].mxu0 %v217
  %v1112 = vpop.f32.mrb[0].mxu0
  %v1113 = vadd.f32 %v1016, %v1112
  %v1114 = vpop.f32.mrb[0].mxu0
  %v1115 = vpop.f32.mrb[0].mxu0
  %v1116 = vadd.f32 %v1019, %v1115
  %v1117 = vpop.f32.mrb[0].mxu0
  %1118 = vmatprep.mubr.bf16.mxu0 %v242
  %1119 = vmatmul.mubr.bf16.gmra.mrb[0].mxu0 %v218
  %v1120 = vpop.f32.mrb[0].mxu0
  %v1121 = vadd.f32 %v1024, %v1120
  %v1122 = vpop.f32.mrb[0].mxu0
  %v1123 = vpop.f32.mrb[0].mxu0
  %v1124 = vadd.f32 %v1027, %v1123
  %v1125 = vpop.f32.mrb[0].mxu0
  %1126 = vmatprep.mubr.bf16.mxu0 %v243
  %1127 = vmatmul.mubr.bf16.gmra.mrb[0].mxu0 %v219
  %v1128 = vpop.f32.mrb[0].mxu0
  %v1129 = vadd.f32 %v1032, %v1128
  %v1130 = vpop.f32.mrb[0].mxu0
  %v1131 = vpop.f32.mrb[0].mxu0
  %v1132 = vadd.f32 %v1035, %v1131
  %v1133 = vpop.f32.mrb[0].mxu0
  %1134 = vmatprep.mubr.bf16.mxu0 %v244
  %1135 = vmatmul.mubr.bf16.gmra.mrb[0].mxu0 %v220
  %v1136 = vpop.f32.mrb[0].mxu0
  %v1137 = vadd.f32 %v1040, %v1136
  %v1138 = vpop.f32.mrb[0].mxu0
  %v1139 = vpop.f32.mrb[0].mxu0
  %v1140 = vadd.f32 %v1043, %v1139
  %v1141 = vpop.f32.mrb[0].mxu0
  %1142 = vdwg.mxu0
  %1143 = vmatprep.subr.bf16.mxu0 0
  %1144 = vmatpush1.bf16.msra.mxu0 %v837
  %1145 = vmatprep.subr.bf16.mxu0 0
  %1146 = vmatpush1.bf16.msra.mxu0 %v838
  %1147 = vmatprep.subr.bf16.mxu0 0
  %1148 = vmatpush1.bf16.msra.mxu0 %v839
  %1149 = vmatprep.subr.bf16.mxu0 0
  %1150 = vmatpush1.bf16.msra.mxu0 %v840
  %1151 = vmatprep.subr.bf16.mxu0 0
  %1152 = vmatpush1.bf16.msra.mxu0 %v841
  %1153 = vmatprep.subr.bf16.mxu0 0
  %1154 = vmatpush1.bf16.msra.mxu0 %v842
  %1155 = vmatprep.subr.bf16.mxu0 0
  %1156 = vmatpush1.bf16.msra.mxu0 %v843
  %1157 = vmatprep.subr.bf16.mxu0 0
  %1158 = vmatpush1.bf16.msra.mxu0 %v844
  %1159 = vmatprep.subr.bf16.mxu0 0
  %1160 = vmatpush1.bf16.msra.mxu0 %v845
  %1161 = vmatprep.subr.bf16.mxu0 0
  %1162 = vmatpush1.bf16.msra.mxu0 %v846
  %1163 = vmatprep.subr.bf16.mxu0 0
  %1164 = vmatpush1.bf16.msra.mxu0 %v847
  %1165 = vmatprep.subr.bf16.mxu0 0
  %1166 = vmatpush1.bf16.msra.mxu0 %v848
  %1167 = vmatprep.subr.bf16.mxu0 0
  %1168 = vmatpush1.bf16.msra.mxu0 %v849
  %1169 = vmatprep.subr.bf16.mxu0 0
  %1170 = vmatpush1.bf16.msra.mxu0 %v850
  %1171 = vmatprep.subr.bf16.mxu0 0
  %1172 = vmatpush1.bf16.msra.mxu0 %v851
  %1173 = vmatprep.subr.bf16.mxu0 0
  %1174 = vmatpush1.bf16.msra.mxu0 %v852
  %1175 = vmatprep.mubr.bf16.mxu0 %v285
  %1176 = vmatmul.mubr.bf16.gmra.mrb[0].mxu0 %v261
  %v1177 = vpop.f32.mrb[0].mxu0
  %v1178 = vadd.f32 %v1081, %v1177
  %v1179 = vpop.f32.mrb[0].mxu0
  %v1180 = vpop.f32.mrb[0].mxu0
  %v1181 = vadd.f32 %v1084, %v1180
  %v1182 = vpop.f32.mrb[0].mxu0
  %1183 = vmatprep.mubr.bf16.mxu0 %v286
  %1184 = vmatmul.mubr.bf16.gmra.mrb[0].mxu0 %v262
  %v1185 = vpop.f32.mrb[0].mxu0
  %v1186 = vadd.f32 %v1089, %v1185
  %v1187 = vpop.f32.mrb[0].mxu0
  %v1188 = vpop.f32.mrb[0].mxu0
  %v1189 = vadd.f32 %v1092, %v1188
  %v1190 = vpop.f32.mrb[0].mxu0
  %1191 = vmatprep.mubr.bf16.mxu0 %v287
  %1192 = vmatmul.mubr.bf16.gmra.mrb[0].mxu0 %v263
  %v1193 = vpop.f32.mrb[0].mxu0
  %v1194 = vadd.f32 %v1097, %v1193
  %v1195 = vpop.f32.mrb[0].mxu0
  %v1196 = vpop.f32.mrb[0].mxu0
  %v1197 = vadd.f32 %v1100, %v1196
  %v1198 = vpop.f32.mrb[0].mxu0
  %1199 = vmatprep.mubr.bf16.mxu0 %v288
  %1200 = vmatmul.mubr.bf16.gmra.mrb[0].mxu0 %v264
  %v1201 = vpop.f32.mrb[0].mxu0
  %v1202 = vadd.f32 %v1105, %v1201
  %v1203 = vpop.f32.mrb[0].mxu0
  %v1204 = vpop.f32.mrb[0].mxu0
  %v1205 = vadd.f32 %v1108, %v1204
  %v1206 = vpop.f32.mrb[0].mxu0
  %1207 = vmatprep.mubr.bf16.mxu0 %v289
  %1208 = vmatmul.mubr.bf16.gmra.mrb[0].mxu0 %v265
  %v1209 = vpop.f32.mrb[0].mxu0
  %v1210 = vadd.f32 %v1113, %v1209
  %v1211 = vpop.f32.mrb[0].mxu0
  %v1212 = vpop.f32.mrb[0].mxu0
  %v1213 = vadd.f32 %v1116, %v1212
  %v1214 = vpop.f32.mrb[0].mxu0
  %1215 = vmatprep.mubr.bf16.mxu0 %v290
  %1216 = vmatmul.mubr.bf16.gmra.mrb[0].mxu0 %v266
  %v1217 = vpop.f32.mrb[0].mxu0
  %v1218 = vadd.f32 %v1121, %v1217
  %v1219 = vpop.f32.mrb[0].mxu0
  %v1220 = vpop.f32.mrb[0].mxu0
  %v1221 = vadd.f32 %v1124, %v1220
  %v1222 = vpop.f32.mrb[0].mxu0
  %1223 = vmatprep.mubr.bf16.mxu0 %v291
  %1224 = vmatmul.mubr.bf16.gmra.mrb[0].mxu0 %v267
  %v1225 = vpop.f32.mrb[0].mxu0
  %v1226 = vadd.f32 %v1129, %v1225
  %v1227 = vpop.f32.mrb[0].mxu0
  %v1228 = vpop.f32.mrb[0].mxu0
  %v1229 = vadd.f32 %v1132, %v1228
  %v1230 = vpop.f32.mrb[0].mxu0
  %1231 = vmatprep.mubr.bf16.mxu0 %v292
  %1232 = vmatmul.mubr.bf16.gmra.mrb[0].mxu0 %v268
  %v1233 = vpop.f32.mrb[0].mxu0
  %v1234 = vadd.f32 %v1137, %v1233
  %v1235 = vpop.f32.mrb[0].mxu0
  %v1236 = vpop.f32.mrb[0].mxu0
  %v1237 = vadd.f32 %v1140, %v1236
  %v1238 = vpop.f32.mrb[0].mxu0
  %1239 = vdwg.mxu0
  %1240 = vmatprep.subr.bf16.mxu0 0
  %1241 = vmatpush1.bf16.msra.mxu0 %v853
  %1242 = vmatprep.subr.bf16.mxu0 0
  %1243 = vmatpush1.bf16.msra.mxu0 %v854
  %1244 = vmatprep.subr.bf16.mxu0 0
  %1245 = vmatpush1.bf16.msra.mxu0 %v855
  %1246 = vmatprep.subr.bf16.mxu0 0
  %1247 = vmatpush1.bf16.msra.mxu0 %v856
  %1248 = vmatprep.subr.bf16.mxu0 0
  %1249 = vmatpush1.bf16.msra.mxu0 %v857
  %1250 = vmatprep.subr.bf16.mxu0 0
  %1251 = vmatpush1.bf16.msra.mxu0 %v858
  %1252 = vmatprep.subr.bf16.mxu0 0
  %1253 = vmatpush1.bf16.msra.mxu0 %v859
  %1254 = vmatprep.subr.bf16.mxu0 0
  %1255 = vmatpush1.bf16.msra.mxu0 %v860
  %1256 = vmatprep.subr.bf16.mxu0 0
  %1257 = vmatpush1.bf16.msra.mxu0 %v861
  %1258 = vmatprep.subr.bf16.mxu0 0
  %1259 = vmatpush1.bf16.msra.mxu0 %v862
  %1260 = vmatprep.subr.bf16.mxu0 0
  %1261 = vmatpush1.bf16.msra.mxu0 %v863
  %1262 = vmatprep.subr.bf16.mxu0 0
  %1263 = vmatpush1.bf16.msra.mxu0 %v864
  %1264 = vmatprep.subr.bf16.mxu0 0
  %1265 = vmatpush1.bf16.msra.mxu0 %v865
  %1266 = vmatprep.subr.bf16.mxu0 0
  %1267 = vmatpush1.bf16.msra.mxu0 %v866
  %1268 = vmatprep.subr.bf16.mxu0 0
  %1269 = vmatpush1.bf16.msra.mxu0 %v867
  %1270 = vmatprep.subr.bf16.mxu0 0
  %1271 = vmatpush1.bf16.msra.mxu0 %v868
  %1272 = vmatprep.mubr.bf16.mxu0 %v334
  %1273 = vmatmul.mubr.bf16.gmra.mrb[0].mxu0 %v310
  %v1274 = vpop.f32.mrb[0].mxu0
  %v1275 = vadd.f32 %v1178, %v1274
  %v1276 = vpop.f32.mrb[0].mxu0
  %v1277 = vpop.f32.mrb[0].mxu0
  %v1278 = vadd.f32 %v1181, %v1277
  %v1279 = vpop.f32.mrb[0].mxu0
  %1280 = vmatprep.mubr.bf16.mxu0 %v335
  %1281 = vmatmul.mubr.bf16.gmra.mrb[0].mxu0 %v311
  %v1282 = vpop.f32.mrb[0].mxu0
  %v1283 = vadd.f32 %v1186, %v1282
  %v1284 = vpop.f32.mrb[0].mxu0
  %v1285 = vpop.f32.mrb[0].mxu0
  %v1286 = vadd.f32 %v1189, %v1285
  %v1287 = vpop.f32.mrb[0].mxu0
  %1288 = vmatprep.mubr.bf16.mxu0 %v336
  %1289 = vmatmul.mubr.bf16.gmra.mrb[0].mxu0 %v312
  %v1290 = vpop.f32.mrb[0].mxu0
  %v1291 = vadd.f32 %v1194, %v1290
  %v1292 = vpop.f32.mrb[0].mxu0
  %v1293 = vpop.f32.mrb[0].mxu0
  %v1294 = vadd.f32 %v1197, %v1293
  %v1295 = vpop.f32.mrb[0].mxu0
  %1296 = vmatprep.mubr.bf16.mxu0 %v337
  %1297 = vmatmul.mubr.bf16.gmra.mrb[0].mxu0 %v313
  %v1298 = vpop.f32.mrb[0].mxu0
  %v1299 = vadd.f32 %v1202, %v1298
  %v1300 = vpop.f32.mrb[0].mxu0
  %v1301 = vpop.f32.mrb[0].mxu0
  %v1302 = vadd.f32 %v1205, %v1301
  %v1303 = vpop.f32.mrb[0].mxu0
  %1304 = vmatprep.mubr.bf16.mxu0 %v338
  %1305 = vmatmul.mubr.bf16.gmra.mrb[0].mxu0 %v314
  %v1306 = vpop.f32.mrb[0].mxu0
  %v1307 = vadd.f32 %v1210, %v1306
  %v1308 = vpop.f32.mrb[0].mxu0
  %v1309 = vpop.f32.mrb[0].mxu0
  %v1310 = vadd.f32 %v1213, %v1309
  %v1311 = vpop.f32.mrb[0].mxu0
  %1312 = vmatprep.mubr.bf16.mxu0 %v339
  %1313 = vmatmul.mubr.bf16.gmra.mrb[0].mxu0 %v315
  %v1314 = vpop.f32.mrb[0].mxu0
  %v1315 = vadd.f32 %v1218, %v1314
  %v1316 = vpop.f32.mrb[0].mxu0
  %v1317 = vpop.f32.mrb[0].mxu0
  %v1318 = vadd.f32 %v1221, %v1317
  %v1319 = vpop.f32.mrb[0].mxu0
  %1320 = vmatprep.mubr.bf16.mxu0 %v340
  %1321 = vmatmul.mubr.bf16.gmra.mrb[0].mxu0 %v316
  %v1322 = vpop.f32.mrb[0].mxu0
  %v1323 = vadd.f32 %v1226, %v1322
  %v1324 = vpop.f32.mrb[0].mxu0
  %v1325 = vpop.f32.mrb[0].mxu0
  %v1326 = vadd.f32 %v1229, %v1325
  %v1327 = vpop.f32.mrb[0].mxu0
  %1328 = vmatprep.mubr.bf16.mxu0 %v341
  %1329 = vmatmul.mubr.bf16.gmra.mrb[0].mxu0 %v317
  %v1330 = vpop.f32.mrb[0].mxu0
  %v1331 = vadd.f32 %v1234, %v1330
  %v1332 = vpop.f32.mrb[0].mxu0
  %v1333 = vpop.f32.mrb[0].mxu0
  %v1334 = vadd.f32 %v1237, %v1333
  %v1335 = vpop.f32.mrb[0].mxu0
  %1336 = vdwg.mxu0
  %1337 = vmatprep.subr.bf16.mxu0 0
  %1338 = vmatpush1.bf16.msra.mxu0 %v869
  %1339 = vmatprep.subr.bf16.mxu0 0
  %1340 = vmatpush1.bf16.msra.mxu0 %v870
  %1341 = vmatprep.subr.bf16.mxu0 0
  %1342 = vmatpush1.bf16.msra.mxu0 %v871
  %1343 = vmatprep.subr.bf16.mxu0 0
  %1344 = vmatpush1.bf16.msra.mxu0 %v872
  %1345 = vmatprep.subr.bf16.mxu0 0
  %1346 = vmatpush1.bf16.msra.mxu0 %v873
  %1347 = vmatprep.subr.bf16.mxu0 0
  %1348 = vmatpush1.bf16.msra.mxu0 %v874
  %1349 = vmatprep.subr.bf16.mxu0 0
  %1350 = vmatpush1.bf16.msra.mxu0 %v875
  %1351 = vmatprep.subr.bf16.mxu0 0
  %1352 = vmatpush1.bf16.msra.mxu0 %v876
  %1353 = vmatprep.subr.bf16.mxu0 0
  %1354 = vmatpush1.bf16.msra.mxu0 0
  %1355 = vmatprep.subr.bf16.mxu0 0
  %1356 = vmatpush1.bf16.msra.mxu0 0
  %1357 = vmatprep.subr.bf16.mxu0 0
  %1358 = vmatpush1.bf16.msra.mxu0 0
  %1359 = vmatprep.subr.bf16.mxu0 0
  %1360 = vmatpush1.bf16.msra.mxu0 0
  %1361 = vmatprep.subr.bf16.mxu0 0
  %1362 = vmatpush1.bf16.msra.mxu0 0
  %1363 = vmatprep.subr.bf16.mxu0 0
  %1364 = vmatpush1.bf16.msra.mxu0 0
  %1365 = vmatprep.subr.bf16.mxu0 0
  %1366 = vmatpush1.bf16.msra.mxu0 0
  %1367 = vmatprep.subr.bf16.mxu0 0
  %1368 = vmatpush1.bf16.msra.mxu0 0
  %1369 = vmatprep.mubr.bf16.mxu0 0
  %1370 = vmatmul.mubr.bf16.gmra.mrb[0].mxu0 %v358
  %v1371 = vpop.f32.mrb[0].mxu0
  %v1372 = vadd.f32 %v1275, %v1371
  %v1373 = vpop.f32.mrb[0].mxu0
  %v1374 = vpop.f32.mrb[0].mxu0
  %v1375 = vadd.f32 %v1278, %v1374
  %v1376 = vpop.f32.mrb[0].mxu0
  %1377 = vmatprep.mubr.bf16.mxu0 0
  %1378 = vmatmul.mubr.bf16.gmra.mrb[0].mxu0 %v359
  %v1379 = vpop.f32.mrb[0].mxu0
  %v1380 = vadd.f32 %v1283, %v1379
  %v1381 = vpop.f32.mrb[0].mxu0
  %v1382 = vpop.f32.mrb[0].mxu0
  %v1383 = vadd.f32 %v1286, %v1382
  %v1384 = vpop.f32.mrb[0].mxu0
  %1385 = vmatprep.mubr.bf16.mxu0 0
  %1386 = vmatmul.mubr.bf16.gmra.mrb[0].mxu0 %v360
  %v1387 = vpop.f32.mrb[0].mxu0
  %v1388 = vadd.f32 %v1291, %v1387
  %v1389 = vpop.f32.mrb[0].mxu0
  %v1390 = vpop.f32.mrb[0].mxu0
  %v1391 = vadd.f32 %v1294, %v1390
  %v1392 = vpop.f32.mrb[0].mxu0
  %1393 = vmatprep.mubr.bf16.mxu0 0
  %1394 = vmatmul.mubr.bf16.gmra.mrb[0].mxu0 %v361
  %v1395 = vpop.f32.mrb[0].mxu0
  %v1396 = vadd.f32 %v1299, %v1395
  %v1397 = vpop.f32.mrb[0].mxu0
  %v1398 = vpop.f32.mrb[0].mxu0
  %v1399 = vadd.f32 %v1302, %v1398
  %v1400 = vpop.f32.mrb[0].mxu0
  %1401 = vmatprep.mubr.bf16.mxu0 0
  %1402 = vmatmul.mubr.bf16.gmra.mrb[0].mxu0 %v362
  %v1403 = vpop.f32.mrb[0].mxu0
  %v1404 = vadd.f32 %v1307, %v1403
  %v1405 = vpop.f32.mrb[0].mxu0
  %v1406 = vpop.f32.mrb[0].mxu0
  %v1407 = vadd.f32 %v1310, %v1406
  %v1408 = vpop.f32.mrb[0].mxu0
  %1409 = vmatprep.mubr.bf16.mxu0 0
  %1410 = vmatmul.mubr.bf16.gmra.mrb[0].mxu0 %v363
  %v1411 = vpop.f32.mrb[0].mxu0
  %v1412 = vadd.f32 %v1315, %v1411
  %v1413 = vpop.f32.mrb[0].mxu0
  %v1414 = vpop.f32.mrb[0].mxu0
  %v1415 = vadd.f32 %v1318, %v1414
  %v1416 = vpop.f32.mrb[0].mxu0
  %1417 = vmatprep.mubr.bf16.mxu0 0
  %1418 = vmatmul.mubr.bf16.gmra.mrb[0].mxu0 %v364
  %v1419 = vpop.f32.mrb[0].mxu0
  %v1420 = vadd.f32 %v1323, %v1419
  %v1421 = vpop.f32.mrb[0].mxu0
  %v1422 = vpop.f32.mrb[0].mxu0
  %v1423 = vadd.f32 %v1326, %v1422
  %v1424 = vpop.f32.mrb[0].mxu0
  %1425 = vmatprep.mubr.bf16.mxu0 0
  %1426 = vmatmul.mubr.bf16.gmra.mrb[0].mxu0 %v365
  %v1427 = vpop.f32.mrb[0].mxu0
  %v1428 = vadd.f32 %v1331, %v1427
  %v1429 = vpop.f32.mrb[0].mxu0
  %v1430 = vpop.f32.mrb[0].mxu0
  %v1431 = vadd.f32 %v1334, %v1430
  %v1432 = vpop.f32.mrb[0].mxu0
  %1433 = vdwg.mxu0
  %1434 = vst [vmem:[%s7] sm:$0xff] %v1372
  %1435 = vst [vmem:[%s7 + $0x8] sm:$0xff] %v1375
  %1436 = vst [vmem:[%s7 + $0x10] sm:$0xff] %v1380
  %1437 = vst [vmem:[%s7 + $0x18] sm:$0xff] %v1383
  %1438 = vst [vmem:[%s7 + $0x20] sm:$0xff] %v1388
  %1439 = vst [vmem:[%s7 + $0x28] sm:$0xff] %v1391
  %1440 = vst [vmem:[%s7 + $0x30] sm:$0xff] %v1396
  %1441 = vst [vmem:[%s7 + $0x38] sm:$0xff] %v1399
  %1442 = vst [vmem:[%s7 + $0x40] sm:$0xff] %v1404
  %1443 = vst [vmem:[%s7 + $0x48] sm:$0xff] %v1407
  %1444 = vst [vmem:[%s7 + $0x50] sm:$0xff] %v1412
  %1445 = vst [vmem:[%s7 + $0x58] sm:$0xff] %v1415
  %1446 = vst [vmem:[%s7 + $0x60] sm:$0xff] %v1420
  %1447 = vst [vmem:[%s7 + $0x68] sm:$0xff] %v1423
  %1448 = vst [vmem:[%s7 + $0x70] sm:$0xff] %v1428
  %1449 = vst [vmem:[%s7 + $0x78] sm:$0xff] %v1431
  %v1450 = vadd.f32 %v1372, %v1375
  %v1451 = vadd.f32 %v1450, %v1380
  %v1452 = vadd.f32 %v1451, %v1383
  %v1453 = vadd.f32 %v1452, %v1388
  %v1454 = vadd.f32 %v1453, %v1391
  %v1455 = vadd.f32 %v1454, %v1396
  %v1456 = vadd.f32 %v1455, %v1399
  %v1457 = vadd.f32 %v1456, %v1404
  %v1458 = vadd.f32 %v1457, %v1407
  %v1459 = vadd.f32 %v1458, %v1412
  %v1460 = vadd.f32 %v1459, %v1415
  %v1461 = vadd.f32 %v1460, %v1420
  %v1462 = vadd.f32 %v1461, %v1423
  %v1463 = vadd.f32 %v1462, %v1428
  %v1464 = vadd.f32 %v1463, %v1431
  %v1465 = vrot.slane %v1464, 4
  %v1466 = vadd.f32 %v1464, %v1465
  %v1467 = vrot.slane %v1466, 2
  %v1468 = vadd.f32 %v1466, %v1467
  %v1469 = vrot.slane %v1468, 1
  %v1470 = vadd.f32 %v1468, %v1469
  %v1471 = vrcp.pop 128.0
  %v1472 = vmul.f32 %v1470, %v1471
  %v1473 = vsub.f32 %v1372, %v1472
  %v1474 = vsub.f32 %v1375, %v1472
  %v1475 = vsub.f32 %v1380, %v1472
  %v1476 = vsub.f32 %v1383, %v1472
  %v1477 = vsub.f32 %v1388, %v1472
  %v1478 = vsub.f32 %v1391, %v1472
  %v1479 = vsub.f32 %v1396, %v1472
  %v1480 = vsub.f32 %v1399, %v1472
  %v1481 = vsub.f32 %v1404, %v1472
  %v1482 = vsub.f32 %v1407, %v1472
  %v1483 = vsub.f32 %v1412, %v1472
  %v1484 = vsub.f32 %v1415, %v1472
  %v1485 = vsub.f32 %v1420, %v1472
  %v1486 = vsub.f32 %v1423, %v1472
  %v1487 = vsub.f32 %v1428, %v1472
  %v1488 = vsub.f32 %v1431, %v1472
  %v1489 = vmul.f32 %v1473, %v1473
  %v1490 = vmul.f32 %v1474, %v1474
  %v1491 = vmul.f32 %v1475, %v1475
  %v1492 = vmul.f32 %v1476, %v1476
  %v1493 = vmul.f32 %v1477, %v1477
  %v1494 = vmul.f32 %v1478, %v1478
  %v1495 = vmul.f32 %v1479, %v1479
  %v1496 = vmul.f32 %v1480, %v1480
  %v1497 = vmul.f32 %v1481, %v1481
  %v1498 = vmul.f32 %v1482, %v1482
  %v1499 = vmul.f32 %v1483, %v1483
  %v1500 = vmul.f32 %v1484, %v1484
  %v1501 = vmul.f32 %v1485, %v1485
  %v1502 = vmul.f32 %v1486, %v1486
  %v1503 = vmul.f32 %v1487, %v1487
  %v1504 = vmul.f32 %v1488, %v1488
  %v1505 = vadd.f32 %v1489, %v1490
  %v1506 = vadd.f32 %v1505, %v1491
  %v1507 = vadd.f32 %v1506, %v1492
  %v1508 = vadd.f32 %v1507, %v1493
  %v1509 = vadd.f32 %v1508, %v1494
  %v1510 = vadd.f32 %v1509, %v1495
  %v1511 = vadd.f32 %v1510, %v1496
  %v1512 = vadd.f32 %v1511, %v1497
  %v1513 = vadd.f32 %v1512, %v1498
  %v1514 = vadd.f32 %v1513, %v1499
  %v1515 = vadd.f32 %v1514, %v1500
  %v1516 = vadd.f32 %v1515, %v1501
  %v1517 = vadd.f32 %v1516, %v1502
  %v1518 = vadd.f32 %v1517, %v1503
  %v1519 = vadd.f32 %v1518, %v1504
  %v1520 = vrot.slane %v1519, 4
  %v1521 = vadd.f32 %v1519, %v1520
  %v1522 = vrot.slane %v1521, 2
  %v1523 = vadd.f32 %v1521, %v1522
  %v1524 = vrot.slane %v1523, 1
  %v1525 = vadd.f32 %v1523, %v1524
  %v1526 = vmul.f32 %v1525, %v1471
  %v1527 = vld [vmem:[%s5] sm:$0x1]
  %v1528 = vadd.f32 %v1526, 0.8
  %v1529 = vrsqrt.pop %v1528
  %v1530 = vmul.f32 %v1527, %v1529
  %1531 = vst [vmem:[%s8] sm:$0x1] %v1530
  %v1532 = vld [vmem:[%s6] sm:$0x1]
  %v1533 = vmul.f32 %v1472, %v1530
  %v1534 = vsub.f32 %v1532, %v1533
  %1535 = vst [vmem:[%s9] sm:$0x1] %v1534
  // Predicated region
  $region30: #{generator_forward.5} parent=0 // pred_check
    _
  $region31: #{generator_forward.5} parent=0 // pred_check_branch
    %1537 = sbr.rel (0) target = $region33
  $region32: #{generator_forward.5} parent=0 // pred_region
    _
  $region33: #{generator_forward.5} parent=0 // pred_fallthru
    _
  // Predicated region
  $region34: #{generator_forward.5} parent=0 // pred_check
    _
  $region35: #{generator_forward.5} parent=0 // pred_check_branch
    %1539 = sbr.rel (0) target = $region37
  $region36: #{generator_forward.5} parent=0 // pred_region
    _
  $region37: #{generator_forward.5} parent=0 // pred_fallthru
    _
  // Predicated region
  $region38: #{generator_forward.5} parent=0 // pred_check
    _
  $region39: #{generator_forward.5} parent=0 // pred_check_branch
    %1541 = sbr.rel (0) target = $region41
  $region40: #{generator_forward.5} parent=0 // pred_region
    _
  $region41: #{generator_forward.5} parent=0 // pred_fallthru
    _
  // Predicated region
  $region42: #{generator_forward.5} parent=0 // pred_check
    _
  $region43: #{generator_forward.5} parent=0 // pred_check_branch
    %1543 = sbr.rel (0) target = $region45
  $region44: #{generator_forward.5} parent=0 // pred_region
    _
  $region45: #{generator_forward.5} parent=0 // pred_fallthru
    _
  // Predicated region
  $region46: #{generator_forward.5} parent=0 // pred_check
    _
  $region47: #{generator_forward.5} parent=0 // pred_check_branch
    %1545 = sbr.rel (0) target = $region49
  $region48: #{generator_forward.5} parent=0 // pred_region
    _
  $region49: #{generator_forward.5} parent=0 // pred_fallthru
    _
  // Predicated region
  $region50: #{generator_forward.5} parent=0 // pred_check
    _
  $region51: #{generator_forward.5} parent=0 // pred_check_branch
    %1547 = sbr.rel (0) target = $region53
  $region52: #{generator_forward.5} parent=0 // pred_region
    _
  $region53: #{generator_forward.5} parent=0 // pred_fallthru
    _

// kernel: generator_forward.6
$region0: #{generator_forward.6}
  #allocation0 [shape = 'u32[]', space=smem, size = 0x4, offset = 0x4, fixed_abs, tag = 'smem constant byte address 0x4 - core index']
  #allocation1 [shape = 'u32[144,128]{1,0:T(1,128)}', space=vmem, size = 0x12000, scoped, tag = 'internal scratch']
  #allocation2 [shape = 'f32[2,18,18,128]{3,2,1,0:T(8,128)}', space=vmem, size = 0x6c000, scoped, tag = 'scratch operand']
  %s0 = inlined_call_operand.vmem [shape: f32[2,16,16,128], index: 0, kind: input, shape index: {}]
  %s1 = inlined_call_operand.vmem [shape: f32[1,128], index: 1, kind: input, shape index: {}]
  %s2 = inlined_call_operand.vmem [shape: f32[1,128], index: 2, kind: input, shape index: {}]
  %s3 = inlined_call_operand.vmem [shape: bf16[1152,128], index: 3, kind: input, shape index: {}]
  %s4 = inlined_call_operand.vmem [shape: f32[1,128], index: 4, kind: input, shape index: {}]
  %s5 = inlined_call_operand.vmem [shape: f32[1,128], index: 5, kind: input, shape index: {}]
  %s6 = inlined_call_operand.vmem [shape: f32[1,128], index: 6, kind: input, shape index: {}]
  %s7 = inlined_call_operand.vmem [shape: f32[512,128], index: 7, kind: output, shape index: {0}]
  %s8 = inlined_call_operand.vmem [shape: f32[1,128], index: 8, kind: output, shape index: {1}]
  %s9 = inlined_call_operand.vmem [shape: f32[1,128], index: 9, kind: output, shape index: {2}]
  %10 = xla_tuple %s7, %s8, %s9
  %s11 = sld [smem:[#allocation0]]
  $region54: #{generator_forward.6} parent=0
    _
  %s13 = ssub.s32 1, %s11
  %s14 = scalar_select 0, %s13, %s11
  // Predicated region
  $region2: #{generator_forward.6} parent=0 // pred_check
    _
  $region3: #{generator_forward.6} parent=0 // pred_check_branch
    %16 = sbr.rel (0) target = $region5
  $region4: #{generator_forward.6} parent=0 // pred_region
    _
  $region5: #{generator_forward.6} parent=0 // pred_fallthru
    _
  // Predicated region
  $region6: #{generator_forward.6} parent=0 // pred_check
    _
  $region7: #{generator_forward.6} parent=0 // pred_check_branch
    %18 = sbr.rel (0) target = $region9
  $region8: #{generator_forward.6} parent=0 // pred_region
    _
  $region9: #{generator_forward.6} parent=0 // pred_fallthru
    _
  // Predicated region
  $region10: #{generator_forward.6} parent=0 // pred_check
    _
  $region11: #{generator_forward.6} parent=0 // pred_check_branch
    %20 = sbr.rel (0) target = $region13
  $region12: #{generator_forward.6} parent=0 // pred_region
    _
  $region13: #{generator_forward.6} parent=0 // pred_fallthru
    _
  // Predicated region
  $region14: #{generator_forward.6} parent=0 // pred_check
    _
  $region15: #{generator_forward.6} parent=0 // pred_check_branch
    %22 = sbr.rel (0) target = $region17
  $region16: #{generator_forward.6} parent=0 // pred_region
    _
  $region17: #{generator_forward.6} parent=0 // pred_fallthru
    _
  // Predicated region
  $region18: #{generator_forward.6} parent=0 // pred_check
    _
  $region19: #{generator_forward.6} parent=0 // pred_check_branch
    %24 = sbr.rel (0) target = $region21
  $region20: #{generator_forward.6} parent=0 // pred_region
    _
  $region21: #{generator_forward.6} parent=0 // pred_fallthru
    _
  // Predicated region
  $region22: #{generator_forward.6} parent=0 // pred_check
    _
  $region23: #{generator_forward.6} parent=0 // pred_check_branch
    %26 = sbr.rel (0) target = $region25
  $region24: #{generator_forward.6} parent=0 // pred_region
    _
  $region25: #{generator_forward.6} parent=0 // pred_fallthru
    _
  // Predicated region
  $region26: #{generator_forward.6} parent=0 // pred_check
    _
  $region27: #{generator_forward.6} parent=0 // pred_check_branch
    %28 = sbr.rel (0) target = $region29
  $region28: #{generator_forward.6} parent=0 // pred_region
    _
  $region29: #{generator_forward.6} parent=0 // pred_fallthru
    _
  %v30 = vld [vmem:[%s0] sm:$0xff]
  %v31 = vld [vmem:[%s0 + $0x8] sm:$0xff]
  %v32 = vld [vmem:[%s0 + $0x10] sm:$0xff]
  %v33 = vld [vmem:[%s0 + $0x18] sm:$0xff]
  %v34 = vld [vmem:[%s0 + $0x20] sm:$0xff]
  %v35 = vld [vmem:[%s0 + $0x28] sm:$0xff]
  %v36 = vld [vmem:[%s0 + $0x30] sm:$0xff]
  %v37 = vld [vmem:[%s0 + $0x38] sm:$0xff]
  %v38 = vld [vmem:[%s0 + $0x40] sm:$0xff]
  %v39 = vld [vmem:[%s0 + $0x48] sm:$0xff]
  %v40 = vld [vmem:[%s0 + $0x50] sm:$0xff]
  %v41 = vld [vmem:[%s0 + $0x58] sm:$0xff]
  %v42 = vld [vmem:[%s0 + $0x60] sm:$0xff]
  %v43 = vld [vmem:[%s0 + $0x68] sm:$0xff]
  %v44 = vld [vmem:[%s0 + $0x70] sm:$0xff]
  %v45 = vld [vmem:[%s0 + $0x78] sm:$0xff]
  %v46 = vld [vmem:[%s0 + $0x80] sm:$0xff]
  %v47 = vld [vmem:[%s0 + $0x88] sm:$0xff]
  %v48 = vld [vmem:[%s0 + $0x90] sm:$0xff]
  %v49 = vld [vmem:[%s0 + $0x98] sm:$0xff]
  %v50 = vld [vmem:[%s0 + $0xa0] sm:$0xff]
  %v51 = vld [vmem:[%s0 + $0xa8] sm:$0xff]
  %v52 = vld [vmem:[%s0 + $0xb0] sm:$0xff]
  %v53 = vld [vmem:[%s0 + $0xb8] sm:$0xff]
  %v54 = vld [vmem:[%s0 + $0xc0] sm:$0xff]
  %v55 = vld [vmem:[%s0 + $0xc8] sm:$0xff]
  %v56 = vld [vmem:[%s0 + $0xd0] sm:$0xff]
  %v57 = vld [vmem:[%s0 + $0xd8] sm:$0xff]
  %v58 = vld [vmem:[%s0 + $0xe0] sm:$0xff]
  %v59 = vld [vmem:[%s0 + $0xe8] sm:$0xff]
  %v60 = vld [vmem:[%s0 + $0xf0] sm:$0xff]
  %v61 = vld [vmem:[%s0 + $0xf8] sm:$0xff]
  %v62 = vld [vmem:[%s0 + $0x100] sm:$0xff]
  %v63 = vld [vmem:[%s0 + $0x108] sm:$0xff]
  %v64 = vld [vmem:[%s0 + $0x110] sm:$0xff]
  %v65 = vld [vmem:[%s0 + $0x118] sm:$0xff]
  %v66 = vld [vmem:[%s0 + $0x120] sm:$0xff]
  %v67 = vld [vmem:[%s0 + $0x128] sm:$0xff]
  %v68 = vld [vmem:[%s0 + $0x130] sm:$0xff]
  %v69 = vld [vmem:[%s0 + $0x138] sm:$0xff]
  %v70 = vld [vmem:[%s0 + $0x140] sm:$0xff]
  %v71 = vld [vmem:[%s0 + $0x148] sm:$0xff]
  %v72 = vld [vmem:[%s0 + $0x150] sm:$0xff]
  %v73 = vld [vmem:[%s0 + $0x158] sm:$0xff]
  %v74 = vld [vmem:[%s0 + $0x160] sm:$0xff]
  %v75 = vld [vmem:[%s0 + $0x168] sm:$0xff]
  %v76 = vld [vmem:[%s0 + $0x170] sm:$0xff]
  %v77 = vld [vmem:[%s0 + $0x178] sm:$0xff]
  %v78 = vld [vmem:[%s0 + $0x180] sm:$0xff]
  %v79 = vld [vmem:[%s0 + $0x188] sm:$0xff]
  %v80 = vld [vmem:[%s0 + $0x190] sm:$0xff]
  %v81 = vld [vmem:[%s0 + $0x198] sm:$0xff]
  %v82 = vld [vmem:[%s0 + $0x1a0] sm:$0xff]
  %v83 = vld [vmem:[%s0 + $0x1a8] sm:$0xff]
  %v84 = vld [vmem:[%s0 + $0x1b0] sm:$0xff]
  %v85 = vld [vmem:[%s0 + $0x1b8] sm:$0xff]
  %v86 = vld [vmem:[%s0 + $0x1c0] sm:$0xff]
  %v87 = vld [vmem:[%s0 + $0x1c8] sm:$0xff]
  %v88 = vld [vmem:[%s0 + $0x1d0] sm:$0xff]
  %v89 = vld [vmem:[%s0 + $0x1d8] sm:$0xff]
  %v90 = vld [vmem:[%s0 + $0x1e0] sm:$0xff]
  %v91 = vld [vmem:[%s0 + $0x1e8] sm:$0xff]
  %v92 = vld [vmem:[%s0 + $0x1f0] sm:$0xff]
  %v93 = vld [vmem:[%s0 + $0x1f8] sm:$0xff]
  %v94 = vld [vmem:[%s1] sm:$0x1]
  %v96 = vlaneseq
  %v97 = vshrl.u32 %v96, 7
  %v98 = vsub.s32 0, %v97
  %v99 = vrot.slane %v94, %v98
  %v101 = vmul.f32 %v30, %v99
  %v102 = vmul.f32 %v31, %v99
  %v103 = vmul.f32 %v32, %v99
  %v104 = vmul.f32 %v33, %v99
  %v105 = vmul.f32 %v34, %v99
  %v106 = vmul.f32 %v35, %v99
  %v107 = vmul.f32 %v36, %v99
  %v108 = vmul.f32 %v37, %v99
  %v109 = vmul.f32 %v38, %v99
  %v110 = vmul.f32 %v39, %v99
  %v111 = vmul.f32 %v40, %v99
  %v112 = vmul.f32 %v41, %v99
  %v113 = vmul.f32 %v42, %v99
  %v114 = vmul.f32 %v43, %v99
  %v115 = vmul.f32 %v44, %v99
  %v116 = vmul.f32 %v45, %v99
  %v117 = vmul.f32 %v46, %v99
  %v118 = vmul.f32 %v47, %v99
  %v119 = vmul.f32 %v48, %v99
  %v120 = vmul.f32 %v49, %v99
  %v121 = vmul.f32 %v50, %v99
  %v122 = vmul.f32 %v51, %v99
  %v123 = vmul.f32 %v52, %v99
  %v124 = vmul.f32 %v53, %v99
  %v125 = vmul.f32 %v54, %v99
  %v126 = vmul.f32 %v55, %v99
  %v127 = vmul.f32 %v56, %v99
  %v128 = vmul.f32 %v57, %v99
  %v129 = vmul.f32 %v58, %v99
  %v130 = vmul.f32 %v59, %v99
  %v131 = vmul.f32 %v60, %v99
  %v132 = vmul.f32 %v61, %v99
  %v133 = vmul.f32 %v62, %v99
  %v134 = vmul.f32 %v63, %v99
  %v135 = vmul.f32 %v64, %v99
  %v136 = vmul.f32 %v65, %v99
  %v137 = vmul.f32 %v66, %v99
  %v138 = vmul.f32 %v67, %v99
  %v139 = vmul.f32 %v68, %v99
  %v140 = vmul.f32 %v69, %v99
  %v141 = vmul.f32 %v70, %v99
  %v142 = vmul.f32 %v71, %v99
  %v143 = vmul.f32 %v72, %v99
  %v144 = vmul.f32 %v73, %v99
  %v145 = vmul.f32 %v74, %v99
  %v146 = vmul.f32 %v75, %v99
  %v147 = vmul.f32 %v76, %v99
  %v148 = vmul.f32 %v77, %v99
  %v149 = vmul.f32 %v78, %v99
  %v150 = vmul.f32 %v79, %v99
  %v151 = vmul.f32 %v80, %v99
  %v152 = vmul.f32 %v81, %v99
  %v153 = vmul.f32 %v82, %v99
  %v154 = vmul.f32 %v83, %v99
  %v155 = vmul.f32 %v84, %v99
  %v156 = vmul.f32 %v85, %v99
  %v157 = vmul.f32 %v86, %v99
  %v158 = vmul.f32 %v87, %v99
  %v159 = vmul.f32 %v88, %v99
  %v160 = vmul.f32 %v89, %v99
  %v161 = vmul.f32 %v90, %v99
  %v162 = vmul.f32 %v91, %v99
  %v163 = vmul.f32 %v92, %v99
  %v164 = vmul.f32 %v93, %v99
  %v165 = vld [vmem:[%s2] sm:$0x1]
  %v167 = vlaneseq
  %v168 = vshrl.u32 %v167, 7
  %v169 = vsub.s32 0, %v168
  %v170 = vrot.slane %v165, %v169
  %v172 = vadd.f32 %v101, %v170
  %v173 = vadd.f32 %v102, %v170
  %v174 = vadd.f32 %v103, %v170
  %v175 = vadd.f32 %v104, %v170
  %v176 = vadd.f32 %v105, %v170
  %v177 = vadd.f32 %v106, %v170
  %v178 = vadd.f32 %v107, %v170
  %v179 = vadd.f32 %v108, %v170
  %v180 = vadd.f32 %v109, %v170
  %v181 = vadd.f32 %v110, %v170
  %v182 = vadd.f32 %v111, %v170
  %v183 = vadd.f32 %v112, %v170
  %v184 = vadd.f32 %v113, %v170
  %v185 = vadd.f32 %v114, %v170
  %v186 = vadd.f32 %v115, %v170
  %v187 = vadd.f32 %v116, %v170
  %v188 = vadd.f32 %v117, %v170
  %v189 = vadd.f32 %v118, %v170
  %v190 = vadd.f32 %v119, %v170
  %v191 = vadd.f32 %v120, %v170
  %v192 = vadd.f32 %v121, %v170
  %v193 = vadd.f32 %v122, %v170
  %v194 = vadd.f32 %v123, %v170
  %v195 = vadd.f32 %v124, %v170
  %v196 = vadd.f32 %v125, %v170
  %v197 = vadd.f32 %v126, %v170
  %v198 = vadd.f32 %v127, %v170
  %v199 = vadd.f32 %v128, %v170
  %v200 = vadd.f32 %v129, %v170
  %v201 = vadd.f32 %v130, %v170
  %v202 = vadd.f32 %v131, %v170
  %v203 = vadd.f32 %v132, %v170
  %v204 = vadd.f32 %v133, %v170
  %v205 = vadd.f32 %v134, %v170
  %v206 = vadd.f32 %v135, %v170
  %v207 = vadd.f32 %v136, %v170
  %v208 = vadd.f32 %v137, %v170
  %v209 = vadd.f32 %v138, %v170
  %v210 = vadd.f32 %v139, %v170
  %v211 = vadd.f32 %v140, %v170
  %v212 = vadd.f32 %v141, %v170
  %v213 = vadd.f32 %v142, %v170
  %v214 = vadd.f32 %v143, %v170
  %v215 = vadd.f32 %v144, %v170
  %v216 = vadd.f32 %v145, %v170
  %v217 = vadd.f32 %v146, %v170
  %v218 = vadd.f32 %v147, %v170
  %v219 = vadd.f32 %v148, %v170
  %v220 = vadd.f32 %v149, %v170
  %v221 = vadd.f32 %v150, %v170
  %v222 = vadd.f32 %v151, %v170
  %v223 = vadd.f32 %v152, %v170
  %v224 = vadd.f32 %v153, %v170
  %v225 = vadd.f32 %v154, %v170
  %v226 = vadd.f32 %v155, %v170
  %v227 = vadd.f32 %v156, %v170
  %v228 = vadd.f32 %v157, %v170
  %v229 = vadd.f32 %v158, %v170
  %v230 = vadd.f32 %v159, %v170
  %v231 = vadd.f32 %v160, %v170
  %v232 = vadd.f32 %v161, %v170
  %v233 = vadd.f32 %v162, %v170
  %v234 = vadd.f32 %v163, %v170
  %v235 = vadd.f32 %v164, %v170
  %vm236 = vcmp.ge.f32.partialorder %v172, 0.0
  %vm237 = vcmp.ge.f32.partialorder %v173, 0.0
  %vm238 = vcmp.ge.f32.partialorder %v174, 0.0
  %vm239 = vcmp.ge.f32.partialorder %v175, 0.0
  %vm240 = vcmp.ge.f32.partialorder %v176, 0.0
  %vm241 = vcmp.ge.f32.partialorder %v177, 0.0
  %vm242 = vcmp.ge.f32.partialorder %v178, 0.0
  %vm243 = vcmp.ge.f32.partialorder %v179, 0.0
  %vm244 = vcmp.ge.f32.partialorder %v180, 0.0
  %vm245 = vcmp.ge.f32.partialorder %v181, 0.0
  %vm246 = vcmp.ge.f32.partialorder %v182, 0.0
  %vm247 = vcmp.ge.f32.partialorder %v183, 0.0
  %vm248 = vcmp.ge.f32.partialorder %v184, 0.0
  %vm249 = vcmp.ge.f32.partialorder %v185, 0.0
  %vm250 = vcmp.ge.f32.partialorder %v186, 0.0
  %vm251 = vcmp.ge.f32.partialorder %v187, 0.0
  %vm252 = vcmp.ge.f32.partialorder %v188, 0.0
  %vm253 = vcmp.ge.f32.partialorder %v189, 0.0
  %vm254 = vcmp.ge.f32.partialorder %v190, 0.0
  %vm255 = vcmp.ge.f32.partialorder %v191, 0.0
  %vm256 = vcmp.ge.f32.partialorder %v192, 0.0
  %vm257 = vcmp.ge.f32.partialorder %v193, 0.0
  %vm258 = vcmp.ge.f32.partialorder %v194, 0.0
  %vm259 = vcmp.ge.f32.partialorder %v195, 0.0
  %vm260 = vcmp.ge.f32.partialorder %v196, 0.0
  %vm261 = vcmp.ge.f32.partialorder %v197, 0.0
  %vm262 = vcmp.ge.f32.partialorder %v198, 0.0
  %vm263 = vcmp.ge.f32.partialorder %v199, 0.0
  %vm264 = vcmp.ge.f32.partialorder %v200, 0.0
  %vm265 = vcmp.ge.f32.partialorder %v201, 0.0
  %vm266 = vcmp.ge.f32.partialorder %v202, 0.0
  %vm267 = vcmp.ge.f32.partialorder %v203, 0.0
  %vm268 = vcmp.ge.f32.partialorder %v204, 0.0
  %vm269 = vcmp.ge.f32.partialorder %v205, 0.0
  %vm270 = vcmp.ge.f32.partialorder %v206, 0.0
  %vm271 = vcmp.ge.f32.partialorder %v207, 0.0
  %vm272 = vcmp.ge.f32.partialorder %v208, 0.0
  %vm273 = vcmp.ge.f32.partialorder %v209, 0.0
  %vm274 = vcmp.ge.f32.partialorder %v210, 0.0
  %vm275 = vcmp.ge.f32.partialorder %v211, 0.0
  %vm276 = vcmp.ge.f32.partialorder %v212, 0.0
  %vm277 = vcmp.ge.f32.partialorder %v213, 0.0
  %vm278 = vcmp.ge.f32.partialorder %v214, 0.0
  %vm279 = vcmp.ge.f32.partialorder %v215, 0.0
  %vm280 = vcmp.ge.f32.partialorder %v216, 0.0
  %vm281 = vcmp.ge.f32.partialorder %v217, 0.0
  %vm282 = vcmp.ge.f32.partialorder %v218, 0.0
  %vm283 = vcmp.ge.f32.partialorder %v219, 0.0
  %vm284 = vcmp.ge.f32.partialorder %v220, 0.0
  %vm285 = vcmp.ge.f32.partialorder %v221, 0.0
  %vm286 = vcmp.ge.f32.partialorder %v222, 0.0
  %vm287 = vcmp.ge.f32.partialorder %v223, 0.0
  %vm288 = vcmp.ge.f32.partialorder %v224, 0.0
  %vm289 = vcmp.ge.f32.partialorder %v225, 0.0
  %vm290 = vcmp.ge.f32.partialorder %v226, 0.0
  %vm291 = vcmp.ge.f32.partialorder %v227, 0.0
  %vm292 = vcmp.ge.f32.partialorder %v228, 0.0
  %vm293 = vcmp.ge.f32.partialorder %v229, 0.0
  %vm294 = vcmp.ge.f32.partialorder %v230, 0.0
  %vm295 = vcmp.ge.f32.partialorder %v231, 0.0
  %vm296 = vcmp.ge.f32.partialorder %v232, 0.0
  %vm297 = vcmp.ge.f32.partialorder %v233, 0.0
  %vm298 = vcmp.ge.f32.partialorder %v234, 0.0
  %vm299 = vcmp.ge.f32.partialorder %v235, 0.0
  %v300 = vmul.f32 %v172, 0.2
  %v301 = vmul.f32 %v173, 0.2
  %v302 = vmul.f32 %v174, 0.2
  %v303 = vmul.f32 %v175, 0.2
  %v304 = vmul.f32 %v176, 0.2
  %v305 = vmul.f32 %v177, 0.2
  %v306 = vmul.f32 %v178, 0.2
  %v307 = vmul.f32 %v179, 0.2
  %v308 = vmul.f32 %v180, 0.2
  %v309 = vmul.f32 %v181, 0.2
  %v310 = vmul.f32 %v182, 0.2
  %v311 = vmul.f32 %v183, 0.2
  %v312 = vmul.f32 %v184, 0.2
  %v313 = vmul.f32 %v185, 0.2
  %v314 = vmul.f32 %v186, 0.2
  %v315 = vmul.f32 %v187, 0.2
  %v316 = vmul.f32 %v188, 0.2
  %v317 = vmul.f32 %v189, 0.2
  %v318 = vmul.f32 %v190, 0.2
  %v319 = vmul.f32 %v191, 0.2
  %v320 = vmul.f32 %v192, 0.2
  %v321 = vmul.f32 %v193, 0.2
  %v322 = vmul.f32 %v194, 0.2
  %v323 = vmul.f32 %v195, 0.2
  %v324 = vmul.f32 %v196, 0.2
  %v325 = vmul.f32 %v197, 0.2
  %v326 = vmul.f32 %v198, 0.2
  %v327 = vmul.f32 %v199, 0.2
  %v328 = vmul.f32 %v200, 0.2
  %v329 = vmul.f32 %v201, 0.2
  %v330 = vmul.f32 %v202, 0.2
  %v331 = vmul.f32 %v203, 0.2
  %v332 = vmul.f32 %v204, 0.2
  %v333 = vmul.f32 %v205, 0.2
  %v334 = vmul.f32 %v206, 0.2
  %v335 = vmul.f32 %v207, 0.2
  %v336 = vmul.f32 %v208, 0.2
  %v337 = vmul.f32 %v209, 0.2
  %v338 = vmul.f32 %v210, 0.2
  %v339 = vmul.f32 %v211, 0.2
  %v340 = vmul.f32 %v212, 0.2
  %v341 = vmul.f32 %v213, 0.2
  %v342 = vmul.f32 %v214, 0.2
  %v343 = vmul.f32 %v215, 0.2
  %v344 = vmul.f32 %v216, 0.2
  %v345 = vmul.f32 %v217, 0.2
  %v346 = vmul.f32 %v218, 0.2
  %v347 = vmul.f32 %v219, 0.2
  %v348 = vmul.f32 %v220, 0.2
  %v349 = vmul.f32 %v221, 0.2
  %v350 = vmul.f32 %v222, 0.2
  %v351 = vmul.f32 %v223, 0.2
  %v352 = vmul.f32 %v224, 0.2
  %v353 = vmul.f32 %v225, 0.2
  %v354 = vmul.f32 %v226, 0.2
  %v355 = vmul.f32 %v227, 0.2
  %v356 = vmul.f32 %v228, 0.2
  %v357 = vmul.f32 %v229, 0.2
  %v358 = vmul.f32 %v230, 0.2
  %v359 = vmul.f32 %v231, 0.2
  %v360 = vmul.f32 %v232, 0.2
  %v361 = vmul.f32 %v233, 0.2
  %v362 = vmul.f32 %v234, 0.2
  %v363 = vmul.f32 %v235, 0.2
  %v364 = vsel %vm236, %v172, %v300
  %v365 = vsel %vm237, %v173, %v301
  %v366 = vsel %vm238, %v174, %v302
  %v367 = vsel %vm239, %v175, %v303
  %v368 = vsel %vm240, %v176, %v304
  %v369 = vsel %vm241, %v177, %v305
  %v370 = vsel %vm242, %v178, %v306
  %v371 = vsel %vm243, %v179, %v307
  %v372 = vsel %vm244, %v180, %v308
  %v373 = vsel %vm245, %v181, %v309
  %v374 = vsel %vm246, %v182, %v310
  %v375 = vsel %vm247, %v183, %v311
  %v376 = vsel %vm248, %v184, %v312
  %v377 = vsel %vm249, %v185, %v313
  %v378 = vsel %vm250, %v186, %v314
  %v379 = vsel %vm251, %v187, %v315
  %v380 = vsel %vm252, %v188, %v316
  %v381 = vsel %vm253, %v189, %v317
  %v382 = vsel %vm254, %v190, %v318
  %v383 = vsel %vm255, %v191, %v319
  %v384 = vsel %vm256, %v192, %v320
  %v385 = vsel %vm257, %v193, %v321
  %v386 = vsel %vm258, %v194, %v322
  %v387 = vsel %vm259, %v195, %v323
  %v388 = vsel %vm260, %v196, %v324
  %v389 = vsel %vm261, %v197, %v325
  %v390 = vsel %vm262, %v198, %v326
  %v391 = vsel %vm263, %v199, %v327
  %v392 = vsel %vm264, %v200, %v328
  %v393 = vsel %vm265, %v201, %v329
  %v394 = vsel %vm266, %v202, %v330
  %v395 = vsel %vm267, %v203, %v331
  %v396 = vsel %vm268, %v204, %v332
  %v397 = vsel %vm269, %v205, %v333
  %v398 = vsel %vm270, %v206, %v334
  %v399 = vsel %vm271, %v207, %v335
  %v400 = vsel %vm272, %v208, %v336
  %v401 = vsel %vm273, %v209, %v337
  %v402 = vsel %vm274, %v210, %v338
  %v403 = vsel %vm275, %v211, %v339
  %v404 = vsel %vm276, %v212, %v340
  %v405 = vsel %vm277, %v213, %v341
  %v406 = vsel %vm278, %v214, %v342
  %v407 = vsel %vm279, %v215, %v343
  %v408 = vsel %vm280, %v216, %v344
  %v409 = vsel %vm281, %v217, %v345
  %v410 = vsel %vm282, %v218, %v346
  %v411 = vsel %vm283, %v219, %v347
  %v412 = vsel %vm284, %v220, %v348
  %v413 = vsel %vm285, %v221, %v349
  %v414 = vsel %vm286, %v222, %v350
  %v415 = vsel %vm287, %v223, %v351
  %v416 = vsel %vm288, %v224, %v352
  %v417 = vsel %vm289, %v225, %v353
  %v418 = vsel %vm290, %v226, %v354
  %v419 = vsel %vm291, %v227, %v355
  %v420 = vsel %vm292, %v228, %v356
  %v421 = vsel %vm293, %v229, %v357
  %v422 = vsel %vm294, %v230, %v358
  %v423 = vsel %vm295, %v231, %v359
  %v424 = vsel %vm296, %v232, %v360
  %v425 = vsel %vm297, %v233, %v361
  %v426 = vsel %vm298, %v234, %v362
  %v427 = vsel %vm299, %v235, %v363
  %428 = vst [vmem:[#allocation2] sm:$0xff] 0.0
  %429 = vst [vmem:[#allocation2 + $0x8] sm:$0xff] 0.0
  %430 = vst [vmem:[#allocation2 + $0x10] sm:$0x3] 0.0
  %431 = vst [vmem:[#allocation2 + $0x18] sm:$0xff] 0.0
  %432 = vst [vmem:[#allocation2 + $0x20] sm:$0xff] 0.0
  %433 = vst [vmem:[#allocation2 + $0x28] sm:$0x3] 0.0
  %434 = vst [vmem:[#allocation2 + $0x30] sm:$0xff] 0.0
  %435 = vst [vmem:[#allocation2 + $0x38] sm:$0xff] 0.0
  %436 = vst [vmem:[#allocation2 + $0x40] sm:$0x3] 0.0
  %437 = vst [vmem:[#allocation2 + $0x48] sm:$0xff] 0.0
  %438 = vst [vmem:[#allocation2 + $0x50] sm:$0xff] 0.0
  %439 = vst [vmem:[#allocation2 + $0x58] sm:$0x3] 0.0
  %440 = vst [vmem:[#allocation2 + $0x60] sm:$0xff] 0.0
  %441 = vst [vmem:[#allocation2 + $0x68] sm:$0xff] 0.0
  %442 = vst [vmem:[#allocation2 + $0x70] sm:$0x3] 0.0
  %443 = vst [vmem:[#allocation2 + $0x78] sm:$0xff] 0.0
  %444 = vst [vmem:[#allocation2 + $0x80] sm:$0xff] 0.0
  %445 = vst [vmem:[#allocation2 + $0x88] sm:$0x3] 0.0
  %446 = vst [vmem:[#allocation2 + $0x90] sm:$0xff] 0.0
  %447 = vst [vmem:[#allocation2 + $0x98] sm:$0xff] 0.0
  %448 = vst [vmem:[#allocation2 + $0xa0] sm:$0x3] 0.0
  %449 = vst [vmem:[#allocation2 + $0xa8] sm:$0xff] 0.0
  %450 = vst [vmem:[#allocation2 + $0xb0] sm:$0xff] 0.0
  %451 = vst [vmem:[#allocation2 + $0xb8] sm:$0x3] 0.0
  %452 = vst [vmem:[#allocation2 + $0xc0] sm:$0xff] 0.0
  %453 = vst [vmem:[#allocation2 + $0xc8] sm:$0xff] 0.0
  %454 = vst [vmem:[#allocation2 + $0xd0] sm:$0x3] 0.0
  %455 = vst [vmem:[#allocation2 + $0xd8] sm:$0xff] 0.0
  %456 = vst [vmem:[#allocation2 + $0xe0] sm:$0xff] 0.0
  %457 = vst [vmem:[#allocation2 + $0xe8] sm:$0x3] 0.0
  %458 = vst [vmem:[#allocation2 + $0xf0] sm:$0xff] 0.0
  %459 = vst [vmem:[#allocation2 + $0xf8] sm:$0xff] 0.0
  %460 = vst [vmem:[#allocation2 + $0x100] sm:$0x3] 0.0
  %461 = vst [vmem:[#allocation2 + $0x108] sm:$0xff] 0.0
  %462 = vst [vmem:[#allocation2 + $0x110] sm:$0xff] 0.0
  %463 = vst [vmem:[#allocation2 + $0x118] sm:$0x3] 0.0
  %464 = vst [vmem:[#allocation2 + $0x120] sm:$0xff] 0.0
  %465 = vst [vmem:[#allocation2 + $0x128] sm:$0xff] 0.0
  %466 = vst [vmem:[#allocation2 + $0x130] sm:$0x3] 0.0
  %467 = vst [vmem:[#allocation2 + $0x138] sm:$0xff] 0.0
  %468 = vst [vmem:[#allocation2 + $0x140] sm:$0xff] 0.0
  %469 = vst [vmem:[#allocation2 + $0x148] sm:$0x3] 0.0
  %470 = vst [vmem:[#allocation2 + $0x150] sm:$0xff] 0.0
  %471 = vst [vmem:[#allocation2 + $0x158] sm:$0xff] 0.0
  %472 = vst [vmem:[#allocation2 + $0x160] sm:$0x3] 0.0
  %473 = vst [vmem:[#allocation2 + $0x168] sm:$0xff] 0.0
  %474 = vst [vmem:[#allocation2 + $0x170] sm:$0xff] 0.0
  %475 = vst [vmem:[#allocation2 + $0x178] sm:$0x3] 0.0
  %476 = vst [vmem:[#allocation2 + $0x180] sm:$0xff] 0.0
  %477 = vst [vmem:[#allocation2 + $0x188] sm:$0xff] 0.0
  %478 = vst [vmem:[#allocation2 + $0x190] sm:$0x3] 0.0
  %479 = vst [vmem:[#allocation2 + $0x198] sm:$0xff] 0.0
  %480 = vst [vmem:[#allocation2 + $0x1a0] sm:$0xff] 0.0
  %481 = vst [vmem:[#allocation2 + $0x1a8] sm:$0x3] 0.0
  %482 = vst [vmem:[#allocation2 + $0x1b0] sm:$0xff] 0.0
  %483 = vst [vmem:[#allocation2 + $0x1b8] sm:$0xff] 0.0
  %484 = vst [vmem:[#allocation2 + $0x1c0] sm:$0x3] 0.0
  %485 = vst [vmem:[#allocation2 + $0x1c8] sm:$0xff] 0.0
  %486 = vst [vmem:[#allocation2 + $0x1d0] sm:$0xff] 0.0
  %487 = vst [vmem:[#allocation2 + $0x1d8] sm:$0x3] 0.0
  %488 = vst [vmem:[#allocation2 + $0x1e0] sm:$0xff] 0.0
  %489 = vst [vmem:[#allocation2 + $0x1e8] sm:$0xff] 0.0
  %490 = vst [vmem:[#allocation2 + $0x1f0] sm:$0x3] 0.0
  %491 = vst [vmem:[#allocation2 + $0x1f8] sm:$0xff] 0.0
  %492 = vst [vmem:[#allocation2 + $0x200] sm:$0xff] 0.0
  %493 = vst [vmem:[#allocation2 + $0x208] sm:$0x3] 0.0
  %494 = vst [vmem:[#allocation2 + $0x210] sm:$0xff] 0.0
  %495 = vst [vmem:[#allocation2 + $0x218] sm:$0xff] 0.0
  %496 = vst [vmem:[#allocation2 + $0x220] sm:$0x3] 0.0
  %497 = vst [vmem:[#allocation2 + $0x228] sm:$0xff] 0.0
  %498 = vst [vmem:[#allocation2 + $0x230] sm:$0xff] 0.0
  %499 = vst [vmem:[#allocation2 + $0x238] sm:$0x3] 0.0
  %500 = vst [vmem:[#allocation2 + $0x240] sm:$0xff] 0.0
  %501 = vst [vmem:[#allocation2 + $0x248] sm:$0xff] 0.0
  %502 = vst [vmem:[#allocation2 + $0x250] sm:$0x3] 0.0
  %503 = vst [vmem:[#allocation2 + $0x258] sm:$0xff] 0.0
  %504 = vst [vmem:[#allocation2 + $0x260] sm:$0xff] 0.0
  %505 = vst [vmem:[#allocation2 + $0x268] sm:$0x3] 0.0
  %506 = vst [vmem:[#allocation2 + $0x270] sm:$0xff] 0.0
  %507 = vst [vmem:[#allocation2 + $0x278] sm:$0xff] 0.0
  %508 = vst [vmem:[#allocation2 + $0x280] sm:$0x3] 0.0
  %509 = vst [vmem:[#allocation2 + $0x288] sm:$0xff] 0.0
  %510 = vst [vmem:[#allocation2 + $0x290] sm:$0xff] 0.0
  %511 = vst [vmem:[#allocation2 + $0x298] sm:$0x3] 0.0
  %512 = vst [vmem:[#allocation2 + $0x2a0] sm:$0xff] 0.0
  %513 = vst [vmem:[#allocation2 + $0x2a8] sm:$0xff] 0.0
  %514 = vst [vmem:[#allocation2 + $0x2b0] sm:$0x3] 0.0
  %515 = vst [vmem:[#allocation2 + $0x2b8] sm:$0xff] 0.0
  %516 = vst [vmem:[#allocation2 + $0x2c0] sm:$0xff] 0.0
  %517 = vst [vmem:[#allocation2 + $0x2c8] sm:$0x3] 0.0
  %518 = vst [vmem:[#allocation2 + $0x2d0] sm:$0xff] 0.0
  %519 = vst [vmem:[#allocation2 + $0x2d8] sm:$0xff] 0.0
  %520 = vst [vmem:[#allocation2 + $0x2e0] sm:$0x3] 0.0
  %521 = vst [vmem:[#allocation2 + $0x2e8] sm:$0xff] 0.0
  %522 = vst [vmem:[#allocation2 + $0x2f0] sm:$0xff] 0.0
  %523 = vst [vmem:[#allocation2 + $0x2f8] sm:$0x3] 0.0
  %524 = vst [vmem:[#allocation2 + $0x300] sm:$0xff] 0.0
  %525 = vst [vmem:[#allocation2 + $0x308] sm:$0xff] 0.0
  %526 = vst [vmem:[#allocation2 + $0x310] sm:$0x3] 0.0
  %527 = vst [vmem:[#allocation2 + $0x318] sm:$0xff] 0.0
  %528 = vst [vmem:[#allocation2 + $0x320] sm:$0xff] 0.0
  %529 = vst [vmem:[#allocation2 + $0x328] sm:$0x3] 0.0
  %530 = vst [vmem:[#allocation2 + $0x330] sm:$0xff] 0.0
  %531 = vst [vmem:[#allocation2 + $0x338] sm:$0xff] 0.0
  %532 = vst [vmem:[#allocation2 + $0x340] sm:$0x3] 0.0
  %533 = vst [vmem:[#allocation2 + $0x348] sm:$0xff] 0.0
  %534 = vst [vmem:[#allocation2 + $0x350] sm:$0xff] 0.0
  %535 = vst [vmem:[#allocation2 + $0x358] sm:$0x3] 0.0
  %s536 = scalar_lea.vmem [#allocation2], 24
  %537 = vst [vmem:[%s536 + $0x1] sm:$0xff] %v364
  %538 = vst [vmem:[%s536 + $0x9] sm:$0xff] %v365
  %539 = vst [vmem:[%s536 + $0x19] sm:$0xff] %v366
  %540 = vst [vmem:[%s536 + $0x21] sm:$0xff] %v367
  %541 = vst [vmem:[%s536 + $0x31] sm:$0xff] %v368
  %542 = vst [vmem:[%s536 + $0x39] sm:$0xff] %v369
  %543 = vst [vmem:[%s536 + $0x49] sm:$0xff] %v370
  %544 = vst [vmem:[%s536 + $0x51] sm:$0xff] %v371
  %545 = vst [vmem:[%s536 + $0x61] sm:$0xff] %v372
  %546 = vst [vmem:[%s536 + $0x69] sm:$0xff] %v373
  %547 = vst [vmem:[%s536 + $0x79] sm:$0xff] %v374
  %548 = vst [vmem:[%s536 + $0x81] sm:$0xff] %v375
  %549 = vst [vmem:[%s536 + $0x91] sm:$0xff] %v376
  %550 = vst [vmem:[%s536 + $0x99] sm:$0xff] %v377
  %551 = vst [vmem:[%s536 + $0xa9] sm:$0xff] %v378
  %552 = vst [vmem:[%s536 + $0xb1] sm:$0xff] %v379
  %553 = vst [vmem:[%s536 + $0xc1] sm:$0xff] %v380
  %554 = vst [vmem:[%s536 + $0xc9] sm:$0xff] %v381
  %555 = vst [vmem:[%s536 + $0xd9] sm:$0xff] %v382
  %556 = vst [vmem:[%s536 + $0xe1] sm:$0xff] %v383
  %557 = vst [vmem:[%s536 + $0xf1] sm:$0xff] %v384
  %558 = vst [vmem:[%s536 + $0xf9] sm:$0xff] %v385
  %559 = vst [vmem:[%s536 + $0x109] sm:$0xff] %v386
  %560 = vst [vmem:[%s536 + $0x111] sm:$0xff] %v387
  %561 = vst [vmem:[%s536 + $0x121] sm:$0xff] %v388
  %562 = vst [vmem:[%s536 + $0x129] sm:$0xff] %v389
  %563 = vst [vmem:[%s536 + $0x139] sm:$0xff] %v390
  %564 = vst [vmem:[%s536 + $0x141] sm:$0xff] %v391
  %565 = vst [vmem:[%s536 + $0x151] sm:$0xff] %v392
  %566 = vst [vmem:[%s536 + $0x159] sm:$0xff] %v393
  %567 = vst [vmem:[%s536 + $0x169] sm:$0xff] %v394
  %568 = vst [vmem:[%s536 + $0x171] sm:$0xff] %v395
  %569 = vst [vmem:[%s536 + $0x1b1] sm:$0xff] %v396
  %570 = vst [vmem:[%s536 + $0x1b9] sm:$0xff] %v397
  %571 = vst [vmem:[%s536 + $0x1c9] sm:$0xff] %v398
  %572 = vst [vmem:[%s536 + $0x1d1] sm:$0xff] %v399
  %573 = vst [vmem:[%s536 + $0x1e1] sm:$0xff] %v400
  %574 = vst [vmem:[%s536 + $0x1e9] sm:$0xff] %v401
  %575 = vst [vmem:[%s536 + $0x1f9] sm:$0xff] %v402
  %576 = vst [vmem:[%s536 + $0x201] sm:$0xff] %v403
  %577 = vst [vmem:[%s536 + $0x211] sm:$0xff] %v404
  %578 = vst [vmem:[%s536 + $0x219] sm:$0xff] %v405
  %579 = vst [vmem:[%s536 + $0x229] sm:$0xff] %v406
  %580 = vst [vmem:[%s536 + $0x231] sm:$0xff] %v407
  %581 = vst [vmem:[%s536 + $0x241] sm:$0xff] %v408
  %582 = vst [vmem:[%s536 + $0x249] sm:$0xff] %v409
  %583 = vst [vmem:[%s536 + $0x259] sm:$0xff] %v410
  %584 = vst [vmem:[%s536 + $0x261] sm:$0xff] %v411
  %585 = vst [vmem:[%s536 + $0x271] sm:$0xff] %v412
  %586 = vst [vmem:[%s536 + $0x279] sm:$0xff] %v413
  %587 = vst [vmem:[%s536 + $0x289] sm:$0xff] %v414
  %588 = vst [vmem:[%s536 + $0x291] sm:$0xff] %v415
  %589 = vst [vmem:[%s536 + $0x2a1] sm:$0xff] %v416
  %590 = vst [vmem:[%s536 + $0x2a9] sm:$0xff] %v417
  %591 = vst [vmem:[%s536 + $0x2b9] sm:$0xff] %v418
  %592 = vst [vmem:[%s536 + $0x2c1] sm:$0xff] %v419
  %593 = vst [vmem:[%s536 + $0x2d1] sm:$0xff] %v420
  %594 = vst [vmem:[%s536 + $0x2d9] sm:$0xff] %v421
  %595 = vst [vmem:[%s536 + $0x2e9] sm:$0xff] %v422
  %596 = vst [vmem:[%s536 + $0x2f1] sm:$0xff] %v423
  %597 = vst [vmem:[%s536 + $0x301] sm:$0xff] %v424
  %598 = vst [vmem:[%s536 + $0x309] sm:$0xff] %v425
  %599 = vst [vmem:[%s536 + $0x319] sm:$0xff] %v426
  %600 = vst [vmem:[%s536 + $0x321] sm:$0xff] %v427
  %v601 = vld [vmem:[#allocation2] sm:$0xff]
  %v602 = vld [vmem:[#allocation2 + $0x8] sm:$0xff]
  %v603 = vld [vmem:[#allocation2 + $0x18] sm:$0xff]
  %v604 = vld [vmem:[#allocation2 + $0x20] sm:$0xff]
  %v605 = vld [vmem:[#allocation2 + $0x30] sm:$0xff]
  %v606 = vld [vmem:[#allocation2 + $0x38] sm:$0xff]
  %v607 = vld [vmem:[#allocation2 + $0x48] sm:$0xff]
  %v608 = vld [vmem:[#allocation2 + $0x50] sm:$0xff]
  %v609 = vld [vmem:[#allocation2 + $0x60] sm:$0xff]
  %v610 = vld [vmem:[#allocation2 + $0x68] sm:$0xff]
  %v611 = vld [vmem:[#allocation2 + $0x78] sm:$0xff]
  %v612 = vld [vmem:[#allocation2 + $0x80] sm:$0xff]
  %v613 = vld [vmem:[#allocation2 + $0x90] sm:$0xff]
  %v614 = vld [vmem:[#allocation2 + $0x98] sm:$0xff]
  %v615 = vld [vmem:[#allocation2 + $0xa8] sm:$0xff]
  %v616 = vld [vmem:[#allocation2 + $0xb0] sm:$0xff]
  %v617 = vld [vmem:[#allocation2 + $0xc0] sm:$0xff]
  %v618 = vld [vmem:[#allocation2 + $0xc8] sm:$0xff]
  %v619 = vld [vmem:[#allocation2 + $0xd8] sm:$0xff]
  %v620 = vld [vmem:[#allocation2 + $0xe0] sm:$0xff]
  %v621 = vld [vmem:[#allocation2 + $0xf0] sm:$0xff]
  %v622 = vld [vmem:[#allocation2 + $0xf8] sm:$0xff]
  %v623 = vld [vmem:[#allocation2 + $0x108] sm:$0xff]
  %v624 = vld [vmem:[#allocation2 + $0x110] sm:$0xff]
  %v625 = vld [vmem:[#allocation2 + $0x120] sm:$0xff]
  %v626 = vld [vmem:[#allocation2 + $0x128] sm:$0xff]
  %v627 = vld [vmem:[#allocation2 + $0x138] sm:$0xff]
  %v628 = vld [vmem:[#allocation2 + $0x140] sm:$0xff]
  %v629 = vld [vmem:[#allocation2 + $0x150] sm:$0xff]
  %v630 = vld [vmem:[#allocation2 + $0x158] sm:$0xff]
  %v631 = vld [vmem:[#allocation2 + $0x168] sm:$0xff]
  %v632 = vld [vmem:[#allocation2 + $0x170] sm:$0xff]
  %v633 = vld [vmem:[#allocation2 + $0x1b0] sm:$0xff]
  %v634 = vld [vmem:[#allocation2 + $0x1b8] sm:$0xff]
  %v635 = vld [vmem:[#allocation2 + $0x1c8] sm:$0xff]
  %v636 = vld [vmem:[#allocation2 + $0x1d0] sm:$0xff]
  %v637 = vld [vmem:[#allocation2 + $0x1e0] sm:$0xff]
  %v638 = vld [vmem:[#allocation2 + $0x1e8] sm:$0xff]
  %v639 = vld [vmem:[#allocation2 + $0x1f8] sm:$0xff]
  %v640 = vld [vmem:[#allocation2 + $0x200] sm:$0xff]
  %v641 = vld [vmem:[#allocation2 + $0x210] sm:$0xff]
  %v642 = vld [vmem:[#allocation2 + $0x218] sm:$0xff]
  %v643 = vld [vmem:[#allocation2 + $0x228] sm:$0xff]
  %v644 = vld [vmem:[#allocation2 + $0x230] sm:$0xff]
  %v645 = vld [vmem:[#allocation2 + $0x240] sm:$0xff]
  %v646 = vld [vmem:[#allocation2 + $0x248] sm:$0xff]
  %v647 = vld [vmem:[#allocation2 + $0x258] sm:$0xff]
  %v648 = vld [vmem:[#allocation2 + $0x260] sm:$0xff]
  %v649 = vld [vmem:[#allocation2 + $0x270] sm:$0xff]
  %v650 = vld [vmem:[#allocation2 + $0x278] sm:$0xff]
  %v651 = vld [vmem:[#allocation2 + $0x288] sm:$0xff]
  %v652 = vld [vmem:[#allocation2 + $0x290] sm:$0xff]
  %v653 = vld [vmem:[#allocation2 + $0x2a0] sm:$0xff]
  %v654 = vld [vmem:[#allocation2 + $0x2a8] sm:$0xff]
  %v655 = vld [vmem:[#allocation2 + $0x2b8] sm:$0xff]
  %v656 = vld [vmem:[#allocation2 + $0x2c0] sm:$0xff]
  %v657 = vld [vmem:[#allocation2 + $0x2d0] sm:$0xff]
  %v658 = vld [vmem:[#allocation2 + $0x2d8] sm:$0xff]
  %v659 = vld [vmem:[#allocation2 + $0x2e8] sm:$0xff]
  %v660 = vld [vmem:[#allocation2 + $0x2f0] sm:$0xff]
  %v661 = vld [vmem:[#allocation2 + $0x300] sm:$0xff]
  %v662 = vld [vmem:[#allocation2 + $0x308] sm:$0xff]
  %v663 = vld [vmem:[#allocation2 + $0x318] sm:$0xff]
  %v664 = vld [vmem:[#allocation2 + $0x320] sm:$0xff]
  %v665 = vpack.c.bf16 %v602, %v601
  %v666 = vpack.c.bf16 %v604, %v603
  %v667 = vpack.c.bf16 %v606, %v605
  %v668 = vpack.c.bf16 %v608, %v607
  %v669 = vpack.c.bf16 %v610, %v609
  %v670 = vpack.c.bf16 %v612, %v611
  %v671 = vpack.c.bf16 %v614, %v613
  %v672 = vpack.c.bf16 %v616, %v615
  %v673 = vpack.c.bf16 %v618, %v617
  %v674 = vpack.c.bf16 %v620, %v619
  %v675 = vpack.c.bf16 %v622, %v621
  %v676 = vpack.c.bf16 %v624, %v623
  %v677 = vpack.c.bf16 %v626, %v625
  %v678 = vpack.c.bf16 %v628, %v627
  %v679 = vpack.c.bf16 %v630, %v629
  %v680 = vpack.c.bf16 %v632, %v631
  %v681 = vpack.c.bf16 %v634, %v633
  %v682 = vpack.c.bf16 %v636, %v635
  %v683 = vpack.c.bf16 %v638, %v637
  %v684 = vpack.c.bf16 %v640, %v639
  %v685 = vpack.c.bf16 %v642, %v641
  %v686 = vpack.c.bf16 %v644, %v643
  %v687 = vpack.c.bf16 %v646, %v645
  %v688 = vpack.c.bf16 %v648, %v647
  %v689 = vpack.c.bf16 %v650, %v649
  %v690 = vpack.c.bf16 %v652, %v651
  %v691 = vpack.c.bf16 %v654, %v653
  %v692 = vpack.c.bf16 %v656, %v655
  %v693 = vpack.c.bf16 %v658, %v657
  %v694 = vpack.c.bf16 %v660, %v659
  %v695 = vpack.c.bf16 %v662, %v661
  %v696 = vpack.c.bf16 %v664, %v663
  %v697 = vld [vmem:[#allocation2 + $0x1] sm:$0xff]
  %v698 = vld [vmem:[#allocation2 + $0x9] sm:$0xff]
  %v699 = vld [vmem:[#allocation2 + $0x19] sm:$0xff]
  %v700 = vld [vmem:[#allocation2 + $0x21] sm:$0xff]
  %v701 = vld [vmem:[#allocation2 + $0x31] sm:$0xff]
  %v702 = vld [vmem:[#allocation2 + $0x39] sm:$0xff]
  %v703 = vld [vmem:[#allocation2 + $0x49] sm:$0xff]
  %v704 = vld [vmem:[#allocation2 + $0x51] sm:$0xff]
  %v705 = vld [vmem:[#allocation2 + $0x61] sm:$0xff]
  %v706 = vld [vmem:[#allocation2 + $0x69] sm:$0xff]
  %v707 = vld [vmem:[#allocation2 + $0x79] sm:$0xff]
  %v708 = vld [vmem:[#allocation2 + $0x81] sm:$0xff]
  %v709 = vld [vmem:[#allocation2 + $0x91] sm:$0xff]
  %v710 = vld [vmem:[#allocation2 + $0x99] sm:$0xff]
  %v711 = vld [vmem:[#allocation2 + $0xa9] sm:$0xff]
  %v712 = vld [vmem:[#allocation2 + $0xb1] sm:$0xff]
  %v713 = vld [vmem:[#allocation2 + $0xc1] sm:$0xff]
  %v714 = vld [vmem:[#allocation2 + $0xc9] sm:$0xff]
  %v715 = vld [vmem:[#allocation2 + $0xd9] sm:$0xff]
  %v716 = vld [vmem:[#allocation2 + $0xe1] sm:$0xff]
  %v717 = vld [vmem:[#allocation2 + $0xf1] sm:$0xff]
  %v718 = vld [vmem:[#allocation2 + $0xf9] sm:$0xff]
  %v719 = vld [vmem:[#allocation2 + $0x109] sm:$0xff]
  %v720 = vld [vmem:[#allocation2 + $0x111] sm:$0xff]
  %v721 = vld [vmem:[#allocation2 + $0x121] sm:$0xff]
  %v722 = vld [vmem:[#allocation2 + $0x129] sm:$0xff]
  %v723 = vld [vmem:[#allocation2 + $0x139] sm:$0xff]
  %v724 = vld [vmem:[#allocation2 + $0x141] sm:$0xff]
  %v725 = vld [vmem:[#allocation2 + $0x151] sm:$0xff]
  %v726 = vld [vmem:[#allocation2 + $0x159] sm:$0xff]
  %v727 = vld [vmem:[#allocation2 + $0x169] sm:$0xff]
  %v728 = vld [vmem:[#allocation2 + $0x171] sm:$0xff]
  %v729 = vld [vmem:[#allocation2 + $0x1b1] sm:$0xff]
  %v730 = vld [vmem:[#allocation2 + $0x1b9] sm:$0xff]
  %v731 = vld [vmem:[#allocation2 + $0x1c9] sm:$0xff]
  %v732 = vld [vmem:[#allocation2 + $0x1d1] sm:$0xff]
  %v733 = vld [vmem:[#allocation2 + $0x1e1] sm:$0xff]
  %v734 = vld [vmem:[#allocation2 + $0x1e9] sm:$0xff]
  %v735 = vld [vmem:[#allocation2 + $0x1f9] sm:$0xff]
  %v736 = vld [vmem:[#allocation2 + $0x201] sm:$0xff]
  %v737 = vld [vmem:[#allocation2 + $0x211] sm:$0xff]
  %v738 = vld [vmem:[#allocation2 + $0x219] sm:$0xff]
  %v739 = vld [vmem:[#allocation2 + $0x229] sm:$0xff]
  %v740 = vld [vmem:[#allocation2 + $0x231] sm:$0xff]
  %v741 = vld [vmem:[#allocation2 + $0x241] sm:$0xff]
  %v742 = vld [vmem:[#allocation2 + $0x249] sm:$0xff]
  %v743 = vld [vmem:[#allocation2 + $0x259] sm:$0xff]
  %v744 = vld [vmem:[#allocation2 + $0x261] sm:$0xff]
  %v745 = vld [vmem:[#allocation2 + $0x271] sm:$0xff]
  %v746 = vld [vmem:[#allocation2 + $0x279] sm:$0xff]
  %v747 = vld [vmem:[#allocation2 + $0x289] sm:$0xff]
  %v748 = vld [vmem:[#allocation2 + $0x291] sm:$0xff]
  %v749 = vld [vmem:[#allocation2 + $0x2a1] sm:$0xff]
  %v750 = vld [vmem:[#allocation2 + $0x2a9] sm:$0xff]
  %v751 = vld [vmem:[#allocation2 + $0x2b9] sm:$0xff]
  %v752 = vld [vmem:[#allocation2 + $0x2c1] sm:$0xff]
  %v753 = vld [vmem:[#allocation2 + $0x2d1] sm:$0xff]
  %v754 = vld [vmem:[#allocation2 + $0x2d9] sm:$0xff]
  %v755 = vld [vmem:[#allocation2 + $0x2e9] sm:$0xff]
  %v756 = vld [vmem:[#allocation2 + $0x2f1] sm:$0xff]
  %v757 = vld [vmem:[#allocation2 + $0x301] sm:$0xff]
  %v758 = vld [vmem:[#allocation2 + $0x309] sm:$0xff]
  %v759 = vld [vmem:[#allocation2 + $0x319] sm:$0xff]
  %v760 = vld [vmem:[#allocation2 + $0x321] sm:$0xff]
  %v761 = vpack.c.bf16 %v698, %v697
  %v762 = vpack.c.bf16 %v700, %v699
  %v763 = vpack.c.bf16 %v702, %v701
  %v764 = vpack.c.bf16 %v704, %v703
  %v765 = vpack.c.bf16 %v706, %v705
  %v766 = vpack.c.bf16 %v708, %v707
  %v767 = vpack.c.bf16 %v710, %v709
  %v768 = vpack.c.bf16 %v712, %v711
  %v769 = vpack.c.bf16 %v714, %v713
  %v770 = vpack.c.bf16 %v716, %v715
  %v771 = vpack.c.bf16 %v718, %v717
  %v772 = vpack.c.bf16 %v720, %v719
  %v773 = vpack.c.bf16 %v722, %v721
  %v774 = vpack.c.bf16 %v724, %v723
  %v775 = vpack.c.bf16 %v726, %v725
  %v776 = vpack.c.bf16 %v728, %v727
  %v777 = vpack.c.bf16 %v730, %v729
  %v778 = vpack.c.bf16 %v732, %v731
  %v779 = vpack.c.bf16 %v734, %v733
  %v780 = vpack.c.bf16 %v736, %v735
  %v781 = vpack.c.bf16 %v738, %v737
  %v782 = vpack.c.bf16 %v740, %v739
  %v783 = vpack.c.bf16 %v742, %v741
  %v784 = vpack.c.bf16 %v744, %v743
  %v785 = vpack.c.bf16 %v746, %v745
  %v786 = vpack.c.bf16 %v748, %v747
  %v787 = vpack.c.bf16 %v750, %v749
  %v788 = vpack.c.bf16 %v752, %v751
  %v789 = vpack.c.bf16 %v754, %v753
  %v790 = vpack.c.bf16 %v756, %v755
  %v791 = vpack.c.bf16 %v758, %v757
  %v792 = vpack.c.bf16 %v760, %v759
  %v793 = vld [vmem:[#allocation2 + $0x2] sm:$0xff]
  %v794 = vld [vmem:[#allocation2 + $0xa] sm:$0xff]
  %v795 = vld [vmem:[#allocation2 + $0x1a] sm:$0xff]
  %v796 = vld [vmem:[#allocation2 + $0x22] sm:$0xff]
  %v797 = vld [vmem:[#allocation2 + $0x32] sm:$0xff]
  %v798 = vld [vmem:[#allocation2 + $0x3a] sm:$0xff]
  %v799 = vld [vmem:[#allocation2 + $0x4a] sm:$0xff]
  %v800 = vld [vmem:[#allocation2 + $0x52] sm:$0xff]
  %v801 = vld [vmem:[#allocation2 + $0x62] sm:$0xff]
  %v802 = vld [vmem:[#allocation2 + $0x6a] sm:$0xff]
  %v803 = vld [vmem:[#allocation2 + $0x7a] sm:$0xff]
  %v804 = vld [vmem:[#allocation2 + $0x82] sm:$0xff]
  %v805 = vld [vmem:[#allocation2 + $0x92] sm:$0xff]
  %v806 = vld [vmem:[#allocation2 + $0x9a] sm:$0xff]
  %v807 = vld [vmem:[#allocation2 + $0xaa] sm:$0xff]
  %v808 = vld [vmem:[#allocation2 + $0xb2] sm:$0xff]
  %v809 = vld [vmem:[#allocation2 + $0xc2] sm:$0xff]
  %v810 = vld [vmem:[#allocation2 + $0xca] sm:$0xff]
  %v811 = vld [vmem:[#allocation2 + $0xda] sm:$0xff]
  %v812 = vld [vmem:[#allocation2 + $0xe2] sm:$0xff]
  %v813 = vld [vmem:[#allocation2 + $0xf2] sm:$0xff]
  %v814 = vld [vmem:[#allocation2 + $0xfa] sm:$0xff]
  %v815 = vld [vmem:[#allocation2 + $0x10a] sm:$0xff]
  %v816 = vld [vmem:[#allocation2 + $0x112] sm:$0xff]
  %v817 = vld [vmem:[#allocation2 + $0x122] sm:$0xff]
  %v818 = vld [vmem:[#allocation2 + $0x12a] sm:$0xff]
  %v819 = vld [vmem:[#allocation2 + $0x13a] sm:$0xff]
  %v820 = vld [vmem:[#allocation2 + $0x142] sm:$0xff]
  %v821 = vld [vmem:[#allocation2 + $0x152] sm:$0xff]
  %v822 = vld [vmem:[#allocation2 + $0x15a] sm:$0xff]
  %v823 = vld [vmem:[#allocation2 + $0x16a] sm:$0xff]
  %v824 = vld [vmem:[#allocation2 + $0x172] sm:$0xff]
  %v825 = vld [vmem:[#allocation2 + $0x1b2] sm:$0xff]
  %v826 = vld [vmem:[#allocation2 + $0x1ba] sm:$0xff]
  %v827 = vld [vmem:[#allocation2 + $0x1ca] sm:$0xff]
  %v828 = vld [vmem:[#allocation2 + $0x1d2] sm:$0xff]
  %v829 = vld [vmem:[#allocation2 + $0x1e2] sm:$0xff]
  %v830 = vld [vmem:[#allocation2 + $0x1ea] sm:$0xff]
  %v831 = vld [vmem:[#allocation2 + $0x1fa] sm:$0xff]
  %v832 = vld [vmem:[#allocation2 + $0x202] sm:$0xff]
  %v833 = vld [vmem:[#allocation2 + $0x212] sm:$0xff]
  %v834 = vld [vmem:[#allocation2 + $0x21a] sm:$0xff]
  %v835 = vld [vmem:[#allocation2 + $0x22a] sm:$0xff]
  %v836 = vld [vmem:[#allocation2 + $0x232] sm:$0xff]
  %v837 = vld [vmem:[#allocation2 + $0x242] sm:$0xff]
  %v838 = vld [vmem:[#allocation2 + $0x24a] sm:$0xff]
  %v839 = vld [vmem:[#allocation2 + $0x25a] sm:$0xff]
  %v840 = vld [vmem:[#allocation2 + $0x262] sm:$0xff]
  %v841 = vld [vmem:[#allocation2 + $0x272] sm:$0xff]
  %v842 = vld [vmem:[#allocation2 + $0x27a] sm:$0xff]
  %v843 = vld [vmem:[#allocation2 + $0x28a] sm:$0xff]
  %v844 = vld [vmem:[#allocation2 + $0x292] sm:$0xff]
  %v845 = vld [vmem:[#allocation2 + $0x2a2] sm:$0xff]
  %v846 = vld [vmem:[#allocation2 + $0x2aa] sm:$0xff]
  %v847 = vld [vmem:[#allocation2 + $0x2ba] sm:$0xff]
  %v848 = vld [vmem:[#allocation2 + $0x2c2] sm:$0xff]
  %v849 = vld [vmem:[#allocation2 + $0x2d2] sm:$0xff]
  %v850 = vld [vmem:[#allocation2 + $0x2da] sm:$0xff]
  %v851 = vld [vmem:[#allocation2 + $0x2ea] sm:$0xff]
  %v852 = vld [vmem:[#allocation2 + $0x2f2] sm:$0xff]
  %v853 = vld [vmem:[#allocation2 + $0x302] sm:$0xff]
  %v854 = vld [vmem:[#allocation2 + $0x30a] sm:$0xff]
  %v855 = vld [vmem:[#allocation2 + $0x31a] sm:$0xff]
  %v856 = vld [vmem:[#allocation2 + $0x322] sm:$0xff]
  %v857 = vpack.c.bf16 %v794, %v793
  %v858 = vpack.c.bf16 %v796, %v795
  %v859 = vpack.c.bf16 %v798, %v797
  %v860 = vpack.c.bf16 %v800, %v799
  %v861 = vpack.c.bf16 %v802, %v801
  %v862 = vpack.c.bf16 %v804, %v803
  %v863 = vpack.c.bf16 %v806, %v805
  %v864 = vpack.c.bf16 %v808, %v807
  %v865 = vpack.c.bf16 %v810, %v809
  %v866 = vpack.c.bf16 %v812, %v811
  %v867 = vpack.c.bf16 %v814, %v813
  %v868 = vpack.c.bf16 %v816, %v815
  %v869 = vpack.c.bf16 %v818, %v817
  %v870 = vpack.c.bf16 %v820, %v819
  %v871 = vpack.c.bf16 %v822, %v821
  %v872 = vpack.c.bf16 %v824, %v823
  %v873 = vpack.c.bf16 %v826, %v825
  %v874 = vpack.c.bf16 %v828, %v827
  %v875 = vpack.c.bf16 %v830, %v829
  %v876 = vpack.c.bf16 %v832, %v831
  %v877 = vpack.c.bf16 %v834, %v833
  %v878 = vpack.c.bf16 %v836, %v835
  %v879 = vpack.c.bf16 %v838, %v837
  %v880 = vpack.c.bf16 %v840, %v839
  %v881 = vpack.c.bf16 %v842, %v841
  %v882 = vpack.c.bf16 %v844, %v843
  %v883 = vpack.c.bf16 %v846, %v845
  %v884 = vpack.c.bf16 %v848, %v847
  %v885 = vpack.c.bf16 %v850, %v849
  %v886 = vpack.c.bf16 %v852, %v851
  %v887 = vpack.c.bf16 %v854, %v853
  %v888 = vpack.c.bf16 %v856, %v855
  %v889 = vld [vmem:[%s536] sm:$0xff]
  %v890 = vld [vmem:[%s536 + $0x8] sm:$0xff]
  %v891 = vld [vmem:[%s536 + $0x18] sm:$0xff]
  %v892 = vld [vmem:[%s536 + $0x20] sm:$0xff]
  %v893 = vld [vmem:[%s536 + $0x30] sm:$0xff]
  %v894 = vld [vmem:[%s536 + $0x38] sm:$0xff]
  %v895 = vld [vmem:[%s536 + $0x48] sm:$0xff]
  %v896 = vld [vmem:[%s536 + $0x50] sm:$0xff]
  %v897 = vld [vmem:[%s536 + $0x60] sm:$0xff]
  %v898 = vld [vmem:[%s536 + $0x68] sm:$0xff]
  %v899 = vld [vmem:[%s536 + $0x78] sm:$0xff]
  %v900 = vld [vmem:[%s536 + $0x80] sm:$0xff]
  %v901 = vld [vmem:[%s536 + $0x90] sm:$0xff]
  %v902 = vld [vmem:[%s536 + $0x98] sm:$0xff]
  %v903 = vld [vmem:[%s536 + $0xa8] sm:$0xff]
  %v904 = vld [vmem:[%s536 + $0xb0] sm:$0xff]
  %v905 = vld [vmem:[%s536 + $0xc0] sm:$0xff]
  %v906 = vld [vmem:[%s536 + $0xc8] sm:$0xff]
  %v907 = vld [vmem:[%s536 + $0xd8] sm:$0xff]
  %v908 = vld [vmem:[%s536 + $0xe0] sm:$0xff]
  %v909 = vld [vmem:[%s536 + $0xf0] sm:$0xff]
  %v910 = vld [vmem:[%s536 + $0xf8] sm:$0xff]
  %v911 = vld [vmem:[%s536 + $0x108] sm:$0xff]
  %v912 = vld [vmem:[%s536 + $0x110] sm:$0xff]
  %v913 = vld [vmem:[%s536 + $0x120] sm:$0xff]
  %v914 = vld [vmem:[%s536 + $0x128] sm:$0xff]
  %v915 = vld [vmem:[%s536 + $0x138] sm:$0xff]
  %v916 = vld [vmem:[%s536 + $0x140] sm:$0xff]
  %v917 = vld [vmem:[%s536 + $0x150] sm:$0xff]
  %v918 = vld [vmem:[%s536 + $0x158] sm:$0xff]
  %v919 = vld [vmem:[%s536 + $0x168] sm:$0xff]
  %v920 = vld [vmem:[%s536 + $0x170] sm:$0xff]
  %v921 = vld [vmem:[%s536 + $0x1b0] sm:$0xff]
  %v922 = vld [vmem:[%s536 + $0x1b8] sm:$0xff]
  %v923 = vld [vmem:[%s536 + $0x1c8] sm:$0xff]
  %v924 = vld [vmem:[%s536 + $0x1d0] sm:$0xff]
  %v925 = vld [vmem:[%s536 + $0x1e0] sm:$0xff]
  %v926 = vld [vmem:[%s536 + $0x1e8] sm:$0xff]
  %v927 = vld [vmem:[%s536 + $0x1f8] sm:$0xff]
  %v928 = vld [vmem:[%s536 + $0x200] sm:$0xff]
  %v929 = vld [vmem:[%s536 + $0x210] sm:$0xff]
  %v930 = vld [vmem:[%s536 + $0x218] sm:$0xff]
  %v931 = vld [vmem:[%s536 + $0x228] sm:$0xff]
  %v932 = vld [vmem:[%s536 + $0x230] sm:$0xff]
  %v933 = vld [vmem:[%s536 + $0x240] sm:$0xff]
  %v934 = vld [vmem:[%s536 + $0x248] sm:$0xff]
  %v935 = vld [vmem:[%s536 + $0x258] sm:$0xff]
  %v936 = vld [vmem:[%s536 + $0x260] sm:$0xff]
  %v937 = vld [vmem:[%s536 + $0x270] sm:$0xff]
  %v938 = vld [vmem:[%s536 + $0x278] sm:$0xff]
  %v939 = vld [vmem:[%s536 + $0x288] sm:$0xff]
  %v940 = vld [vmem:[%s536 + $0x290] sm:$0xff]
  %v941 = vld [vmem:[%s536 + $0x2a0] sm:$0xff]
  %v942 = vld [vmem:[%s536 + $0x2a8] sm:$0xff]
  %v943 = vld [vmem:[%s536 + $0x2b8] sm:$0xff]
  %v944 = vld [vmem:[%s536 + $0x2c0] sm:$0xff]
  %v945 = vld [vmem:[%s536 + $0x2d0] sm:$0xff]
  %v946 = vld [vmem:[%s536 + $0x2d8] sm:$0xff]
  %v947 = vld [vmem:[%s536 + $0x2e8] sm:$0xff]
  %v948 = vld [vmem:[%s536 + $0x2f0] sm:$0xff]
  %v949 = vld [vmem:[%s536 + $0x300] sm:$0xff]
  %v950 = vld [vmem:[%s536 + $0x308] sm:$0xff]
  %v951 = vld [vmem:[%s536 + $0x318] sm:$0xff]
  %v952 = vld [vmem:[%s536 + $0x320] sm:$0xff]
  %v953 = vpack.c.bf16 %v890, %v889
  %v954 = vpack.c.bf16 %v892, %v891
  %v955 = vpack.c.bf16 %v894, %v893
  %v956 = vpack.c.bf16 %v896, %v895
  %v957 = vpack.c.bf16 %v898, %v897
  %v958 = vpack.c.bf16 %v900, %v899
  %v959 = vpack.c.bf16 %v902, %v901
  %v960 = vpack.c.bf16 %v904, %v903
  %v961 = vpack.c.bf16 %v906, %v905
  %v962 = vpack.c.bf16 %v908, %v907
  %v963 = vpack.c.bf16 %v910, %v909
  %v964 = vpack.c.bf16 %v912, %v911
  %v965 = vpack.c.bf16 %v914, %v913
  %v966 = vpack.c.bf16 %v916, %v915
  %v967 = vpack.c.bf16 %v918, %v917
  %v968 = vpack.c.bf16 %v920, %v919
  %v969 = vpack.c.bf16 %v922, %v921
  %v970 = vpack.c.bf16 %v924, %v923
  %v971 = vpack.c.bf16 %v926, %v925
  %v972 = vpack.c.bf16 %v928, %v927
  %v973 = vpack.c.bf16 %v930, %v929
  %v974 = vpack.c.bf16 %v932, %v931
  %v975 = vpack.c.bf16 %v934, %v933
  %v976 = vpack.c.bf16 %v936, %v935
  %v977 = vpack.c.bf16 %v938, %v937
  %v978 = vpack.c.bf16 %v940, %v939
  %v979 = vpack.c.bf16 %v942, %v941
  %v980 = vpack.c.bf16 %v944, %v943
  %v981 = vpack.c.bf16 %v946, %v945
  %v982 = vpack.c.bf16 %v948, %v947
  %v983 = vpack.c.bf16 %v950, %v949
  %v984 = vpack.c.bf16 %v952, %v951
  %v985 = vld [vmem:[%s536 + $0x1] sm:$0xff]
  %v986 = vld [vmem:[%s536 + $0x9] sm:$0xff]
  %v987 = vld [vmem:[%s536 + $0x19] sm:$0xff]
  %v988 = vld [vmem:[%s536 + $0x21] sm:$0xff]
  %v989 = vld [vmem:[%s536 + $0x31] sm:$0xff]
  %v990 = vld [vmem:[%s536 + $0x39] sm:$0xff]
  %v991 = vld [vmem:[%s536 + $0x49] sm:$0xff]
  %v992 = vld [vmem:[%s536 + $0x51] sm:$0xff]
  %v993 = vld [vmem:[%s536 + $0x61] sm:$0xff]
  %v994 = vld [vmem:[%s536 + $0x69] sm:$0xff]
  %v995 = vld [vmem:[%s536 + $0x79] sm:$0xff]
  %v996 = vld [vmem:[%s536 + $0x81] sm:$0xff]
  %v997 = vld [vmem:[%s536 + $0x91] sm:$0xff]
  %v998 = vld [vmem:[%s536 + $0x99] sm:$0xff]
  %v999 = vld [vmem:[%s536 + $0xa9] sm:$0xff]
  %v1000 = vld [vmem:[%s536 + $0xb1] sm:$0xff]
  %v1001 = vld [vmem:[%s536 + $0xc1] sm:$0xff]
  %v1002 = vld [vmem:[%s536 + $0xc9] sm:$0xff]
  %v1003 = vld [vmem:[%s536 + $0xd9] sm:$0xff]
  %v1004 = vld [vmem:[%s536 + $0xe1] sm:$0xff]
  %v1005 = vld [vmem:[%s536 + $0xf1] sm:$0xff]
  %v1006 = vld [vmem:[%s536 + $0xf9] sm:$0xff]
  %v1007 = vld [vmem:[%s536 + $0x109] sm:$0xff]
  %v1008 = vld [vmem:[%s536 + $0x111] sm:$0xff]
  %v1009 = vld [vmem:[%s536 + $0x121] sm:$0xff]
  %v1010 = vld [vmem:[%s536 + $0x129] sm:$0xff]
  %v1011 = vld [vmem:[%s536 + $0x139] sm:$0xff]
  %v1012 = vld [vmem:[%s536 + $0x141] sm:$0xff]
  %v1013 = vld [vmem:[%s536 + $0x151] sm:$0xff]
  %v1014 = vld [vmem:[%s536 + $0x159] sm:$0xff]
  %v1015 = vld [vmem:[%s536 + $0x169] sm:$0xff]
  %v1016 = vld [vmem:[%s536 + $0x171] sm:$0xff]
  %v1017 = vld [vmem:[%s536 + $0x1b1] sm:$0xff]
  %v1018 = vld [vmem:[%s536 + $0x1b9] sm:$0xff]
  %v1019 = vld [vmem:[%s536 + $0x1c9] sm:$0xff]
  %v1020 = vld [vmem:[%s536 + $0x1d1] sm:$0xff]
  %v1021 = vld [vmem:[%s536 + $0x1e1] sm:$0xff]
  %v1022 = vld [vmem:[%s536 + $0x1e9] sm:$0xff]
  %v1023 = vld [vmem:[%s536 + $0x1f9] sm:$0xff]
  %v1024 = vld [vmem:[%s536 + $0x201] sm:$0xff]
  %v1025 = vld [vmem:[%s536 + $0x211] sm:$0xff]
  %v1026 = vld [vmem:[%s536 + $0x219] sm:$0xff]
  %v1027 = vld [vmem:[%s536 + $0x229] sm:$0xff]
  %v1028 = vld [vmem:[%s536 + $0x231] sm:$0xff]
  %v1029 = vld [vmem:[%s536 + $0x241] sm:$0xff]
  %v1030 = vld [vmem:[%s536 + $0x249] sm:$0xff]
  %v1031 = vld [vmem:[%s536 + $0x259] sm:$0xff]
  %v1032 = vld [vmem:[%s536 + $0x261] sm:$0xff]
  %v1033 = vld [vmem:[%s536 + $0x271] sm:$0xff]
  %v1034 = vld [vmem:[%s536 + $0x279] sm:$0xff]
  %v1035 = vld [vmem:[%s536 + $0x289] sm:$0xff]
  %v1036 = vld [vmem:[%s536 + $0x291] sm:$0xff]
  %v1037 = vld [vmem:[%s536 + $0x2a1] sm:$0xff]
  %v1038 = vld [vmem:[%s536 + $0x2a9] sm:$0xff]
  %v1039 = vld [vmem:[%s536 + $0x2b9] sm:$0xff]
  %v1040 = vld [vmem:[%s536 + $0x2c1] sm:$0xff]
  %v1041 = vld [vmem:[%s536 + $0x2d1] sm:$0xff]
  %v1042 = vld [vmem:[%s536 + $0x2d9] sm:$0xff]
  %v1043 = vld [vmem:[%s536 + $0x2e9] sm:$0xff]
  %v1044 = vld [vmem:[%s536 + $0x2f1] sm:$0xff]
  %v1045 = vld [vmem:[%s536 + $0x301] sm:$0xff]
  %v1046 = vld [vmem:[%s536 + $0x309] sm:$0xff]
  %v1047 = vld [vmem:[%s536 + $0x319] sm:$0xff]
  %v1048 = vld [vmem:[%s536 + $0x321] sm:$0xff]
  %v1049 = vpack.c.bf16 %v986, %v985
  %v1050 = vpack.c.bf16 %v988, %v987
  %v1051 = vpack.c.bf16 %v990, %v989
  %v1052 = vpack.c.bf16 %v992, %v991
  %v1053 = vpack.c.bf16 %v994, %v993
  %v1054 = vpack.c.bf16 %v996, %v995
  %v1055 = vpack.c.bf16 %v998, %v997
  %v1056 = vpack.c.bf16 %v1000, %v999
  %v1057 = vpack.c.bf16 %v1002, %v1001
  %v1058 = vpack.c.bf16 %v1004, %v1003
  %v1059 = vpack.c.bf16 %v1006, %v1005
  %v1060 = vpack.c.bf16 %v1008, %v1007
  %v1061 = vpack.c.bf16 %v1010, %v1009
  %v1062 = vpack.c.bf16 %v1012, %v1011
  %v1063 = vpack.c.bf16 %v1014, %v1013
  %v1064 = vpack.c.bf16 %v1016, %v1015
  %v1065 = vpack.c.bf16 %v1018, %v1017
  %v1066 = vpack.c.bf16 %v1020, %v1019
  %v1067 = vpack.c.bf16 %v1022, %v1021
  %v1068 = vpack.c.bf16 %v1024, %v1023
  %v1069 = vpack.c.bf16 %v1026, %v1025
  %v1070 = vpack.c.bf16 %v1028, %v1027
  %v1071 = vpack.c.bf16 %v1030, %v1029
  %v1072 = vpack.c.bf16 %v1032, %v1031
  %v1073 = vpack.c.bf16 %v1034, %v1033
  %v1074 = vpack.c.bf16 %v1036, %v1035
  %v1075 = vpack.c.bf16 %v1038, %v1037
  %v1076 = vpack.c.bf16 %v1040, %v1039
  %v1077 = vpack.c.bf16 %v1042, %v1041
  %v1078 = vpack.c.bf16 %v1044, %v1043
  %v1079 = vpack.c.bf16 %v1046, %v1045
  %v1080 = vpack.c.bf16 %v1048, %v1047
  %v1081 = vld [vmem:[%s536 + $0x2] sm:$0xff]
  %v1082 = vld [vmem:[%s536 + $0xa] sm:$0xff]
  %v1083 = vld [vmem:[%s536 + $0x1a] sm:$0xff]
  %v1084 = vld [vmem:[%s536 + $0x22] sm:$0xff]
  %v1085 = vld [vmem:[%s536 + $0x32] sm:$0xff]
  %v1086 = vld [vmem:[%s536 + $0x3a] sm:$0xff]
  %v1087 = vld [vmem:[%s536 + $0x4a] sm:$0xff]
  %v1088 = vld [vmem:[%s536 + $0x52] sm:$0xff]
  %v1089 = vld [vmem:[%s536 + $0x62] sm:$0xff]
  %v1090 = vld [vmem:[%s536 + $0x6a] sm:$0xff]
  %v1091 = vld [vmem:[%s536 + $0x7a] sm:$0xff]
  %v1092 = vld [vmem:[%s536 + $0x82] sm:$0xff]
  %v1093 = vld [vmem:[%s536 + $0x92] sm:$0xff]
  %v1094 = vld [vmem:[%s536 + $0x9a] sm:$0xff]
  %v1095 = vld [vmem:[%s536 + $0xaa] sm:$0xff]
  %v1096 = vld [vmem:[%s536 + $0xb2] sm:$0xff]
  %v1097 = vld [vmem:[%s536 + $0xc2] sm:$0xff]
  %v1098 = vld [vmem:[%s536 + $0xca] sm:$0xff]
  %v1099 = vld [vmem:[%s536 + $0xda] sm:$0xff]
  %v1100 = vld [vmem:[%s536 + $0xe2] sm:$0xff]
  %v1101 = vld [vmem:[%s536 + $0xf2] sm:$0xff]
  %v1102 = vld [vmem:[%s536 + $0xfa] sm:$0xff]
  %v1103 = vld [vmem:[%s536 + $0x10a] sm:$0xff]
  %v1104 = vld [vmem:[%s536 + $0x112] sm:$0xff]
  %v1105 = vld [vmem:[%s536 + $0x122] sm:$0xff]
  %v1106 = vld [vmem:[%s536 + $0x12a] sm:$0xff]
  %v1107 = vld [vmem:[%s536 + $0x13a] sm:$0xff]
  %v1108 = vld [vmem:[%s536 + $0x142] sm:$0xff]
  %v1109 = vld [vmem:[%s536 + $0x152] sm:$0xff]
  %v1110 = vld [vmem:[%s536 + $0x15a] sm:$0xff]
  %v1111 = vld [vmem:[%s536 + $0x16a] sm:$0xff]
  %v1112 = vld [vmem:[%s536 + $0x172] sm:$0xff]
  %v1113 = vld [vmem:[%s536 + $0x1b2] sm:$0xff]
  %v1114 = vld [vmem:[%s536 + $0x1ba] sm:$0xff]
  %v1115 = vld [vmem:[%s536 + $0x1ca] sm:$0xff]
  %v1116 = vld [vmem:[%s536 + $0x1d2] sm:$0xff]
  %v1117 = vld [vmem:[%s536 + $0x1e2] sm:$0xff]
  %v1118 = vld [vmem:[%s536 + $0x1ea] sm:$0xff]
  %v1119 = vld [vmem:[%s536 + $0x1fa] sm:$0xff]
  %v1120 = vld [vmem:[%s536 + $0x202] sm:$0xff]
  %v1121 = vld [vmem:[%s536 + $0x212] sm:$0xff]
  %v1122 = vld [vmem:[%s536 + $0x21a] sm:$0xff]
  %v1123 = vld [vmem:[%s536 + $0x22a] sm:$0xff]
  %v1124 = vld [vmem:[%s536 + $0x232] sm:$0xff]
  %v1125 = vld [vmem:[%s536 + $0x242] sm:$0xff]
  %v1126 = vld [vmem:[%s536 + $0x24a] sm:$0xff]
  %v1127 = vld [vmem:[%s536 + $0x25a] sm:$0xff]
  %v1128 = vld [vmem:[%s536 + $0x262] sm:$0xff]
  %v1129 = vld [vmem:[%s536 + $0x272] sm:$0xff]
  %v1130 = vld [vmem:[%s536 + $0x27a] sm:$0xff]
  %v1131 = vld [vmem:[%s536 + $0x28a] sm:$0xff]
  %v1132 = vld [vmem:[%s536 + $0x292] sm:$0xff]
  %v1133 = vld [vmem:[%s536 + $0x2a2] sm:$0xff]
  %v1134 = vld [vmem:[%s536 + $0x2aa] sm:$0xff]
  %v1135 = vld [vmem:[%s536 + $0x2ba] sm:$0xff]
  %v1136 = vld [vmem:[%s536 + $0x2c2] sm:$0xff]
  %v1137 = vld [vmem:[%s536 + $0x2d2] sm:$0xff]
  %v1138 = vld [vmem:[%s536 + $0x2da] sm:$0xff]
  %v1139 = vld [vmem:[%s536 + $0x2ea] sm:$0xff]
  %v1140 = vld [vmem:[%s536 + $0x2f2] sm:$0xff]
  %v1141 = vld [vmem:[%s536 + $0x302] sm:$0xff]
  %v1142 = vld [vmem:[%s536 + $0x30a] sm:$0xff]
  %v1143 = vld [vmem:[%s536 + $0x31a] sm:$0xff]
  %v1144 = vld [vmem:[%s536 + $0x322] sm:$0xff]
  %v1145 = vpack.c.bf16 %v1082, %v1081
  %v1146 = vpack.c.bf16 %v1084, %v1083
  %v1147 = vpack.c.bf16 %v1086, %v1085
  %v1148 = vpack.c.bf16 %v1088, %v1087
  %v1149 = vpack.c.bf16 %v1090, %v1089
  %v1150 = vpack.c.bf16 %v1092, %v1091
  %v1151 = vpack.c.bf16 %v1094, %v1093
  %v1152 = vpack.c.bf16 %v1096, %v1095
  %v1153 = vpack.c.bf16 %v1098, %v1097
  %v1154 = vpack.c.bf16 %v1100, %v1099
  %v1155 = vpack.c.bf16 %v1102, %v1101
  %v1156 = vpack.c.bf16 %v1104, %v1103
  %v1157 = vpack.c.bf16 %v1106, %v1105
  %v1158 = vpack.c.bf16 %v1108, %v1107
  %v1159 = vpack.c.bf16 %v1110, %v1109
  %v1160 = vpack.c.bf16 %v1112, %v1111
  %v1161 = vpack.c.bf16 %v1114, %v1113
  %v1162 = vpack.c.bf16 %v1116, %v1115
  %v1163 = vpack.c.bf16 %v1118, %v1117
  %v1164 = vpack.c.bf16 %v1120, %v1119
  %v1165 = vpack.c.bf16 %v1122, %v1121
  %v1166 = vpack.c.bf16 %v1124, %v1123
  %v1167 = vpack.c.bf16 %v1126, %v1125
  %v1168 = vpack.c.bf16 %v1128, %v1127
  %v1169 = vpack.c.bf16 %v1130, %v1129
  %v1170 = vpack.c.bf16 %v1132, %v1131
  %v1171 = vpack.c.bf16 %v1134, %v1133
  %v1172 = vpack.c.bf16 %v1136, %v1135
  %v1173 = vpack.c.bf16 %v1138, %v1137
  %v1174 = vpack.c.bf16 %v1140, %v1139
  %v1175 = vpack.c.bf16 %v1142, %v1141
  %v1176 = vpack.c.bf16 %v1144, %v1143
  %s1177 = scalar_lea.vmem [#allocation2], 48
  %v1178 = vld [vmem:[%s1177] sm:$0xff]
  %v1179 = vld [vmem:[%s1177 + $0x8] sm:$0xff]
  %v1180 = vld [vmem:[%s1177 + $0x18] sm:$0xff]
  %v1181 = vld [vmem:[%s1177 + $0x20] sm:$0xff]
  %v1182 = vld [vmem:[%s1177 + $0x30] sm:$0xff]
  %v1183 = vld [vmem:[%s1177 + $0x38] sm:$0xff]
  %v1184 = vld [vmem:[%s1177 + $0x48] sm:$0xff]
  %v1185 = vld [vmem:[%s1177 + $0x50] sm:$0xff]
  %v1186 = vld [vmem:[%s1177 + $0x60] sm:$0xff]
  %v1187 = vld [vmem:[%s1177 + $0x68] sm:$0xff]
  %v1188 = vld [vmem:[%s1177 + $0x78] sm:$0xff]
  %v1189 = vld [vmem:[%s1177 + $0x80] sm:$0xff]
  %v1190 = vld [vmem:[%s1177 + $0x90] sm:$0xff]
  %v1191 = vld [vmem:[%s1177 + $0x98] sm:$0xff]
  %v1192 = vld [vmem:[%s1177 + $0xa8] sm:$0xff]
  %v1193 = vld [vmem:[%s1177 + $0xb0] sm:$0xff]
  %v1194 = vld [vmem:[%s1177 + $0xc0] sm:$0xff]
  %v1195 = vld [vmem:[%s1177 + $0xc8] sm:$0xff]
  %v1196 = vld [vmem:[%s1177 + $0xd8] sm:$0xff]
  %v1197 = vld [vmem:[%s1177 + $0xe0] sm:$0xff]
  %v1198 = vld [vmem:[%s1177 + $0xf0] sm:$0xff]
  %v1199 = vld [vmem:[%s1177 + $0xf8] sm:$0xff]
  %v1200 = vld [vmem:[%s1177 + $0x108] sm:$0xff]
  %v1201 = vld [vmem:[%s1177 + $0x110] sm:$0xff]
  %v1202 = vld [vmem:[%s1177 + $0x120] sm:$0xff]
  %v1203 = vld [vmem:[%s1177 + $0x128] sm:$0xff]
  %v1204 = vld [vmem:[%s1177 + $0x138] sm:$0xff]
  %v1205 = vld [vmem:[%s1177 + $0x140] sm:$0xff]
  %v1206 = vld [vmem:[%s1177 + $0x150] sm:$0xff]
  %v1207 = vld [vmem:[%s1177 + $0x158] sm:$0xff]
  %v1208 = vld [vmem:[%s1177 + $0x168] sm:$0xff]
  %v1209 = vld [vmem:[%s1177 + $0x170] sm:$0xff]
  %v1210 = vld [vmem:[%s1177 + $0x1b0] sm:$0xff]
  %v1211 = vld [vmem:[%s1177 + $0x1b8] sm:$0xff]
  %v1212 = vld [vmem:[%s1177 + $0x1c8] sm:$0xff]
  %v1213 = vld [vmem:[%s1177 + $0x1d0] sm:$0xff]
  %v1214 = vld [vmem:[%s1177 + $0x1e0] sm:$0xff]
  %v1215 = vld [vmem:[%s1177 + $0x1e8] sm:$0xff]
  %v1216 = vld [vmem:[%s1177 + $0x1f8] sm:$0xff]
  %v1217 = vld [vmem:[%s1177 + $0x200] sm:$0xff]
  %v1218 = vld [vmem:[%s1177 + $0x210] sm:$0xff]
  %v1219 = vld [vmem:[%s1177 + $0x218] sm:$0xff]
  %v1220 = vld [vmem:[%s1177 + $0x228] sm:$0xff]
  %v1221 = vld [vmem:[%s1177 + $0x230] sm:$0xff]
  %v1222 = vld [vmem:[%s1177 + $0x240] sm:$0xff]
  %v1223 = vld [vmem:[%s1177 + $0x248] sm:$0xff]
  %v1224 = vld [vmem:[%s1177 + $0x258] sm:$0xff]
  %v1225 = vld [vmem:[%s1177 + $0x260] sm:$0xff]
  %v1226 = vld [vmem:[%s1177 + $0x270] sm:$0xff]
  %v1227 = vld [vmem:[%s1177 + $0x278] sm:$0xff]
  %v1228 = vld [vmem:[%s1177 + $0x288] sm:$0xff]
  %v1229 = vld [vmem:[%s1177 + $0x290] sm:$0xff]
  %v1230 = vld [vmem:[%s1177 + $0x2a0] sm:$0xff]
  %v1231 = vld [vmem:[%s1177 + $0x2a8] sm:$0xff]
  %v1232 = vld [vmem:[%s1177 + $0x2b8] sm:$0xff]
  %v1233 = vld [vmem:[%s1177 + $0x2c0] sm:$0xff]
  %v1234 = vld [vmem:[%s1177 + $0x2d0] sm:$0xff]
  %v1235 = vld [vmem:[%s1177 + $0x2d8] sm:$0xff]
  %v1236 = vld [vmem:[%s1177 + $0x2e8] sm:$0xff]
  %v1237 = vld [vmem:[%s1177 + $0x2f0] sm:$0xff]
  %v1238 = vld [vmem:[%s1177 + $0x300] sm:$0xff]
  %v1239 = vld [vmem:[%s1177 + $0x308] sm:$0xff]
  %v1240 = vld [vmem:[%s1177 + $0x318] sm:$0xff]
  %v1241 = vld [vmem:[%s1177 + $0x320] sm:$0xff]
  %v1242 = vpack.c.bf16 %v1179, %v1178
  %v1243 = vpack.c.bf16 %v1181, %v1180
  %v1244 = vpack.c.bf16 %v1183, %v1182
  %v1245 = vpack.c.bf16 %v1185, %v1184
  %v1246 = vpack.c.bf16 %v1187, %v1186
  %v1247 = vpack.c.bf16 %v1189, %v1188
  %v1248 = vpack.c.bf16 %v1191, %v1190
  %v1249 = vpack.c.bf16 %v1193, %v1192
  %v1250 = vpack.c.bf16 %v1195, %v1194
  %v1251 = vpack.c.bf16 %v1197, %v1196
  %v1252 = vpack.c.bf16 %v1199, %v1198
  %v1253 = vpack.c.bf16 %v1201, %v1200
  %v1254 = vpack.c.bf16 %v1203, %v1202
  %v1255 = vpack.c.bf16 %v1205, %v1204
  %v1256 = vpack.c.bf16 %v1207, %v1206
  %v1257 = vpack.c.bf16 %v1209, %v1208
  %v1258 = vpack.c.bf16 %v1211, %v1210
  %v1259 = vpack.c.bf16 %v1213, %v1212
  %v1260 = vpack.c.bf16 %v1215, %v1214
  %v1261 = vpack.c.bf16 %v1217, %v1216
  %v1262 = vpack.c.bf16 %v1219, %v1218
  %v1263 = vpack.c.bf16 %v1221, %v1220
  %v1264 = vpack.c.bf16 %v1223, %v1222
  %v1265 = vpack.c.bf16 %v1225, %v1224
  %v1266 = vpack.c.bf16 %v1227, %v1226
  %v1267 = vpack.c.bf16 %v1229, %v1228
  %v1268 = vpack.c.bf16 %v1231, %v1230
  %v1269 = vpack.c.bf16 %v1233, %v1232
  %v1270 = vpack.c.bf16 %v1235, %v1234
  %v1271 = vpack.c.bf16 %v1237, %v1236
  %v1272 = vpack.c.bf16 %v1239, %v1238
  %v1273 = vpack.c.bf16 %v1241, %v1240
  %v1274 = vld [vmem:[%s1177 + $0x1] sm:$0xff]
  %v1275 = vld [vmem:[%s1177 + $0x9] sm:$0xff]
  %v1276 = vld [vmem:[%s1177 + $0x19] sm:$0xff]
  %v1277 = vld [vmem:[%s1177 + $0x21] sm:$0xff]
  %v1278 = vld [vmem:[%s1177 + $0x31] sm:$0xff]
  %v1279 = vld [vmem:[%s1177 + $0x39] sm:$0xff]
  %v1280 = vld [vmem:[%s1177 + $0x49] sm:$0xff]
  %v1281 = vld [vmem:[%s1177 + $0x51] sm:$0xff]
  %v1282 = vld [vmem:[%s1177 + $0x61] sm:$0xff]
  %v1283 = vld [vmem:[%s1177 + $0x69] sm:$0xff]
  %v1284 = vld [vmem:[%s1177 + $0x79] sm:$0xff]
  %v1285 = vld [vmem:[%s1177 + $0x81] sm:$0xff]
  %v1286 = vld [vmem:[%s1177 + $0x91] sm:$0xff]
  %v1287 = vld [vmem:[%s1177 + $0x99] sm:$0xff]
  %v1288 = vld [vmem:[%s1177 + $0xa9] sm:$0xff]
  %v1289 = vld [vmem:[%s1177 + $0xb1] sm:$0xff]
  %v1290 = vld [vmem:[%s1177 + $0xc1] sm:$0xff]
  %v1291 = vld [vmem:[%s1177 + $0xc9] sm:$0xff]
  %v1292 = vld [vmem:[%s1177 + $0xd9] sm:$0xff]
  %v1293 = vld [vmem:[%s1177 + $0xe1] sm:$0xff]
  %v1294 = vld [vmem:[%s1177 + $0xf1] sm:$0xff]
  %v1295 = vld [vmem:[%s1177 + $0xf9] sm:$0xff]
  %v1296 = vld [vmem:[%s1177 + $0x109] sm:$0xff]
  %v1297 = vld [vmem:[%s1177 + $0x111] sm:$0xff]
  %v1298 = vld [vmem:[%s1177 + $0x121] sm:$0xff]
  %v1299 = vld [vmem:[%s1177 + $0x129] sm:$0xff]
  %v1300 = vld [vmem:[%s1177 + $0x139] sm:$0xff]
  %v1301 = vld [vmem:[%s1177 + $0x141] sm:$0xff]
  %v1302 = vld [vmem:[%s1177 + $0x151] sm:$0xff]
  %v1303 = vld [vmem:[%s1177 + $0x159] sm:$0xff]
  %v1304 = vld [vmem:[%s1177 + $0x169] sm:$0xff]
  %v1305 = vld [vmem:[%s1177 + $0x171] sm:$0xff]
  %v1306 = vld [vmem:[%s1177 + $0x1b1] sm:$0xff]
  %v1307 = vld [vmem:[%s1177 + $0x1b9] sm:$0xff]
  %v1308 = vld [vmem:[%s1177 + $0x1c9] sm:$0xff]
  %v1309 = vld [vmem:[%s1177 + $0x1d1] sm:$0xff]
  %v1310 = vld [vmem:[%s1177 + $0x1e1] sm:$0xff]
  %v1311 = vld [vmem:[%s1177 + $0x1e9] sm:$0xff]
  %v1312 = vld [vmem:[%s1177 + $0x1f9] sm:$0xff]
  %v1313 = vld [vmem:[%s1177 + $0x201] sm:$0xff]
  %v1314 = vld [vmem:[%s1177 + $0x211] sm:$0xff]
  %v1315 = vld [vmem:[%s1177 + $0x219] sm:$0xff]
  %v1316 = vld [vmem:[%s1177 + $0x229] sm:$0xff]
  %v1317 = vld [vmem:[%s1177 + $0x231] sm:$0xff]
  %v1318 = vld [vmem:[%s1177 + $0x241] sm:$0xff]
  %v1319 = vld [vmem:[%s1177 + $0x249] sm:$0xff]
  %v1320 = vld [vmem:[%s1177 + $0x259] sm:$0xff]
  %v1321 = vld [vmem:[%s1177 + $0x261] sm:$0xff]
  %v1322 = vld [vmem:[%s1177 + $0x271] sm:$0xff]
  %v1323 = vld [vmem:[%s1177 + $0x279] sm:$0xff]
  %v1324 = vld [vmem:[%s1177 + $0x289] sm:$0xff]
  %v1325 = vld [vmem:[%s1177 + $0x291] sm:$0xff]
  %v1326 = vld [vmem:[%s1177 + $0x2a1] sm:$0xff]
  %v1327 = vld [vmem:[%s1177 + $0x2a9] sm:$0xff]
  %v1328 = vld [vmem:[%s1177 + $0x2b9] sm:$0xff]
  %v1329 = vld [vmem:[%s1177 + $0x2c1] sm:$0xff]
  %v1330 = vld [vmem:[%s1177 + $0x2d1] sm:$0xff]
  %v1331 = vld [vmem:[%s1177 + $0x2d9] sm:$0xff]
  %v1332 = vld [vmem:[%s1177 + $0x2e9] sm:$0xff]
  %v1333 = vld [vmem:[%s1177 + $0x2f1] sm:$0xff]
  %v1334 = vld [vmem:[%s1177 + $0x301] sm:$0xff]
  %v1335 = vld [vmem:[%s1177 + $0x309] sm:$0xff]
  %v1336 = vld [vmem:[%s1177 + $0x319] sm:$0xff]
  %v1337 = vld [vmem:[%s1177 + $0x321] sm:$0xff]
  %v1338 = vpack.c.bf16 %v1275, %v1274
  %v1339 = vpack.c.bf16 %v1277, %v1276
  %v1340 = vpack.c.bf16 %v1279, %v1278
  %v1341 = vpack.c.bf16 %v1281, %v1280
  %v1342 = vpack.c.bf16 %v1283, %v1282
  %v1343 = vpack.c.bf16 %v1285, %v1284
  %v1344 = vpack.c.bf16 %v1287, %v1286
  %v1345 = vpack.c.bf16 %v1289, %v1288
  %v1346 = vpack.c.bf16 %v1291, %v1290
  %v1347 = vpack.c.bf16 %v1293, %v1292
  %v1348 = vpack.c.bf16 %v1295, %v1294
  %v1349 = vpack.c.bf16 %v1297, %v1296
  %v1350 = vpack.c.bf16 %v1299, %v1298
  %v1351 = vpack.c.bf16 %v1301, %v1300
  %v1352 = vpack.c.bf16 %v1303, %v1302
  %v1353 = vpack.c.bf16 %v1305, %v1304
  %v1354 = vpack.c.bf16 %v1307, %v1306
  %v1355 = vpack.c.bf16 %v1309, %v1308
  %v1356 = vpack.c.bf16 %v1311, %v1310
  %v1357 = vpack.c.bf16 %v1313, %v1312
  %v1358 = vpack.c.bf16 %v1315, %v1314
  %v1359 = vpack.c.bf16 %v1317, %v1316
  %v1360 = vpack.c.bf16 %v1319, %v1318
  %v1361 = vpack.c.bf16 %v1321, %v1320
  %v1362 = vpack.c.bf16 %v1323, %v1322
  %v1363 = vpack.c.bf16 %v1325, %v1324
  %v1364 = vpack.c.bf16 %v1327, %v1326
  %v1365 = vpack.c.bf16 %v1329, %v1328
  %v1366 = vpack.c.bf16 %v1331, %v1330
  %v1367 = vpack.c.bf16 %v1333, %v1332
  %v1368 = vpack.c.bf16 %v1335, %v1334
  %v1369 = vpack.c.bf16 %v1337, %v1336
  %v1370 = vld [vmem:[%s1177 + $0x2] sm:$0xff]
  %v1371 = vld [vmem:[%s1177 + $0xa] sm:$0xff]
  %v1372 = vld [vmem:[%s1177 + $0x1a] sm:$0xff]
  %v1373 = vld [vmem:[%s1177 + $0x22] sm:$0xff]
  %v1374 = vld [vmem:[%s1177 + $0x32] sm:$0xff]
  %v1375 = vld [vmem:[%s1177 + $0x3a] sm:$0xff]
  %v1376 = vld [vmem:[%s1177 + $0x4a] sm:$0xff]
  %v1377 = vld [vmem:[%s1177 + $0x52] sm:$0xff]
  %v1378 = vld [vmem:[%s1177 + $0x62] sm:$0xff]
  %v1379 = vld [vmem:[%s1177 + $0x6a] sm:$0xff]
  %v1380 = vld [vmem:[%s1177 + $0x7a] sm:$0xff]
  %v1381 = vld [vmem:[%s1177 + $0x82] sm:$0xff]
  %v1382 = vld [vmem:[%s1177 + $0x92] sm:$0xff]
  %v1383 = vld [vmem:[%s1177 + $0x9a] sm:$0xff]
  %v1384 = vld [vmem:[%s1177 + $0xaa] sm:$0xff]
  %v1385 = vld [vmem:[%s1177 + $0xb2] sm:$0xff]
  %v1386 = vld [vmem:[%s1177 + $0xc2] sm:$0xff]
  %v1387 = vld [vmem:[%s1177 + $0xca] sm:$0xff]
  %v1388 = vld [vmem:[%s1177 + $0xda] sm:$0xff]
  %v1389 = vld [vmem:[%s1177 + $0xe2] sm:$0xff]
  %v1390 = vld [vmem:[%s1177 + $0xf2] sm:$0xff]
  %v1391 = vld [vmem:[%s1177 + $0xfa] sm:$0xff]
  %v1392 = vld [vmem:[%s1177 + $0x10a] sm:$0xff]
  %v1393 = vld [vmem:[%s1177 + $0x112] sm:$0xff]
  %v1394 = vld [vmem:[%s1177 + $0x122] sm:$0xff]
  %v1395 = vld [vmem:[%s1177 + $0x12a] sm:$0xff]
  %v1396 = vld [vmem:[%s1177 + $0x13a] sm:$0xff]
  %v1397 = vld [vmem:[%s1177 + $0x142] sm:$0xff]
  %v1398 = vld [vmem:[%s1177 + $0x152] sm:$0xff]
  %v1399 = vld [vmem:[%s1177 + $0x15a] sm:$0xff]
  %v1400 = vld [vmem:[%s1177 + $0x16a] sm:$0xff]
  %v1401 = vld [vmem:[%s1177 + $0x172] sm:$0xff]
  %v1402 = vld [vmem:[%s1177 + $0x1b2] sm:$0xff]
  %v1403 = vld [vmem:[%s1177 + $0x1ba] sm:$0xff]
  %v1404 = vld [vmem:[%s1177 + $0x1ca] sm:$0xff]
  %v1405 = vld [vmem:[%s1177 + $0x1d2] sm:$0xff]
  %v1406 = vld [vmem:[%s1177 + $0x1e2] sm:$0xff]
  %v1407 = vld [vmem:[%s1177 + $0x1ea] sm:$0xff]
  %v1408 = vld [vmem:[%s1177 + $0x1fa] sm:$0xff]
  %v1409 = vld [vmem:[%s1177 + $0x202] sm:$0xff]
  %v1410 = vld [vmem:[%s1177 + $0x212] sm:$0xff]
  %v1411 = vld [vmem:[%s1177 + $0x21a] sm:$0xff]
  %v1412 = vld [vmem:[%s1177 + $0x22a] sm:$0xff]
  %v1413 = vld [vmem:[%s1177 + $0x232] sm:$0xff]
  %v1414 = vld [vmem:[%s1177 + $0x242] sm:$0xff]
  %v1415 = vld [vmem:[%s1177 + $0x24a] sm:$0xff]
  %v1416 = vld [vmem:[%s1177 + $0x25a] sm:$0xff]
  %v1417 = vld [vmem:[%s1177 + $0x262] sm:$0xff]
  %v1418 = vld [vmem:[%s1177 + $0x272] sm:$0xff]
  %v1419 = vld [vmem:[%s1177 + $0x27a] sm:$0xff]
  %v1420 = vld [vmem:[%s1177 + $0x28a] sm:$0xff]
  %v1421 = vld [vmem:[%s1177 + $0x292] sm:$0xff]
  %v1422 = vld [vmem:[%s1177 + $0x2a2] sm:$0xff]
  %v1423 = vld [vmem:[%s1177 + $0x2aa] sm:$0xff]
  %v1424 = vld [vmem:[%s1177 + $0x2ba] sm:$0xff]
  %v1425 = vld [vmem:[%s1177 + $0x2c2] sm:$0xff]
  %v1426 = vld [vmem:[%s1177 + $0x2d2] sm:$0xff]
  %v1427 = vld [vmem:[%s1177 + $0x2da] sm:$0xff]
  %v1428 = vld [vmem:[%s1177 + $0x2ea] sm:$0xff]
  %v1429 = vld [vmem:[%s1177 + $0x2f2] sm:$0xff]
  %v1430 = vld [vmem:[%s1177 + $0x302] sm:$0xff]
  %v1431 = vld [vmem:[%s1177 + $0x30a] sm:$0xff]
  %v1432 = vld [vmem:[%s1177 + $0x31a] sm:$0xff]
  %v1433 = vld [vmem:[%s1177 + $0x322] sm:$0xff]
  %v1434 = vpack.c.bf16 %v1371, %v1370
  %v1435 = vpack.c.bf16 %v1373, %v1372
  %v1436 = vpack.c.bf16 %v1375, %v1374
  %v1437 = vpack.c.bf16 %v1377, %v1376
  %v1438 = vpack.c.bf16 %v1379, %v1378
  %v1439 = vpack.c.bf16 %v1381, %v1380
  %v1440 = vpack.c.bf16 %v1383, %v1382
  %v1441 = vpack.c.bf16 %v1385, %v1384
  %v1442 = vpack.c.bf16 %v1387, %v1386
  %v1443 = vpack.c.bf16 %v1389, %v1388
  %v1444 = vpack.c.bf16 %v1391, %v1390
  %v1445 = vpack.c.bf16 %v1393, %v1392
  %v1446 = vpack.c.bf16 %v1395, %v1394
  %v1447 = vpack.c.bf16 %v1397, %v1396
  %v1448 = vpack.c.bf16 %v1399, %v1398
  %v1449 = vpack.c.bf16 %v1401, %v1400
  %v1450 = vpack.c.bf16 %v1403, %v1402
  %v1451 = vpack.c.bf16 %v1405, %v1404
  %v1452 = vpack.c.bf16 %v1407, %v1406
  %v1453 = vpack.c.bf16 %v1409, %v1408
  %v1454 = vpack.c.bf16 %v1411, %v1410
  %v1455 = vpack.c.bf16 %v1413, %v1412
  %v1456 = vpack.c.bf16 %v1415, %v1414
  %v1457 = vpack.c.bf16 %v1417, %v1416
  %v1458 = vpack.c.bf16 %v1419, %v1418
  %v1459 = vpack.c.bf16 %v1421, %v1420
  %v1460 = vpack.c.bf16 %v1423, %v1422
  %v1461 = vpack.c.bf16 %v1425, %v1424
  %v1462 = vpack.c.bf16 %v1427, %v1426
  %v1463 = vpack.c.bf16 %v1429, %v1428
  %v1464 = vpack.c.bf16 %v1431, %v1430
  %v1465 = vpack.c.bf16 %v1433, %v1432
  %v1466 = vld [vmem:[%s3] sm:$0xf]
  %v1467 = vld [vmem:[%s3 + $0x4] sm:$0xf]
  %v1468 = vld [vmem:[%s3 + $0x8] sm:$0xf]
  %v1469 = vld [vmem:[%s3 + $0xc] sm:$0xf]
  %v1470 = vld [vmem:[%s3 + $0x10] sm:$0xf]
  %v1471 = vld [vmem:[%s3 + $0x14] sm:$0xf]
  %v1472 = vld [vmem:[%s3 + $0x18] sm:$0xf]
  %v1473 = vld [vmem:[%s3 + $0x1c] sm:$0xf]
  %v1474 = vld [vmem:[%s3 + $0x20] sm:$0xf]
  %v1475 = vld [vmem:[%s3 + $0x24] sm:$0xf]
  %v1476 = vld [vmem:[%s3 + $0x28] sm:$0xf]
  %v1477 = vld [vmem:[%s3 + $0x2c] sm:$0xf]
  %v1478 = vld [vmem:[%s3 + $0x30] sm:$0xf]
  %v1479 = vld [vmem:[%s3 + $0x34] sm:$0xf]
  %v1480 = vld [vmem:[%s3 + $0x38] sm:$0xf]
  %v1481 = vld [vmem:[%s3 + $0x3c] sm:$0xf]
  %v1482 = vld [vmem:[%s3 + $0x40] sm:$0xf]
  %v1483 = vld [vmem:[%s3 + $0x44] sm:$0xf]
  %v1484 = vld [vmem:[%s3 + $0x48] sm:$0xf]
  %v1485 = vld [vmem:[%s3 + $0x4c] sm:$0xf]
  %v1486 = vld [vmem:[%s3 + $0x50] sm:$0xf]
  %v1487 = vld [vmem:[%s3 + $0x54] sm:$0xf]
  %v1488 = vld [vmem:[%s3 + $0x58] sm:$0xf]
  %v1489 = vld [vmem:[%s3 + $0x5c] sm:$0xf]
  %v1490 = vld [vmem:[%s3 + $0x60] sm:$0xf]
  %v1491 = vld [vmem:[%s3 + $0x64] sm:$0xf]
  %v1492 = vld [vmem:[%s3 + $0x68] sm:$0xf]
  %v1493 = vld [vmem:[%s3 + $0x6c] sm:$0xf]
  %v1494 = vld [vmem:[%s3 + $0x70] sm:$0xf]
  %v1495 = vld [vmem:[%s3 + $0x74] sm:$0xf]
  %v1496 = vld [vmem:[%s3 + $0x78] sm:$0xf]
  %v1497 = vld [vmem:[%s3 + $0x7c] sm:$0xf]
  %v1498 = vld [vmem:[%s3 + $0x80] sm:$0xf]
  %v1499 = vld [vmem:[%s3 + $0x84] sm:$0xf]
  %v1500 = vld [vmem:[%s3 + $0x88] sm:$0xf]
  %v1501 = vld [vmem:[%s3 + $0x8c] sm:$0xf]
  %v1502 = vld [vmem:[%s3 + $0x90] sm:$0xf]
  %v1503 = vld [vmem:[%s3 + $0x94] sm:$0xf]
  %v1504 = vld [vmem:[%s3 + $0x98] sm:$0xf]
  %v1505 = vld [vmem:[%s3 + $0x9c] sm:$0xf]
  %v1506 = vld [vmem:[%s3 + $0xa0] sm:$0xf]
  %v1507 = vld [vmem:[%s3 + $0xa4] sm:$0xf]
  %v1508 = vld [vmem:[%s3 + $0xa8] sm:$0xf]
  %v1509 = vld [vmem:[%s3 + $0xac] sm:$0xf]
  %v1510 = vld [vmem:[%s3 + $0xb0] sm:$0xf]
  %v1511 = vld [vmem:[%s3 + $0xb4] sm:$0xf]
  %v1512 = vld [vmem:[%s3 + $0xb8] sm:$0xf]
  %v1513 = vld [vmem:[%s3 + $0xbc] sm:$0xf]
  %v1514 = vld [vmem:[%s3 + $0xc0] sm:$0xf]
  %v1515 = vld [vmem:[%s3 + $0xc4] sm:$0xf]
  %v1516 = vld [vmem:[%s3 + $0xc8] sm:$0xf]
  %v1517 = vld [vmem:[%s3 + $0xcc] sm:$0xf]
  %v1518 = vld [vmem:[%s3 + $0xd0] sm:$0xf]
  %v1519 = vld [vmem:[%s3 + $0xd4] sm:$0xf]
  %v1520 = vld [vmem:[%s3 + $0xd8] sm:$0xf]
  %v1521 = vld [vmem:[%s3 + $0xdc] sm:$0xf]
  %v1522 = vld [vmem:[%s3 + $0xe0] sm:$0xf]
  %v1523 = vld [vmem:[%s3 + $0xe4] sm:$0xf]
  %v1524 = vld [vmem:[%s3 + $0xe8] sm:$0xf]
  %v1525 = vld [vmem:[%s3 + $0xec] sm:$0xf]
  %v1526 = vld [vmem:[%s3 + $0xf0] sm:$0xf]
  %v1527 = vld [vmem:[%s3 + $0xf4] sm:$0xf]
  %v1528 = vld [vmem:[%s3 + $0xf8] sm:$0xf]
  %v1529 = vld [vmem:[%s3 + $0xfc] sm:$0xf]
  %v1530 = vld [vmem:[%s3 + $0x100] sm:$0xf]
  %v1531 = vld [vmem:[%s3 + $0x104] sm:$0xf]
  %v1532 = vld [vmem:[%s3 + $0x108] sm:$0xf]
  %v1533 = vld [vmem:[%s3 + $0x10c] sm:$0xf]
  %v1534 = vld [vmem:[%s3 + $0x110] sm:$0xf]
  %v1535 = vld [vmem:[%s3 + $0x114] sm:$0xf]
  %v1536 = vld [vmem:[%s3 + $0x118] sm:$0xf]
  %v1537 = vld [vmem:[%s3 + $0x11c] sm:$0xf]
  %v1538 = vld [vmem:[%s3 + $0x120] sm:$0xf]
  %v1539 = vld [vmem:[%s3 + $0x124] sm:$0xf]
  %v1540 = vld [vmem:[%s3 + $0x128] sm:$0xf]
  %v1541 = vld [vmem:[%s3 + $0x12c] sm:$0xf]
  %v1542 = vld [vmem:[%s3 + $0x130] sm:$0xf]
  %v1543 = vld [vmem:[%s3 + $0x134] sm:$0xf]
  %v1544 = vld [vmem:[%s3 + $0x138] sm:$0xf]
  %v1545 = vld [vmem:[%s3 + $0x13c] sm:$0xf]
  %v1546 = vld [vmem:[%s3 + $0x140] sm:$0xf]
  %v1547 = vld [vmem:[%s3 + $0x144] sm:$0xf]
  %v1548 = vld [vmem:[%s3 + $0x148] sm:$0xf]
  %v1549 = vld [vmem:[%s3 + $0x14c] sm:$0xf]
  %v1550 = vld [vmem:[%s3 + $0x150] sm:$0xf]
  %v1551 = vld [vmem:[%s3 + $0x154] sm:$0xf]
  %v1552 = vld [vmem:[%s3 + $0x158] sm:$0xf]
  %v1553 = vld [vmem:[%s3 + $0x15c] sm:$0xf]
  %v1554 = vld [vmem:[%s3 + $0x160] sm:$0xf]
  %v1555 = vld [vmem:[%s3 + $0x164] sm:$0xf]
  %v1556 = vld [vmem:[%s3 + $0x168] sm:$0xf]
  %v1557 = vld [vmem:[%s3 + $0x16c] sm:$0xf]
  %v1558 = vld [vmem:[%s3 + $0x170] sm:$0xf]
  %v1559 = vld [vmem:[%s3 + $0x174] sm:$0xf]
  %v1560 = vld [vmem:[%s3 + $0x178] sm:$0xf]
  %v1561 = vld [vmem:[%s3 + $0x17c] sm:$0xf]
  %v1562 = vld [vmem:[%s3 + $0x180] sm:$0xf]
  %v1563 = vld [vmem:[%s3 + $0x184] sm:$0xf]
  %v1564 = vld [vmem:[%s3 + $0x188] sm:$0xf]
  %v1565 = vld [vmem:[%s3 + $0x18c] sm:$0xf]
  %v1566 = vld [vmem:[%s3 + $0x190] sm:$0xf]
  %v1567 = vld [vmem:[%s3 + $0x194] sm:$0xf]
  %v1568 = vld [vmem:[%s3 + $0x198] sm:$0xf]
  %v1569 = vld [vmem:[%s3 + $0x19c] sm:$0xf]
  %v1570 = vld [vmem:[%s3 + $0x1a0] sm:$0xf]
  %v1571 = vld [vmem:[%s3 + $0x1a4] sm:$0xf]
  %v1572 = vld [vmem:[%s3 + $0x1a8] sm:$0xf]
  %v1573 = vld [vmem:[%s3 + $0x1ac] sm:$0xf]
  %v1574 = vld [vmem:[%s3 + $0x1b0] sm:$0xf]
  %v1575 = vld [vmem:[%s3 + $0x1b4] sm:$0xf]
  %v1576 = vld [vmem:[%s3 + $0x1b8] sm:$0xf]
  %v1577 = vld [vmem:[%s3 + $0x1bc] sm:$0xf]
  %v1578 = vld [vmem:[%s3 + $0x1c0] sm:$0xf]
  %v1579 = vld [vmem:[%s3 + $0x1c4] sm:$0xf]
  %v1580 = vld [vmem:[%s3 + $0x1c8] sm:$0xf]
  %v1581 = vld [vmem:[%s3 + $0x1cc] sm:$0xf]
  %v1582 = vld [vmem:[%s3 + $0x1d0] sm:$0xf]
  %v1583 = vld [vmem:[%s3 + $0x1d4] sm:$0xf]
  %v1584 = vld [vmem:[%s3 + $0x1d8] sm:$0xf]
  %v1585 = vld [vmem:[%s3 + $0x1dc] sm:$0xf]
  %v1586 = vld [vmem:[%s3 + $0x1e0] sm:$0xf]
  %v1587 = vld [vmem:[%s3 + $0x1e4] sm:$0xf]
  %v1588 = vld [vmem:[%s3 + $0x1e8] sm:$0xf]
  %v1589 = vld [vmem:[%s3 + $0x1ec] sm:$0xf]
  %v1590 = vld [vmem:[%s3 + $0x1f0] sm:$0xf]
  %v1591 = vld [vmem:[%s3 + $0x1f4] sm:$0xf]
  %v1592 = vld [vmem:[%s3 + $0x1f8] sm:$0xf]
  %v1593 = vld [vmem:[%s3 + $0x1fc] sm:$0xf]
  %v1594 = vld [vmem:[%s3 + $0x200] sm:$0xf]
  %v1595 = vld [vmem:[%s3 + $0x204] sm:$0xf]
  %v1596 = vld [vmem:[%s3 + $0x208] sm:$0xf]
  %v1597 = vld [vmem:[%s3 + $0x20c] sm:$0xf]
  %v1598 = vld [vmem:[%s3 + $0x210] sm:$0xf]
  %v1599 = vld [vmem:[%s3 + $0x214] sm:$0xf]
  %v1600 = vld [vmem:[%s3 + $0x218] sm:$0xf]
  %v1601 = vld [vmem:[%s3 + $0x21c] sm:$0xf]
  %v1602 = vld [vmem:[%s3 + $0x220] sm:$0xf]
  %v1603 = vld [vmem:[%s3 + $0x224] sm:$0xf]
  %v1604 = vld [vmem:[%s3 + $0x228] sm:$0xf]
  %v1605 = vld [vmem:[%s3 + $0x22c] sm:$0xf]
  %v1606 = vld [vmem:[%s3 + $0x230] sm:$0xf]
  %v1607 = vld [vmem:[%s3 + $0x234] sm:$0xf]
  %v1608 = vld [vmem:[%s3 + $0x238] sm:$0xf]
  %v1609 = vld [vmem:[%s3 + $0x23c] sm:$0xf]
  %v1610 = vld [vmem:[%s4] sm:$0x1]
  %v1612 = vlaneseq
  %v1613 = vshrl.u32 %v1612, 7
  %v1614 = vsub.s32 0, %v1613
  %v1615 = vrot.slane %v1610, %v1614
  %v1761 = vunpack.c.l.b16 %v1466
  %v1762 = vunpack.c.l.b16 %v1467
  %v1763 = vunpack.c.l.b16 %v1468
  %v1764 = vunpack.c.l.b16 %v1469
  %v1765 = vunpack.c.l.b16 %v1470
  %v1766 = vunpack.c.l.b16 %v1471
  %v1767 = vunpack.c.l.b16 %v1472
  %v1768 = vunpack.c.l.b16 %v1473
  %v1769 = vunpack.c.l.b16 %v1474
  %v1770 = vunpack.c.l.b16 %v1475
  %v1771 = vunpack.c.l.b16 %v1476
  %v1772 = vunpack.c.l.b16 %v1477
  %v1773 = vunpack.c.l.b16 %v1478
  %v1774 = vunpack.c.l.b16 %v1479
  %v1775 = vunpack.c.l.b16 %v1480
  %v1776 = vunpack.c.l.b16 %v1481
  %v1777 = vunpack.c.l.b16 %v1482
  %v1778 = vunpack.c.l.b16 %v1483
  %v1779 = vunpack.c.l.b16 %v1484
  %v1780 = vunpack.c.l.b16 %v1485
  %v1781 = vunpack.c.l.b16 %v1486
  %v1782 = vunpack.c.l.b16 %v1487
  %v1783 = vunpack.c.l.b16 %v1488
  %v1784 = vunpack.c.l.b16 %v1489
  %v1785 = vunpack.c.l.b16 %v1490
  %v1786 = vunpack.c.l.b16 %v1491
  %v1787 = vunpack.c.l.b16 %v1492
  %v1788 = vunpack.c.l.b16 %v1493
  %v1789 = vunpack.c.l.b16 %v1494
  %v1790 = vunpack.c.l.b16 %v1495
  %v1791 = vunpack.c.l.b16 %v1496
  %v1792 = vunpack.c.l.b16 %v1497
  %v1793 = vunpack.c.l.b16 %v1498
  %v1794 = vunpack.c.l.b16 %v1499
  %v1795 = vunpack.c.l.b16 %v1500
  %v1796 = vunpack.c.l.b16 %v1501
  %v1797 = vunpack.c.l.b16 %v1502
  %v1798 = vunpack.c.l.b16 %v1503
  %v1799 = vunpack.c.l.b16 %v1504
  %v1800 = vunpack.c.l.b16 %v1505
  %v1801 = vunpack.c.l.b16 %v1506
  %v1802 = vunpack.c.l.b16 %v1507
  %v1803 = vunpack.c.l.b16 %v1508
  %v1804 = vunpack.c.l.b16 %v1509
  %v1805 = vunpack.c.l.b16 %v1510
  %v1806 = vunpack.c.l.b16 %v1511
  %v1807 = vunpack.c.l.b16 %v1512
  %v1808 = vunpack.c.l.b16 %v1513
  %v1809 = vunpack.c.l.b16 %v1514
  %v1810 = vunpack.c.l.b16 %v1515
  %v1811 = vunpack.c.l.b16 %v1516
  %v1812 = vunpack.c.l.b16 %v1517
  %v1813 = vunpack.c.l.b16 %v1518
  %v1814 = vunpack.c.l.b16 %v1519
  %v1815 = vunpack.c.l.b16 %v1520
  %v1816 = vunpack.c.l.b16 %v1521
  %v1817 = vunpack.c.l.b16 %v1522
  %v1818 = vunpack.c.l.b16 %v1523
  %v1819 = vunpack.c.l.b16 %v1524
  %v1820 = vunpack.c.l.b16 %v1525
  %v1821 = vunpack.c.l.b16 %v1526
  %v1822 = vunpack.c.l.b16 %v1527
  %v1823 = vunpack.c.l.b16 %v1528
  %v1824 = vunpack.c.l.b16 %v1529
  %v1825 = vunpack.c.l.b16 %v1530
  %v1826 = vunpack.c.l.b16 %v1531
  %v1827 = vunpack.c.l.b16 %v1532
  %v1828 = vunpack.c.l.b16 %v1533
  %v1829 = vunpack.c.l.b16 %v1534
  %v1830 = vunpack.c.l.b16 %v1535
  %v1831 = vunpack.c.l.b16 %v1536
  %v1832 = vunpack.c.l.b16 %v1537
  %v1833 = vunpack.c.l.b16 %v1538
  %v1834 = vunpack.c.l.b16 %v1539
  %v1835 = vunpack.c.l.b16 %v1540
  %v1836 = vunpack.c.l.b16 %v1541
  %v1837 = vunpack.c.l.b16 %v1542
  %v1838 = vunpack.c.l.b16 %v1543
  %v1839 = vunpack.c.l.b16 %v1544
  %v1840 = vunpack.c.l.b16 %v1545
  %v1841 = vunpack.c.l.b16 %v1546
  %v1842 = vunpack.c.l.b16 %v1547
  %v1843 = vunpack.c.l.b16 %v1548
  %v1844 = vunpack.c.l.b16 %v1549
  %v1845 = vunpack.c.l.b16 %v1550
  %v1846 = vunpack.c.l.b16 %v1551
  %v1847 = vunpack.c.l.b16 %v1552
  %v1848 = vunpack.c.l.b16 %v1553
  %v1849 = vunpack.c.l.b16 %v1554
  %v1850 = vunpack.c.l.b16 %v1555
  %v1851 = vunpack.c.l.b16 %v1556
  %v1852 = vunpack.c.l.b16 %v1557
  %v1853 = vunpack.c.l.b16 %v1558
  %v1854 = vunpack.c.l.b16 %v1559
  %v1855 = vunpack.c.l.b16 %v1560
  %v1856 = vunpack.c.l.b16 %v1561
  %v1857 = vunpack.c.l.b16 %v1562
  %v1858 = vunpack.c.l.b16 %v1563
  %v1859 = vunpack.c.l.b16 %v1564
  %v1860 = vunpack.c.l.b16 %v1565
  %v1861 = vunpack.c.l.b16 %v1566
  %v1862 = vunpack.c.l.b16 %v1567
  %v1863 = vunpack.c.l.b16 %v1568
  %v1864 = vunpack.c.l.b16 %v1569
  %v1865 = vunpack.c.l.b16 %v1570
  %v1866 = vunpack.c.l.b16 %v1571
  %v1867 = vunpack.c.l.b16 %v1572
  %v1868 = vunpack.c.l.b16 %v1573
  %v1869 = vunpack.c.l.b16 %v1574
  %v1870 = vunpack.c.l.b16 %v1575
  %v1871 = vunpack.c.l.b16 %v1576
  %v1872 = vunpack.c.l.b16 %v1577
  %v1873 = vunpack.c.l.b16 %v1578
  %v1874 = vunpack.c.l.b16 %v1579
  %v1875 = vunpack.c.l.b16 %v1580
  %v1876 = vunpack.c.l.b16 %v1581
  %v1877 = vunpack.c.l.b16 %v1582
  %v1878 = vunpack.c.l.b16 %v1583
  %v1879 = vunpack.c.l.b16 %v1584
  %v1880 = vunpack.c.l.b16 %v1585
  %v1881 = vunpack.c.l.b16 %v1586
  %v1882 = vunpack.c.l.b16 %v1587
  %v1883 = vunpack.c.l.b16 %v1588
  %v1884 = vunpack.c.l.b16 %v1589
  %v1885 = vunpack.c.l.b16 %v1590
  %v1886 = vunpack.c.l.b16 %v1591
  %v1887 = vunpack.c.l.b16 %v1592
  %v1888 = vunpack.c.l.b16 %v1593
  %v1889 = vunpack.c.l.b16 %v1594
  %v1890 = vunpack.c.l.b16 %v1595
  %v1891 = vunpack.c.l.b16 %v1596
  %v1892 = vunpack.c.l.b16 %v1597
  %v1893 = vunpack.c.l.b16 %v1598
  %v1894 = vunpack.c.l.b16 %v1599
  %v1895 = vunpack.c.l.b16 %v1600
  %v1896 = vunpack.c.l.b16 %v1601
  %v1897 = vunpack.c.l.b16 %v1602
  %v1898 = vunpack.c.l.b16 %v1603
  %v1899 = vunpack.c.l.b16 %v1604
  %v1900 = vunpack.c.l.b16 %v1605
  %v1901 = vunpack.c.l.b16 %v1606
  %v1902 = vunpack.c.l.b16 %v1607
  %v1903 = vunpack.c.l.b16 %v1608
  %v1904 = vunpack.c.l.b16 %v1609
  %v1905 = vpack.c.b16 %v1762, %v1761
  %v1906 = vpack.c.b16 %v1764, %v1763
  %v1907 = vpack.c.b16 %v1766, %v1765
  %v1908 = vpack.c.b16 %v1768, %v1767
  %v1909 = vpack.c.b16 %v1770, %v1769
  %v1910 = vpack.c.b16 %v1772, %v1771
  %v1911 = vpack.c.b16 %v1774, %v1773
  %v1912 = vpack.c.b16 %v1776, %v1775
  %v1913 = vpack.c.b16 %v1778, %v1777
  %v1914 = vpack.c.b16 %v1780, %v1779
  %v1915 = vpack.c.b16 %v1782, %v1781
  %v1916 = vpack.c.b16 %v1784, %v1783
  %v1917 = vpack.c.b16 %v1786, %v1785
  %v1918 = vpack.c.b16 %v1788, %v1787
  %v1919 = vpack.c.b16 %v1790, %v1789
  %v1920 = vpack.c.b16 %v1792, %v1791
  %v1921 = vpack.c.b16 %v1794, %v1793
  %v1922 = vpack.c.b16 %v1796, %v1795
  %v1923 = vpack.c.b16 %v1798, %v1797
  %v1924 = vpack.c.b16 %v1800, %v1799
  %v1925 = vpack.c.b16 %v1802, %v1801
  %v1926 = vpack.c.b16 %v1804, %v1803
  %v1927 = vpack.c.b16 %v1806, %v1805
  %v1928 = vpack.c.b16 %v1808, %v1807
  %v1929 = vpack.c.b16 %v1810, %v1809
  %v1930 = vpack.c.b16 %v1812, %v1811
  %v1931 = vpack.c.b16 %v1814, %v1813
  %v1932 = vpack.c.b16 %v1816, %v1815
  %v1933 = vpack.c.b16 %v1818, %v1817
  %v1934 = vpack.c.b16 %v1820, %v1819
  %v1935 = vpack.c.b16 %v1822, %v1821
  %v1936 = vpack.c.b16 %v1824, %v1823
  %v1937 = vpack.c.b16 %v1826, %v1825
  %v1938 = vpack.c.b16 %v1828, %v1827
  %v1939 = vpack.c.b16 %v1830, %v1829
  %v1940 = vpack.c.b16 %v1832, %v1831
  %v1941 = vpack.c.b16 %v1834, %v1833
  %v1942 = vpack.c.b16 %v1836, %v1835
  %v1943 = vpack.c.b16 %v1838, %v1837
  %v1944 = vpack.c.b16 %v1840, %v1839
  %v1945 = vpack.c.b16 %v1842, %v1841
  %v1946 = vpack.c.b16 %v1844, %v1843
  %v1947 = vpack.c.b16 %v1846, %v1845
  %v1948 = vpack.c.b16 %v1848, %v1847
  %v1949 = vpack.c.b16 %v1850, %v1849
  %v1950 = vpack.c.b16 %v1852, %v1851
  %v1951 = vpack.c.b16 %v1854, %v1853
  %v1952 = vpack.c.b16 %v1856, %v1855
  %v1953 = vpack.c.b16 %v1858, %v1857
  %v1954 = vpack.c.b16 %v1860, %v1859
  %v1955 = vpack.c.b16 %v1862, %v1861
  %v1956 = vpack.c.b16 %v1864, %v1863
  %v1957 = vpack.c.b16 %v1866, %v1865
  %v1958 = vpack.c.b16 %v1868, %v1867
  %v1959 = vpack.c.b16 %v1870, %v1869
  %v1960 = vpack.c.b16 %v1872, %v1871
  %v1961 = vpack.c.b16 %v1874, %v1873
  %v1962 = vpack.c.b16 %v1876, %v1875
  %v1963 = vpack.c.b16 %v1878, %v1877
  %v1964 = vpack.c.b16 %v1880, %v1879
  %v1965 = vpack.c.b16 %v1882, %v1881
  %v1966 = vpack.c.b16 %v1884, %v1883
  %v1967 = vpack.c.b16 %v1886, %v1885
  %v1968 = vpack.c.b16 %v1888, %v1887
  %v1969 = vpack.c.b16 %v1890, %v1889
  %v1970 = vpack.c.b16 %v1892, %v1891
  %v1971 = vpack.c.b16 %v1894, %v1893
  %v1972 = vpack.c.b16 %v1896, %v1895
  %v1973 = vpack.c.b16 %v1898, %v1897
  %v1974 = vpack.c.b16 %v1900, %v1899
  %v1975 = vpack.c.b16 %v1902, %v1901
  %v1976 = vpack.c.b16 %v1904, %v1903
  %2049 = vmatprep.subr.bf16.mxu0 0
  %2050 = vmatpush1.bf16.msra.mxu0 %v1905
  %2051 = vmatprep.subr.bf16.mxu0 0
  %2052 = vmatpush1.bf16.msra.mxu0 %v1906
  %2053 = vmatprep.subr.bf16.mxu0 0
  %2054 = vmatpush1.bf16.msra.mxu0 %v1907
  %2055 = vmatprep.subr.bf16.mxu0 0
  %2056 = vmatpush1.bf16.msra.mxu0 %v1908
  %2057 = vmatprep.subr.bf16.mxu0 0
  %2058 = vmatpush1.bf16.msra.mxu0 %v1909
  %2059 = vmatprep.subr.bf16.mxu0 0
  %2060 = vmatpush1.bf16.msra.mxu0 %v1910
  %2061 = vmatprep.subr.bf16.mxu0 0
  %2062 = vmatpush1.bf16.msra.mxu0 %v1911
  %2063 = vmatprep.subr.bf16.mxu0 0
  %2064 = vmatpush1.bf16.msra.mxu0 %v1912
  %2065 = vmatprep.subr.bf16.mxu0 0
  %2066 = vmatpush1.bf16.msra.mxu0 %v1913
  %2067 = vmatprep.subr.bf16.mxu0 0
  %2068 = vmatpush1.bf16.msra.mxu0 %v1914
  %2069 = vmatprep.subr.bf16.mxu0 0
  %2070 = vmatpush1.bf16.msra.mxu0 %v1915
  %2071 = vmatprep.subr.bf16.mxu0 0
  %2072 = vmatpush1.bf16.msra.mxu0 %v1916
  %2073 = vmatprep.subr.bf16.mxu0 0
  %2074 = vmatpush1.bf16.msra.mxu0 %v1917
  %2075 = vmatprep.subr.bf16.mxu0 0
  %2076 = vmatpush1.bf16.msra.mxu0 %v1918
  %2077 = vmatprep.subr.bf16.mxu0 0
  %2078 = vmatpush1.bf16.msra.mxu0 %v1919
  %2079 = vmatprep.subr.bf16.mxu0 0
  %2080 = vmatpush1.bf16.msra.mxu0 %v1920
  %2081 = vmatprep.mubr.bf16.mxu0 %v761
  %2082 = vmatmul.mubr.bf16.gmra.mrb[0].mxu0 %v665
  %v2083 = vpop.f32.mrb[0].mxu0
  %v2084 = vadd.f32 %v1615, %v2083
  %v2085 = vpop.f32.mrb[0].mxu0
  %v2086 = vpop.f32.mrb[0].mxu0
  %v2087 = vadd.f32 %v1615, %v2086
  %v2088 = vpop.f32.mrb[0].mxu0
  %2089 = vmatprep.mubr.bf16.mxu0 %v762
  %2090 = vmatmul.mubr.bf16.gmra.mrb[0].mxu0 %v666
  %v2091 = vpop.f32.mrb[0].mxu0
  %v2092 = vadd.f32 %v1615, %v2091
  %v2093 = vpop.f32.mrb[0].mxu0
  %v2094 = vpop.f32.mrb[0].mxu0
  %v2095 = vadd.f32 %v1615, %v2094
  %v2096 = vpop.f32.mrb[0].mxu0
  %2097 = vmatprep.mubr.bf16.mxu0 %v763
  %2098 = vmatmul.mubr.bf16.gmra.mrb[0].mxu0 %v667
  %v2099 = vpop.f32.mrb[0].mxu0
  %v2100 = vadd.f32 %v1615, %v2099
  %v2101 = vpop.f32.mrb[0].mxu0
  %v2102 = vpop.f32.mrb[0].mxu0
  %v2103 = vadd.f32 %v1615, %v2102
  %v2104 = vpop.f32.mrb[0].mxu0
  %2105 = vmatprep.mubr.bf16.mxu0 %v764
  %2106 = vmatmul.mubr.bf16.gmra.mrb[0].mxu0 %v668
  %v2107 = vpop.f32.mrb[0].mxu0
  %v2108 = vadd.f32 %v1615, %v2107
  %v2109 = vpop.f32.mrb[0].mxu0
  %v2110 = vpop.f32.mrb[0].mxu0
  %v2111 = vadd.f32 %v1615, %v2110
  %v2112 = vpop.f32.mrb[0].mxu0
  %2113 = vmatprep.mubr.bf16.mxu0 %v765
  %2114 = vmatmul.mubr.bf16.gmra.mrb[0].mxu0 %v669
  %v2115 = vpop.f32.mrb[0].mxu0
  %v2116 = vadd.f32 %v1615, %v2115
  %v2117 = vpop.f32.mrb[0].mxu0
  %v2118 = vpop.f32.mrb[0].mxu0
  %v2119 = vadd.f32 %v1615, %v2118
  %v2120 = vpop.f32.mrb[0].mxu0
  %2121 = vmatprep.mubr.bf16.mxu0 %v766
  %2122 = vmatmul.mubr.bf16.gmra.mrb[0].mxu0 %v670
  %v2123 = vpop.f32.mrb[0].mxu0
  %v2124 = vadd.f32 %v1615, %v2123
  %v2125 = vpop.f32.mrb[0].mxu0
  %v2126 = vpop.f32.mrb[0].mxu0
  %v2127 = vadd.f32 %v1615, %v2126
  %v2128 = vpop.f32.mrb[0].mxu0
  %2129 = vmatprep.mubr.bf16.mxu0 %v767
  %2130 = vmatmul.mubr.bf16.gmra.mrb[0].mxu0 %v671
  %v2131 = vpop.f32.mrb[0].mxu0
  %v2132 = vadd.f32 %v1615, %v2131
  %v2133 = vpop.f32.mrb[0].mxu0
  %v2134 = vpop.f32.mrb[0].mxu0
  %v2135 = vadd.f32 %v1615, %v2134
  %v2136 = vpop.f32.mrb[0].mxu0
  %2137 = vmatprep.mubr.bf16.mxu0 %v768
  %2138 = vmatmul.mubr.bf16.gmra.mrb[0].mxu0 %v672
  %v2139 = vpop.f32.mrb[0].mxu0
  %v2140 = vadd.f32 %v1615, %v2139
  %v2141 = vpop.f32.mrb[0].mxu0
  %v2142 = vpop.f32.mrb[0].mxu0
  %v2143 = vadd.f32 %v1615, %v2142
  %v2144 = vpop.f32.mrb[0].mxu0
  %2145 = vmatprep.mubr.bf16.mxu0 %v769
  %2146 = vmatmul.mubr.bf16.gmra.mrb[0].mxu0 %v673
  %v2147 = vpop.f32.mrb[0].mxu0
  %v2148 = vadd.f32 %v1615, %v2147
  %v2149 = vpop.f32.mrb[0].mxu0
  %v2150 = vpop.f32.mrb[0].mxu0
  %v2151 = vadd.f32 %v1615, %v2150
  %v2152 = vpop.f32.mrb[0].mxu0
  %2153 = vmatprep.mubr.bf16.mxu0 %v770
  %2154 = vmatmul.mubr.bf16.gmra.mrb[0].mxu0 %v674
  %v2155 = vpop.f32.mrb[0].mxu0
  %v2156 = vadd.f32 %v1615, %v2155
  %v2157 = vpop.f32.mrb[0].mxu0
  %v2158 = vpop.f32.mrb[0].mxu0
  %v2159 = vadd.f32 %v1615, %v2158
  %v2160 = vpop.f32.mrb[0].mxu0
  %2161 = vmatprep.mubr.bf16.mxu0 %v771
  %2162 = vmatmul.mubr.bf16.gmra.mrb[0].mxu0 %v675
  %v2163 = vpop.f32.mrb[0].mxu0
  %v2164 = vadd.f32 %v1615, %v2163
  %v2165 = vpop.f32.mrb[0].mxu0
  %v2166 = vpop.f32.mrb[0].mxu0
  %v2167 = vadd.f32 %v1615, %v2166
  %v2168 = vpop.f32.mrb[0].mxu0
  %2169 = vmatprep.mubr.bf16.mxu0 %v772
  %2170 = vmatmul.mubr.bf16.gmra.mrb[0].mxu0 %v676
  %v2171 = vpop.f32.mrb[0].mxu0
  %v2172 = vadd.f32 %v1615, %v2171
  %v2173 = vpop.f32.mrb[0].mxu0
  %v2174 = vpop.f32.mrb[0].mxu0
  %v2175 = vadd.f32 %v1615, %v2174
  %v2176 = vpop.f32.mrb[0].mxu0
  %2177 = vmatprep.mubr.bf16.mxu0 %v773
  %2178 = vmatmul.mubr.bf16.gmra.mrb[0].mxu0 %v677
  %v2179 = vpop.f32.mrb[0].mxu0
  %v2180 = vadd.f32 %v1615, %v2179
  %v2181 = vpop.f32.mrb[0].mxu0
  %v2182 = vpop.f32.mrb[0].mxu0
  %v2183 = vadd.f32 %v1615, %v2182
  %v2184 = vpop.f32.mrb[0].mxu0
  %2185 = vmatprep.mubr.bf16.mxu0 %v774
  %2186 = vmatmul.mubr.bf16.gmra.mrb[0].mxu0 %v678
  %v2187 = vpop.f32.mrb[0].mxu0
  %v2188 = vadd.f32 %v1615, %v2187
  %v2189 = vpop.f32.mrb[0].mxu0
  %v2190 = vpop.f32.mrb[0].mxu0
  %v2191 = vadd.f32 %v1615, %v2190
  %v2192 = vpop.f32.mrb[0].mxu0
  %2193 = vmatprep.mubr.bf16.mxu0 %v775
  %2194 = vmatmul.mubr.bf16.gmra.mrb[0].mxu0 %v679
  %v2195 = vpop.f32.mrb[0].mxu0
  %v2196 = vadd.f32 %v1615, %v2195
  %v2197 = vpop.f32.mrb[0].mxu0
  %v2198 = vpop.f32.mrb[0].mxu0
  %v2199 = vadd.f32 %v1615, %v2198
  %v2200 = vpop.f32.mrb[0].mxu0
  %2201 = vmatprep.mubr.bf16.mxu0 %v776
  %2202 = vmatmul.mubr.bf16.gmra.mrb[0].mxu0 %v680
  %v2203 = vpop.f32.mrb[0].mxu0
  %v2204 = vadd.f32 %v1615, %v2203
  %v2205 = vpop.f32.mrb[0].mxu0
  %v2206 = vpop.f32.mrb[0].mxu0
  %v2207 = vadd.f32 %v1615, %v2206
  %v2208 = vpop.f32.mrb[0].mxu0
  %2209 = vmatprep.mubr.bf16.mxu0 %v777
  %2210 = vmatmul.mubr.bf16.gmra.mrb[0].mxu0 %v681
  %v2211 = vpop.f32.mrb[0].mxu0
  %v2212 = vadd.f32 %v1615, %v2211
  %v2213 = vpop.f32.mrb[0].mxu0
  %v2214 = vpop.f32.mrb[0].mxu0
  %v2215 = vadd.f32 %v1615, %v2214
  %v2216 = vpop.f32.mrb[0].mxu0
  %2217 = vmatprep.mubr.bf16.mxu0 %v778
  %2218 = vmatmul.mubr.bf16.gmra.mrb[0].mxu0 %v682
  %v2219 = vpop.f32.mrb[0].mxu0
  %v2220 = vadd.f32 %v1615, %v2219
  %v2221 = vpop.f32.mrb[0].mxu0
  %v2222 = vpop.f32.mrb[0].mxu0
  %v2223 = vadd.f32 %v1615, %v2222
  %v2224 = vpop.f32.mrb[0].mxu0
  %2225 = vmatprep.mubr.bf16.mxu0 %v779
  %2226 = vmatmul.mubr.bf16.gmra.mrb[0].mxu0 %v683
  %v2227 = vpop.f32.mrb[0].mxu0
  %v2228 = vadd.f32 %v1615, %v2227
  %v2229 = vpop.f32.mrb[0].mxu0
  %v2230 = vpop.f32.mrb[0].mxu0
  %v2231 = vadd.f32 %v1615, %v2230
  %v2232 = vpop.f32.mrb[0].mxu0
  %2233 = vmatprep.mubr.bf16.mxu0 %v780
  %2234 = vmatmul.mubr.bf16.gmra.mrb[0].mxu0 %v684
  %v2235 = vpop.f32.mrb[0].mxu0
  %v2236 = vadd.f32 %v1615, %v2235
  %v2237 = vpop.f32.mrb[0].mxu0
  %v2238 = vpop.f32.mrb[0].mxu0
  %v2239 = vadd.f32 %v1615, %v2238
  %v2240 = vpop.f32.mrb[0].mxu0
  %2241 = vmatprep.mubr.bf16.mxu0 %v781
  %2242 = vmatmul.mubr.bf16.gmra.mrb[0].mxu0 %v685
  %v2243 = vpop.f32.mrb[0].mxu0
  %v2244 = vadd.f32 %v1615, %v2243
  %v2245 = vpop.f32.mrb[0].mxu0
  %v2246 = vpop.f32.mrb[0].mxu0
  %v2247 = vadd.f32 %v1615, %v2246
  %v2248 = vpop.f32.mrb[0].mxu0
  %2249 = vmatprep.mubr.bf16.mxu0 %v782
  %2250 = vmatmul.mubr.bf16.gmra.mrb[0].mxu0 %v686
  %v2251 = vpop.f32.mrb[0].mxu0
  %v2252 = vadd.f32 %v1615, %v2251
  %v2253 = vpop.f32.mrb[0].mxu0
  %v2254 = vpop.f32.mrb[0].mxu0
  %v2255 = vadd.f32 %v1615, %v2254
  %v2256 = vpop.f32.mrb[0].mxu0
  %2257 = vmatprep.mubr.bf16.mxu0 %v783
  %2258 = vmatmul.mubr.bf16.gmra.mrb[0].mxu0 %v687
  %v2259 = vpop.f32.mrb[0].mxu0
  %v2260 = vadd.f32 %v1615, %v2259
  %v2261 = vpop.f32.mrb[0].mxu0
  %v2262 = vpop.f32.mrb[0].mxu0
  %v2263 = vadd.f32 %v1615, %v2262
  %v2264 = vpop.f32.mrb[0].mxu0
  %2265 = vmatprep.mubr.bf16.mxu0 %v784
  %2266 = vmatmul.mubr.bf16.gmra.mrb[0].mxu0 %v688
  %v2267 = vpop.f32.mrb[0].mxu0
  %v2268 = vadd.f32 %v1615, %v2267
  %v2269 = vpop.f32.mrb[0].mxu0
  %v2270 = vpop.f32.mrb[0].mxu0
  %v2271 = vadd.f32 %v1615, %v2270
  %v2272 = vpop.f32.mrb[0].mxu0
  %2273 = vmatprep.mubr.bf16.mxu0 %v785
  %2274 = vmatmul.mubr.bf16.gmra.mrb[0].mxu0 %v689
  %v2275 = vpop.f32.mrb[0].mxu0
  %v2276 = vadd.f32 %v1615, %v2275
  %v2277 = vpop.f32.mrb[0].mxu0
  %v2278 = vpop.f32.mrb[0].mxu0
  %v2279 = vadd.f32 %v1615, %v2278
  %v2280 = vpop.f32.mrb[0].mxu0
  %2281 = vmatprep.mubr.bf16.mxu0 %v786
  %2282 = vmatmul.mubr.bf16.gmra.mrb[0].mxu0 %v690
  %v2283 = vpop.f32.mrb[0].mxu0
  %v2284 = vadd.f32 %v1615, %v2283
  %v2285 = vpop.f32.mrb[0].mxu0
  %v2286 = vpop.f32.mrb[0].mxu0
  %v2287 = vadd.f32 %v1615, %v2286
  %v2288 = vpop.f32.mrb[0].mxu0
  %2289 = vmatprep.mubr.bf16.mxu0 %v787
  %2290 = vmatmul.mubr.bf16.gmra.mrb[0].mxu0 %v691
  %v2291 = vpop.f32.mrb[0].mxu0
  %v2292 = vadd.f32 %v1615, %v2291
  %v2293 = vpop.f32.mrb[0].mxu0
  %v2294 = vpop.f32.mrb[0].mxu0
  %v2295 = vadd.f32 %v1615, %v2294
  %v2296 = vpop.f32.mrb[0].mxu0
  %2297 = vmatprep.mubr.bf16.mxu0 %v788
  %2298 = vmatmul.mubr.bf16.gmra.mrb[0].mxu0 %v692
  %v2299 = vpop.f32.mrb[0].mxu0
  %v2300 = vadd.f32 %v1615, %v2299
  %v2301 = vpop.f32.mrb[0].mxu0
  %v2302 = vpop.f32.mrb[0].mxu0
  %v2303 = vadd.f32 %v1615, %v2302
  %v2304 = vpop.f32.mrb[0].mxu0
  %2305 = vmatprep.mubr.bf16.mxu0 %v789
  %2306 = vmatmul.mubr.bf16.gmra.mrb[0].mxu0 %v693
  %v2307 = vpop.f32.mrb[0].mxu0
  %v2308 = vadd.f32 %v1615, %v2307
  %v2309 = vpop.f32.mrb[0].mxu0
  %v2310 = vpop.f32.mrb[0].mxu0
  %v2311 = vadd.f32 %v1615, %v2310
  %v2312 = vpop.f32.mrb[0].mxu0
  %2313 = vmatprep.mubr.bf16.mxu0 %v790
  %2314 = vmatmul.mubr.bf16.gmra.mrb[0].mxu0 %v694
  %v2315 = vpop.f32.mrb[0].mxu0
  %v2316 = vadd.f32 %v1615, %v2315
  %v2317 = vpop.f32.mrb[0].mxu0
  %v2318 = vpop.f32.mrb[0].mxu0
  %v2319 = vadd.f32 %v1615, %v2318
  %v2320 = vpop.f32.mrb[0].mxu0
  %2321 = vmatprep.mubr.bf16.mxu0 %v791
  %2322 = vmatmul.mubr.bf16.gmra.mrb[0].mxu0 %v695
  %v2323 = vpop.f32.mrb[0].mxu0
  %v2324 = vadd.f32 %v1615, %v2323
  %v2325 = vpop.f32.mrb[0].mxu0
  %v2326 = vpop.f32.mrb[0].mxu0
  %v2327 = vadd.f32 %v1615, %v2326
  %v2328 = vpop.f32.mrb[0].mxu0
  %2329 = vmatprep.mubr.bf16.mxu0 %v792
  %2330 = vmatmul.mubr.bf16.gmra.mrb[0].mxu0 %v696
  %v2331 = vpop.f32.mrb[0].mxu0
  %v2332 = vadd.f32 %v1615, %v2331
  %v2333 = vpop.f32.mrb[0].mxu0
  %v2334 = vpop.f32.mrb[0].mxu0
  %v2335 = vadd.f32 %v1615, %v2334
  %v2336 = vpop.f32.mrb[0].mxu0
  %2337 = vdwg.mxu0
  %2338 = vmatprep.subr.bf16.mxu0 0
  %2339 = vmatpush1.bf16.msra.mxu0 %v1921
  %2340 = vmatprep.subr.bf16.mxu0 0
  %2341 = vmatpush1.bf16.msra.mxu0 %v1922
  %2342 = vmatprep.subr.bf16.mxu0 0
  %2343 = vmatpush1.bf16.msra.mxu0 %v1923
  %2344 = vmatprep.subr.bf16.mxu0 0
  %2345 = vmatpush1.bf16.msra.mxu0 %v1924
  %2346 = vmatprep.subr.bf16.mxu0 0
  %2347 = vmatpush1.bf16.msra.mxu0 %v1925
  %2348 = vmatprep.subr.bf16.mxu0 0
  %2349 = vmatpush1.bf16.msra.mxu0 %v1926
  %2350 = vmatprep.subr.bf16.mxu0 0
  %2351 = vmatpush1.bf16.msra.mxu0 %v1927
  %2352 = vmatprep.subr.bf16.mxu0 0
  %2353 = vmatpush1.bf16.msra.mxu0 %v1928
  %2354 = vmatprep.subr.bf16.mxu0 0
  %2355 = vmatpush1.bf16.msra.mxu0 %v1929
  %2356 = vmatprep.subr.bf16.mxu0 0
  %2357 = vmatpush1.bf16.msra.mxu0 %v1930
  %2358 = vmatprep.subr.bf16.mxu0 0
  %2359 = vmatpush1.bf16.msra.mxu0 %v1931
  %2360 = vmatprep.subr.bf16.mxu0 0
  %2361 = vmatpush1.bf16.msra.mxu0 %v1932
  %2362 = vmatprep.subr.bf16.mxu0 0
  %2363 = vmatpush1.bf16.msra.mxu0 %v1933
  %2364 = vmatprep.subr.bf16.mxu0 0
  %2365 = vmatpush1.bf16.msra.mxu0 %v1934
  %2366 = vmatprep.subr.bf16.mxu0 0
  %2367 = vmatpush1.bf16.msra.mxu0 %v1935
  %2368 = vmatprep.subr.bf16.mxu0 0
  %2369 = vmatpush1.bf16.msra.mxu0 %v1936
  %2370 = vmatprep.mubr.bf16.mxu0 %v953
  %2371 = vmatmul.mubr.bf16.gmra.mrb[0].mxu0 %v857
  %v2372 = vpop.f32.mrb[0].mxu0
  %v2373 = vadd.f32 %v2084, %v2372
  %v2374 = vpop.f32.mrb[0].mxu0
  %v2375 = vpop.f32.mrb[0].mxu0
  %v2376 = vadd.f32 %v2087, %v2375
  %v2377 = vpop.f32.mrb[0].mxu0
  %2378 = vmatprep.mubr.bf16.mxu0 %v954
  %2379 = vmatmul.mubr.bf16.gmra.mrb[0].mxu0 %v858
  %v2380 = vpop.f32.mrb[0].mxu0
  %v2381 = vadd.f32 %v2092, %v2380
  %v2382 = vpop.f32.mrb[0].mxu0
  %v2383 = vpop.f32.mrb[0].mxu0
  %v2384 = vadd.f32 %v2095, %v2383
  %v2385 = vpop.f32.mrb[0].mxu0
  %2386 = vmatprep.mubr.bf16.mxu0 %v955
  %2387 = vmatmul.mubr.bf16.gmra.mrb[0].mxu0 %v859
  %v2388 = vpop.f32.mrb[0].mxu0
  %v2389 = vadd.f32 %v2100, %v2388
  %v2390 = vpop.f32.mrb[0].mxu0
  %v2391 = vpop.f32.mrb[0].mxu0
  %v2392 = vadd.f32 %v2103, %v2391
  %v2393 = vpop.f32.mrb[0].mxu0
  %2394 = vmatprep.mubr.bf16.mxu0 %v956
  %2395 = vmatmul.mubr.bf16.gmra.mrb[0].mxu0 %v860
  %v2396 = vpop.f32.mrb[0].mxu0
  %v2397 = vadd.f32 %v2108, %v2396
  %v2398 = vpop.f32.mrb[0].mxu0
  %v2399 = vpop.f32.mrb[0].mxu0
  %v2400 = vadd.f32 %v2111, %v2399
  %v2401 = vpop.f32.mrb[0].mxu0
  %2402 = vmatprep.mubr.bf16.mxu0 %v957
  %2403 = vmatmul.mubr.bf16.gmra.mrb[0].mxu0 %v861
  %v2404 = vpop.f32.mrb[0].mxu0
  %v2405 = vadd.f32 %v2116, %v2404
  %v2406 = vpop.f32.mrb[0].mxu0
  %v2407 = vpop.f32.mrb[0].mxu0
  %v2408 = vadd.f32 %v2119, %v2407
  %v2409 = vpop.f32.mrb[0].mxu0
  %2410 = vmatprep.mubr.bf16.mxu0 %v958
  %2411 = vmatmul.mubr.bf16.gmra.mrb[0].mxu0 %v862
  %v2412 = vpop.f32.mrb[0].mxu0
  %v2413 = vadd.f32 %v2124, %v2412
  %v2414 = vpop.f32.mrb[0].mxu0
  %v2415 = vpop.f32.mrb[0].mxu0
  %v2416 = vadd.f32 %v2127, %v2415
  %v2417 = vpop.f32.mrb[0].mxu0
  %2418 = vmatprep.mubr.bf16.mxu0 %v959
  %2419 = vmatmul.mubr.bf16.gmra.mrb[0].mxu0 %v863
  %v2420 = vpop.f32.mrb[0].mxu0
  %v2421 = vadd.f32 %v2132, %v2420
  %v2422 = vpop.f32.mrb[0].mxu0
  %v2423 = vpop.f32.mrb[0].mxu0
  %v2424 = vadd.f32 %v2135, %v2423
  %v2425 = vpop.f32.mrb[0].mxu0
  %2426 = vmatprep.mubr.bf16.mxu0 %v960
  %2427 = vmatmul.mubr.bf16.gmra.mrb[0].mxu0 %v864
  %v2428 = vpop.f32.mrb[0].mxu0
  %v2429 = vadd.f32 %v2140, %v2428
  %v2430 = vpop.f32.mrb[0].mxu0
  %v2431 = vpop.f32.mrb[0].mxu0
  %v2432 = vadd.f32 %v2143, %v2431
  %v2433 = vpop.f32.mrb[0].mxu0
  %2434 = vmatprep.mubr.bf16.mxu0 %v961
  %2435 = vmatmul.mubr.bf16.gmra.mrb[0].mxu0 %v865
  %v2436 = vpop.f32.mrb[0].mxu0
  %v2437 = vadd.f32 %v2148, %v2436
  %v2438 = vpop.f32.mrb[0].mxu0
  %v2439 = vpop.f32.mrb[0].mxu0
  %v2440 = vadd.f32 %v2151, %v2439
  %v2441 = vpop.f32.mrb[0].mxu0
  %2442 = vmatprep.mubr.bf16.mxu0 %v962
  %2443 = vmatmul.mubr.bf16.gmra.mrb[0].mxu0 %v866
  %v2444 = vpop.f32.mrb[0].mxu0
  %v2445 = vadd.f32 %v2156, %v2444
  %v2446 = vpop.f32.mrb[0].mxu0
  %v2447 = vpop.f32.mrb[0].mxu0
  %v2448 = vadd.f32 %v2159, %v2447
  %v2449 = vpop.f32.mrb[0].mxu0
  %2450 = vmatprep.mubr.bf16.mxu0 %v963
  %2451 = vmatmul.mubr.bf16.gmra.mrb[0].mxu0 %v867
  %v2452 = vpop.f32.mrb[0].mxu0
  %v2453 = vadd.f32 %v2164, %v2452
  %v2454 = vpop.f32.mrb[0].mxu0
  %v2455 = vpop.f32.mrb[0].mxu0
  %v2456 = vadd.f32 %v2167, %v2455
  %v2457 = vpop.f32.mrb[0].mxu0
  %2458 = vmatprep.mubr.bf16.mxu0 %v964
  %2459 = vmatmul.mubr.bf16.gmra.mrb[0].mxu0 %v868
  %v2460 = vpop.f32.mrb[0].mxu0
  %v2461 = vadd.f32 %v2172, %v2460
  %v2462 = vpop.f32.mrb[0].mxu0
  %v2463 = vpop.f32.mrb[0].mxu0
  %v2464 = vadd.f32 %v2175, %v2463
  %v2465 = vpop.f32.mrb[0].mxu0
  %2466 = vmatprep.mubr.bf16.mxu0 %v965
  %2467 = vmatmul.mubr.bf16.gmra.mrb[0].mxu0 %v869
  %v2468 = vpop.f32.mrb[0].mxu0
  %v2469 = vadd.f32 %v2180, %v2468
  %v2470 = vpop.f32.mrb[0].mxu0
  %v2471 = vpop.f32.mrb[0].mxu0
  %v2472 = vadd.f32 %v2183, %v2471
  %v2473 = vpop.f32.mrb[0].mxu0
  %2474 = vmatprep.mubr.bf16.mxu0 %v966
  %2475 = vmatmul.mubr.bf16.gmra.mrb[0].mxu0 %v870
  %v2476 = vpop.f32.mrb[0].mxu0
  %v2477 = vadd.f32 %v2188, %v2476
  %v2478 = vpop.f32.mrb[0].mxu0
  %v2479 = vpop.f32.mrb[0].mxu0
  %v2480 = vadd.f32 %v2191, %v2479
  %v2481 = vpop.f32.mrb[0].mxu0
  %2482 = vmatprep.mubr.bf16.mxu0 %v967
  %2483 = vmatmul.mubr.bf16.gmra.mrb[0].mxu0 %v871
  %v2484 = vpop.f32.mrb[0].mxu0
  %v2485 = vadd.f32 %v2196, %v2484
  %v2486 = vpop.f32.mrb[0].mxu0
  %v2487 = vpop.f32.mrb[0].mxu0
  %v2488 = vadd.f32 %v2199, %v2487
  %v2489 = vpop.f32.mrb[0].mxu0
  %2490 = vmatprep.mubr.bf16.mxu0 %v968
  %2491 = vmatmul.mubr.bf16.gmra.mrb[0].mxu0 %v872
  %v2492 = vpop.f32.mrb[0].mxu0
  %v2493 = vadd.f32 %v2204, %v2492
  %v2494 = vpop.f32.mrb[0].mxu0
  %v2495 = vpop.f32.mrb[0].mxu0
  %v2496 = vadd.f32 %v2207, %v2495
  %v2497 = vpop.f32.mrb[0].mxu0
  %2498 = vmatprep.mubr.bf16.mxu0 %v969
  %2499 = vmatmul.mubr.bf16.gmra.mrb[0].mxu0 %v873
  %v2500 = vpop.f32.mrb[0].mxu0
  %v2501 = vadd.f32 %v2212, %v2500
  %v2502 = vpop.f32.mrb[0].mxu0
  %v2503 = vpop.f32.mrb[0].mxu0
  %v2504 = vadd.f32 %v2215, %v2503
  %v2505 = vpop.f32.mrb[0].mxu0
  %2506 = vmatprep.mubr.bf16.mxu0 %v970
  %2507 = vmatmul.mubr.bf16.gmra.mrb[0].mxu0 %v874
  %v2508 = vpop.f32.mrb[0].mxu0
  %v2509 = vadd.f32 %v2220, %v2508
  %v2510 = vpop.f32.mrb[0].mxu0
  %v2511 = vpop.f32.mrb[0].mxu0
  %v2512 = vadd.f32 %v2223, %v2511
  %v2513 = vpop.f32.mrb[0].mxu0
  %2514 = vmatprep.mubr.bf16.mxu0 %v971
  %2515 = vmatmul.mubr.bf16.gmra.mrb[0].mxu0 %v875
  %v2516 = vpop.f32.mrb[0].mxu0
  %v2517 = vadd.f32 %v2228, %v2516
  %v2518 = vpop.f32.mrb[0].mxu0
  %v2519 = vpop.f32.mrb[0].mxu0
  %v2520 = vadd.f32 %v2231, %v2519
  %v2521 = vpop.f32.mrb[0].mxu0
  %2522 = vmatprep.mubr.bf16.mxu0 %v972
  %2523 = vmatmul.mubr.bf16.gmra.mrb[0].mxu0 %v876
  %v2524 = vpop.f32.mrb[0].mxu0
  %v2525 = vadd.f32 %v2236, %v2524
  %v2526 = vpop.f32.mrb[0].mxu0
  %v2527 = vpop.f32.mrb[0].mxu0
  %v2528 = vadd.f32 %v2239, %v2527
  %v2529 = vpop.f32.mrb[0].mxu0
  %2530 = vmatprep.mubr.bf16.mxu0 %v973
  %2531 = vmatmul.mubr.bf16.gmra.mrb[0].mxu0 %v877
  %v2532 = vpop.f32.mrb[0].mxu0
  %v2533 = vadd.f32 %v2244, %v2532
  %v2534 = vpop.f32.mrb[0].mxu0
  %v2535 = vpop.f32.mrb[0].mxu0
  %v2536 = vadd.f32 %v2247, %v2535
  %v2537 = vpop.f32.mrb[0].mxu0
  %2538 = vmatprep.mubr.bf16.mxu0 %v974
  %2539 = vmatmul.mubr.bf16.gmra.mrb[0].mxu0 %v878
  %v2540 = vpop.f32.mrb[0].mxu0
  %v2541 = vadd.f32 %v2252, %v2540
  %v2542 = vpop.f32.mrb[0].mxu0
  %v2543 = vpop.f32.mrb[0].mxu0
  %v2544 = vadd.f32 %v2255, %v2543
  %v2545 = vpop.f32.mrb[0].mxu0
  %2546 = vmatprep.mubr.bf16.mxu0 %v975
  %2547 = vmatmul.mubr.bf16.gmra.mrb[0].mxu0 %v879
  %v2548 = vpop.f32.mrb[0].mxu0
  %v2549 = vadd.f32 %v2260, %v2548
  %v2550 = vpop.f32.mrb[0].mxu0
  %v2551 = vpop.f32.mrb[0].mxu0
  %v2552 = vadd.f32 %v2263, %v2551
  %v2553 = vpop.f32.mrb[0].mxu0
  %2554 = vmatprep.mubr.bf16.mxu0 %v976
  %2555 = vmatmul.mubr.bf16.gmra.mrb[0].mxu0 %v880
  %v2556 = vpop.f32.mrb[0].mxu0
  %v2557 = vadd.f32 %v2268, %v2556
  %v2558 = vpop.f32.mrb[0].mxu0
  %v2559 = vpop.f32.mrb[0].mxu0
  %v2560 = vadd.f32 %v2271, %v2559
  %v2561 = vpop.f32.mrb[0].mxu0
  %2562 = vmatprep.mubr.bf16.mxu0 %v977
  %2563 = vmatmul.mubr.bf16.gmra.mrb[0].mxu0 %v881
  %v2564 = vpop.f32.mrb[0].mxu0
  %v2565 = vadd.f32 %v2276, %v2564
  %v2566 = vpop.f32.mrb[0].mxu0
  %v2567 = vpop.f32.mrb[0].mxu0
  %v2568 = vadd.f32 %v2279, %v2567
  %v2569 = vpop.f32.mrb[0].mxu0
  %2570 = vmatprep.mubr.bf16.mxu0 %v978
  %2571 = vmatmul.mubr.bf16.gmra.mrb[0].mxu0 %v882
  %v2572 = vpop.f32.mrb[0].mxu0
  %v2573 = vadd.f32 %v2284, %v2572
  %v2574 = vpop.f32.mrb[0].mxu0
  %v2575 = vpop.f32.mrb[0].mxu0
  %v2576 = vadd.f32 %v2287, %v2575
  %v2577 = vpop.f32.mrb[0].mxu0
  %2578 = vmatprep.mubr.bf16.mxu0 %v979
  %2579 = vmatmul.mubr.bf16.gmra.mrb[0].mxu0 %v883
  %v2580 = vpop.f32.mrb[0].mxu0
  %v2581 = vadd.f32 %v2292, %v2580
  %v2582 = vpop.f32.mrb[0].mxu0
  %v2583 = vpop.f32.mrb[0].mxu0
  %v2584 = vadd.f32 %v2295, %v2583
  %v2585 = vpop.f32.mrb[0].mxu0
  %2586 = vmatprep.mubr.bf16.mxu0 %v980
  %2587 = vmatmul.mubr.bf16.gmra.mrb[0].mxu0 %v884
  %v2588 = vpop.f32.mrb[0].mxu0
  %v2589 = vadd.f32 %v2300, %v2588
  %v2590 = vpop.f32.mrb[0].mxu0
  %v2591 = vpop.f32.mrb[0].mxu0
  %v2592 = vadd.f32 %v2303, %v2591
  %v2593 = vpop.f32.mrb[0].mxu0
  %2594 = vmatprep.mubr.bf16.mxu0 %v981
  %2595 = vmatmul.mubr.bf16.gmra.mrb[0].mxu0 %v885
  %v2596 = vpop.f32.mrb[0].mxu0
  %v2597 = vadd.f32 %v2308, %v2596
  %v2598 = vpop.f32.mrb[0].mxu0
  %v2599 = vpop.f32.mrb[0].mxu0
  %v2600 = vadd.f32 %v2311, %v2599
  %v2601 = vpop.f32.mrb[0].mxu0
  %2602 = vmatprep.mubr.bf16.mxu0 %v982
  %2603 = vmatmul.mubr.bf16.gmra.mrb[0].mxu0 %v886
  %v2604 = vpop.f32.mrb[0].mxu0
  %v2605 = vadd.f32 %v2316, %v2604
  %v2606 = vpop.f32.mrb[0].mxu0
  %v2607 = vpop.f32.mrb[0].mxu0
  %v2608 = vadd.f32 %v2319, %v2607
  %v2609 = vpop.f32.mrb[0].mxu0
  %2610 = vmatprep.mubr.bf16.mxu0 %v983
  %2611 = vmatmul.mubr.bf16.gmra.mrb[0].mxu0 %v887
  %v2612 = vpop.f32.mrb[0].mxu0
  %v2613 = vadd.f32 %v2324, %v2612
  %v2614 = vpop.f32.mrb[0].mxu0
  %v2615 = vpop.f32.mrb[0].mxu0
  %v2616 = vadd.f32 %v2327, %v2615
  %v2617 = vpop.f32.mrb[0].mxu0
  %2618 = vmatprep.mubr.bf16.mxu0 %v984
  %2619 = vmatmul.mubr.bf16.gmra.mrb[0].mxu0 %v888
  %v2620 = vpop.f32.mrb[0].mxu0
  %v2621 = vadd.f32 %v2332, %v2620
  %v2622 = vpop.f32.mrb[0].mxu0
  %v2623 = vpop.f32.mrb[0].mxu0
  %v2624 = vadd.f32 %v2335, %v2623
  %v2625 = vpop.f32.mrb[0].mxu0
  %2626 = vdwg.mxu0
  %2627 = vmatprep.subr.bf16.mxu0 0
  %2628 = vmatpush1.bf16.msra.mxu0 %v1937
  %2629 = vmatprep.subr.bf16.mxu0 0
  %2630 = vmatpush1.bf16.msra.mxu0 %v1938
  %2631 = vmatprep.subr.bf16.mxu0 0
  %2632 = vmatpush1.bf16.msra.mxu0 %v1939
  %2633 = vmatprep.subr.bf16.mxu0 0
  %2634 = vmatpush1.bf16.msra.mxu0 %v1940
  %2635 = vmatprep.subr.bf16.mxu0 0
  %2636 = vmatpush1.bf16.msra.mxu0 %v1941
  %2637 = vmatprep.subr.bf16.mxu0 0
  %2638 = vmatpush1.bf16.msra.mxu0 %v1942
  %2639 = vmatprep.subr.bf16.mxu0 0
  %2640 = vmatpush1.bf16.msra.mxu0 %v1943
  %2641 = vmatprep.subr.bf16.mxu0 0
  %2642 = vmatpush1.bf16.msra.mxu0 %v1944
  %2643 = vmatprep.subr.bf16.mxu0 0
  %2644 = vmatpush1.bf16.msra.mxu0 %v1945
  %2645 = vmatprep.subr.bf16.mxu0 0
  %2646 = vmatpush1.bf16.msra.mxu0 %v1946
  %2647 = vmatprep.subr.bf16.mxu0 0
  %2648 = vmatpush1.bf16.msra.mxu0 %v1947
  %2649 = vmatprep.subr.bf16.mxu0 0
  %2650 = vmatpush1.bf16.msra.mxu0 %v1948
  %2651 = vmatprep.subr.bf16.mxu0 0
  %2652 = vmatpush1.bf16.msra.mxu0 %v1949
  %2653 = vmatprep.subr.bf16.mxu0 0
  %2654 = vmatpush1.bf16.msra.mxu0 %v1950
  %2655 = vmatprep.subr.bf16.mxu0 0
  %2656 = vmatpush1.bf16.msra.mxu0 %v1951
  %2657 = vmatprep.subr.bf16.mxu0 0
  %2658 = vmatpush1.bf16.msra.mxu0 %v1952
  %2659 = vmatprep.mubr.bf16.mxu0 %v1145
  %2660 = vmatmul.mubr.bf16.gmra.mrb[0].mxu0 %v1049
  %v2661 = vpop.f32.mrb[0].mxu0
  %v2662 = vadd.f32 %v2373, %v2661
  %v2663 = vpop.f32.mrb[0].mxu0
  %v2664 = vpop.f32.mrb[0].mxu0
  %v2665 = vadd.f32 %v2376, %v2664
  %v2666 = vpop.f32.mrb[0].mxu0
  %2667 = vmatprep.mubr.bf16.mxu0 %v1146
  %2668 = vmatmul.mubr.bf16.gmra.mrb[0].mxu0 %v1050
  %v2669 = vpop.f32.mrb[0].mxu0
  %v2670 = vadd.f32 %v2381, %v2669
  %v2671 = vpop.f32.mrb[0].mxu0
  %v2672 = vpop.f32.mrb[0].mxu0
  %v2673 = vadd.f32 %v2384, %v2672
  %v2674 = vpop.f32.mrb[0].mxu0
  %2675 = vmatprep.mubr.bf16.mxu0 %v1147
  %2676 = vmatmul.mubr.bf16.gmra.mrb[0].mxu0 %v1051
  %v2677 = vpop.f32.mrb[0].mxu0
  %v2678 = vadd.f32 %v2389, %v2677
  %v2679 = vpop.f32.mrb[0].mxu0
  %v2680 = vpop.f32.mrb[0].mxu0
  %v2681 = vadd.f32 %v2392, %v2680
  %v2682 = vpop.f32.mrb[0].mxu0
  %2683 = vmatprep.mubr.bf16.mxu0 %v1148
  %2684 = vmatmul.mubr.bf16.gmra.mrb[0].mxu0 %v1052
  %v2685 = vpop.f32.mrb[0].mxu0
  %v2686 = vadd.f32 %v2397, %v2685
  %v2687 = vpop.f32.mrb[0].mxu0
  %v2688 = vpop.f32.mrb[0].mxu0
  %v2689 = vadd.f32 %v2400, %v2688
  %v2690 = vpop.f32.mrb[0].mxu0
  %2691 = vmatprep.mubr.bf16.mxu0 %v1149
  %2692 = vmatmul.mubr.bf16.gmra.mrb[0].mxu0 %v1053
  %v2693 = vpop.f32.mrb[0].mxu0
  %v2694 = vadd.f32 %v2405, %v2693
  %v2695 = vpop.f32.mrb[0].mxu0
  %v2696 = vpop.f32.mrb[0].mxu0
  %v2697 = vadd.f32 %v2408, %v2696
  %v2698 = vpop.f32.mrb[0].mxu0
  %2699 = vmatprep.mubr.bf16.mxu0 %v1150
  %2700 = vmatmul.mubr.bf16.gmra.mrb[0].mxu0 %v1054
  %v2701 = vpop.f32.mrb[0].mxu0
  %v2702 = vadd.f32 %v2413, %v2701
  %v2703 = vpop.f32.mrb[0].mxu0
  %v2704 = vpop.f32.mrb[0].mxu0
  %v2705 = vadd.f32 %v2416, %v2704
  %v2706 = vpop.f32.mrb[0].mxu0
  %2707 = vmatprep.mubr.bf16.mxu0 %v1151
  %2708 = vmatmul.mubr.bf16.gmra.mrb[0].mxu0 %v1055
  %v2709 = vpop.f32.mrb[0].mxu0
  %v2710 = vadd.f32 %v2421, %v2709
  %v2711 = vpop.f32.mrb[0].mxu0
  %v2712 = vpop.f32.mrb[0].mxu0
  %v2713 = vadd.f32 %v2424, %v2712
  %v2714 = vpop.f32.mrb[0].mxu0
  %2715 = vmatprep.mubr.bf16.mxu0 %v1152
  %2716 = vmatmul.mubr.bf16.gmra.mrb[0].mxu0 %v1056
  %v2717 = vpop.f32.mrb[0].mxu0
  %v2718 = vadd.f32 %v2429, %v2717
  %v2719 = vpop.f32.mrb[0].mxu0
  %v2720 = vpop.f32.mrb[0].mxu0
  %v2721 = vadd.f32 %v2432, %v2720
  %v2722 = vpop.f32.mrb[0].mxu0
  %2723 = vmatprep.mubr.bf16.mxu0 %v1153
  %2724 = vmatmul.mubr.bf16.gmra.mrb[0].mxu0 %v1057
  %v2725 = vpop.f32.mrb[0].mxu0
  %v2726 = vadd.f32 %v2437, %v2725
  %v2727 = vpop.f32.mrb[0].mxu0
  %v2728 = vpop.f32.mrb[0].mxu0
  %v2729 = vadd.f32 %v2440, %v2728
  %v2730 = vpop.f32.mrb[0].mxu0
  %2731 = vmatprep.mubr.bf16.mxu0 %v1154
  %2732 = vmatmul.mubr.bf16.gmra.mrb[0].mxu0 %v1058
  %v2733 = vpop.f32.mrb[0].mxu0
  %v2734 = vadd.f32 %v2445, %v2733
  %v2735 = vpop.f32.mrb[0].mxu0
  %v2736 = vpop.f32.mrb[0].mxu0
  %v2737 = vadd.f32 %v2448, %v2736
  %v2738 = vpop.f32.mrb[0].mxu0
  %2739 = vmatprep.mubr.bf16.mxu0 %v1155
  %2740 = vmatmul.mubr.bf16.gmra.mrb[0].mxu0 %v1059
  %v2741 = vpop.f32.mrb[0].mxu0
  %v2742 = vadd.f32 %v2453, %v2741
  %v2743 = vpop.f32.mrb[0].mxu0
  %v2744 = vpop.f32.mrb[0].mxu0
  %v2745 = vadd.f32 %v2456, %v2744
  %v2746 = vpop.f32.mrb[0].mxu0
  %2747 = vmatprep.mubr.bf16.mxu0 %v1156
  %2748 = vmatmul.mubr.bf16.gmra.mrb[0].mxu0 %v1060
  %v2749 = vpop.f32.mrb[0].mxu0
  %v2750 = vadd.f32 %v2461, %v2749
  %v2751 = vpop.f32.mrb[0].mxu0
  %v2752 = vpop.f32.mrb[0].mxu0
  %v2753 = vadd.f32 %v2464, %v2752
  %v2754 = vpop.f32.mrb[0].mxu0
  %2755 = vmatprep.mubr.bf16.mxu0 %v1157
  %2756 = vmatmul.mubr.bf16.gmra.mrb[0].mxu0 %v1061
  %v2757 = vpop.f32.mrb[0].mxu0
  %v2758 = vadd.f32 %v2469, %v2757
  %v2759 = vpop.f32.mrb[0].mxu0
  %v2760 = vpop.f32.mrb[0].mxu0
  %v2761 = vadd.f32 %v2472, %v2760
  %v2762 = vpop.f32.mrb[0].mxu0
  %2763 = vmatprep.mubr.bf16.mxu0 %v1158
  %2764 = vmatmul.mubr.bf16.gmra.mrb[0].mxu0 %v1062
  %v2765 = vpop.f32.mrb[0].mxu0
  %v2766 = vadd.f32 %v2477, %v2765
  %v2767 = vpop.f32.mrb[0].mxu0
  %v2768 = vpop.f32.mrb[0].mxu0
  %v2769 = vadd.f32 %v2480, %v2768
  %v2770 = vpop.f32.mrb[0].mxu0
  %2771 = vmatprep.mubr.bf16.mxu0 %v1159
  %2772 = vmatmul.mubr.bf16.gmra.mrb[0].mxu0 %v1063
  %v2773 = vpop.f32.mrb[0].mxu0
  %v2774 = vadd.f32 %v2485, %v2773
  %v2775 = vpop.f32.mrb[0].mxu0
  %v2776 = vpop.f32.mrb[0].mxu0
  %v2777 = vadd.f32 %v2488, %v2776
  %v2778 = vpop.f32.mrb[0].mxu0
  %2779 = vmatprep.mubr.bf16.mxu0 %v1160
  %2780 = vmatmul.mubr.bf16.gmra.mrb[0].mxu0 %v1064
  %v2781 = vpop.f32.mrb[0].mxu0
  %v2782 = vadd.f32 %v2493, %v2781
  %v2783 = vpop.f32.mrb[0].mxu0
  %v2784 = vpop.f32.mrb[0].mxu0
  %v2785 = vadd.f32 %v2496, %v2784
  %v2786 = vpop.f32.mrb[0].mxu0
  %2787 = vmatprep.mubr.bf16.mxu0 %v1161
  %2788 = vmatmul.mubr.bf16.gmra.mrb[0].mxu0 %v1065
  %v2789 = vpop.f32.mrb[0].mxu0
  %v2790 = vadd.f32 %v2501, %v2789
  %v2791 = vpop.f32.mrb[0].mxu0
  %v2792 = vpop.f32.mrb[0].mxu0
  %v2793 = vadd.f32 %v2504, %v2792
  %v2794 = vpop.f32.mrb[0].mxu0
  %2795 = vmatprep.mubr.bf16.mxu0 %v1162
  %2796 = vmatmul.mubr.bf16.gmra.mrb[0].mxu0 %v1066
  %v2797 = vpop.f32.mrb[0].mxu0
  %v2798 = vadd.f32 %v2509, %v2797
  %v2799 = vpop.f32.mrb[0].mxu0
  %v2800 = vpop.f32.mrb[0].mxu0
  %v2801 = vadd.f32 %v2512, %v2800
  %v2802 = vpop.f32.mrb[0].mxu0
  %2803 = vmatprep.mubr.bf16.mxu0 %v1163
  %2804 = vmatmul.mubr.bf16.gmra.mrb[0].mxu0 %v1067
  %v2805 = vpop.f32.mrb[0].mxu0
  %v2806 = vadd.f32 %v2517, %v2805
  %v2807 = vpop.f32.mrb[0].mxu0
  %v2808 = vpop.f32.mrb[0].mxu0
  %v2809 = vadd.f32 %v2520, %v2808
  %v2810 = vpop.f32.mrb[0].mxu0
  %2811 = vmatprep.mubr.bf16.mxu0 %v1164
  %2812 = vmatmul.mubr.bf16.gmra.mrb[0].mxu0 %v1068
  %v2813 = vpop.f32.mrb[0].mxu0
  %v2814 = vadd.f32 %v2525, %v2813
  %v2815 = vpop.f32.mrb[0].mxu0
  %v2816 = vpop.f32.mrb[0].mxu0
  %v2817 = vadd.f32 %v2528, %v2816
  %v2818 = vpop.f32.mrb[0].mxu0
  %2819 = vmatprep.mubr.bf16.mxu0 %v1165
  %2820 = vmatmul.mubr.bf16.gmra.mrb[0].mxu0 %v1069
  %v2821 = vpop.f32.mrb[0].mxu0
  %v2822 = vadd.f32 %v2533, %v2821
  %v2823 = vpop.f32.mrb[0].mxu0
  %v2824 = vpop.f32.mrb[0].mxu0
  %v2825 = vadd.f32 %v2536, %v2824
  %v2826 = vpop.f32.mrb[0].mxu0
  %2827 = vmatprep.mubr.bf16.mxu0 %v1166
  %2828 = vmatmul.mubr.bf16.gmra.mrb[0].mxu0 %v1070
  %v2829 = vpop.f32.mrb[0].mxu0
  %v2830 = vadd.f32 %v2541, %v2829
  %v2831 = vpop.f32.mrb[0].mxu0
  %v2832 = vpop.f32.mrb[0].mxu0
  %v2833 = vadd.f32 %v2544, %v2832
  %v2834 = vpop.f32.mrb[0].mxu0
  %2835 = vmatprep.mubr.bf16.mxu0 %v1167
  %2836 = vmatmul.mubr.bf16.gmra.mrb[0].mxu0 %v1071
  %v2837 = vpop.f32.mrb[0].mxu0
  %v2838 = vadd.f32 %v2549, %v2837
  %v2839 = vpop.f32.mrb[0].mxu0
  %v2840 = vpop.f32.mrb[0].mxu0
  %v2841 = vadd.f32 %v2552, %v2840
  %v2842 = vpop.f32.mrb[0].mxu0
  %2843 = vmatprep.mubr.bf16.mxu0 %v1168
  %2844 = vmatmul.mubr.bf16.gmra.mrb[0].mxu0 %v1072
  %v2845 = vpop.f32.mrb[0].mxu0
  %v2846 = vadd.f32 %v2557, %v2845
  %v2847 = vpop.f32.mrb[0].mxu0
  %v2848 = vpop.f32.mrb[0].mxu0
  %v2849 = vadd.f32 %v2560, %v2848
  %v2850 = vpop.f32.mrb[0].mxu0
  %2851 = vmatprep.mubr.bf16.mxu0 %v1169
  %2852 = vmatmul.mubr.bf16.gmra.mrb[0].mxu0 %v1073
  %v2853 = vpop.f32.mrb[0].mxu0
  %v2854 = vadd.f32 %v2565, %v2853
  %v2855 = vpop.f32.mrb[0].mxu0
  %v2856 = vpop.f32.mrb[0].mxu0
  %v2857 = vadd.f32 %v2568, %v2856
  %v2858 = vpop.f32.mrb[0].mxu0
  %2859 = vmatprep.mubr.bf16.mxu0 %v1170
  %2860 = vmatmul.mubr.bf16.gmra.mrb[0].mxu0 %v1074
  %v2861 = vpop.f32.mrb[0].mxu0
  %v2862 = vadd.f32 %v2573, %v2861
  %v2863 = vpop.f32.mrb[0].mxu0
  %v2864 = vpop.f32.mrb[0].mxu0
  %v2865 = vadd.f32 %v2576, %v2864
  %v2866 = vpop.f32.mrb[0].mxu0
  %2867 = vmatprep.mubr.bf16.mxu0 %v1171
  %2868 = vmatmul.mubr.bf16.gmra.mrb[0].mxu0 %v1075
  %v2869 = vpop.f32.mrb[0].mxu0
  %v2870 = vadd.f32 %v2581, %v2869
  %v2871 = vpop.f32.mrb[0].mxu0
  %v2872 = vpop.f32.mrb[0].mxu0
  %v2873 = vadd.f32 %v2584, %v2872
  %v2874 = vpop.f32.mrb[0].mxu0
  %2875 = vmatprep.mubr.bf16.mxu0 %v1172
  %2876 = vmatmul.mubr.bf16.gmra.mrb[0].mxu0 %v1076
  %v2877 = vpop.f32.mrb[0].mxu0
  %v2878 = vadd.f32 %v2589, %v2877
  %v2879 = vpop.f32.mrb[0].mxu0
  %v2880 = vpop.f32.mrb[0].mxu0
  %v2881 = vadd.f32 %v2592, %v2880
  %v2882 = vpop.f32.mrb[0].mxu0
  %2883 = vmatprep.mubr.bf16.mxu0 %v1173
  %2884 = vmatmul.mubr.bf16.gmra.mrb[0].mxu0 %v1077
  %v2885 = vpop.f32.mrb[0].mxu0
  %v2886 = vadd.f32 %v2597, %v2885
  %v2887 = vpop.f32.mrb[0].mxu0
  %v2888 = vpop.f32.mrb[0].mxu0
  %v2889 = vadd.f32 %v2600, %v2888
  %v2890 = vpop.f32.mrb[0].mxu0
  %2891 = vmatprep.mubr.bf16.mxu0 %v1174
  %2892 = vmatmul.mubr.bf16.gmra.mrb[0].mxu0 %v1078
  %v2893 = vpop.f32.mrb[0].mxu0
  %v2894 = vadd.f32 %v2605, %v2893
  %v2895 = vpop.f32.mrb[0].mxu0
  %v2896 = vpop.f32.mrb[0].mxu0
  %v2897 = vadd.f32 %v2608, %v2896
  %v2898 = vpop.f32.mrb[0].mxu0
  %2899 = vmatprep.mubr.bf16.mxu0 %v1175
  %2900 = vmatmul.mubr.bf16.gmra.mrb[0].mxu0 %v1079
  %v2901 = vpop.f32.mrb[0].mxu0
  %v2902 = vadd.f32 %v2613, %v2901
  %v2903 = vpop.f32.mrb[0].mxu0
  %v2904 = vpop.f32.mrb[0].mxu0
  %v2905 = vadd.f32 %v2616, %v2904
  %v2906 = vpop.f32.mrb[0].mxu0
  %2907 = vmatprep.mubr.bf16.mxu0 %v1176
  %2908 = vmatmul.mubr.bf16.gmra.mrb[0].mxu0 %v1080
  %v2909 = vpop.f32.mrb[0].mxu0
  %v2910 = vadd.f32 %v2621, %v2909
  %v2911 = vpop.f32.mrb[0].mxu0
  %v2912 = vpop.f32.mrb[0].mxu0
  %v2913 = vadd.f32 %v2624, %v2912
  %v2914 = vpop.f32.mrb[0].mxu0
  %2915 = vdwg.mxu0
  %2916 = vmatprep.subr.bf16.mxu0 0
  %2917 = vmatpush1.bf16.msra.mxu0 %v1953
  %2918 = vmatprep.subr.bf16.mxu0 0
  %2919 = vmatpush1.bf16.msra.mxu0 %v1954
  %2920 = vmatprep.subr.bf16.mxu0 0
  %2921 = vmatpush1.bf16.msra.mxu0 %v1955
  %2922 = vmatprep.subr.bf16.mxu0 0
  %2923 = vmatpush1.bf16.msra.mxu0 %v1956
  %2924 = vmatprep.subr.bf16.mxu0 0
  %2925 = vmatpush1.bf16.msra.mxu0 %v1957
  %2926 = vmatprep.subr.bf16.mxu0 0
  %2927 = vmatpush1.bf16.msra.mxu0 %v1958
  %2928 = vmatprep.subr.bf16.mxu0 0
  %2929 = vmatpush1.bf16.msra.mxu0 %v1959
  %2930 = vmatprep.subr.bf16.mxu0 0
  %2931 = vmatpush1.bf16.msra.mxu0 %v1960
  %2932 = vmatprep.subr.bf16.mxu0 0
  %2933 = vmatpush1.bf16.msra.mxu0 %v1961
  %2934 = vmatprep.subr.bf16.mxu0 0
  %2935 = vmatpush1.bf16.msra.mxu0 %v1962
  %2936 = vmatprep.subr.bf16.mxu0 0
  %2937 = vmatpush1.bf16.msra.mxu0 %v1963
  %2938 = vmatprep.subr.bf16.mxu0 0
  %2939 = vmatpush1.bf16.msra.mxu0 %v1964
  %2940 = vmatprep.subr.bf16.mxu0 0
  %2941 = vmatpush1.bf16.msra.mxu0 %v1965
  %2942 = vmatprep.subr.bf16.mxu0 0
  %2943 = vmatpush1.bf16.msra.mxu0 %v1966
  %2944 = vmatprep.subr.bf16.mxu0 0
  %2945 = vmatpush1.bf16.msra.mxu0 %v1967
  %2946 = vmatprep.subr.bf16.mxu0 0
  %2947 = vmatpush1.bf16.msra.mxu0 %v1968
  %2948 = vmatprep.mubr.bf16.mxu0 %v1338
  %2949 = vmatmul.mubr.bf16.gmra.mrb[0].mxu0 %v1242
  %v2950 = vpop.f32.mrb[0].mxu0
  %v2951 = vadd.f32 %v2662, %v2950
  %v2952 = vpop.f32.mrb[0].mxu0
  %v2953 = vpop.f32.mrb[0].mxu0
  %v2954 = vadd.f32 %v2665, %v2953
  %v2955 = vpop.f32.mrb[0].mxu0
  %2956 = vmatprep.mubr.bf16.mxu0 %v1339
  %2957 = vmatmul.mubr.bf16.gmra.mrb[0].mxu0 %v1243
  %v2958 = vpop.f32.mrb[0].mxu0
  %v2959 = vadd.f32 %v2670, %v2958
  %v2960 = vpop.f32.mrb[0].mxu0
  %v2961 = vpop.f32.mrb[0].mxu0
  %v2962 = vadd.f32 %v2673, %v2961
  %v2963 = vpop.f32.mrb[0].mxu0
  %2964 = vmatprep.mubr.bf16.mxu0 %v1340
  %2965 = vmatmul.mubr.bf16.gmra.mrb[0].mxu0 %v1244
  %v2966 = vpop.f32.mrb[0].mxu0
  %v2967 = vadd.f32 %v2678, %v2966
  %v2968 = vpop.f32.mrb[0].mxu0
  %v2969 = vpop.f32.mrb[0].mxu0
  %v2970 = vadd.f32 %v2681, %v2969
  %v2971 = vpop.f32.mrb[0].mxu0
  %2972 = vmatprep.mubr.bf16.mxu0 %v1341
  %2973 = vmatmul.mubr.bf16.gmra.mrb[0].mxu0 %v1245
  %v2974 = vpop.f32.mrb[0].mxu0
  %v2975 = vadd.f32 %v2686, %v2974
  %v2976 = vpop.f32.mrb[0].mxu0
  %v2977 = vpop.f32.mrb[0].mxu0
  %v2978 = vadd.f32 %v2689, %v2977
  %v2979 = vpop.f32.mrb[0].mxu0
  %2980 = vmatprep.mubr.bf16.mxu0 %v1342
  %2981 = vmatmul.mubr.bf16.gmra.mrb[0].mxu0 %v1246
  %v2982 = vpop.f32.mrb[0].mxu0
  %v2983 = vadd.f32 %v2694, %v2982
  %v2984 = vpop.f32.mrb[0].mxu0
  %v2985 = vpop.f32.mrb[0].mxu0
  %v2986 = vadd.f32 %v2697, %v2985
  %v2987 = vpop.f32.mrb[0].mxu0
  %2988 = vmatprep.mubr.bf16.mxu0 %v1343
  %2989 = vmatmul.mubr.bf16.gmra.mrb[0].mxu0 %v1247
  %v2990 = vpop.f32.mrb[0].mxu0
  %v2991 = vadd.f32 %v2702, %v2990
  %v2992 = vpop.f32.mrb[0].mxu0
  %v2993 = vpop.f32.mrb[0].mxu0
  %v2994 = vadd.f32 %v2705, %v2993
  %v2995 = vpop.f32.mrb[0].mxu0
  %2996 = vmatprep.mubr.bf16.mxu0 %v1344
  %2997 = vmatmul.mubr.bf16.gmra.mrb[0].mxu0 %v1248
  %v2998 = vpop.f32.mrb[0].mxu0
  %v2999 = vadd.f32 %v2710, %v2998
  %v3000 = vpop.f32.mrb[0].mxu0
  %v3001 = vpop.f32.mrb[0].mxu0
  %v3002 = vadd.f32 %v2713, %v3001
  %v3003 = vpop.f32.mrb[0].mxu0
  %3004 = vmatprep.mubr.bf16.mxu0 %v1345
  %3005 = vmatmul.mubr.bf16.gmra.mrb[0].mxu0 %v1249
  %v3006 = vpop.f32.mrb[0].mxu0
  %v3007 = vadd.f32 %v2718, %v3006
  %v3008 = vpop.f32.mrb[0].mxu0
  %v3009 = vpop.f32.mrb[0].mxu0
  %v3010 = vadd.f32 %v2721, %v3009
  %v3011 = vpop.f32.mrb[0].mxu0
  %3012 = vmatprep.mubr.bf16.mxu0 %v1346
  %3013 = vmatmul.mubr.bf16.gmra.mrb[0].mxu0 %v1250
  %v3014 = vpop.f32.mrb[0].mxu0
  %v3015 = vadd.f32 %v2726, %v3014
  %v3016 = vpop.f32.mrb[0].mxu0
  %v3017 = vpop.f32.mrb[0].mxu0
  %v3018 = vadd.f32 %v2729, %v3017
  %v3019 = vpop.f32.mrb[0].mxu0
  %3020 = vmatprep.mubr.bf16.mxu0 %v1347
  %3021 = vmatmul.mubr.bf16.gmra.mrb[0].mxu0 %v1251
  %v3022 = vpop.f32.mrb[0].mxu0
  %v3023 = vadd.f32 %v2734, %v3022
  %v3024 = vpop.f32.mrb[0].mxu0
  %v3025 = vpop.f32.mrb[0].mxu0
  %v3026 = vadd.f32 %v2737, %v3025
  %v3027 = vpop.f32.mrb[0].mxu0
  %3028 = vmatprep.mubr.bf16.mxu0 %v1348
  %3029 = vmatmul.mubr.bf16.gmra.mrb[0].mxu0 %v1252
  %v3030 = vpop.f32.mrb[0].mxu0
  %v3031 = vadd.f32 %v2742, %v3030
  %v3032 = vpop.f32.mrb[0].mxu0
  %v3033 = vpop.f32.mrb[0].mxu0
  %v3034 = vadd.f32 %v2745, %v3033
  %v3035 = vpop.f32.mrb[0].mxu0
  %3036 = vmatprep.mubr.bf16.mxu0 %v1349
  %3037 = vmatmul.mubr.bf16.gmra.mrb[0].mxu0 %v1253
  %v3038 = vpop.f32.mrb[0].mxu0
  %v3039 = vadd.f32 %v2750, %v3038
  %v3040 = vpop.f32.mrb[0].mxu0
  %v3041 = vpop.f32.mrb[0].mxu0
  %v3042 = vadd.f32 %v2753, %v3041
  %v3043 = vpop.f32.mrb[0].mxu0
  %3044 = vmatprep.mubr.bf16.mxu0 %v1350
  %3045 = vmatmul.mubr.bf16.gmra.mrb[0].mxu0 %v1254
  %v3046 = vpop.f32.mrb[0].mxu0
  %v3047 = vadd.f32 %v2758, %v3046
  %v3048 = vpop.f32.mrb[0].mxu0
  %v3049 = vpop.f32.mrb[0].mxu0
  %v3050 = vadd.f32 %v2761, %v3049
  %v3051 = vpop.f32.mrb[0].mxu0
  %3052 = vmatprep.mubr.bf16.mxu0 %v1351
  %3053 = vmatmul.mubr.bf16.gmra.mrb[0].mxu0 %v1255
  %v3054 = vpop.f32.mrb[0].mxu0
  %v3055 = vadd.f32 %v2766, %v3054
  %v3056 = vpop.f32.mrb[0].mxu0
  %v3057 = vpop.f32.mrb[0].mxu0
  %v3058 = vadd.f32 %v2769, %v3057
  %v3059 = vpop.f32.mrb[0].mxu0
  %3060 = vmatprep.mubr.bf16.mxu0 %v1352
  %3061 = vmatmul.mubr.bf16.gmra.mrb[0].mxu0 %v1256
  %v3062 = vpop.f32.mrb[0].mxu0
  %v3063 = vadd.f32 %v2774, %v3062
  %v3064 = vpop.f32.mrb[0].mxu0
  %v3065 = vpop.f32.mrb[0].mxu0
  %v3066 = vadd.f32 %v2777, %v3065
  %v3067 = vpop.f32.mrb[0].mxu0
  %3068 = vmatprep.mubr.bf16.mxu0 %v1353
  %3069 = vmatmul.mubr.bf16.gmra.mrb[0].mxu0 %v1257
  %v3070 = vpop.f32.mrb[0].mxu0
  %v3071 = vadd.f32 %v2782, %v3070
  %v3072 = vpop.f32.mrb[0].mxu0
  %v3073 = vpop.f32.mrb[0].mxu0
  %v3074 = vadd.f32 %v2785, %v3073
  %v3075 = vpop.f32.mrb[0].mxu0
  %3076 = vmatprep.mubr.bf16.mxu0 %v1354
  %3077 = vmatmul.mubr.bf16.gmra.mrb[0].mxu0 %v1258
  %v3078 = vpop.f32.mrb[0].mxu0
  %v3079 = vadd.f32 %v2790, %v3078
  %v3080 = vpop.f32.mrb[0].mxu0
  %v3081 = vpop.f32.mrb[0].mxu0
  %v3082 = vadd.f32 %v2793, %v3081
  %v3083 = vpop.f32.mrb[0].mxu0
  %3084 = vmatprep.mubr.bf16.mxu0 %v1355
  %3085 = vmatmul.mubr.bf16.gmra.mrb[0].mxu0 %v1259
  %v3086 = vpop.f32.mrb[0].mxu0
  %v3087 = vadd.f32 %v2798, %v3086
  %v3088 = vpop.f32.mrb[0].mxu0
  %v3089 = vpop.f32.mrb[0].mxu0
  %v3090 = vadd.f32 %v2801, %v3089
  %v3091 = vpop.f32.mrb[0].mxu0
  %3092 = vmatprep.mubr.bf16.mxu0 %v1356
  %3093 = vmatmul.mubr.bf16.gmra.mrb[0].mxu0 %v1260
  %v3094 = vpop.f32.mrb[0].mxu0
  %v3095 = vadd.f32 %v2806, %v3094
  %v3096 = vpop.f32.mrb[0].mxu0
  %v3097 = vpop.f32.mrb[0].mxu0
  %v3098 = vadd.f32 %v2809, %v3097
  %v3099 = vpop.f32.mrb[0].mxu0
  %3100 = vmatprep.mubr.bf16.mxu0 %v1357
  %3101 = vmatmul.mubr.bf16.gmra.mrb[0].mxu0 %v1261
  %v3102 = vpop.f32.mrb[0].mxu0
  %v3103 = vadd.f32 %v2814, %v3102
  %v3104 = vpop.f32.mrb[0].mxu0
  %v3105 = vpop.f32.mrb[0].mxu0
  %v3106 = vadd.f32 %v2817, %v3105
  %v3107 = vpop.f32.mrb[0].mxu0
  %3108 = vmatprep.mubr.bf16.mxu0 %v1358
  %3109 = vmatmul.mubr.bf16.gmra.mrb[0].mxu0 %v1262
  %v3110 = vpop.f32.mrb[0].mxu0
  %v3111 = vadd.f32 %v2822, %v3110
  %v3112 = vpop.f32.mrb[0].mxu0
  %v3113 = vpop.f32.mrb[0].mxu0
  %v3114 = vadd.f32 %v2825, %v3113
  %v3115 = vpop.f32.mrb[0].mxu0
  %3116 = vmatprep.mubr.bf16.mxu0 %v1359
  %3117 = vmatmul.mubr.bf16.gmra.mrb[0].mxu0 %v1263
  %v3118 = vpop.f32.mrb[0].mxu0
  %v3119 = vadd.f32 %v2830, %v3118
  %v3120 = vpop.f32.mrb[0].mxu0
  %v3121 = vpop.f32.mrb[0].mxu0
  %v3122 = vadd.f32 %v2833, %v3121
  %v3123 = vpop.f32.mrb[0].mxu0
  %3124 = vmatprep.mubr.bf16.mxu0 %v1360
  %3125 = vmatmul.mubr.bf16.gmra.mrb[0].mxu0 %v1264
  %v3126 = vpop.f32.mrb[0].mxu0
  %v3127 = vadd.f32 %v2838, %v3126
  %v3128 = vpop.f32.mrb[0].mxu0
  %v3129 = vpop.f32.mrb[0].mxu0
  %v3130 = vadd.f32 %v2841, %v3129
  %v3131 = vpop.f32.mrb[0].mxu0
  %3132 = vmatprep.mubr.bf16.mxu0 %v1361
  %3133 = vmatmul.mubr.bf16.gmra.mrb[0].mxu0 %v1265
  %v3134 = vpop.f32.mrb[0].mxu0
  %v3135 = vadd.f32 %v2846, %v3134
  %v3136 = vpop.f32.mrb[0].mxu0
  %v3137 = vpop.f32.mrb[0].mxu0
  %v3138 = vadd.f32 %v2849, %v3137
  %v3139 = vpop.f32.mrb[0].mxu0
  %3140 = vmatprep.mubr.bf16.mxu0 %v1362
  %3141 = vmatmul.mubr.bf16.gmra.mrb[0].mxu0 %v1266
  %v3142 = vpop.f32.mrb[0].mxu0
  %v3143 = vadd.f32 %v2854, %v3142
  %v3144 = vpop.f32.mrb[0].mxu0
  %v3145 = vpop.f32.mrb[0].mxu0
  %v3146 = vadd.f32 %v2857, %v3145
  %v3147 = vpop.f32.mrb[0].mxu0
  %3148 = vmatprep.mubr.bf16.mxu0 %v1363
  %3149 = vmatmul.mubr.bf16.gmra.mrb[0].mxu0 %v1267
  %v3150 = vpop.f32.mrb[0].mxu0
  %v3151 = vadd.f32 %v2862, %v3150
  %v3152 = vpop.f32.mrb[0].mxu0
  %v3153 = vpop.f32.mrb[0].mxu0
  %v3154 = vadd.f32 %v2865, %v3153
  %v3155 = vpop.f32.mrb[0].mxu0
  %3156 = vmatprep.mubr.bf16.mxu0 %v1364
  %3157 = vmatmul.mubr.bf16.gmra.mrb[0].mxu0 %v1268
  %v3158 = vpop.f32.mrb[0].mxu0
  %v3159 = vadd.f32 %v2870, %v3158
  %v3160 = vpop.f32.mrb[0].mxu0
  %v3161 = vpop.f32.mrb[0].mxu0
  %v3162 = vadd.f32 %v2873, %v3161
  %v3163 = vpop.f32.mrb[0].mxu0
  %3164 = vmatprep.mubr.bf16.mxu0 %v1365
  %3165 = vmatmul.mubr.bf16.gmra.mrb[0].mxu0 %v1269
  %v3166 = vpop.f32.mrb[0].mxu0
  %v3167 = vadd.f32 %v2878, %v3166
  %v3168 = vpop.f32.mrb[0].mxu0
  %v3169 = vpop.f32.mrb[0].mxu0
  %v3170 = vadd.f32 %v2881, %v3169
  %v3171 = vpop.f32.mrb[0].mxu0
  %3172 = vmatprep.mubr.bf16.mxu0 %v1366
  %3173 = vmatmul.mubr.bf16.gmra.mrb[0].mxu0 %v1270
  %v3174 = vpop.f32.mrb[0].mxu0
  %v3175 = vadd.f32 %v2886, %v3174
  %v3176 = vpop.f32.mrb[0].mxu0
  %v3177 = vpop.f32.mrb[0].mxu0
  %v3178 = vadd.f32 %v2889, %v3177
  %v3179 = vpop.f32.mrb[0].mxu0
  %3180 = vmatprep.mubr.bf16.mxu0 %v1367
  %3181 = vmatmul.mubr.bf16.gmra.mrb[0].mxu0 %v1271
  %v3182 = vpop.f32.mrb[0].mxu0
  %v3183 = vadd.f32 %v2894, %v3182
  %v3184 = vpop.f32.mrb[0].mxu0
  %v3185 = vpop.f32.mrb[0].mxu0
  %v3186 = vadd.f32 %v2897, %v3185
  %v3187 = vpop.f32.mrb[0].mxu0
  %3188 = vmatprep.mubr.bf16.mxu0 %v1368
  %3189 = vmatmul.mubr.bf16.gmra.mrb[0].mxu0 %v1272
  %v3190 = vpop.f32.mrb[0].mxu0
  %v3191 = vadd.f32 %v2902, %v3190
  %v3192 = vpop.f32.mrb[0].mxu0
  %v3193 = vpop.f32.mrb[0].mxu0
  %v3194 = vadd.f32 %v2905, %v3193
  %v3195 = vpop.f32.mrb[0].mxu0
  %3196 = vmatprep.mubr.bf16.mxu0 %v1369
  %3197 = vmatmul.mubr.bf16.gmra.mrb[0].mxu0 %v1273
  %v3198 = vpop.f32.mrb[0].mxu0
  %v3199 = vadd.f32 %v2910, %v3198
  %v3200 = vpop.f32.mrb[0].mxu0
  %v3201 = vpop.f32.mrb[0].mxu0
  %v3202 = vadd.f32 %v2913, %v3201
  %v3203 = vpop.f32.mrb[0].mxu0
  %3204 = vdwg.mxu0
  %3205 = vmatprep.subr.bf16.mxu0 0
  %3206 = vmatpush1.bf16.msra.mxu0 %v1969
  %3207 = vmatprep.subr.bf16.mxu0 0
  %3208 = vmatpush1.bf16.msra.mxu0 %v1970
  %3209 = vmatprep.subr.bf16.mxu0 0
  %3210 = vmatpush1.bf16.msra.mxu0 %v1971
  %3211 = vmatprep.subr.bf16.mxu0 0
  %3212 = vmatpush1.bf16.msra.mxu0 %v1972
  %3213 = vmatprep.subr.bf16.mxu0 0
  %3214 = vmatpush1.bf16.msra.mxu0 %v1973
  %3215 = vmatprep.subr.bf16.mxu0 0
  %3216 = vmatpush1.bf16.msra.mxu0 %v1974
  %3217 = vmatprep.subr.bf16.mxu0 0
  %3218 = vmatpush1.bf16.msra.mxu0 %v1975
  %3219 = vmatprep.subr.bf16.mxu0 0
  %3220 = vmatpush1.bf16.msra.mxu0 %v1976
  %3221 = vmatprep.subr.bf16.mxu0 0
  %3222 = vmatpush1.bf16.msra.mxu0 0
  %3223 = vmatprep.subr.bf16.mxu0 0
  %3224 = vmatpush1.bf16.msra.mxu0 0
  %3225 = vmatprep.subr.bf16.mxu0 0
  %3226 = vmatpush1.bf16.msra.mxu0 0
  %3227 = vmatprep.subr.bf16.mxu0 0
  %3228 = vmatpush1.bf16.msra.mxu0 0
  %3229 = vmatprep.subr.bf16.mxu0 0
  %3230 = vmatpush1.bf16.msra.mxu0 0
  %3231 = vmatprep.subr.bf16.mxu0 0
  %3232 = vmatpush1.bf16.msra.mxu0 0
  %3233 = vmatprep.subr.bf16.mxu0 0
  %3234 = vmatpush1.bf16.msra.mxu0 0
  %3235 = vmatprep.subr.bf16.mxu0 0
  %3236 = vmatpush1.bf16.msra.mxu0 0
  %3237 = vmatprep.mubr.bf16.mxu0 0
  %3238 = vmatmul.mubr.bf16.gmra.mrb[0].mxu0 %v1434
  %v3239 = vpop.f32.mrb[0].mxu0
  %v3240 = vadd.f32 %v2951, %v3239
  %v3241 = vpop.f32.mrb[0].mxu0
  %v3242 = vpop.f32.mrb[0].mxu0
  %v3243 = vadd.f32 %v2954, %v3242
  %v3244 = vpop.f32.mrb[0].mxu0
  %3245 = vmatprep.mubr.bf16.mxu0 0
  %3246 = vmatmul.mubr.bf16.gmra.mrb[0].mxu0 %v1435
  %v3247 = vpop.f32.mrb[0].mxu0
  %v3248 = vadd.f32 %v2959, %v3247
  %v3249 = vpop.f32.mrb[0].mxu0
  %v3250 = vpop.f32.mrb[0].mxu0
  %v3251 = vadd.f32 %v2962, %v3250
  %v3252 = vpop.f32.mrb[0].mxu0
  %3253 = vmatprep.mubr.bf16.mxu0 0
  %3254 = vmatmul.mubr.bf16.gmra.mrb[0].mxu0 %v1436
  %v3255 = vpop.f32.mrb[0].mxu0
  %v3256 = vadd.f32 %v2967, %v3255
  %v3257 = vpop.f32.mrb[0].mxu0
  %v3258 = vpop.f32.mrb[0].mxu0
  %v3259 = vadd.f32 %v2970, %v3258
  %v3260 = vpop.f32.mrb[0].mxu0
  %3261 = vmatprep.mubr.bf16.mxu0 0
  %3262 = vmatmul.mubr.bf16.gmra.mrb[0].mxu0 %v1437
  %v3263 = vpop.f32.mrb[0].mxu0
  %v3264 = vadd.f32 %v2975, %v3263
  %v3265 = vpop.f32.mrb[0].mxu0
  %v3266 = vpop.f32.mrb[0].mxu0
  %v3267 = vadd.f32 %v2978, %v3266
  %v3268 = vpop.f32.mrb[0].mxu0
  %3269 = vmatprep.mubr.bf16.mxu0 0
  %3270 = vmatmul.mubr.bf16.gmra.mrb[0].mxu0 %v1438
  %v3271 = vpop.f32.mrb[0].mxu0
  %v3272 = vadd.f32 %v2983, %v3271
  %v3273 = vpop.f32.mrb[0].mxu0
  %v3274 = vpop.f32.mrb[0].mxu0
  %v3275 = vadd.f32 %v2986, %v3274
  %v3276 = vpop.f32.mrb[0].mxu0
  %3277 = vmatprep.mubr.bf16.mxu0 0
  %3278 = vmatmul.mubr.bf16.gmra.mrb[0].mxu0 %v1439
  %v3279 = vpop.f32.mrb[0].mxu0
  %v3280 = vadd.f32 %v2991, %v3279
  %v3281 = vpop.f32.mrb[0].mxu0
  %v3282 = vpop.f32.mrb[0].mxu0
  %v3283 = vadd.f32 %v2994, %v3282
  %v3284 = vpop.f32.mrb[0].mxu0
  %3285 = vmatprep.mubr.bf16.mxu0 0
  %3286 = vmatmul.mubr.bf16.gmra.mrb[0].mxu0 %v1440
  %v3287 = vpop.f32.mrb[0].mxu0
  %v3288 = vadd.f32 %v2999, %v3287
  %v3289 = vpop.f32.mrb[0].mxu0
  %v3290 = vpop.f32.mrb[0].mxu0
  %v3291 = vadd.f32 %v3002, %v3290
  %v3292 = vpop.f32.mrb[0].mxu0
  %3293 = vmatprep.mubr.bf16.mxu0 0
  %3294 = vmatmul.mubr.bf16.gmra.mrb[0].mxu0 %v1441
  %v3295 = vpop.f32.mrb[0].mxu0
  %v3296 = vadd.f32 %v3007, %v3295
  %v3297 = vpop.f32.mrb[0].mxu0
  %v3298 = vpop.f32.mrb[0].mxu0
  %v3299 = vadd.f32 %v3010, %v3298
  %v3300 = vpop.f32.mrb[0].mxu0
  %3301 = vmatprep.mubr.bf16.mxu0 0
  %3302 = vmatmul.mubr.bf16.gmra.mrb[0].mxu0 %v1442
  %v3303 = vpop.f32.mrb[0].mxu0
  %v3304 = vadd.f32 %v3015, %v3303
  %v3305 = vpop.f32.mrb[0].mxu0
  %v3306 = vpop.f32.mrb[0].mxu0
  %v3307 = vadd.f32 %v3018, %v3306
  %v3308 = vpop.f32.mrb[0].mxu0
  %3309 = vmatprep.mubr.bf16.mxu0 0
  %3310 = vmatmul.mubr.bf16.gmra.mrb[0].mxu0 %v1443
  %v3311 = vpop.f32.mrb[0].mxu0
  %v3312 = vadd.f32 %v3023, %v3311
  %v3313 = vpop.f32.mrb[0].mxu0
  %v3314 = vpop.f32.mrb[0].mxu0
  %v3315 = vadd.f32 %v3026, %v3314
  %v3316 = vpop.f32.mrb[0].mxu0
  %3317 = vmatprep.mubr.bf16.mxu0 0
  %3318 = vmatmul.mubr.bf16.gmra.mrb[0].mxu0 %v1444
  %v3319 = vpop.f32.mrb[0].mxu0
  %v3320 = vadd.f32 %v3031, %v3319
  %v3321 = vpop.f32.mrb[0].mxu0
  %v3322 = vpop.f32.mrb[0].mxu0
  %v3323 = vadd.f32 %v3034, %v3322
  %v3324 = vpop.f32.mrb[0].mxu0
  %3325 = vmatprep.mubr.bf16.mxu0 0
  %3326 = vmatmul.mubr.bf16.gmra.mrb[0].mxu0 %v1445
  %v3327 = vpop.f32.mrb[0].mxu0
  %v3328 = vadd.f32 %v3039, %v3327
  %v3329 = vpop.f32.mrb[0].mxu0
  %v3330 = vpop.f32.mrb[0].mxu0
  %v3331 = vadd.f32 %v3042, %v3330
  %v3332 = vpop.f32.mrb[0].mxu0
  %3333 = vmatprep.mubr.bf16.mxu0 0
  %3334 = vmatmul.mubr.bf16.gmra.mrb[0].mxu0 %v1446
  %v3335 = vpop.f32.mrb[0].mxu0
  %v3336 = vadd.f32 %v3047, %v3335
  %v3337 = vpop.f32.mrb[0].mxu0
  %v3338 = vpop.f32.mrb[0].mxu0
  %v3339 = vadd.f32 %v3050, %v3338
  %v3340 = vpop.f32.mrb[0].mxu0
  %3341 = vmatprep.mubr.bf16.mxu0 0
  %3342 = vmatmul.mubr.bf16.gmra.mrb[0].mxu0 %v1447
  %v3343 = vpop.f32.mrb[0].mxu0
  %v3344 = vadd.f32 %v3055, %v3343
  %v3345 = vpop.f32.mrb[0].mxu0
  %v3346 = vpop.f32.mrb[0].mxu0
  %v3347 = vadd.f32 %v3058, %v3346
  %v3348 = vpop.f32.mrb[0].mxu0
  %3349 = vmatprep.mubr.bf16.mxu0 0
  %3350 = vmatmul.mubr.bf16.gmra.mrb[0].mxu0 %v1448
  %v3351 = vpop.f32.mrb[0].mxu0
  %v3352 = vadd.f32 %v3063, %v3351
  %v3353 = vpop.f32.mrb[0].mxu0
  %v3354 = vpop.f32.mrb[0].mxu0
  %v3355 = vadd.f32 %v3066, %v3354
  %v3356 = vpop.f32.mrb[0].mxu0
  %3357 = vmatprep.mubr.bf16.mxu0 0
  %3358 = vmatmul.mubr.bf16.gmra.mrb[0].mxu0 %v1449
  %v3359 = vpop.f32.mrb[0].mxu0
  %v3360 = vadd.f32 %v3071, %v3359
  %v3361 = vpop.f32.mrb[0].mxu0
  %v3362 = vpop.f32.mrb[0].mxu0
  %v3363 = vadd.f32 %v3074, %v3362
  %v3364 = vpop.f32.mrb[0].mxu0
  %3365 = vmatprep.mubr.bf16.mxu0 0
  %3366 = vmatmul.mubr.bf16.gmra.mrb[0].mxu0 %v1450
  %v3367 = vpop.f32.mrb[0].mxu0
  %v3368 = vadd.f32 %v3079, %v3367
  %v3369 = vpop.f32.mrb[0].mxu0
  %v3370 = vpop.f32.mrb[0].mxu0
  %v3371 = vadd.f32 %v3082, %v3370
  %v3372 = vpop.f32.mrb[0].mxu0
  %3373 = vmatprep.mubr.bf16.mxu0 0
  %3374 = vmatmul.mubr.bf16.gmra.mrb[0].mxu0 %v1451
  %v3375 = vpop.f32.mrb[0].mxu0
  %v3376 = vadd.f32 %v3087, %v3375
  %v3377 = vpop.f32.mrb[0].mxu0
  %v3378 = vpop.f32.mrb[0].mxu0
  %v3379 = vadd.f32 %v3090, %v3378
  %v3380 = vpop.f32.mrb[0].mxu0
  %3381 = vmatprep.mubr.bf16.mxu0 0
  %3382 = vmatmul.mubr.bf16.gmra.mrb[0].mxu0 %v1452
  %v3383 = vpop.f32.mrb[0].mxu0
  %v3384 = vadd.f32 %v3095, %v3383
  %v3385 = vpop.f32.mrb[0].mxu0
  %v3386 = vpop.f32.mrb[0].mxu0
  %v3387 = vadd.f32 %v3098, %v3386
  %v3388 = vpop.f32.mrb[0].mxu0
  %3389 = vmatprep.mubr.bf16.mxu0 0
  %3390 = vmatmul.mubr.bf16.gmra.mrb[0].mxu0 %v1453
  %v3391 = vpop.f32.mrb[0].mxu0
  %v3392 = vadd.f32 %v3103, %v3391
  %v3393 = vpop.f32.mrb[0].mxu0
  %v3394 = vpop.f32.mrb[0].mxu0
  %v3395 = vadd.f32 %v3106, %v3394
  %v3396 = vpop.f32.mrb[0].mxu0
  %3397 = vmatprep.mubr.bf16.mxu0 0
  %3398 = vmatmul.mubr.bf16.gmra.mrb[0].mxu0 %v1454
  %v3399 = vpop.f32.mrb[0].mxu0
  %v3400 = vadd.f32 %v3111, %v3399
  %v3401 = vpop.f32.mrb[0].mxu0
  %v3402 = vpop.f32.mrb[0].mxu0
  %v3403 = vadd.f32 %v3114, %v3402
  %v3404 = vpop.f32.mrb[0].mxu0
  %3405 = vmatprep.mubr.bf16.mxu0 0
  %3406 = vmatmul.mubr.bf16.gmra.mrb[0].mxu0 %v1455
  %v3407 = vpop.f32.mrb[0].mxu0
  %v3408 = vadd.f32 %v3119, %v3407
  %v3409 = vpop.f32.mrb[0].mxu0
  %v3410 = vpop.f32.mrb[0].mxu0
  %v3411 = vadd.f32 %v3122, %v3410
  %v3412 = vpop.f32.mrb[0].mxu0
  %3413 = vmatprep.mubr.bf16.mxu0 0
  %3414 = vmatmul.mubr.bf16.gmra.mrb[0].mxu0 %v1456
  %v3415 = vpop.f32.mrb[0].mxu0
  %v3416 = vadd.f32 %v3127, %v3415
  %v3417 = vpop.f32.mrb[0].mxu0
  %v3418 = vpop.f32.mrb[0].mxu0
  %v3419 = vadd.f32 %v3130, %v3418
  %v3420 = vpop.f32.mrb[0].mxu0
  %3421 = vmatprep.mubr.bf16.mxu0 0
  %3422 = vmatmul.mubr.bf16.gmra.mrb[0].mxu0 %v1457
  %v3423 = vpop.f32.mrb[0].mxu0
  %v3424 = vadd.f32 %v3135, %v3423
  %v3425 = vpop.f32.mrb[0].mxu0
  %v3426 = vpop.f32.mrb[0].mxu0
  %v3427 = vadd.f32 %v3138, %v3426
  %v3428 = vpop.f32.mrb[0].mxu0
  %3429 = vmatprep.mubr.bf16.mxu0 0
  %3430 = vmatmul.mubr.bf16.gmra.mrb[0].mxu0 %v1458
  %v3431 = vpop.f32.mrb[0].mxu0
  %v3432 = vadd.f32 %v3143, %v3431
  %v3433 = vpop.f32.mrb[0].mxu0
  %v3434 = vpop.f32.mrb[0].mxu0
  %v3435 = vadd.f32 %v3146, %v3434
  %v3436 = vpop.f32.mrb[0].mxu0
  %3437 = vmatprep.mubr.bf16.mxu0 0
  %3438 = vmatmul.mubr.bf16.gmra.mrb[0].mxu0 %v1459
  %v3439 = vpop.f32.mrb[0].mxu0
  %v3440 = vadd.f32 %v3151, %v3439
  %v3441 = vpop.f32.mrb[0].mxu0
  %v3442 = vpop.f32.mrb[0].mxu0
  %v3443 = vadd.f32 %v3154, %v3442
  %v3444 = vpop.f32.mrb[0].mxu0
  %3445 = vmatprep.mubr.bf16.mxu0 0
  %3446 = vmatmul.mubr.bf16.gmra.mrb[0].mxu0 %v1460
  %v3447 = vpop.f32.mrb[0].mxu0
  %v3448 = vadd.f32 %v3159, %v3447
  %v3449 = vpop.f32.mrb[0].mxu0
  %v3450 = vpop.f32.mrb[0].mxu0
  %v3451 = vadd.f32 %v3162, %v3450
  %v3452 = vpop.f32.mrb[0].mxu0
  %3453 = vmatprep.mubr.bf16.mxu0 0
  %3454 = vmatmul.mubr.bf16.gmra.mrb[0].mxu0 %v1461
  %v3455 = vpop.f32.mrb[0].mxu0
  %v3456 = vadd.f32 %v3167, %v3455
  %v3457 = vpop.f32.mrb[0].mxu0
  %v3458 = vpop.f32.mrb[0].mxu0
  %v3459 = vadd.f32 %v3170, %v3458
  %v3460 = vpop.f32.mrb[0].mxu0
  %3461 = vmatprep.mubr.bf16.mxu0 0
  %3462 = vmatmul.mubr.bf16.gmra.mrb[0].mxu0 %v1462
  %v3463 = vpop.f32.mrb[0].mxu0
  %v3464 = vadd.f32 %v3175, %v3463
  %v3465 = vpop.f32.mrb[0].mxu0
  %v3466 = vpop.f32.mrb[0].mxu0
  %v3467 = vadd.f32 %v3178, %v3466
  %v3468 = vpop.f32.mrb[0].mxu0
  %3469 = vmatprep.mubr.bf16.mxu0 0
  %3470 = vmatmul.mubr.bf16.gmra.mrb[0].mxu0 %v1463
  %v3471 = vpop.f32.mrb[0].mxu0
  %v3472 = vadd.f32 %v3183, %v3471
  %v3473 = vpop.f32.mrb[0].mxu0
  %v3474 = vpop.f32.mrb[0].mxu0
  %v3475 = vadd.f32 %v3186, %v3474
  %v3476 = vpop.f32.mrb[0].mxu0
  %3477 = vmatprep.mubr.bf16.mxu0 0
  %3478 = vmatmul.mubr.bf16.gmra.mrb[0].mxu0 %v1464
  %v3479 = vpop.f32.mrb[0].mxu0
  %v3480 = vadd.f32 %v3191, %v3479
  %v3481 = vpop.f32.mrb[0].mxu0
  %v3482 = vpop.f32.mrb[0].mxu0
  %v3483 = vadd.f32 %v3194, %v3482
  %v3484 = vpop.f32.mrb[0].mxu0
  %3485 = vmatprep.mubr.bf16.mxu0 0
  %3486 = vmatmul.mubr.bf16.gmra.mrb[0].mxu0 %v1465
  %v3487 = vpop.f32.mrb[0].mxu0
  %v3488 = vadd.f32 %v3199, %v3487
  %v3489 = vpop.f32.mrb[0].mxu0
  %v3490 = vpop.f32.mrb[0].mxu0
  %v3491 = vadd.f32 %v3202, %v3490
  %v3492 = vpop.f32.mrb[0].mxu0
  %3493 = vdwg.mxu0
  %3494 = vst [vmem:[%s7] sm:$0xff] %v3240
  %3495 = vst [vmem:[%s7 + $0x8] sm:$0xff] %v3243
  %3496 = vst [vmem:[%s7 + $0x10] sm:$0xff] %v3248
  %3497 = vst [vmem:[%s7 + $0x18] sm:$0xff] %v3251
  %3498 = vst [vmem:[%s7 + $0x20] sm:$0xff] %v3256
  %3499 = vst [vmem:[%s7 + $0x28] sm:$0xff] %v3259
  %3500 = vst [vmem:[%s7 + $0x30] sm:$0xff] %v3264
  %3501 = vst [vmem:[%s7 + $0x38] sm:$0xff] %v3267
  %3502 = vst [vmem:[%s7 + $0x40] sm:$0xff] %v3272
  %3503 = vst [vmem:[%s7 + $0x48] sm:$0xff] %v3275
  %3504 = vst [vmem:[%s7 + $0x50] sm:$0xff] %v3280
  %3505 = vst [vmem:[%s7 + $0x58] sm:$0xff] %v3283
  %3506 = vst [vmem:[%s7 + $0x60] sm:$0xff] %v3288
  %3507 = vst [vmem:[%s7 + $0x68] sm:$0xff] %v3291
  %3508 = vst [vmem:[%s7 + $0x70] sm:$0xff] %v3296
  %3509 = vst [vmem:[%s7 + $0x78] sm:$0xff] %v3299
  %3510 = vst [vmem:[%s7 + $0x80] sm:$0xff] %v3304
  %3511 = vst [vmem:[%s7 + $0x88] sm:$0xff] %v3307
  %3512 = vst [vmem:[%s7 + $0x90] sm:$0xff] %v3312
  %3513 = vst [vmem:[%s7 + $0x98] sm:$0xff] %v3315
  %3514 = vst [vmem:[%s7 + $0xa0] sm:$0xff] %v3320
  %3515 = vst [vmem:[%s7 + $0xa8] sm:$0xff] %v3323
  %3516 = vst [vmem:[%s7 + $0xb0] sm:$0xff] %v3328
  %3517 = vst [vmem:[%s7 + $0xb8] sm:$0xff] %v3331
  %3518 = vst [vmem:[%s7 + $0xc0] sm:$0xff] %v3336
  %3519 = vst [vmem:[%s7 + $0xc8] sm:$0xff] %v3339
  %3520 = vst [vmem:[%s7 + $0xd0] sm:$0xff] %v3344
  %3521 = vst [vmem:[%s7 + $0xd8] sm:$0xff] %v3347
  %3522 = vst [vmem:[%s7 + $0xe0] sm:$0xff] %v3352
  %3523 = vst [vmem:[%s7 + $0xe8] sm:$0xff] %v3355
  %3524 = vst [vmem:[%s7 + $0xf0] sm:$0xff] %v3360
  %3525 = vst [vmem:[%s7 + $0xf8] sm:$0xff] %v3363
  %3526 = vst [vmem:[%s7 + $0x100] sm:$0xff] %v3368
  %3527 = vst [vmem:[%s7 + $0x108] sm:$0xff] %v3371
  %3528 = vst [vmem:[%s7 + $0x110] sm:$0xff] %v3376
  %3529 = vst [vmem:[%s7 + $0x118] sm:$0xff] %v3379
  %3530 = vst [vmem:[%s7 + $0x120] sm:$0xff] %v3384
  %3531 = vst [vmem:[%s7 + $0x128] sm:$0xff] %v3387
  %3532 = vst [vmem:[%s7 + $0x130] sm:$0xff] %v3392
  %3533 = vst [vmem:[%s7 + $0x138] sm:$0xff] %v3395
  %3534 = vst [vmem:[%s7 + $0x140] sm:$0xff] %v3400
  %3535 = vst [vmem:[%s7 + $0x148] sm:$0xff] %v3403
  %3536 = vst [vmem:[%s7 + $0x150] sm:$0xff] %v3408
  %3537 = vst [vmem:[%s7 + $0x158] sm:$0xff] %v3411
  %3538 = vst [vmem:[%s7 + $0x160] sm:$0xff] %v3416
  %3539 = vst [vmem:[%s7 + $0x168] sm:$0xff] %v3419
  %3540 = vst [vmem:[%s7 + $0x170] sm:$0xff] %v3424
  %3541 = vst [vmem:[%s7 + $0x178] sm:$0xff] %v3427
  %3542 = vst [vmem:[%s7 + $0x180] sm:$0xff] %v3432
  %3543 = vst [vmem:[%s7 + $0x188] sm:$0xff] %v3435
  %3544 = vst [vmem:[%s7 + $0x190] sm:$0xff] %v3440
  %3545 = vst [vmem:[%s7 + $0x198] sm:$0xff] %v3443
  %3546 = vst [vmem:[%s7 + $0x1a0] sm:$0xff] %v3448
  %3547 = vst [vmem:[%s7 + $0x1a8] sm:$0xff] %v3451
  %3548 = vst [vmem:[%s7 + $0x1b0] sm:$0xff] %v3456
  %3549 = vst [vmem:[%s7 + $0x1b8] sm:$0xff] %v3459
  %3550 = vst [vmem:[%s7 + $0x1c0] sm:$0xff] %v3464
  %3551 = vst [vmem:[%s7 + $0x1c8] sm:$0xff] %v3467
  %3552 = vst [vmem:[%s7 + $0x1d0] sm:$0xff] %v3472
  %3553 = vst [vmem:[%s7 + $0x1d8] sm:$0xff] %v3475
  %3554 = vst [vmem:[%s7 + $0x1e0] sm:$0xff] %v3480
  %3555 = vst [vmem:[%s7 + $0x1e8] sm:$0xff] %v3483
  %3556 = vst [vmem:[%s7 + $0x1f0] sm:$0xff] %v3488
  %3557 = vst [vmem:[%s7 + $0x1f8] sm:$0xff] %v3491
  %v3558 = vadd.f32 %v3240, %v3243
  %v3559 = vadd.f32 %v3558, %v3248
  %v3560 = vadd.f32 %v3559, %v3251
  %v3561 = vadd.f32 %v3560, %v3256
  %v3562 = vadd.f32 %v3561, %v3259
  %v3563 = vadd.f32 %v3562, %v3264
  %v3564 = vadd.f32 %v3563, %v3267
  %v3565 = vadd.f32 %v3564, %v3272
  %v3566 = vadd.f32 %v3565, %v3275
  %v3567 = vadd.f32 %v3566, %v3280
  %v3568 = vadd.f32 %v3567, %v3283
  %v3569 = vadd.f32 %v3568, %v3288
  %v3570 = vadd.f32 %v3569, %v3291
  %v3571 = vadd.f32 %v3570, %v3296
  %v3572 = vadd.f32 %v3571, %v3299
  %v3573 = vadd.f32 %v3572, %v3304
  %v3574 = vadd.f32 %v3573, %v3307
  %v3575 = vadd.f32 %v3574, %v3312
  %v3576 = vadd.f32 %v3575, %v3315
  %v3577 = vadd.f32 %v3576, %v3320
  %v3578 = vadd.f32 %v3577, %v3323
  %v3579 = vadd.f32 %v3578, %v3328
  %v3580 = vadd.f32 %v3579, %v3331
  %v3581 = vadd.f32 %v3580, %v3336
  %v3582 = vadd.f32 %v3581, %v3339
  %v3583 = vadd.f32 %v3582, %v3344
  %v3584 = vadd.f32 %v3583, %v3347
  %v3585 = vadd.f32 %v3584, %v3352
  %v3586 = vadd.f32 %v3585, %v3355
  %v3587 = vadd.f32 %v3586, %v3360
  %v3588 = vadd.f32 %v3587, %v3363
  %v3589 = vadd.f32 %v3588, %v3368
  %v3590 = vadd.f32 %v3589, %v3371
  %v3591 = vadd.f32 %v3590, %v3376
  %v3592 = vadd.f32 %v3591, %v3379
  %v3593 = vadd.f32 %v3592, %v3384
  %v3594 = vadd.f32 %v3593, %v3387
  %v3595 = vadd.f32 %v3594, %v3392
  %v3596 = vadd.f32 %v3595, %v3395
  %v3597 = vadd.f32 %v3596, %v3400
  %v3598 = vadd.f32 %v3597, %v3403
  %v3599 = vadd.f32 %v3598, %v3408
  %v3600 = vadd.f32 %v3599, %v3411
  %v3601 = vadd.f32 %v3600, %v3416
  %v3602 = vadd.f32 %v3601, %v3419
  %v3603 = vadd.f32 %v3602, %v3424
  %v3604 = vadd.f32 %v3603, %v3427
  %v3605 = vadd.f32 %v3604, %v3432
  %v3606 = vadd.f32 %v3605, %v3435
  %v3607 = vadd.f32 %v3606, %v3440
  %v3608 = vadd.f32 %v3607, %v3443
  %v3609 = vadd.f32 %v3608, %v3448
  %v3610 = vadd.f32 %v3609, %v3451
  %v3611 = vadd.f32 %v3610, %v3456
  %v3612 = vadd.f32 %v3611, %v3459
  %v3613 = vadd.f32 %v3612, %v3464
  %v3614 = vadd.f32 %v3613, %v3467
  %v3615 = vadd.f32 %v3614, %v3472
  %v3616 = vadd.f32 %v3615, %v3475
  %v3617 = vadd.f32 %v3616, %v3480
  %v3618 = vadd.f32 %v3617, %v3483
  %v3619 = vadd.f32 %v3618, %v3488
  %v3620 = vadd.f32 %v3619, %v3491
  %v3621 = vrot.slane %v3620, 4
  %v3622 = vadd.f32 %v3620, %v3621
  %v3623 = vrot.slane %v3622, 2
  %v3624 = vadd.f32 %v3622, %v3623
  %v3625 = vrot.slane %v3624, 1
  %v3626 = vadd.f32 %v3624, %v3625
  %v3627 = vrcp.pop 512.0
  %v3628 = vmul.f32 %v3626, %v3627
  %v3629 = vsub.f32 %v3240, %v3628
  %v3630 = vsub.f32 %v3243, %v3628
  %v3631 = vsub.f32 %v3248, %v3628
  %v3632 = vsub.f32 %v3251, %v3628
  %v3633 = vsub.f32 %v3256, %v3628
  %v3634 = vsub.f32 %v3259, %v3628
  %v3635 = vsub.f32 %v3264, %v3628
  %v3636 = vsub.f32 %v3267, %v3628
  %v3637 = vsub.f32 %v3272, %v3628
  %v3638 = vsub.f32 %v3275, %v3628
  %v3639 = vsub.f32 %v3280, %v3628
  %v3640 = vsub.f32 %v3283, %v3628
  %v3641 = vsub.f32 %v3288, %v3628
  %v3642 = vsub.f32 %v3291, %v3628
  %v3643 = vsub.f32 %v3296, %v3628
  %v3644 = vsub.f32 %v3299, %v3628
  %v3645 = vsub.f32 %v3304, %v3628
  %v3646 = vsub.f32 %v3307, %v3628
  %v3647 = vsub.f32 %v3312, %v3628
  %v3648 = vsub.f32 %v3315, %v3628
  %v3649 = vsub.f32 %v3320, %v3628
  %v3650 = vsub.f32 %v3323, %v3628
  %v3651 = vsub.f32 %v3328, %v3628
  %v3652 = vsub.f32 %v3331, %v3628
  %v3653 = vsub.f32 %v3336, %v3628
  %v3654 = vsub.f32 %v3339, %v3628
  %v3655 = vsub.f32 %v3344, %v3628
  %v3656 = vsub.f32 %v3347, %v3628
  %v3657 = vsub.f32 %v3352, %v3628
  %v3658 = vsub.f32 %v3355, %v3628
  %v3659 = vsub.f32 %v3360, %v3628
  %v3660 = vsub.f32 %v3363, %v3628
  %v3661 = vsub.f32 %v3368, %v3628
  %v3662 = vsub.f32 %v3371, %v3628
  %v3663 = vsub.f32 %v3376, %v3628
  %v3664 = vsub.f32 %v3379, %v3628
  %v3665 = vsub.f32 %v3384, %v3628
  %v3666 = vsub.f32 %v3387, %v3628
  %v3667 = vsub.f32 %v3392, %v3628
  %v3668 = vsub.f32 %v3395, %v3628
  %v3669 = vsub.f32 %v3400, %v3628
  %v3670 = vsub.f32 %v3403, %v3628
  %v3671 = vsub.f32 %v3408, %v3628
  %v3672 = vsub.f32 %v3411, %v3628
  %v3673 = vsub.f32 %v3416, %v3628
  %v3674 = vsub.f32 %v3419, %v3628
  %v3675 = vsub.f32 %v3424, %v3628
  %v3676 = vsub.f32 %v3427, %v3628
  %v3677 = vsub.f32 %v3432, %v3628
  %v3678 = vsub.f32 %v3435, %v3628
  %v3679 = vsub.f32 %v3440, %v3628
  %v3680 = vsub.f32 %v3443, %v3628
  %v3681 = vsub.f32 %v3448, %v3628
  %v3682 = vsub.f32 %v3451, %v3628
  %v3683 = vsub.f32 %v3456, %v3628
  %v3684 = vsub.f32 %v3459, %v3628
  %v3685 = vsub.f32 %v3464, %v3628
  %v3686 = vsub.f32 %v3467, %v3628
  %v3687 = vsub.f32 %v3472, %v3628
  %v3688 = vsub.f32 %v3475, %v3628
  %v3689 = vsub.f32 %v3480, %v3628
  %v3690 = vsub.f32 %v3483, %v3628
  %v3691 = vsub.f32 %v3488, %v3628
  %v3692 = vsub.f32 %v3491, %v3628
  %v3693 = vmul.f32 %v3629, %v3629
  %v3694 = vmul.f32 %v3630, %v3630
  %v3695 = vmul.f32 %v3631, %v3631
  %v3696 = vmul.f32 %v3632, %v3632
  %v3697 = vmul.f32 %v3633, %v3633
  %v3698 = vmul.f32 %v3634, %v3634
  %v3699 = vmul.f32 %v3635, %v3635
  %v3700 = vmul.f32 %v3636, %v3636
  %v3701 = vmul.f32 %v3637, %v3637
  %v3702 = vmul.f32 %v3638, %v3638
  %v3703 = vmul.f32 %v3639, %v3639
  %v3704 = vmul.f32 %v3640, %v3640
  %v3705 = vmul.f32 %v3641, %v3641
  %v3706 = vmul.f32 %v3642, %v3642
  %v3707 = vmul.f32 %v3643, %v3643
  %v3708 = vmul.f32 %v3644, %v3644
  %v3709 = vmul.f32 %v3645, %v3645
  %v3710 = vmul.f32 %v3646, %v3646
  %v3711 = vmul.f32 %v3647, %v3647
  %v3712 = vmul.f32 %v3648, %v3648
  %v3713 = vmul.f32 %v3649, %v3649
  %v3714 = vmul.f32 %v3650, %v3650
  %v3715 = vmul.f32 %v3651, %v3651
  %v3716 = vmul.f32 %v3652, %v3652
  %v3717 = vmul.f32 %v3653, %v3653
  %v3718 = vmul.f32 %v3654, %v3654
  %v3719 = vmul.f32 %v3655, %v3655
  %v3720 = vmul.f32 %v3656, %v3656
  %v3721 = vmul.f32 %v3657, %v3657
  %v3722 = vmul.f32 %v3658, %v3658
  %v3723 = vmul.f32 %v3659, %v3659
  %v3724 = vmul.f32 %v3660, %v3660
  %v3725 = vmul.f32 %v3661, %v3661
  %v3726 = vmul.f32 %v3662, %v3662
  %v3727 = vmul.f32 %v3663, %v3663
  %v3728 = vmul.f32 %v3664, %v3664
  %v3729 = vmul.f32 %v3665, %v3665
  %v3730 = vmul.f32 %v3666, %v3666
  %v3731 = vmul.f32 %v3667, %v3667
  %v3732 = vmul.f32 %v3668, %v3668
  %v3733 = vmul.f32 %v3669, %v3669
  %v3734 = vmul.f32 %v3670, %v3670
  %v3735 = vmul.f32 %v3671, %v3671
  %v3736 = vmul.f32 %v3672, %v3672
  %v3737 = vmul.f32 %v3673, %v3673
  %v3738 = vmul.f32 %v3674, %v3674
  %v3739 = vmul.f32 %v3675, %v3675
  %v3740 = vmul.f32 %v3676, %v3676
  %v3741 = vmul.f32 %v3677, %v3677
  %v3742 = vmul.f32 %v3678, %v3678
  %v3743 = vmul.f32 %v3679, %v3679
  %v3744 = vmul.f32 %v3680, %v3680
  %v3745 = vmul.f32 %v3681, %v3681
  %v3746 = vmul.f32 %v3682, %v3682
  %v3747 = vmul.f32 %v3683, %v3683
  %v3748 = vmul.f32 %v3684, %v3684
  %v3749 = vmul.f32 %v3685, %v3685
  %v3750 = vmul.f32 %v3686, %v3686
  %v3751 = vmul.f32 %v3687, %v3687
  %v3752 = vmul.f32 %v3688, %v3688
  %v3753 = vmul.f32 %v3689, %v3689
  %v3754 = vmul.f32 %v3690, %v3690
  %v3755 = vmul.f32 %v3691, %v3691
  %v3756 = vmul.f32 %v3692, %v3692
  %v3757 = vadd.f32 %v3693, %v3694
  %v3758 = vadd.f32 %v3757, %v3695
  %v3759 = vadd.f32 %v3758, %v3696
  %v3760 = vadd.f32 %v3759, %v3697
  %v3761 = vadd.f32 %v3760, %v3698
  %v3762 = vadd.f32 %v3761, %v3699
  %v3763 = vadd.f32 %v3762, %v3700
  %v3764 = vadd.f32 %v3763, %v3701
  %v3765 = vadd.f32 %v3764, %v3702
  %v3766 = vadd.f32 %v3765, %v3703
  %v3767 = vadd.f32 %v3766, %v3704
  %v3768 = vadd.f32 %v3767, %v3705
  %v3769 = vadd.f32 %v3768, %v3706
  %v3770 = vadd.f32 %v3769, %v3707
  %v3771 = vadd.f32 %v3770, %v3708
  %v3772 = vadd.f32 %v3771, %v3709
  %v3773 = vadd.f32 %v3772, %v3710
  %v3774 = vadd.f32 %v3773, %v3711
  %v3775 = vadd.f32 %v3774, %v3712
  %v3776 = vadd.f32 %v3775, %v3713
  %v3777 = vadd.f32 %v3776, %v3714
  %v3778 = vadd.f32 %v3777, %v3715
  %v3779 = vadd.f32 %v3778, %v3716
  %v3780 = vadd.f32 %v3779, %v3717
  %v3781 = vadd.f32 %v3780, %v3718
  %v3782 = vadd.f32 %v3781, %v3719
  %v3783 = vadd.f32 %v3782, %v3720
  %v3784 = vadd.f32 %v3783, %v3721
  %v3785 = vadd.f32 %v3784, %v3722
  %v3786 = vadd.f32 %v3785, %v3723
  %v3787 = vadd.f32 %v3786, %v3724
  %v3788 = vadd.f32 %v3787, %v3725
  %v3789 = vadd.f32 %v3788, %v3726
  %v3790 = vadd.f32 %v3789, %v3727
  %v3791 = vadd.f32 %v3790, %v3728
  %v3792 = vadd.f32 %v3791, %v3729
  %v3793 = vadd.f32 %v3792, %v3730
  %v3794 = vadd.f32 %v3793, %v3731
  %v3795 = vadd.f32 %v3794, %v3732
  %v3796 = vadd.f32 %v3795, %v3733
  %v3797 = vadd.f32 %v3796, %v3734
  %v3798 = vadd.f32 %v3797, %v3735
  %v3799 = vadd.f32 %v3798, %v3736
  %v3800 = vadd.f32 %v3799, %v3737
  %v3801 = vadd.f32 %v3800, %v3738
  %v3802 = vadd.f32 %v3801, %v3739
  %v3803 = vadd.f32 %v3802, %v3740
  %v3804 = vadd.f32 %v3803, %v3741
  %v3805 = vadd.f32 %v3804, %v3742
  %v3806 = vadd.f32 %v3805, %v3743
  %v3807 = vadd.f32 %v3806, %v3744
  %v3808 = vadd.f32 %v3807, %v3745
  %v3809 = vadd.f32 %v3808, %v3746
  %v3810 = vadd.f32 %v3809, %v3747
  %v3811 = vadd.f32 %v3810, %v3748
  %v3812 = vadd.f32 %v3811, %v3749
  %v3813 = vadd.f32 %v3812, %v3750
  %v3814 = vadd.f32 %v3813, %v3751
  %v3815 = vadd.f32 %v3814, %v3752
  %v3816 = vadd.f32 %v3815, %v3753
  %v3817 = vadd.f32 %v3816, %v3754
  %v3818 = vadd.f32 %v3817, %v3755
  %v3819 = vadd.f32 %v3818, %v3756
  %v3820 = vrot.slane %v3819, 4
  %v3821 = vadd.f32 %v3819, %v3820
  %v3822 = vrot.slane %v3821, 2
  %v3823 = vadd.f32 %v3821, %v3822
  %v3824 = vrot.slane %v3823, 1
  %v3825 = vadd.f32 %v3823, %v3824
  %v3826 = vmul.f32 %v3825, %v3627
  %v3827 = vld [vmem:[%s5] sm:$0x1]
  %v3828 = vadd.f32 %v3826, 0.8
  %v3829 = vrsqrt.pop %v3828
  %v3830 = vmul.f32 %v3827, %v3829
  %3831 = vst [vmem:[%s8] sm:$0x1] %v3830
  %v3832 = vld [vmem:[%s6] sm:$0x1]
  %v3833 = vmul.f32 %v3628, %v3830
  %v3834 = vsub.f32 %v3832, %v3833
  %3835 = vst [vmem:[%s9] sm:$0x1] %v3834
  // Predicated region
  $region30: #{generator_forward.6} parent=0 // pred_check
    _
  $region31: #{generator_forward.6} parent=0 // pred_check_branch
    %3837 = sbr.rel (0) target = $region33
  $region32: #{generator_forward.6} parent=0 // pred_region
    _
  $region33: #{generator_forward.6} parent=0 // pred_fallthru
    _
  // Predicated region
  $region34: #{generator_forward.6} parent=0 // pred_check
    _
  $region35: #{generator_forward.6} parent=0 // pred_check_branch
    %3839 = sbr.rel (0) target = $region37
  $region36: #{generator_forward.6} parent=0 // pred_region
    _
  $region37: #{generator_forward.6} parent=0 // pred_fallthru
    _
  // Predicated region
  $region38: #{generator_forward.6} parent=0 // pred_check
    _
  $region39: #{generator_forward.6} parent=0 // pred_check_branch
    %3841 = sbr.rel (0) target = $region41
  $region40: #{generator_forward.6} parent=0 // pred_region
    _
  $region41: #{generator_forward.6} parent=0 // pred_fallthru
    _
  // Predicated region
  $region42: #{generator_forward.6} parent=0 // pred_check
    _
  $region43: #{generator_forward.6} parent=0 // pred_check_branch
    %3843 = sbr.rel (0) target = $region45
  $region44: #{generator_forward.6} parent=0 // pred_region
    _
  $region45: #{generator_forward.6} parent=0 // pred_fallthru
    _
  // Predicated region
  $region46: #{generator_forward.6} parent=0 // pred_check
    _
  $region47: #{generator_forward.6} parent=0 // pred_check_branch
    %3845 = sbr.rel (0) target = $region49
  $region48: #{generator_forward.6} parent=0 // pred_region
    _
  $region49: #{generator_forward.6} parent=0 // pred_fallthru
    _
  // Predicated region
  $region50: #{generator_forward.6} parent=0 // pred_check
    _
  $region51: #{generator_forward.6} parent=0 // pred_check_branch
    %3847 = sbr.rel (0) target = $region53
  $region52: #{generator_forward.6} parent=0 // pred_region
    _
  $region53: #{generator_forward.6} parent=0 // pred_fallthru
    _

// kernel: generator_forward.7
$region0: #{generator_forward.7}
  #allocation0 [shape = 'u32[]', space=smem, size = 0x4, offset = 0x4, fixed_abs, tag = 'smem constant byte address 0x4 - core index']
  #allocation1 [shape = 'u32[144,128]{1,0:T(1,128)}', space=vmem, size = 0x12000, scoped, tag = 'internal scratch']
  #allocation2 [shape = 'f32[2,18,18,128]{3,2,1,0:T(8,128)}', space=vmem, size = 0x6c000, scoped, tag = 'scratch operand']
  %s0 = inlined_call_operand.vmem [shape: f32[2,16,16,128], index: 0, kind: input, shape index: {}]
  %s1 = inlined_call_operand.vmem [shape: f32[1,128], index: 1, kind: input, shape index: {}]
  %s2 = inlined_call_operand.vmem [shape: f32[1,128], index: 2, kind: input, shape index: {}]
  %s3 = inlined_call_operand.vmem [shape: bf16[1152,128], index: 3, kind: input, shape index: {}]
  %s4 = inlined_call_operand.vmem [shape: f32[1,128], index: 4, kind: input, shape index: {}]
  %s5 = inlined_call_operand.vmem [shape: f32[512,128], index: 5, kind: output, shape index: {}]
  %s6 = sld [smem:[#allocation0]]
  $region30: #{generator_forward.7} parent=0
    _
  %s8 = ssub.s32 1, %s6
  %s9 = scalar_select 0, %s8, %s6
  // Predicated region
  $region2: #{generator_forward.7} parent=0 // pred_check
    _
  $region3: #{generator_forward.7} parent=0 // pred_check_branch
    %11 = sbr.rel (0) target = $region5
  $region4: #{generator_forward.7} parent=0 // pred_region
    _
  $region5: #{generator_forward.7} parent=0 // pred_fallthru
    _
  // Predicated region
  $region6: #{generator_forward.7} parent=0 // pred_check
    _
  $region7: #{generator_forward.7} parent=0 // pred_check_branch
    %13 = sbr.rel (0) target = $region9
  $region8: #{generator_forward.7} parent=0 // pred_region
    _
  $region9: #{generator_forward.7} parent=0 // pred_fallthru
    _
  // Predicated region
  $region10: #{generator_forward.7} parent=0 // pred_check
    _
  $region11: #{generator_forward.7} parent=0 // pred_check_branch
    %15 = sbr.rel (0) target = $region13
  $region12: #{generator_forward.7} parent=0 // pred_region
    _
  $region13: #{generator_forward.7} parent=0 // pred_fallthru
    _
  // Predicated region
  $region14: #{generator_forward.7} parent=0 // pred_check
    _
  $region15: #{generator_forward.7} parent=0 // pred_check_branch
    %17 = sbr.rel (0) target = $region17
  $region16: #{generator_forward.7} parent=0 // pred_region
    _
  $region17: #{generator_forward.7} parent=0 // pred_fallthru
    _
  // Predicated region
  $region18: #{generator_forward.7} parent=0 // pred_check
    _
  $region19: #{generator_forward.7} parent=0 // pred_check_branch
    %19 = sbr.rel (0) target = $region21
  $region20: #{generator_forward.7} parent=0 // pred_region
    _
  $region21: #{generator_forward.7} parent=0 // pred_fallthru
    _
  %v21 = vld [vmem:[%s0] sm:$0xff]
  %v22 = vld [vmem:[%s0 + $0x8] sm:$0xff]
  %v23 = vld [vmem:[%s0 + $0x10] sm:$0xff]
  %v24 = vld [vmem:[%s0 + $0x18] sm:$0xff]
  %v25 = vld [vmem:[%s0 + $0x20] sm:$0xff]
  %v26 = vld [vmem:[%s0 + $0x28] sm:$0xff]
  %v27 = vld [vmem:[%s0 + $0x30] sm:$0xff]
  %v28 = vld [vmem:[%s0 + $0x38] sm:$0xff]
  %v29 = vld [vmem:[%s0 + $0x40] sm:$0xff]
  %v30 = vld [vmem:[%s0 + $0x48] sm:$0xff]
  %v31 = vld [vmem:[%s0 + $0x50] sm:$0xff]
  %v32 = vld [vmem:[%s0 + $0x58] sm:$0xff]
  %v33 = vld [vmem:[%s0 + $0x60] sm:$0xff]
  %v34 = vld [vmem:[%s0 + $0x68] sm:$0xff]
  %v35 = vld [vmem:[%s0 + $0x70] sm:$0xff]
  %v36 = vld [vmem:[%s0 + $0x78] sm:$0xff]
  %v37 = vld [vmem:[%s0 + $0x80] sm:$0xff]
  %v38 = vld [vmem:[%s0 + $0x88] sm:$0xff]
  %v39 = vld [vmem:[%s0 + $0x90] sm:$0xff]
  %v40 = vld [vmem:[%s0 + $0x98] sm:$0xff]
  %v41 = vld [vmem:[%s0 + $0xa0] sm:$0xff]
  %v42 = vld [vmem:[%s0 + $0xa8] sm:$0xff]
  %v43 = vld [vmem:[%s0 + $0xb0] sm:$0xff]
  %v44 = vld [vmem:[%s0 + $0xb8] sm:$0xff]
  %v45 = vld [vmem:[%s0 + $0xc0] sm:$0xff]
  %v46 = vld [vmem:[%s0 + $0xc8] sm:$0xff]
  %v47 = vld [vmem:[%s0 + $0xd0] sm:$0xff]
  %v48 = vld [vmem:[%s0 + $0xd8] sm:$0xff]
  %v49 = vld [vmem:[%s0 + $0xe0] sm:$0xff]
  %v50 = vld [vmem:[%s0 + $0xe8] sm:$0xff]
  %v51 = vld [vmem:[%s0 + $0xf0] sm:$0xff]
  %v52 = vld [vmem:[%s0 + $0xf8] sm:$0xff]
  %v53 = vld [vmem:[%s0 + $0x100] sm:$0xff]
  %v54 = vld [vmem:[%s0 + $0x108] sm:$0xff]
  %v55 = vld [vmem:[%s0 + $0x110] sm:$0xff]
  %v56 = vld [vmem:[%s0 + $0x118] sm:$0xff]
  %v57 = vld [vmem:[%s0 + $0x120] sm:$0xff]
  %v58 = vld [vmem:[%s0 + $0x128] sm:$0xff]
  %v59 = vld [vmem:[%s0 + $0x130] sm:$0xff]
  %v60 = vld [vmem:[%s0 + $0x138] sm:$0xff]
  %v61 = vld [vmem:[%s0 + $0x140] sm:$0xff]
  %v62 = vld [vmem:[%s0 + $0x148] sm:$0xff]
  %v63 = vld [vmem:[%s0 + $0x150] sm:$0xff]
  %v64 = vld [vmem:[%s0 + $0x158] sm:$0xff]
  %v65 = vld [vmem:[%s0 + $0x160] sm:$0xff]
  %v66 = vld [vmem:[%s0 + $0x168] sm:$0xff]
  %v67 = vld [vmem:[%s0 + $0x170] sm:$0xff]
  %v68 = vld [vmem:[%s0 + $0x178] sm:$0xff]
  %v69 = vld [vmem:[%s0 + $0x180] sm:$0xff]
  %v70 = vld [vmem:[%s0 + $0x188] sm:$0xff]
  %v71 = vld [vmem:[%s0 + $0x190] sm:$0xff]
  %v72 = vld [vmem:[%s0 + $0x198] sm:$0xff]
  %v73 = vld [vmem:[%s0 + $0x1a0] sm:$0xff]
  %v74 = vld [vmem:[%s0 + $0x1a8] sm:$0xff]
  %v75 = vld [vmem:[%s0 + $0x1b0] sm:$0xff]
  %v76 = vld [vmem:[%s0 + $0x1b8] sm:$0xff]
  %v77 = vld [vmem:[%s0 + $0x1c0] sm:$0xff]
  %v78 = vld [vmem:[%s0 + $0x1c8] sm:$0xff]
  %v79 = vld [vmem:[%s0 + $0x1d0] sm:$0xff]
  %v80 = vld [vmem:[%s0 + $0x1d8] sm:$0xff]
  %v81 = vld [vmem:[%s0 + $0x1e0] sm:$0xff]
  %v82 = vld [vmem:[%s0 + $0x1e8] sm:$0xff]
  %v83 = vld [vmem:[%s0 + $0x1f0] sm:$0xff]
  %v84 = vld [vmem:[%s0 + $0x1f8] sm:$0xff]
  %v85 = vld [vmem:[%s1] sm:$0x1]
  %v87 = vlaneseq
  %v88 = vshrl.u32 %v87, 7
  %v89 = vsub.s32 0, %v88
  %v90 = vrot.slane %v85, %v89
  %v92 = vmul.f32 %v21, %v90
  %v93 = vmul.f32 %v22, %v90
  %v94 = vmul.f32 %v23, %v90
  %v95 = vmul.f32 %v24, %v90
  %v96 = vmul.f32 %v25, %v90
  %v97 = vmul.f32 %v26, %v90
  %v98 = vmul.f32 %v27, %v90
  %v99 = vmul.f32 %v28, %v90
  %v100 = vmul.f32 %v29, %v90
  %v101 = vmul.f32 %v30, %v90
  %v102 = vmul.f32 %v31, %v90
  %v103 = vmul.f32 %v32, %v90
  %v104 = vmul.f32 %v33, %v90
  %v105 = vmul.f32 %v34, %v90
  %v106 = vmul.f32 %v35, %v90
  %v107 = vmul.f32 %v36, %v90
  %v108 = vmul.f32 %v37, %v90
  %v109 = vmul.f32 %v38, %v90
  %v110 = vmul.f32 %v39, %v90
  %v111 = vmul.f32 %v40, %v90
  %v112 = vmul.f32 %v41, %v90
  %v113 = vmul.f32 %v42, %v90
  %v114 = vmul.f32 %v43, %v90
  %v115 = vmul.f32 %v44, %v90
  %v116 = vmul.f32 %v45, %v90
  %v117 = vmul.f32 %v46, %v90
  %v118 = vmul.f32 %v47, %v90
  %v119 = vmul.f32 %v48, %v90
  %v120 = vmul.f32 %v49, %v90
  %v121 = vmul.f32 %v50, %v90
  %v122 = vmul.f32 %v51, %v90
  %v123 = vmul.f32 %v52, %v90
  %v124 = vmul.f32 %v53, %v90
  %v125 = vmul.f32 %v54, %v90
  %v126 = vmul.f32 %v55, %v90
  %v127 = vmul.f32 %v56, %v90
  %v128 = vmul.f32 %v57, %v90
  %v129 = vmul.f32 %v58, %v90
  %v130 = vmul.f32 %v59, %v90
  %v131 = vmul.f32 %v60, %v90
  %v132 = vmul.f32 %v61, %v90
  %v133 = vmul.f32 %v62, %v90
  %v134 = vmul.f32 %v63, %v90
  %v135 = vmul.f32 %v64, %v90
  %v136 = vmul.f32 %v65, %v90
  %v137 = vmul.f32 %v66, %v90
  %v138 = vmul.f32 %v67, %v90
  %v139 = vmul.f32 %v68, %v90
  %v140 = vmul.f32 %v69, %v90
  %v141 = vmul.f32 %v70, %v90
  %v142 = vmul.f32 %v71, %v90
  %v143 = vmul.f32 %v72, %v90
  %v144 = vmul.f32 %v73, %v90
  %v145 = vmul.f32 %v74, %v90
  %v146 = vmul.f32 %v75, %v90
  %v147 = vmul.f32 %v76, %v90
  %v148 = vmul.f32 %v77, %v90
  %v149 = vmul.f32 %v78, %v90
  %v150 = vmul.f32 %v79, %v90
  %v151 = vmul.f32 %v80, %v90
  %v152 = vmul.f32 %v81, %v90
  %v153 = vmul.f32 %v82, %v90
  %v154 = vmul.f32 %v83, %v90
  %v155 = vmul.f32 %v84, %v90
  %v156 = vld [vmem:[%s2] sm:$0x1]
  %v158 = vlaneseq
  %v159 = vshrl.u32 %v158, 7
  %v160 = vsub.s32 0, %v159
  %v161 = vrot.slane %v156, %v160
  %v163 = vadd.f32 %v92, %v161
  %v164 = vadd.f32 %v93, %v161
  %v165 = vadd.f32 %v94, %v161
  %v166 = vadd.f32 %v95, %v161
  %v167 = vadd.f32 %v96, %v161
  %v168 = vadd.f32 %v97, %v161
  %v169 = vadd.f32 %v98, %v161
  %v170 = vadd.f32 %v99, %v161
  %v171 = vadd.f32 %v100, %v161
  %v172 = vadd.f32 %v101, %v161
  %v173 = vadd.f32 %v102, %v161
  %v174 = vadd.f32 %v103, %v161
  %v175 = vadd.f32 %v104, %v161
  %v176 = vadd.f32 %v105, %v161
  %v177 = vadd.f32 %v106, %v161
  %v178 = vadd.f32 %v107, %v161
  %v179 = vadd.f32 %v108, %v161
  %v180 = vadd.f32 %v109, %v161
  %v181 = vadd.f32 %v110, %v161
  %v182 = vadd.f32 %v111, %v161
  %v183 = vadd.f32 %v112, %v161
  %v184 = vadd.f32 %v113, %v161
  %v185 = vadd.f32 %v114, %v161
  %v186 = vadd.f32 %v115, %v161
  %v187 = vadd.f32 %v116, %v161
  %v188 = vadd.f32 %v117, %v161
  %v189 = vadd.f32 %v118, %v161
  %v190 = vadd.f32 %v119, %v161
  %v191 = vadd.f32 %v120, %v161
  %v192 = vadd.f32 %v121, %v161
  %v193 = vadd.f32 %v122, %v161
  %v194 = vadd.f32 %v123, %v161
  %v195 = vadd.f32 %v124, %v161
  %v196 = vadd.f32 %v125, %v161
  %v197 = vadd.f32 %v126, %v161
  %v198 = vadd.f32 %v127, %v161
  %v199 = vadd.f32 %v128, %v161
  %v200 = vadd.f32 %v129, %v161
  %v201 = vadd.f32 %v130, %v161
  %v202 = vadd.f32 %v131, %v161
  %v203 = vadd.f32 %v132, %v161
  %v204 = vadd.f32 %v133, %v161
  %v205 = vadd.f32 %v134, %v161
  %v206 = vadd.f32 %v135, %v161
  %v207 = vadd.f32 %v136, %v161
  %v208 = vadd.f32 %v137, %v161
  %v209 = vadd.f32 %v138, %v161
  %v210 = vadd.f32 %v139, %v161
  %v211 = vadd.f32 %v140, %v161
  %v212 = vadd.f32 %v141, %v161
  %v213 = vadd.f32 %v142, %v161
  %v214 = vadd.f32 %v143, %v161
  %v215 = vadd.f32 %v144, %v161
  %v216 = vadd.f32 %v145, %v161
  %v217 = vadd.f32 %v146, %v161
  %v218 = vadd.f32 %v147, %v161
  %v219 = vadd.f32 %v148, %v161
  %v220 = vadd.f32 %v149, %v161
  %v221 = vadd.f32 %v150, %v161
  %v222 = vadd.f32 %v151, %v161
  %v223 = vadd.f32 %v152, %v161
  %v224 = vadd.f32 %v153, %v161
  %v225 = vadd.f32 %v154, %v161
  %v226 = vadd.f32 %v155, %v161
  %vm227 = vcmp.ge.f32.partialorder %v163, 0.0
  %vm228 = vcmp.ge.f32.partialorder %v164, 0.0
  %vm229 = vcmp.ge.f32.partialorder %v165, 0.0
  %vm230 = vcmp.ge.f32.partialorder %v166, 0.0
  %vm231 = vcmp.ge.f32.partialorder %v167, 0.0
  %vm232 = vcmp.ge.f32.partialorder %v168, 0.0
  %vm233 = vcmp.ge.f32.partialorder %v169, 0.0
  %vm234 = vcmp.ge.f32.partialorder %v170, 0.0
  %vm235 = vcmp.ge.f32.partialorder %v171, 0.0
  %vm236 = vcmp.ge.f32.partialorder %v172, 0.0
  %vm237 = vcmp.ge.f32.partialorder %v173, 0.0
  %vm238 = vcmp.ge.f32.partialorder %v174, 0.0
  %vm239 = vcmp.ge.f32.partialorder %v175, 0.0
  %vm240 = vcmp.ge.f32.partialorder %v176, 0.0
  %vm241 = vcmp.ge.f32.partialorder %v177, 0.0
  %vm242 = vcmp.ge.f32.partialorder %v178, 0.0
  %vm243 = vcmp.ge.f32.partialorder %v179, 0.0
  %vm244 = vcmp.ge.f32.partialorder %v180, 0.0
  %vm245 = vcmp.ge.f32.partialorder %v181, 0.0
  %vm246 = vcmp.ge.f32.partialorder %v182, 0.0
  %vm247 = vcmp.ge.f32.partialorder %v183, 0.0
  %vm248 = vcmp.ge.f32.partialorder %v184, 0.0
  %vm249 = vcmp.ge.f32.partialorder %v185, 0.0
  %vm250 = vcmp.ge.f32.partialorder %v186, 0.0
  %vm251 = vcmp.ge.f32.partialorder %v187, 0.0
  %vm252 = vcmp.ge.f32.partialorder %v188, 0.0
  %vm253 = vcmp.ge.f32.partialorder %v189, 0.0
  %vm254 = vcmp.ge.f32.partialorder %v190, 0.0
  %vm255 = vcmp.ge.f32.partialorder %v191, 0.0
  %vm256 = vcmp.ge.f32.partialorder %v192, 0.0
  %vm257 = vcmp.ge.f32.partialorder %v193, 0.0
  %vm258 = vcmp.ge.f32.partialorder %v194, 0.0
  %vm259 = vcmp.ge.f32.partialorder %v195, 0.0
  %vm260 = vcmp.ge.f32.partialorder %v196, 0.0
  %vm261 = vcmp.ge.f32.partialorder %v197, 0.0
  %vm262 = vcmp.ge.f32.partialorder %v198, 0.0
  %vm263 = vcmp.ge.f32.partialorder %v199, 0.0
  %vm264 = vcmp.ge.f32.partialorder %v200, 0.0
  %vm265 = vcmp.ge.f32.partialorder %v201, 0.0
  %vm266 = vcmp.ge.f32.partialorder %v202, 0.0
  %vm267 = vcmp.ge.f32.partialorder %v203, 0.0
  %vm268 = vcmp.ge.f32.partialorder %v204, 0.0
  %vm269 = vcmp.ge.f32.partialorder %v205, 0.0
  %vm270 = vcmp.ge.f32.partialorder %v206, 0.0
  %vm271 = vcmp.ge.f32.partialorder %v207, 0.0
  %vm272 = vcmp.ge.f32.partialorder %v208, 0.0
  %vm273 = vcmp.ge.f32.partialorder %v209, 0.0
  %vm274 = vcmp.ge.f32.partialorder %v210, 0.0
  %vm275 = vcmp.ge.f32.partialorder %v211, 0.0
  %vm276 = vcmp.ge.f32.partialorder %v212, 0.0
  %vm277 = vcmp.ge.f32.partialorder %v213, 0.0
  %vm278 = vcmp.ge.f32.partialorder %v214, 0.0
  %vm279 = vcmp.ge.f32.partialorder %v215, 0.0
  %vm280 = vcmp.ge.f32.partialorder %v216, 0.0
  %vm281 = vcmp.ge.f32.partialorder %v217, 0.0
  %vm282 = vcmp.ge.f32.partialorder %v218, 0.0
  %vm283 = vcmp.ge.f32.partialorder %v219, 0.0
  %vm284 = vcmp.ge.f32.partialorder %v220, 0.0
  %vm285 = vcmp.ge.f32.partialorder %v221, 0.0
  %vm286 = vcmp.ge.f32.partialorder %v222, 0.0
  %vm287 = vcmp.ge.f32.partialorder %v223, 0.0
  %vm288 = vcmp.ge.f32.partialorder %v224, 0.0
  %vm289 = vcmp.ge.f32.partialorder %v225, 0.0
  %vm290 = vcmp.ge.f32.partialorder %v226, 0.0
  %v291 = vmul.f32 %v163, 0.2
  %v292 = vmul.f32 %v164, 0.2
  %v293 = vmul.f32 %v165, 0.2
  %v294 = vmul.f32 %v166, 0.2
  %v295 = vmul.f32 %v167, 0.2
  %v296 = vmul.f32 %v168, 0.2
  %v297 = vmul.f32 %v169, 0.2
  %v298 = vmul.f32 %v170, 0.2
  %v299 = vmul.f32 %v171, 0.2
  %v300 = vmul.f32 %v172, 0.2
  %v301 = vmul.f32 %v173, 0.2
  %v302 = vmul.f32 %v174, 0.2
  %v303 = vmul.f32 %v175, 0.2
  %v304 = vmul.f32 %v176, 0.2
  %v305 = vmul.f32 %v177, 0.2
  %v306 = vmul.f32 %v178, 0.2
  %v307 = vmul.f32 %v179, 0.2
  %v308 = vmul.f32 %v180, 0.2
  %v309 = vmul.f32 %v181, 0.2
  %v310 = vmul.f32 %v182, 0.2
  %v311 = vmul.f32 %v183, 0.2
  %v312 = vmul.f32 %v184, 0.2
  %v313 = vmul.f32 %v185, 0.2
  %v314 = vmul.f32 %v186, 0.2
  %v315 = vmul.f32 %v187, 0.2
  %v316 = vmul.f32 %v188, 0.2
  %v317 = vmul.f32 %v189, 0.2
  %v318 = vmul.f32 %v190, 0.2
  %v319 = vmul.f32 %v191, 0.2
  %v320 = vmul.f32 %v192, 0.2
  %v321 = vmul.f32 %v193, 0.2
  %v322 = vmul.f32 %v194, 0.2
  %v323 = vmul.f32 %v195, 0.2
  %v324 = vmul.f32 %v196, 0.2
  %v325 = vmul.f32 %v197, 0.2
  %v326 = vmul.f32 %v198, 0.2
  %v327 = vmul.f32 %v199, 0.2
  %v328 = vmul.f32 %v200, 0.2
  %v329 = vmul.f32 %v201, 0.2
  %v330 = vmul.f32 %v202, 0.2
  %v331 = vmul.f32 %v203, 0.2
  %v332 = vmul.f32 %v204, 0.2
  %v333 = vmul.f32 %v205, 0.2
  %v334 = vmul.f32 %v206, 0.2
  %v335 = vmul.f32 %v207, 0.2
  %v336 = vmul.f32 %v208, 0.2
  %v337 = vmul.f32 %v209, 0.2
  %v338 = vmul.f32 %v210, 0.2
  %v339 = vmul.f32 %v211, 0.2
  %v340 = vmul.f32 %v212, 0.2
  %v341 = vmul.f32 %v213, 0.2
  %v342 = vmul.f32 %v214, 0.2
  %v343 = vmul.f32 %v215, 0.2
  %v344 = vmul.f32 %v216, 0.2
  %v345 = vmul.f32 %v217, 0.2
  %v346 = vmul.f32 %v218, 0.2
  %v347 = vmul.f32 %v219, 0.2
  %v348 = vmul.f32 %v220, 0.2
  %v349 = vmul.f32 %v221, 0.2
  %v350 = vmul.f32 %v222, 0.2
  %v351 = vmul.f32 %v223, 0.2
  %v352 = vmul.f32 %v224, 0.2
  %v353 = vmul.f32 %v225, 0.2
  %v354 = vmul.f32 %v226, 0.2
  %v355 = vsel %vm227, %v163, %v291
  %v356 = vsel %vm228, %v164, %v292
  %v357 = vsel %vm229, %v165, %v293
  %v358 = vsel %vm230, %v166, %v294
  %v359 = vsel %vm231, %v167, %v295
  %v360 = vsel %vm232, %v168, %v296
  %v361 = vsel %vm233, %v169, %v297
  %v362 = vsel %vm234, %v170, %v298
  %v363 = vsel %vm235, %v171, %v299
  %v364 = vsel %vm236, %v172, %v300
  %v365 = vsel %vm237, %v173, %v301
  %v366 = vsel %vm238, %v174, %v302
  %v367 = vsel %vm239, %v175, %v303
  %v368 = vsel %vm240, %v176, %v304
  %v369 = vsel %vm241, %v177, %v305
  %v370 = vsel %vm242, %v178, %v306
  %v371 = vsel %vm243, %v179, %v307
  %v372 = vsel %vm244, %v180, %v308
  %v373 = vsel %vm245, %v181, %v309
  %v374 = vsel %vm246, %v182, %v310
  %v375 = vsel %vm247, %v183, %v311
  %v376 = vsel %vm248, %v184, %v312
  %v377 = vsel %vm249, %v185, %v313
  %v378 = vsel %vm250, %v186, %v314
  %v379 = vsel %vm251, %v187, %v315
  %v380 = vsel %vm252, %v188, %v316
  %v381 = vsel %vm253, %v189, %v317
  %v382 = vsel %vm254, %v190, %v318
  %v383 = vsel %vm255, %v191, %v319
  %v384 = vsel %vm256, %v192, %v320
  %v385 = vsel %vm257, %v193, %v321
  %v386 = vsel %vm258, %v194, %v322
  %v387 = vsel %vm259, %v195, %v323
  %v388 = vsel %vm260, %v196, %v324
  %v389 = vsel %vm261, %v197, %v325
  %v390 = vsel %vm262, %v198, %v326
  %v391 = vsel %vm263, %v199, %v327
  %v392 = vsel %vm264, %v200, %v328
  %v393 = vsel %vm265, %v201, %v329
  %v394 = vsel %vm266, %v202, %v330
  %v395 = vsel %vm267, %v203, %v331
  %v396 = vsel %vm268, %v204, %v332
  %v397 = vsel %vm269, %v205, %v333
  %v398 = vsel %vm270, %v206, %v334
  %v399 = vsel %vm271, %v207, %v335
  %v400 = vsel %vm272, %v208, %v336
  %v401 = vsel %vm273, %v209, %v337
  %v402 = vsel %vm274, %v210, %v338
  %v403 = vsel %vm275, %v211, %v339
  %v404 = vsel %vm276, %v212, %v340
  %v405 = vsel %vm277, %v213, %v341
  %v406 = vsel %vm278, %v214, %v342
  %v407 = vsel %vm279, %v215, %v343
  %v408 = vsel %vm280, %v216, %v344
  %v409 = vsel %vm281, %v217, %v345
  %v410 = vsel %vm282, %v218, %v346
  %v411 = vsel %vm283, %v219, %v347
  %v412 = vsel %vm284, %v220, %v348
  %v413 = vsel %vm285, %v221, %v349
  %v414 = vsel %vm286, %v222, %v350
  %v415 = vsel %vm287, %v223, %v351
  %v416 = vsel %vm288, %v224, %v352
  %v417 = vsel %vm289, %v225, %v353
  %v418 = vsel %vm290, %v226, %v354
  %419 = vst [vmem:[#allocation2] sm:$0xff] 0.0
  %420 = vst [vmem:[#allocation2 + $0x8] sm:$0xff] 0.0
  %421 = vst [vmem:[#allocation2 + $0x10] sm:$0x3] 0.0
  %422 = vst [vmem:[#allocation2 + $0x18] sm:$0xff] 0.0
  %423 = vst [vmem:[#allocation2 + $0x20] sm:$0xff] 0.0
  %424 = vst [vmem:[#allocation2 + $0x28] sm:$0x3] 0.0
  %425 = vst [vmem:[#allocation2 + $0x30] sm:$0xff] 0.0
  %426 = vst [vmem:[#allocation2 + $0x38] sm:$0xff] 0.0
  %427 = vst [vmem:[#allocation2 + $0x40] sm:$0x3] 0.0
  %428 = vst [vmem:[#allocation2 + $0x48] sm:$0xff] 0.0
  %429 = vst [vmem:[#allocation2 + $0x50] sm:$0xff] 0.0
  %430 = vst [vmem:[#allocation2 + $0x58] sm:$0x3] 0.0
  %431 = vst [vmem:[#allocation2 + $0x60] sm:$0xff] 0.0
  %432 = vst [vmem:[#allocation2 + $0x68] sm:$0xff] 0.0
  %433 = vst [vmem:[#allocation2 + $0x70] sm:$0x3] 0.0
  %434 = vst [vmem:[#allocation2 + $0x78] sm:$0xff] 0.0
  %435 = vst [vmem:[#allocation2 + $0x80] sm:$0xff] 0.0
  %436 = vst [vmem:[#allocation2 + $0x88] sm:$0x3] 0.0
  %437 = vst [vmem:[#allocation2 + $0x90] sm:$0xff] 0.0
  %438 = vst [vmem:[#allocation2 + $0x98] sm:$0xff] 0.0
  %439 = vst [vmem:[#allocation2 + $0xa0] sm:$0x3] 0.0
  %440 = vst [vmem:[#allocation2 + $0xa8] sm:$0xff] 0.0
  %441 = vst [vmem:[#allocation2 + $0xb0] sm:$0xff] 0.0
  %442 = vst [vmem:[#allocation2 + $0xb8] sm:$0x3] 0.0
  %443 = vst [vmem:[#allocation2 + $0xc0] sm:$0xff] 0.0
  %444 = vst [vmem:[#allocation2 + $0xc8] sm:$0xff] 0.0
  %445 = vst [vmem:[#allocation2 + $0xd0] sm:$0x3] 0.0
  %446 = vst [vmem:[#allocation2 + $0xd8] sm:$0xff] 0.0
  %447 = vst [vmem:[#allocation2 + $0xe0] sm:$0xff] 0.0
  %448 = vst [vmem:[#allocation2 + $0xe8] sm:$0x3] 0.0
  %449 = vst [vmem:[#allocation2 + $0xf0] sm:$0xff] 0.0
  %450 = vst [vmem:[#allocation2 + $0xf8] sm:$0xff] 0.0
  %451 = vst [vmem:[#allocation2 + $0x100] sm:$0x3] 0.0
  %452 = vst [vmem:[#allocation2 + $0x108] sm:$0xff] 0.0
  %453 = vst [vmem:[#allocation2 + $0x110] sm:$0xff] 0.0
  %454 = vst [vmem:[#allocation2 + $0x118] sm:$0x3] 0.0
  %455 = vst [vmem:[#allocation2 + $0x120] sm:$0xff] 0.0
  %456 = vst [vmem:[#allocation2 + $0x128] sm:$0xff] 0.0
  %457 = vst [vmem:[#allocation2 + $0x130] sm:$0x3] 0.0
  %458 = vst [vmem:[#allocation2 + $0x138] sm:$0xff] 0.0
  %459 = vst [vmem:[#allocation2 + $0x140] sm:$0xff] 0.0
  %460 = vst [vmem:[#allocation2 + $0x148] sm:$0x3] 0.0
  %461 = vst [vmem:[#allocation2 + $0x150] sm:$0xff] 0.0
  %462 = vst [vmem:[#allocation2 + $0x158] sm:$0xff] 0.0
  %463 = vst [vmem:[#allocation2 + $0x160] sm:$0x3] 0.0
  %464 = vst [vmem:[#allocation2 + $0x168] sm:$0xff] 0.0
  %465 = vst [vmem:[#allocation2 + $0x170] sm:$0xff] 0.0
  %466 = vst [vmem:[#allocation2 + $0x178] sm:$0x3] 0.0
  %467 = vst [vmem:[#allocation2 + $0x180] sm:$0xff] 0.0
  %468 = vst [vmem:[#allocation2 + $0x188] sm:$0xff] 0.0
  %469 = vst [vmem:[#allocation2 + $0x190] sm:$0x3] 0.0
  %470 = vst [vmem:[#allocation2 + $0x198] sm:$0xff] 0.0
  %471 = vst [vmem:[#allocation2 + $0x1a0] sm:$0xff] 0.0
  %472 = vst [vmem:[#allocation2 + $0x1a8] sm:$0x3] 0.0
  %473 = vst [vmem:[#allocation2 + $0x1b0] sm:$0xff] 0.0
  %474 = vst [vmem:[#allocation2 + $0x1b8] sm:$0xff] 0.0
  %475 = vst [vmem:[#allocation2 + $0x1c0] sm:$0x3] 0.0
  %476 = vst [vmem:[#allocation2 + $0x1c8] sm:$0xff] 0.0
  %477 = vst [vmem:[#allocation2 + $0x1d0] sm:$0xff] 0.0
  %478 = vst [vmem:[#allocation2 + $0x1d8] sm:$0x3] 0.0
  %479 = vst [vmem:[#allocation2 + $0x1e0] sm:$0xff] 0.0
  %480 = vst [vmem:[#allocation2 + $0x1e8] sm:$0xff] 0.0
  %481 = vst [vmem:[#allocation2 + $0x1f0] sm:$0x3] 0.0
  %482 = vst [vmem:[#allocation2 + $0x1f8] sm:$0xff] 0.0
  %483 = vst [vmem:[#allocation2 + $0x200] sm:$0xff] 0.0
  %484 = vst [vmem:[#allocation2 + $0x208] sm:$0x3] 0.0
  %485 = vst [vmem:[#allocation2 + $0x210] sm:$0xff] 0.0
  %486 = vst [vmem:[#allocation2 + $0x218] sm:$0xff] 0.0
  %487 = vst [vmem:[#allocation2 + $0x220] sm:$0x3] 0.0
  %488 = vst [vmem:[#allocation2 + $0x228] sm:$0xff] 0.0
  %489 = vst [vmem:[#allocation2 + $0x230] sm:$0xff] 0.0
  %490 = vst [vmem:[#allocation2 + $0x238] sm:$0x3] 0.0
  %491 = vst [vmem:[#allocation2 + $0x240] sm:$0xff] 0.0
  %492 = vst [vmem:[#allocation2 + $0x248] sm:$0xff] 0.0
  %493 = vst [vmem:[#allocation2 + $0x250] sm:$0x3] 0.0
  %494 = vst [vmem:[#allocation2 + $0x258] sm:$0xff] 0.0
  %495 = vst [vmem:[#allocation2 + $0x260] sm:$0xff] 0.0
  %496 = vst [vmem:[#allocation2 + $0x268] sm:$0x3] 0.0
  %497 = vst [vmem:[#allocation2 + $0x270] sm:$0xff] 0.0
  %498 = vst [vmem:[#allocation2 + $0x278] sm:$0xff] 0.0
  %499 = vst [vmem:[#allocation2 + $0x280] sm:$0x3] 0.0
  %500 = vst [vmem:[#allocation2 + $0x288] sm:$0xff] 0.0
  %501 = vst [vmem:[#allocation2 + $0x290] sm:$0xff] 0.0
  %502 = vst [vmem:[#allocation2 + $0x298] sm:$0x3] 0.0
  %503 = vst [vmem:[#allocation2 + $0x2a0] sm:$0xff] 0.0
  %504 = vst [vmem:[#allocation2 + $0x2a8] sm:$0xff] 0.0
  %505 = vst [vmem:[#allocation2 + $0x2b0] sm:$0x3] 0.0
  %506 = vst [vmem:[#allocation2 + $0x2b8] sm:$0xff] 0.0
  %507 = vst [vmem:[#allocation2 + $0x2c0] sm:$0xff] 0.0
  %508 = vst [vmem:[#allocation2 + $0x2c8] sm:$0x3] 0.0
  %509 = vst [vmem:[#allocation2 + $0x2d0] sm:$0xff] 0.0
  %510 = vst [vmem:[#allocation2 + $0x2d8] sm:$0xff] 0.0
  %511 = vst [vmem:[#allocation2 + $0x2e0] sm:$0x3] 0.0
  %512 = vst [vmem:[#allocation2 + $0x2e8] sm:$0xff] 0.0
  %513 = vst [vmem:[#allocation2 + $0x2f0] sm:$0xff] 0.0
  %514 = vst [vmem:[#allocation2 + $0x2f8] sm:$0x3] 0.0
  %515 = vst [vmem:[#allocation2 + $0x300] sm:$0xff] 0.0
  %516 = vst [vmem:[#allocation2 + $0x308] sm:$0xff] 0.0
  %517 = vst [vmem:[#allocation2 + $0x310] sm:$0x3] 0.0
  %518 = vst [vmem:[#allocation2 + $0x318] sm:$0xff] 0.0
  %519 = vst [vmem:[#allocation2 + $0x320] sm:$0xff] 0.0
  %520 = vst [vmem:[#allocation2 + $0x328] sm:$0x3] 0.0
  %521 = vst [vmem:[#allocation2 + $0x330] sm:$0xff] 0.0
  %522 = vst [vmem:[#allocation2 + $0x338] sm:$0xff] 0.0
  %523 = vst [vmem:[#allocation2 + $0x340] sm:$0x3] 0.0
  %524 = vst [vmem:[#allocation2 + $0x348] sm:$0xff] 0.0
  %525 = vst [vmem:[#allocation2 + $0x350] sm:$0xff] 0.0
  %526 = vst [vmem:[#allocation2 + $0x358] sm:$0x3] 0.0
  %s527 = scalar_lea.vmem [#allocation2], 24
  %528 = vst [vmem:[%s527 + $0x1] sm:$0xff] %v355
  %529 = vst [vmem:[%s527 + $0x9] sm:$0xff] %v356
  %530 = vst [vmem:[%s527 + $0x19] sm:$0xff] %v357
  %531 = vst [vmem:[%s527 + $0x21] sm:$0xff] %v358
  %532 = vst [vmem:[%s527 + $0x31] sm:$0xff] %v359
  %533 = vst [vmem:[%s527 + $0x39] sm:$0xff] %v360
  %534 = vst [vmem:[%s527 + $0x49] sm:$0xff] %v361
  %535 = vst [vmem:[%s527 + $0x51] sm:$0xff] %v362
  %536 = vst [vmem:[%s527 + $0x61] sm:$0xff] %v363
  %537 = vst [vmem:[%s527 + $0x69] sm:$0xff] %v364
  %538 = vst [vmem:[%s527 + $0x79] sm:$0xff] %v365
  %539 = vst [vmem:[%s527 + $0x81] sm:$0xff] %v366
  %540 = vst [vmem:[%s527 + $0x91] sm:$0xff] %v367
  %541 = vst [vmem:[%s527 + $0x99] sm:$0xff] %v368
  %542 = vst [vmem:[%s527 + $0xa9] sm:$0xff] %v369
  %543 = vst [vmem:[%s527 + $0xb1] sm:$0xff] %v370
  %544 = vst [vmem:[%s527 + $0xc1] sm:$0xff] %v371
  %545 = vst [vmem:[%s527 + $0xc9] sm:$0xff] %v372
  %546 = vst [vmem:[%s527 + $0xd9] sm:$0xff] %v373
  %547 = vst [vmem:[%s527 + $0xe1] sm:$0xff] %v374
  %548 = vst [vmem:[%s527 + $0xf1] sm:$0xff] %v375
  %549 = vst [vmem:[%s527 + $0xf9] sm:$0xff] %v376
  %550 = vst [vmem:[%s527 + $0x109] sm:$0xff] %v377
  %551 = vst [vmem:[%s527 + $0x111] sm:$0xff] %v378
  %552 = vst [vmem:[%s527 + $0x121] sm:$0xff] %v379
  %553 = vst [vmem:[%s527 + $0x129] sm:$0xff] %v380
  %554 = vst [vmem:[%s527 + $0x139] sm:$0xff] %v381
  %555 = vst [vmem:[%s527 + $0x141] sm:$0xff] %v382
  %556 = vst [vmem:[%s527 + $0x151] sm:$0xff] %v383
  %557 = vst [vmem:[%s527 + $0x159] sm:$0xff] %v384
  %558 = vst [vmem:[%s527 + $0x169] sm:$0xff] %v385
  %559 = vst [vmem:[%s527 + $0x171] sm:$0xff] %v386
  %560 = vst [vmem:[%s527 + $0x1b1] sm:$0xff] %v387
  %561 = vst [vmem:[%s527 + $0x1b9] sm:$0xff] %v388
  %562 = vst [vmem:[%s527 + $0x1c9] sm:$0xff] %v389
  %563 = vst [vmem:[%s527 + $0x1d1] sm:$0xff] %v390
  %564 = vst [vmem:[%s527 + $0x1e1] sm:$0xff] %v391
  %565 = vst [vmem:[%s527 + $0x1e9] sm:$0xff] %v392
  %566 = vst [vmem:[%s527 + $0x1f9] sm:$0xff] %v393
  %567 = vst [vmem:[%s527 + $0x201] sm:$0xff] %v394
  %568 = vst [vmem:[%s527 + $0x211] sm:$0xff] %v395
  %569 = vst [vmem:[%s527 + $0x219] sm:$0xff] %v396
  %570 = vst [vmem:[%s527 + $0x229] sm:$0xff] %v397
  %571 = vst [vmem:[%s527 + $0x231] sm:$0xff] %v398
  %572 = vst [vmem:[%s527 + $0x241] sm:$0xff] %v399
  %573 = vst [vmem:[%s527 + $0x249] sm:$0xff] %v400
  %574 = vst [vmem:[%s527 + $0x259] sm:$0xff] %v401
  %575 = vst [vmem:[%s527 + $0x261] sm:$0xff] %v402
  %576 = vst [vmem:[%s527 + $0x271] sm:$0xff] %v403
  %577 = vst [vmem:[%s527 + $0x279] sm:$0xff] %v404
  %578 = vst [vmem:[%s527 + $0x289] sm:$0xff] %v405
  %579 = vst [vmem:[%s527 + $0x291] sm:$0xff] %v406
  %580 = vst [vmem:[%s527 + $0x2a1] sm:$0xff] %v407
  %581 = vst [vmem:[%s527 + $0x2a9] sm:$0xff] %v408
  %582 = vst [vmem:[%s527 + $0x2b9] sm:$0xff] %v409
  %583 = vst [vmem:[%s527 + $0x2c1] sm:$0xff] %v410
  %584 = vst [vmem:[%s527 + $0x2d1] sm:$0xff] %v411
  %585 = vst [vmem:[%s527 + $0x2d9] sm:$0xff] %v412
  %586 = vst [vmem:[%s527 + $0x2e9] sm:$0xff] %v413
  %587 = vst [vmem:[%s527 + $0x2f1] sm:$0xff] %v414
  %588 = vst [vmem:[%s527 + $0x301] sm:$0xff] %v415
  %589 = vst [vmem:[%s527 + $0x309] sm:$0xff] %v416
  %590 = vst [vmem:[%s527 + $0x319] sm:$0xff] %v417
  %591 = vst [vmem:[%s527 + $0x321] sm:$0xff] %v418
  %v592 = vld [vmem:[#allocation2] sm:$0xff]
  %v593 = vld [vmem:[#allocation2 + $0x8] sm:$0xff]
  %v594 = vld [vmem:[#allocation2 + $0x18] sm:$0xff]
  %v595 = vld [vmem:[#allocation2 + $0x20] sm:$0xff]
  %v596 = vld [vmem:[#allocation2 + $0x30] sm:$0xff]
  %v597 = vld [vmem:[#allocation2 + $0x38] sm:$0xff]
  %v598 = vld [vmem:[#allocation2 + $0x48] sm:$0xff]
  %v599 = vld [vmem:[#allocation2 + $0x50] sm:$0xff]
  %v600 = vld [vmem:[#allocation2 + $0x60] sm:$0xff]
  %v601 = vld [vmem:[#allocation2 + $0x68] sm:$0xff]
  %v602 = vld [vmem:[#allocation2 + $0x78] sm:$0xff]
  %v603 = vld [vmem:[#allocation2 + $0x80] sm:$0xff]
  %v604 = vld [vmem:[#allocation2 + $0x90] sm:$0xff]
  %v605 = vld [vmem:[#allocation2 + $0x98] sm:$0xff]
  %v606 = vld [vmem:[#allocation2 + $0xa8] sm:$0xff]
  %v607 = vld [vmem:[#allocation2 + $0xb0] sm:$0xff]
  %v608 = vld [vmem:[#allocation2 + $0xc0] sm:$0xff]
  %v609 = vld [vmem:[#allocation2 + $0xc8] sm:$0xff]
  %v610 = vld [vmem:[#allocation2 + $0xd8] sm:$0xff]
  %v611 = vld [vmem:[#allocation2 + $0xe0] sm:$0xff]
  %v612 = vld [vmem:[#allocation2 + $0xf0] sm:$0xff]
  %v613 = vld [vmem:[#allocation2 + $0xf8] sm:$0xff]
  %v614 = vld [vmem:[#allocation2 + $0x108] sm:$0xff]
  %v615 = vld [vmem:[#allocation2 + $0x110] sm:$0xff]
  %v616 = vld [vmem:[#allocation2 + $0x120] sm:$0xff]
  %v617 = vld [vmem:[#allocation2 + $0x128] sm:$0xff]
  %v618 = vld [vmem:[#allocation2 + $0x138] sm:$0xff]
  %v619 = vld [vmem:[#allocation2 + $0x140] sm:$0xff]
  %v620 = vld [vmem:[#allocation2 + $0x150] sm:$0xff]
  %v621 = vld [vmem:[#allocation2 + $0x158] sm:$0xff]
  %v622 = vld [vmem:[#allocation2 + $0x168] sm:$0xff]
  %v623 = vld [vmem:[#allocation2 + $0x170] sm:$0xff]
  %v624 = vld [vmem:[#allocation2 + $0x1b0] sm:$0xff]
  %v625 = vld [vmem:[#allocation2 + $0x1b8] sm:$0xff]
  %v626 = vld [vmem:[#allocation2 + $0x1c8] sm:$0xff]
  %v627 = vld [vmem:[#allocation2 + $0x1d0] sm:$0xff]
  %v628 = vld [vmem:[#allocation2 + $0x1e0] sm:$0xff]
  %v629 = vld [vmem:[#allocation2 + $0x1e8] sm:$0xff]
  %v630 = vld [vmem:[#allocation2 + $0x1f8] sm:$0xff]
  %v631 = vld [vmem:[#allocation2 + $0x200] sm:$0xff]
  %v632 = vld [vmem:[#allocation2 + $0x210] sm:$0xff]
  %v633 = vld [vmem:[#allocation2 + $0x218] sm:$0xff]
  %v634 = vld [vmem:[#allocation2 + $0x228] sm:$0xff]
  %v635 = vld [vmem:[#allocation2 + $0x230] sm:$0xff]
  %v636 = vld [vmem:[#allocation2 + $0x240] sm:$0xff]
  %v637 = vld [vmem:[#allocation2 + $0x248] sm:$0xff]
  %v638 = vld [vmem:[#allocation2 + $0x258] sm:$0xff]
  %v639 = vld [vmem:[#allocation2 + $0x260] sm:$0xff]
  %v640 = vld [vmem:[#allocation2 + $0x270] sm:$0xff]
  %v641 = vld [vmem:[#allocation2 + $0x278] sm:$0xff]
  %v642 = vld [vmem:[#allocation2 + $0x288] sm:$0xff]
  %v643 = vld [vmem:[#allocation2 + $0x290] sm:$0xff]
  %v644 = vld [vmem:[#allocation2 + $0x2a0] sm:$0xff]
  %v645 = vld [vmem:[#allocation2 + $0x2a8] sm:$0xff]
  %v646 = vld [vmem:[#allocation2 + $0x2b8] sm:$0xff]
  %v647 = vld [vmem:[#allocation2 + $0x2c0] sm:$0xff]
  %v648 = vld [vmem:[#allocation2 + $0x2d0] sm:$0xff]
  %v649 = vld [vmem:[#allocation2 + $0x2d8] sm:$0xff]
  %v650 = vld [vmem:[#allocation2 + $0x2e8] sm:$0xff]
  %v651 = vld [vmem:[#allocation2 + $0x2f0] sm:$0xff]
  %v652 = vld [vmem:[#allocation2 + $0x300] sm:$0xff]
  %v653 = vld [vmem:[#allocation2 + $0x308] sm:$0xff]
  %v654 = vld [vmem:[#allocation2 + $0x318] sm:$0xff]
  %v655 = vld [vmem:[#allocation2 + $0x320] sm:$0xff]
  %v656 = vpack.c.bf16 %v593, %v592
  %v657 = vpack.c.bf16 %v595, %v594
  %v658 = vpack.c.bf16 %v597, %v596
  %v659 = vpack.c.bf16 %v599, %v598
  %v660 = vpack.c.bf16 %v601, %v600
  %v661 = vpack.c.bf16 %v603, %v602
  %v662 = vpack.c.bf16 %v605, %v604
  %v663 = vpack.c.bf16 %v607, %v606
  %v664 = vpack.c.bf16 %v609, %v608
  %v665 = vpack.c.bf16 %v611, %v610
  %v666 = vpack.c.bf16 %v613, %v612
  %v667 = vpack.c.bf16 %v615, %v614
  %v668 = vpack.c.bf16 %v617, %v616
  %v669 = vpack.c.bf16 %v619, %v618
  %v670 = vpack.c.bf16 %v621, %v620
  %v671 = vpack.c.bf16 %v623, %v622
  %v672 = vpack.c.bf16 %v625, %v624
  %v673 = vpack.c.bf16 %v627, %v626
  %v674 = vpack.c.bf16 %v629, %v628
  %v675 = vpack.c.bf16 %v631, %v630
  %v676 = vpack.c.bf16 %v633, %v632
  %v677 = vpack.c.bf16 %v635, %v634
  %v678 = vpack.c.bf16 %v637, %v636
  %v679 = vpack.c.bf16 %v639, %v638
  %v680 = vpack.c.bf16 %v641, %v640
  %v681 = vpack.c.bf16 %v643, %v642
  %v682 = vpack.c.bf16 %v645, %v644
  %v683 = vpack.c.bf16 %v647, %v646
  %v684 = vpack.c.bf16 %v649, %v648
  %v685 = vpack.c.bf16 %v651, %v650
  %v686 = vpack.c.bf16 %v653, %v652
  %v687 = vpack.c.bf16 %v655, %v654
  %v688 = vld [vmem:[#allocation2 + $0x1] sm:$0xff]
  %v689 = vld [vmem:[#allocation2 + $0x9] sm:$0xff]
  %v690 = vld [vmem:[#allocation2 + $0x19] sm:$0xff]
  %v691 = vld [vmem:[#allocation2 + $0x21] sm:$0xff]
  %v692 = vld [vmem:[#allocation2 + $0x31] sm:$0xff]
  %v693 = vld [vmem:[#allocation2 + $0x39] sm:$0xff]
  %v694 = vld [vmem:[#allocation2 + $0x49] sm:$0xff]
  %v695 = vld [vmem:[#allocation2 + $0x51] sm:$0xff]
  %v696 = vld [vmem:[#allocation2 + $0x61] sm:$0xff]
  %v697 = vld [vmem:[#allocation2 + $0x69] sm:$0xff]
  %v698 = vld [vmem:[#allocation2 + $0x79] sm:$0xff]
  %v699 = vld [vmem:[#allocation2 + $0x81] sm:$0xff]
  %v700 = vld [vmem:[#allocation2 + $0x91] sm:$0xff]
  %v701 = vld [vmem:[#allocation2 + $0x99] sm:$0xff]
  %v702 = vld [vmem:[#allocation2 + $0xa9] sm:$0xff]
  %v703 = vld [vmem:[#allocation2 + $0xb1] sm:$0xff]
  %v704 = vld [vmem:[#allocation2 + $0xc1] sm:$0xff]
  %v705 = vld [vmem:[#allocation2 + $0xc9] sm:$0xff]
  %v706 = vld [vmem:[#allocation2 + $0xd9] sm:$0xff]
  %v707 = vld [vmem:[#allocation2 + $0xe1] sm:$0xff]
  %v708 = vld [vmem:[#allocation2 + $0xf1] sm:$0xff]
  %v709 = vld [vmem:[#allocation2 + $0xf9] sm:$0xff]
  %v710 = vld [vmem:[#allocation2 + $0x109] sm:$0xff]
  %v711 = vld [vmem:[#allocation2 + $0x111] sm:$0xff]
  %v712 = vld [vmem:[#allocation2 + $0x121] sm:$0xff]
  %v713 = vld [vmem:[#allocation2 + $0x129] sm:$0xff]
  %v714 = vld [vmem:[#allocation2 + $0x139] sm:$0xff]
  %v715 = vld [vmem:[#allocation2 + $0x141] sm:$0xff]
  %v716 = vld [vmem:[#allocation2 + $0x151] sm:$0xff]
  %v717 = vld [vmem:[#allocation2 + $0x159] sm:$0xff]
  %v718 = vld [vmem:[#allocation2 + $0x169] sm:$0xff]
  %v719 = vld [vmem:[#allocation2 + $0x171] sm:$0xff]
  %v720 = vld [vmem:[#allocation2 + $0x1b1] sm:$0xff]
  %v721 = vld [vmem:[#allocation2 + $0x1b9] sm:$0xff]
  %v722 = vld [vmem:[#allocation2 + $0x1c9] sm:$0xff]
  %v723 = vld [vmem:[#allocation2 + $0x1d1] sm:$0xff]
  %v724 = vld [vmem:[#allocation2 + $0x1e1] sm:$0xff]
  %v725 = vld [vmem:[#allocation2 + $0x1e9] sm:$0xff]
  %v726 = vld [vmem:[#allocation2 + $0x1f9] sm:$0xff]
  %v727 = vld [vmem:[#allocation2 + $0x201] sm:$0xff]
  %v728 = vld [vmem:[#allocation2 + $0x211] sm:$0xff]
  %v729 = vld [vmem:[#allocation2 + $0x219] sm:$0xff]
  %v730 = vld [vmem:[#allocation2 + $0x229] sm:$0xff]
  %v731 = vld [vmem:[#allocation2 + $0x231] sm:$0xff]
  %v732 = vld [vmem:[#allocation2 + $0x241] sm:$0xff]
  %v733 = vld [vmem:[#allocation2 + $0x249] sm:$0xff]
  %v734 = vld [vmem:[#allocation2 + $0x259] sm:$0xff]
  %v735 = vld [vmem:[#allocation2 + $0x261] sm:$0xff]
  %v736 = vld [vmem:[#allocation2 + $0x271] sm:$0xff]
  %v737 = vld [vmem:[#allocation2 + $0x279] sm:$0xff]
  %v738 = vld [vmem:[#allocation2 + $0x289] sm:$0xff]
  %v739 = vld [vmem:[#allocation2 + $0x291] sm:$0xff]
  %v740 = vld [vmem:[#allocation2 + $0x2a1] sm:$0xff]
  %v741 = vld [vmem:[#allocation2 + $0x2a9] sm:$0xff]
  %v742 = vld [vmem:[#allocation2 + $0x2b9] sm:$0xff]
  %v743 = vld [vmem:[#allocation2 + $0x2c1] sm:$0xff]
  %v744 = vld [vmem:[#allocation2 + $0x2d1] sm:$0xff]
  %v745 = vld [vmem:[#allocation2 + $0x2d9] sm:$0xff]
  %v746 = vld [vmem:[#allocation2 + $0x2e9] sm:$0xff]
  %v747 = vld [vmem:[#allocation2 + $0x2f1] sm:$0xff]
  %v748 = vld [vmem:[#allocation2 + $0x301] sm:$0xff]
  %v749 = vld [vmem:[#allocation2 + $0x309] sm:$0xff]
  %v750 = vld [vmem:[#allocation2 + $0x319] sm:$0xff]
  %v751 = vld [vmem:[#allocation2 + $0x321] sm:$0xff]
  %v752 = vpack.c.bf16 %v689, %v688
  %v753 = vpack.c.bf16 %v691, %v690
  %v754 = vpack.c.bf16 %v693, %v692
  %v755 = vpack.c.bf16 %v695, %v694
  %v756 = vpack.c.bf16 %v697, %v696
  %v757 = vpack.c.bf16 %v699, %v698
  %v758 = vpack.c.bf16 %v701, %v700
  %v759 = vpack.c.bf16 %v703, %v702
  %v760 = vpack.c.bf16 %v705, %v704
  %v761 = vpack.c.bf16 %v707, %v706
  %v762 = vpack.c.bf16 %v709, %v708
  %v763 = vpack.c.bf16 %v711, %v710
  %v764 = vpack.c.bf16 %v713, %v712
  %v765 = vpack.c.bf16 %v715, %v714
  %v766 = vpack.c.bf16 %v717, %v716
  %v767 = vpack.c.bf16 %v719, %v718
  %v768 = vpack.c.bf16 %v721, %v720
  %v769 = vpack.c.bf16 %v723, %v722
  %v770 = vpack.c.bf16 %v725, %v724
  %v771 = vpack.c.bf16 %v727, %v726
  %v772 = vpack.c.bf16 %v729, %v728
  %v773 = vpack.c.bf16 %v731, %v730
  %v774 = vpack.c.bf16 %v733, %v732
  %v775 = vpack.c.bf16 %v735, %v734
  %v776 = vpack.c.bf16 %v737, %v736
  %v777 = vpack.c.bf16 %v739, %v738
  %v778 = vpack.c.bf16 %v741, %v740
  %v779 = vpack.c.bf16 %v743, %v742
  %v780 = vpack.c.bf16 %v745, %v744
  %v781 = vpack.c.bf16 %v747, %v746
  %v782 = vpack.c.bf16 %v749, %v748
  %v783 = vpack.c.bf16 %v751, %v750
  %v784 = vld [vmem:[#allocation2 + $0x2] sm:$0xff]
  %v785 = vld [vmem:[#allocation2 + $0xa] sm:$0xff]
  %v786 = vld [vmem:[#allocation2 + $0x1a] sm:$0xff]
  %v787 = vld [vmem:[#allocation2 + $0x22] sm:$0xff]
  %v788 = vld [vmem:[#allocation2 + $0x32] sm:$0xff]
  %v789 = vld [vmem:[#allocation2 + $0x3a] sm:$0xff]
  %v790 = vld [vmem:[#allocation2 + $0x4a] sm:$0xff]
  %v791 = vld [vmem:[#allocation2 + $0x52] sm:$0xff]
  %v792 = vld [vmem:[#allocation2 + $0x62] sm:$0xff]
  %v793 = vld [vmem:[#allocation2 + $0x6a] sm:$0xff]
  %v794 = vld [vmem:[#allocation2 + $0x7a] sm:$0xff]
  %v795 = vld [vmem:[#allocation2 + $0x82] sm:$0xff]
  %v796 = vld [vmem:[#allocation2 + $0x92] sm:$0xff]
  %v797 = vld [vmem:[#allocation2 + $0x9a] sm:$0xff]
  %v798 = vld [vmem:[#allocation2 + $0xaa] sm:$0xff]
  %v799 = vld [vmem:[#allocation2 + $0xb2] sm:$0xff]
  %v800 = vld [vmem:[#allocation2 + $0xc2] sm:$0xff]
  %v801 = vld [vmem:[#allocation2 + $0xca] sm:$0xff]
  %v802 = vld [vmem:[#allocation2 + $0xda] sm:$0xff]
  %v803 = vld [vmem:[#allocation2 + $0xe2] sm:$0xff]
  %v804 = vld [vmem:[#allocation2 + $0xf2] sm:$0xff]
  %v805 = vld [vmem:[#allocation2 + $0xfa] sm:$0xff]
  %v806 = vld [vmem:[#allocation2 + $0x10a] sm:$0xff]
  %v807 = vld [vmem:[#allocation2 + $0x112] sm:$0xff]
  %v808 = vld [vmem:[#allocation2 + $0x122] sm:$0xff]
  %v809 = vld [vmem:[#allocation2 + $0x12a] sm:$0xff]
  %v810 = vld [vmem:[#allocation2 + $0x13a] sm:$0xff]
  %v811 = vld [vmem:[#allocation2 + $0x142] sm:$0xff]
  %v812 = vld [vmem:[#allocation2 + $0x152] sm:$0xff]
  %v813 = vld [vmem:[#allocation2 + $0x15a] sm:$0xff]
  %v814 = vld [vmem:[#allocation2 + $0x16a] sm:$0xff]
  %v815 = vld [vmem:[#allocation2 + $0x172] sm:$0xff]
  %v816 = vld [vmem:[#allocation2 + $0x1b2] sm:$0xff]
  %v817 = vld [vmem:[#allocation2 + $0x1ba] sm:$0xff]
  %v818 = vld [vmem:[#allocation2 + $0x1ca] sm:$0xff]
  %v819 = vld [vmem:[#allocation2 + $0x1d2] sm:$0xff]
  %v820 = vld [vmem:[#allocation2 + $0x1e2] sm:$0xff]
  %v821 = vld [vmem:[#allocation2 + $0x1ea] sm:$0xff]
  %v822 = vld [vmem:[#allocation2 + $0x1fa] sm:$0xff]
  %v823 = vld [vmem:[#allocation2 + $0x202] sm:$0xff]
  %v824 = vld [vmem:[#allocation2 + $0x212] sm:$0xff]
  %v825 = vld [vmem:[#allocation2 + $0x21a] sm:$0xff]
  %v826 = vld [vmem:[#allocation2 + $0x22a] sm:$0xff]
  %v827 = vld [vmem:[#allocation2 + $0x232] sm:$0xff]
  %v828 = vld [vmem:[#allocation2 + $0x242] sm:$0xff]
  %v829 = vld [vmem:[#allocation2 + $0x24a] sm:$0xff]
  %v830 = vld [vmem:[#allocation2 + $0x25a] sm:$0xff]
  %v831 = vld [vmem:[#allocation2 + $0x262] sm:$0xff]
  %v832 = vld [vmem:[#allocation2 + $0x272] sm:$0xff]
  %v833 = vld [vmem:[#allocation2 + $0x27a] sm:$0xff]
  %v834 = vld [vmem:[#allocation2 + $0x28a] sm:$0xff]
  %v835 = vld [vmem:[#allocation2 + $0x292] sm:$0xff]
  %v836 = vld [vmem:[#allocation2 + $0x2a2] sm:$0xff]
  %v837 = vld [vmem:[#allocation2 + $0x2aa] sm:$0xff]
  %v838 = vld [vmem:[#allocation2 + $0x2ba] sm:$0xff]
  %v839 = vld [vmem:[#allocation2 + $0x2c2] sm:$0xff]
  %v840 = vld [vmem:[#allocation2 + $0x2d2] sm:$0xff]
  %v841 = vld [vmem:[#allocation2 + $0x2da] sm:$0xff]
  %v842 = vld [vmem:[#allocation2 + $0x2ea] sm:$0xff]
  %v843 = vld [vmem:[#allocation2 + $0x2f2] sm:$0xff]
  %v844 = vld [vmem:[#allocation2 + $0x302] sm:$0xff]
  %v845 = vld [vmem:[#allocation2 + $0x30a] sm:$0xff]
  %v846 = vld [vmem:[#allocation2 + $0x31a] sm:$0xff]
  %v847 = vld [vmem:[#allocation2 + $0x322] sm:$0xff]
  %v848 = vpack.c.bf16 %v785, %v784
  %v849 = vpack.c.bf16 %v787, %v786
  %v850 = vpack.c.bf16 %v789, %v788
  %v851 = vpack.c.bf16 %v791, %v790
  %v852 = vpack.c.bf16 %v793, %v792
  %v853 = vpack.c.bf16 %v795, %v794
  %v854 = vpack.c.bf16 %v797, %v796
  %v855 = vpack.c.bf16 %v799, %v798
  %v856 = vpack.c.bf16 %v801, %v800
  %v857 = vpack.c.bf16 %v803, %v802
  %v858 = vpack.c.bf16 %v805, %v804
  %v859 = vpack.c.bf16 %v807, %v806
  %v860 = vpack.c.bf16 %v809, %v808
  %v861 = vpack.c.bf16 %v811, %v810
  %v862 = vpack.c.bf16 %v813, %v812
  %v863 = vpack.c.bf16 %v815, %v814
  %v864 = vpack.c.bf16 %v817, %v816
  %v865 = vpack.c.bf16 %v819, %v818
  %v866 = vpack.c.bf16 %v821, %v820
  %v867 = vpack.c.bf16 %v823, %v822
  %v868 = vpack.c.bf16 %v825, %v824
  %v869 = vpack.c.bf16 %v827, %v826
  %v870 = vpack.c.bf16 %v829, %v828
  %v871 = vpack.c.bf16 %v831, %v830
  %v872 = vpack.c.bf16 %v833, %v832
  %v873 = vpack.c.bf16 %v835, %v834
  %v874 = vpack.c.bf16 %v837, %v836
  %v875 = vpack.c.bf16 %v839, %v838
  %v876 = vpack.c.bf16 %v841, %v840
  %v877 = vpack.c.bf16 %v843, %v842
  %v878 = vpack.c.bf16 %v845, %v844
  %v879 = vpack.c.bf16 %v847, %v846
  %v880 = vld [vmem:[%s527] sm:$0xff]
  %v881 = vld [vmem:[%s527 + $0x8] sm:$0xff]
  %v882 = vld [vmem:[%s527 + $0x18] sm:$0xff]
  %v883 = vld [vmem:[%s527 + $0x20] sm:$0xff]
  %v884 = vld [vmem:[%s527 + $0x30] sm:$0xff]
  %v885 = vld [vmem:[%s527 + $0x38] sm:$0xff]
  %v886 = vld [vmem:[%s527 + $0x48] sm:$0xff]
  %v887 = vld [vmem:[%s527 + $0x50] sm:$0xff]
  %v888 = vld [vmem:[%s527 + $0x60] sm:$0xff]
  %v889 = vld [vmem:[%s527 + $0x68] sm:$0xff]
  %v890 = vld [vmem:[%s527 + $0x78] sm:$0xff]
  %v891 = vld [vmem:[%s527 + $0x80] sm:$0xff]
  %v892 = vld [vmem:[%s527 + $0x90] sm:$0xff]
  %v893 = vld [vmem:[%s527 + $0x98] sm:$0xff]
  %v894 = vld [vmem:[%s527 + $0xa8] sm:$0xff]
  %v895 = vld [vmem:[%s527 + $0xb0] sm:$0xff]
  %v896 = vld [vmem:[%s527 + $0xc0] sm:$0xff]
  %v897 = vld [vmem:[%s527 + $0xc8] sm:$0xff]
  %v898 = vld [vmem:[%s527 + $0xd8] sm:$0xff]
  %v899 = vld [vmem:[%s527 + $0xe0] sm:$0xff]
  %v900 = vld [vmem:[%s527 + $0xf0] sm:$0xff]
  %v901 = vld [vmem:[%s527 + $0xf8] sm:$0xff]
  %v902 = vld [vmem:[%s527 + $0x108] sm:$0xff]
  %v903 = vld [vmem:[%s527 + $0x110] sm:$0xff]
  %v904 = vld [vmem:[%s527 + $0x120] sm:$0xff]
  %v905 = vld [vmem:[%s527 + $0x128] sm:$0xff]
  %v906 = vld [vmem:[%s527 + $0x138] sm:$0xff]
  %v907 = vld [vmem:[%s527 + $0x140] sm:$0xff]
  %v908 = vld [vmem:[%s527 + $0x150] sm:$0xff]
  %v909 = vld [vmem:[%s527 + $0x158] sm:$0xff]
  %v910 = vld [vmem:[%s527 + $0x168] sm:$0xff]
  %v911 = vld [vmem:[%s527 + $0x170] sm:$0xff]
  %v912 = vld [vmem:[%s527 + $0x1b0] sm:$0xff]
  %v913 = vld [vmem:[%s527 + $0x1b8] sm:$0xff]
  %v914 = vld [vmem:[%s527 + $0x1c8] sm:$0xff]
  %v915 = vld [vmem:[%s527 + $0x1d0] sm:$0xff]
  %v916 = vld [vmem:[%s527 + $0x1e0] sm:$0xff]
  %v917 = vld [vmem:[%s527 + $0x1e8] sm:$0xff]
  %v918 = vld [vmem:[%s527 + $0x1f8] sm:$0xff]
  %v919 = vld [vmem:[%s527 + $0x200] sm:$0xff]
  %v920 = vld [vmem:[%s527 + $0x210] sm:$0xff]
  %v921 = vld [vmem:[%s527 + $0x218] sm:$0xff]
  %v922 = vld [vmem:[%s527 + $0x228] sm:$0xff]
  %v923 = vld [vmem:[%s527 + $0x230] sm:$0xff]
  %v924 = vld [vmem:[%s527 + $0x240] sm:$0xff]
  %v925 = vld [vmem:[%s527 + $0x248] sm:$0xff]
  %v926 = vld [vmem:[%s527 + $0x258] sm:$0xff]
  %v927 = vld [vmem:[%s527 + $0x260] sm:$0xff]
  %v928 = vld [vmem:[%s527 + $0x270] sm:$0xff]
  %v929 = vld [vmem:[%s527 + $0x278] sm:$0xff]
  %v930 = vld [vmem:[%s527 + $0x288] sm:$0xff]
  %v931 = vld [vmem:[%s527 + $0x290] sm:$0xff]
  %v932 = vld [vmem:[%s527 + $0x2a0] sm:$0xff]
  %v933 = vld [vmem:[%s527 + $0x2a8] sm:$0xff]
  %v934 = vld [vmem:[%s527 + $0x2b8] sm:$0xff]
  %v935 = vld [vmem:[%s527 + $0x2c0] sm:$0xff]
  %v936 = vld [vmem:[%s527 + $0x2d0] sm:$0xff]
  %v937 = vld [vmem:[%s527 + $0x2d8] sm:$0xff]
  %v938 = vld [vmem:[%s527 + $0x2e8] sm:$0xff]
  %v939 = vld [vmem:[%s527 + $0x2f0] sm:$0xff]
  %v940 = vld [vmem:[%s527 + $0x300] sm:$0xff]
  %v941 = vld [vmem:[%s527 + $0x308] sm:$0xff]
  %v942 = vld [vmem:[%s527 + $0x318] sm:$0xff]
  %v943 = vld [vmem:[%s527 + $0x320] sm:$0xff]
  %v944 = vpack.c.bf16 %v881, %v880
  %v945 = vpack.c.bf16 %v883, %v882
  %v946 = vpack.c.bf16 %v885, %v884
  %v947 = vpack.c.bf16 %v887, %v886
  %v948 = vpack.c.bf16 %v889, %v888
  %v949 = vpack.c.bf16 %v891, %v890
  %v950 = vpack.c.bf16 %v893, %v892
  %v951 = vpack.c.bf16 %v895, %v894
  %v952 = vpack.c.bf16 %v897, %v896
  %v953 = vpack.c.bf16 %v899, %v898
  %v954 = vpack.c.bf16 %v901, %v900
  %v955 = vpack.c.bf16 %v903, %v902
  %v956 = vpack.c.bf16 %v905, %v904
  %v957 = vpack.c.bf16 %v907, %v906
  %v958 = vpack.c.bf16 %v909, %v908
  %v959 = vpack.c.bf16 %v911, %v910
  %v960 = vpack.c.bf16 %v913, %v912
  %v961 = vpack.c.bf16 %v915, %v914
  %v962 = vpack.c.bf16 %v917, %v916
  %v963 = vpack.c.bf16 %v919, %v918
  %v964 = vpack.c.bf16 %v921, %v920
  %v965 = vpack.c.bf16 %v923, %v922
  %v966 = vpack.c.bf16 %v925, %v924
  %v967 = vpack.c.bf16 %v927, %v926
  %v968 = vpack.c.bf16 %v929, %v928
  %v969 = vpack.c.bf16 %v931, %v930
  %v970 = vpack.c.bf16 %v933, %v932
  %v971 = vpack.c.bf16 %v935, %v934
  %v972 = vpack.c.bf16 %v937, %v936
  %v973 = vpack.c.bf16 %v939, %v938
  %v974 = vpack.c.bf16 %v941, %v940
  %v975 = vpack.c.bf16 %v943, %v942
  %v976 = vld [vmem:[%s527 + $0x1] sm:$0xff]
  %v977 = vld [vmem:[%s527 + $0x9] sm:$0xff]
  %v978 = vld [vmem:[%s527 + $0x19] sm:$0xff]
  %v979 = vld [vmem:[%s527 + $0x21] sm:$0xff]
  %v980 = vld [vmem:[%s527 + $0x31] sm:$0xff]
  %v981 = vld [vmem:[%s527 + $0x39] sm:$0xff]
  %v982 = vld [vmem:[%s527 + $0x49] sm:$0xff]
  %v983 = vld [vmem:[%s527 + $0x51] sm:$0xff]
  %v984 = vld [vmem:[%s527 + $0x61] sm:$0xff]
  %v985 = vld [vmem:[%s527 + $0x69] sm:$0xff]
  %v986 = vld [vmem:[%s527 + $0x79] sm:$0xff]
  %v987 = vld [vmem:[%s527 + $0x81] sm:$0xff]
  %v988 = vld [vmem:[%s527 + $0x91] sm:$0xff]
  %v989 = vld [vmem:[%s527 + $0x99] sm:$0xff]
  %v990 = vld [vmem:[%s527 + $0xa9] sm:$0xff]
  %v991 = vld [vmem:[%s527 + $0xb1] sm:$0xff]
  %v992 = vld [vmem:[%s527 + $0xc1] sm:$0xff]
  %v993 = vld [vmem:[%s527 + $0xc9] sm:$0xff]
  %v994 = vld [vmem:[%s527 + $0xd9] sm:$0xff]
  %v995 = vld [vmem:[%s527 + $0xe1] sm:$0xff]
  %v996 = vld [vmem:[%s527 + $0xf1] sm:$0xff]
  %v997 = vld [vmem:[%s527 + $0xf9] sm:$0xff]
  %v998 = vld [vmem:[%s527 + $0x109] sm:$0xff]
  %v999 = vld [vmem:[%s527 + $0x111] sm:$0xff]
  %v1000 = vld [vmem:[%s527 + $0x121] sm:$0xff]
  %v1001 = vld [vmem:[%s527 + $0x129] sm:$0xff]
  %v1002 = vld [vmem:[%s527 + $0x139] sm:$0xff]
  %v1003 = vld [vmem:[%s527 + $0x141] sm:$0xff]
  %v1004 = vld [vmem:[%s527 + $0x151] sm:$0xff]
  %v1005 = vld [vmem:[%s527 + $0x159] sm:$0xff]
  %v1006 = vld [vmem:[%s527 + $0x169] sm:$0xff]
  %v1007 = vld [vmem:[%s527 + $0x171] sm:$0xff]
  %v1008 = vld [vmem:[%s527 + $0x1b1] sm:$0xff]
  %v1009 = vld [vmem:[%s527 + $0x1b9] sm:$0xff]
  %v1010 = vld [vmem:[%s527 + $0x1c9] sm:$0xff]
  %v1011 = vld [vmem:[%s527 + $0x1d1] sm:$0xff]
  %v1012 = vld [vmem:[%s527 + $0x1e1] sm:$0xff]
  %v1013 = vld [vmem:[%s527 + $0x1e9] sm:$0xff]
  %v1014 = vld [vmem:[%s527 + $0x1f9] sm:$0xff]
  %v1015 = vld [vmem:[%s527 + $0x201] sm:$0xff]
  %v1016 = vld [vmem:[%s527 + $0x211] sm:$0xff]
  %v1017 = vld [vmem:[%s527 + $0x219] sm:$0xff]
  %v1018 = vld [vmem:[%s527 + $0x229] sm:$0xff]
  %v1019 = vld [vmem:[%s527 + $0x231] sm:$0xff]
  %v1020 = vld [vmem:[%s527 + $0x241] sm:$0xff]
  %v1021 = vld [vmem:[%s527 + $0x249] sm:$0xff]
  %v1022 = vld [vmem:[%s527 + $0x259] sm:$0xff]
  %v1023 = vld [vmem:[%s527 + $0x261] sm:$0xff]
  %v1024 = vld [vmem:[%s527 + $0x271] sm:$0xff]
  %v1025 = vld [vmem:[%s527 + $0x279] sm:$0xff]
  %v1026 = vld [vmem:[%s527 + $0x289] sm:$0xff]
  %v1027 = vld [vmem:[%s527 + $0x291] sm:$0xff]
  %v1028 = vld [vmem:[%s527 + $0x2a1] sm:$0xff]
  %v1029 = vld [vmem:[%s527 + $0x2a9] sm:$0xff]
  %v1030 = vld [vmem:[%s527 + $0x2b9] sm:$0xff]
  %v1031 = vld [vmem:[%s527 + $0x2c1] sm:$0xff]
  %v1032 = vld [vmem:[%s527 + $0x2d1] sm:$0xff]
  %v1033 = vld [vmem:[%s527 + $0x2d9] sm:$0xff]
  %v1034 = vld [vmem:[%s527 + $0x2e9] sm:$0xff]
  %v1035 = vld [vmem:[%s527 + $0x2f1] sm:$0xff]
  %v1036 = vld [vmem:[%s527 + $0x301] sm:$0xff]
  %v1037 = vld [vmem:[%s527 + $0x309] sm:$0xff]
  %v1038 = vld [vmem:[%s527 + $0x319] sm:$0xff]
  %v1039 = vld [vmem:[%s527 + $0x321] sm:$0xff]
  %v1040 = vpack.c.bf16 %v977, %v976
  %v1041 = vpack.c.bf16 %v979, %v978
  %v1042 = vpack.c.bf16 %v981, %v980
  %v1043 = vpack.c.bf16 %v983, %v982
  %v1044 = vpack.c.bf16 %v985, %v984
  %v1045 = vpack.c.bf16 %v987, %v986
  %v1046 = vpack.c.bf16 %v989, %v988
  %v1047 = vpack.c.bf16 %v991, %v990
  %v1048 = vpack.c.bf16 %v993, %v992
  %v1049 = vpack.c.bf16 %v995, %v994
  %v1050 = vpack.c.bf16 %v997, %v996
  %v1051 = vpack.c.bf16 %v999, %v998
  %v1052 = vpack.c.bf16 %v1001, %v1000
  %v1053 = vpack.c.bf16 %v1003, %v1002
  %v1054 = vpack.c.bf16 %v1005, %v1004
  %v1055 = vpack.c.bf16 %v1007, %v1006
  %v1056 = vpack.c.bf16 %v1009, %v1008
  %v1057 = vpack.c.bf16 %v1011, %v1010
  %v1058 = vpack.c.bf16 %v1013, %v1012
  %v1059 = vpack.c.bf16 %v1015, %v1014
  %v1060 = vpack.c.bf16 %v1017, %v1016
  %v1061 = vpack.c.bf16 %v1019, %v1018
  %v1062 = vpack.c.bf16 %v1021, %v1020
  %v1063 = vpack.c.bf16 %v1023, %v1022
  %v1064 = vpack.c.bf16 %v1025, %v1024
  %v1065 = vpack.c.bf16 %v1027, %v1026
  %v1066 = vpack.c.bf16 %v1029, %v1028
  %v1067 = vpack.c.bf16 %v1031, %v1030
  %v1068 = vpack.c.bf16 %v1033, %v1032
  %v1069 = vpack.c.bf16 %v1035, %v1034
  %v1070 = vpack.c.bf16 %v1037, %v1036
  %v1071 = vpack.c.bf16 %v1039, %v1038
  %v1072 = vld [vmem:[%s527 + $0x2] sm:$0xff]
  %v1073 = vld [vmem:[%s527 + $0xa] sm:$0xff]
  %v1074 = vld [vmem:[%s527 + $0x1a] sm:$0xff]
  %v1075 = vld [vmem:[%s527 + $0x22] sm:$0xff]
  %v1076 = vld [vmem:[%s527 + $0x32] sm:$0xff]
  %v1077 = vld [vmem:[%s527 + $0x3a] sm:$0xff]
  %v1078 = vld [vmem:[%s527 + $0x4a] sm:$0xff]
  %v1079 = vld [vmem:[%s527 + $0x52] sm:$0xff]
  %v1080 = vld [vmem:[%s527 + $0x62] sm:$0xff]
  %v1081 = vld [vmem:[%s527 + $0x6a] sm:$0xff]
  %v1082 = vld [vmem:[%s527 + $0x7a] sm:$0xff]
  %v1083 = vld [vmem:[%s527 + $0x82] sm:$0xff]
  %v1084 = vld [vmem:[%s527 + $0x92] sm:$0xff]
  %v1085 = vld [vmem:[%s527 + $0x9a] sm:$0xff]
  %v1086 = vld [vmem:[%s527 + $0xaa] sm:$0xff]
  %v1087 = vld [vmem:[%s527 + $0xb2] sm:$0xff]
  %v1088 = vld [vmem:[%s527 + $0xc2] sm:$0xff]
  %v1089 = vld [vmem:[%s527 + $0xca] sm:$0xff]
  %v1090 = vld [vmem:[%s527 + $0xda] sm:$0xff]
  %v1091 = vld [vmem:[%s527 + $0xe2] sm:$0xff]
  %v1092 = vld [vmem:[%s527 + $0xf2] sm:$0xff]
  %v1093 = vld [vmem:[%s527 + $0xfa] sm:$0xff]
  %v1094 = vld [vmem:[%s527 + $0x10a] sm:$0xff]
  %v1095 = vld [vmem:[%s527 + $0x112] sm:$0xff]
  %v1096 = vld [vmem:[%s527 + $0x122] sm:$0xff]
  %v1097 = vld [vmem:[%s527 + $0x12a] sm:$0xff]
  %v1098 = vld [vmem:[%s527 + $0x13a] sm:$0xff]
  %v1099 = vld [vmem:[%s527 + $0x142] sm:$0xff]
  %v1100 = vld [vmem:[%s527 + $0x152] sm:$0xff]
  %v1101 = vld [vmem:[%s527 + $0x15a] sm:$0xff]
  %v1102 = vld [vmem:[%s527 + $0x16a] sm:$0xff]
  %v1103 = vld [vmem:[%s527 + $0x172] sm:$0xff]
  %v1104 = vld [vmem:[%s527 + $0x1b2] sm:$0xff]
  %v1105 = vld [vmem:[%s527 + $0x1ba] sm:$0xff]
  %v1106 = vld [vmem:[%s527 + $0x1ca] sm:$0xff]
  %v1107 = vld [vmem:[%s527 + $0x1d2] sm:$0xff]
  %v1108 = vld [vmem:[%s527 + $0x1e2] sm:$0xff]
  %v1109 = vld [vmem:[%s527 + $0x1ea] sm:$0xff]
  %v1110 = vld [vmem:[%s527 + $0x1fa] sm:$0xff]
  %v1111 = vld [vmem:[%s527 + $0x202] sm:$0xff]
  %v1112 = vld [vmem:[%s527 + $0x212] sm:$0xff]
  %v1113 = vld [vmem:[%s527 + $0x21a] sm:$0xff]
  %v1114 = vld [vmem:[%s527 + $0x22a] sm:$0xff]
  %v1115 = vld [vmem:[%s527 + $0x232] sm:$0xff]
  %v1116 = vld [vmem:[%s527 + $0x242] sm:$0xff]
  %v1117 = vld [vmem:[%s527 + $0x24a] sm:$0xff]
  %v1118 = vld [vmem:[%s527 + $0x25a] sm:$0xff]
  %v1119 = vld [vmem:[%s527 + $0x262] sm:$0xff]
  %v1120 = vld [vmem:[%s527 + $0x272] sm:$0xff]
  %v1121 = vld [vmem:[%s527 + $0x27a] sm:$0xff]
  %v1122 = vld [vmem:[%s527 + $0x28a] sm:$0xff]
  %v1123 = vld [vmem:[%s527 + $0x292] sm:$0xff]
  %v1124 = vld [vmem:[%s527 + $0x2a2] sm:$0xff]
  %v1125 = vld [vmem:[%s527 + $0x2aa] sm:$0xff]
  %v1126 = vld [vmem:[%s527 + $0x2ba] sm:$0xff]
  %v1127 = vld [vmem:[%s527 + $0x2c2] sm:$0xff]
  %v1128 = vld [vmem:[%s527 + $0x2d2] sm:$0xff]
  %v1129 = vld [vmem:[%s527 + $0x2da] sm:$0xff]
  %v1130 = vld [vmem:[%s527 + $0x2ea] sm:$0xff]
  %v1131 = vld [vmem:[%s527 + $0x2f2] sm:$0xff]
  %v1132 = vld [vmem:[%s527 + $0x302] sm:$0xff]
  %v1133 = vld [vmem:[%s527 + $0x30a] sm:$0xff]
  %v1134 = vld [vmem:[%s527 + $0x31a] sm:$0xff]
  %v1135 = vld [vmem:[%s527 + $0x322] sm:$0xff]
  %v1136 = vpack.c.bf16 %v1073, %v1072
  %v1137 = vpack.c.bf16 %v1075, %v1074
  %v1138 = vpack.c.bf16 %v1077, %v1076
  %v1139 = vpack.c.bf16 %v1079, %v1078
  %v1140 = vpack.c.bf16 %v1081, %v1080
  %v1141 = vpack.c.bf16 %v1083, %v1082
  %v1142 = vpack.c.bf16 %v1085, %v1084
  %v1143 = vpack.c.bf16 %v1087, %v1086
  %v1144 = vpack.c.bf16 %v1089, %v1088
  %v1145 = vpack.c.bf16 %v1091, %v1090
  %v1146 = vpack.c.bf16 %v1093, %v1092
  %v1147 = vpack.c.bf16 %v1095, %v1094
  %v1148 = vpack.c.bf16 %v1097, %v1096
  %v1149 = vpack.c.bf16 %v1099, %v1098
  %v1150 = vpack.c.bf16 %v1101, %v1100
  %v1151 = vpack.c.bf16 %v1103, %v1102
  %v1152 = vpack.c.bf16 %v1105, %v1104
  %v1153 = vpack.c.bf16 %v1107, %v1106
  %v1154 = vpack.c.bf16 %v1109, %v1108
  %v1155 = vpack.c.bf16 %v1111, %v1110
  %v1156 = vpack.c.bf16 %v1113, %v1112
  %v1157 = vpack.c.bf16 %v1115, %v1114
  %v1158 = vpack.c.bf16 %v1117, %v1116
  %v1159 = vpack.c.bf16 %v1119, %v1118
  %v1160 = vpack.c.bf16 %v1121, %v1120
  %v1161 = vpack.c.bf16 %v1123, %v1122
  %v1162 = vpack.c.bf16 %v1125, %v1124
  %v1163 = vpack.c.bf16 %v1127, %v1126
  %v1164 = vpack.c.bf16 %v1129, %v1128
  %v1165 = vpack.c.bf16 %v1131, %v1130
  %v1166 = vpack.c.bf16 %v1133, %v1132
  %v1167 = vpack.c.bf16 %v1135, %v1134
  %s1168 = scalar_lea.vmem [#allocation2], 48
  %v1169 = vld [vmem:[%s1168] sm:$0xff]
  %v1170 = vld [vmem:[%s1168 + $0x8] sm:$0xff]
  %v1171 = vld [vmem:[%s1168 + $0x18] sm:$0xff]
  %v1172 = vld [vmem:[%s1168 + $0x20] sm:$0xff]
  %v1173 = vld [vmem:[%s1168 + $0x30] sm:$0xff]
  %v1174 = vld [vmem:[%s1168 + $0x38] sm:$0xff]
  %v1175 = vld [vmem:[%s1168 + $0x48] sm:$0xff]
  %v1176 = vld [vmem:[%s1168 + $0x50] sm:$0xff]
  %v1177 = vld [vmem:[%s1168 + $0x60] sm:$0xff]
  %v1178 = vld [vmem:[%s1168 + $0x68] sm:$0xff]
  %v1179 = vld [vmem:[%s1168 + $0x78] sm:$0xff]
  %v1180 = vld [vmem:[%s1168 + $0x80] sm:$0xff]
  %v1181 = vld [vmem:[%s1168 + $0x90] sm:$0xff]
  %v1182 = vld [vmem:[%s1168 + $0x98] sm:$0xff]
  %v1183 = vld [vmem:[%s1168 + $0xa8] sm:$0xff]
  %v1184 = vld [vmem:[%s1168 + $0xb0] sm:$0xff]
  %v1185 = vld [vmem:[%s1168 + $0xc0] sm:$0xff]
  %v1186 = vld [vmem:[%s1168 + $0xc8] sm:$0xff]
  %v1187 = vld [vmem:[%s1168 + $0xd8] sm:$0xff]
  %v1188 = vld [vmem:[%s1168 + $0xe0] sm:$0xff]
  %v1189 = vld [vmem:[%s1168 + $0xf0] sm:$0xff]
  %v1190 = vld [vmem:[%s1168 + $0xf8] sm:$0xff]
  %v1191 = vld [vmem:[%s1168 + $0x108] sm:$0xff]
  %v1192 = vld [vmem:[%s1168 + $0x110] sm:$0xff]
  %v1193 = vld [vmem:[%s1168 + $0x120] sm:$0xff]
  %v1194 = vld [vmem:[%s1168 + $0x128] sm:$0xff]
  %v1195 = vld [vmem:[%s1168 + $0x138] sm:$0xff]
  %v1196 = vld [vmem:[%s1168 + $0x140] sm:$0xff]
  %v1197 = vld [vmem:[%s1168 + $0x150] sm:$0xff]
  %v1198 = vld [vmem:[%s1168 + $0x158] sm:$0xff]
  %v1199 = vld [vmem:[%s1168 + $0x168] sm:$0xff]
  %v1200 = vld [vmem:[%s1168 + $0x170] sm:$0xff]
  %v1201 = vld [vmem:[%s1168 + $0x1b0] sm:$0xff]
  %v1202 = vld [vmem:[%s1168 + $0x1b8] sm:$0xff]
  %v1203 = vld [vmem:[%s1168 + $0x1c8] sm:$0xff]
  %v1204 = vld [vmem:[%s1168 + $0x1d0] sm:$0xff]
  %v1205 = vld [vmem:[%s1168 + $0x1e0] sm:$0xff]
  %v1206 = vld [vmem:[%s1168 + $0x1e8] sm:$0xff]
  %v1207 = vld [vmem:[%s1168 + $0x1f8] sm:$0xff]
  %v1208 = vld [vmem:[%s1168 + $0x200] sm:$0xff]
  %v1209 = vld [vmem:[%s1168 + $0x210] sm:$0xff]
  %v1210 = vld [vmem:[%s1168 + $0x218] sm:$0xff]
  %v1211 = vld [vmem:[%s1168 + $0x228] sm:$0xff]
  %v1212 = vld [vmem:[%s1168 + $0x230] sm:$0xff]
  %v1213 = vld [vmem:[%s1168 + $0x240] sm:$0xff]
  %v1214 = vld [vmem:[%s1168 + $0x248] sm:$0xff]
  %v1215 = vld [vmem:[%s1168 + $0x258] sm:$0xff]
  %v1216 = vld [vmem:[%s1168 + $0x260] sm:$0xff]
  %v1217 = vld [vmem:[%s1168 + $0x270] sm:$0xff]
  %v1218 = vld [vmem:[%s1168 + $0x278] sm:$0xff]
  %v1219 = vld [vmem:[%s1168 + $0x288] sm:$0xff]
  %v1220 = vld [vmem:[%s1168 + $0x290] sm:$0xff]
  %v1221 = vld [vmem:[%s1168 + $0x2a0] sm:$0xff]
  %v1222 = vld [vmem:[%s1168 + $0x2a8] sm:$0xff]
  %v1223 = vld [vmem:[%s1168 + $0x2b8] sm:$0xff]
  %v1224 = vld [vmem:[%s1168 + $0x2c0] sm:$0xff]
  %v1225 = vld [vmem:[%s1168 + $0x2d0] sm:$0xff]
  %v1226 = vld [vmem:[%s1168 + $0x2d8] sm:$0xff]
  %v1227 = vld [vmem:[%s1168 + $0x2e8] sm:$0xff]
  %v1228 = vld [vmem:[%s1168 + $0x2f0] sm:$0xff]
  %v1229 = vld [vmem:[%s1168 + $0x300] sm:$0xff]
  %v1230 = vld [vmem:[%s1168 + $0x308] sm:$0xff]
  %v1231 = vld [vmem:[%s1168 + $0x318] sm:$0xff]
  %v1232 = vld [vmem:[%s1168 + $0x320] sm:$0xff]
  %v1233 = vpack.c.bf16 %v1170, %v1169
  %v1234 = vpack.c.bf16 %v1172, %v1171
  %v1235 = vpack.c.bf16 %v1174, %v1173
  %v1236 = vpack.c.bf16 %v1176, %v1175
  %v1237 = vpack.c.bf16 %v1178, %v1177
  %v1238 = vpack.c.bf16 %v1180, %v1179
  %v1239 = vpack.c.bf16 %v1182, %v1181
  %v1240 = vpack.c.bf16 %v1184, %v1183
  %v1241 = vpack.c.bf16 %v1186, %v1185
  %v1242 = vpack.c.bf16 %v1188, %v1187
  %v1243 = vpack.c.bf16 %v1190, %v1189
  %v1244 = vpack.c.bf16 %v1192, %v1191
  %v1245 = vpack.c.bf16 %v1194, %v1193
  %v1246 = vpack.c.bf16 %v1196, %v1195
  %v1247 = vpack.c.bf16 %v1198, %v1197
  %v1248 = vpack.c.bf16 %v1200, %v1199
  %v1249 = vpack.c.bf16 %v1202, %v1201
  %v1250 = vpack.c.bf16 %v1204, %v1203
  %v1251 = vpack.c.bf16 %v1206, %v1205
  %v1252 = vpack.c.bf16 %v1208, %v1207
  %v1253 = vpack.c.bf16 %v1210, %v1209
  %v1254 = vpack.c.bf16 %v1212, %v1211
  %v1255 = vpack.c.bf16 %v1214, %v1213
  %v1256 = vpack.c.bf16 %v1216, %v1215
  %v1257 = vpack.c.bf16 %v1218, %v1217
  %v1258 = vpack.c.bf16 %v1220, %v1219
  %v1259 = vpack.c.bf16 %v1222, %v1221
  %v1260 = vpack.c.bf16 %v1224, %v1223
  %v1261 = vpack.c.bf16 %v1226, %v1225
  %v1262 = vpack.c.bf16 %v1228, %v1227
  %v1263 = vpack.c.bf16 %v1230, %v1229
  %v1264 = vpack.c.bf16 %v1232, %v1231
  %v1265 = vld [vmem:[%s1168 + $0x1] sm:$0xff]
  %v1266 = vld [vmem:[%s1168 + $0x9] sm:$0xff]
  %v1267 = vld [vmem:[%s1168 + $0x19] sm:$0xff]
  %v1268 = vld [vmem:[%s1168 + $0x21] sm:$0xff]
  %v1269 = vld [vmem:[%s1168 + $0x31] sm:$0xff]
  %v1270 = vld [vmem:[%s1168 + $0x39] sm:$0xff]
  %v1271 = vld [vmem:[%s1168 + $0x49] sm:$0xff]
  %v1272 = vld [vmem:[%s1168 + $0x51] sm:$0xff]
  %v1273 = vld [vmem:[%s1168 + $0x61] sm:$0xff]
  %v1274 = vld [vmem:[%s1168 + $0x69] sm:$0xff]
  %v1275 = vld [vmem:[%s1168 + $0x79] sm:$0xff]
  %v1276 = vld [vmem:[%s1168 + $0x81] sm:$0xff]
  %v1277 = vld [vmem:[%s1168 + $0x91] sm:$0xff]
  %v1278 = vld [vmem:[%s1168 + $0x99] sm:$0xff]
  %v1279 = vld [vmem:[%s1168 + $0xa9] sm:$0xff]
  %v1280 = vld [vmem:[%s1168 + $0xb1] sm:$0xff]
  %v1281 = vld [vmem:[%s1168 + $0xc1] sm:$0xff]
  %v1282 = vld [vmem:[%s1168 + $0xc9] sm:$0xff]
  %v1283 = vld [vmem:[%s1168 + $0xd9] sm:$0xff]
  %v1284 = vld [vmem:[%s1168 + $0xe1] sm:$0xff]
  %v1285 = vld [vmem:[%s1168 + $0xf1] sm:$0xff]
  %v1286 = vld [vmem:[%s1168 + $0xf9] sm:$0xff]
  %v1287 = vld [vmem:[%s1168 + $0x109] sm:$0xff]
  %v1288 = vld [vmem:[%s1168 + $0x111] sm:$0xff]
  %v1289 = vld [vmem:[%s1168 + $0x121] sm:$0xff]
  %v1290 = vld [vmem:[%s1168 + $0x129] sm:$0xff]
  %v1291 = vld [vmem:[%s1168 + $0x139] sm:$0xff]
  %v1292 = vld [vmem:[%s1168 + $0x141] sm:$0xff]
  %v1293 = vld [vmem:[%s1168 + $0x151] sm:$0xff]
  %v1294 = vld [vmem:[%s1168 + $0x159] sm:$0xff]
  %v1295 = vld [vmem:[%s1168 + $0x169] sm:$0xff]
  %v1296 = vld [vmem:[%s1168 + $0x171] sm:$0xff]
  %v1297 = vld [vmem:[%s1168 + $0x1b1] sm:$0xff]
  %v1298 = vld [vmem:[%s1168 + $0x1b9] sm:$0xff]
  %v1299 = vld [vmem:[%s1168 + $0x1c9] sm:$0xff]
  %v1300 = vld [vmem:[%s1168 + $0x1d1] sm:$0xff]
  %v1301 = vld [vmem:[%s1168 + $0x1e1] sm:$0xff]
  %v1302 = vld [vmem:[%s1168 + $0x1e9] sm:$0xff]
  %v1303 = vld [vmem:[%s1168 + $0x1f9] sm:$0xff]
  %v1304 = vld [vmem:[%s1168 + $0x201] sm:$0xff]
  %v1305 = vld [vmem:[%s1168 + $0x211] sm:$0xff]
  %v1306 = vld [vmem:[%s1168 + $0x219] sm:$0xff]
  %v1307 = vld [vmem:[%s1168 + $0x229] sm:$0xff]
  %v1308 = vld [vmem:[%s1168 + $0x231] sm:$0xff]
  %v1309 = vld [vmem:[%s1168 + $0x241] sm:$0xff]
  %v1310 = vld [vmem:[%s1168 + $0x249] sm:$0xff]
  %v1311 = vld [vmem:[%s1168 + $0x259] sm:$0xff]
  %v1312 = vld [vmem:[%s1168 + $0x261] sm:$0xff]
  %v1313 = vld [vmem:[%s1168 + $0x271] sm:$0xff]
  %v1314 = vld [vmem:[%s1168 + $0x279] sm:$0xff]
  %v1315 = vld [vmem:[%s1168 + $0x289] sm:$0xff]
  %v1316 = vld [vmem:[%s1168 + $0x291] sm:$0xff]
  %v1317 = vld [vmem:[%s1168 + $0x2a1] sm:$0xff]
  %v1318 = vld [vmem:[%s1168 + $0x2a9] sm:$0xff]
  %v1319 = vld [vmem:[%s1168 + $0x2b9] sm:$0xff]
  %v1320 = vld [vmem:[%s1168 + $0x2c1] sm:$0xff]
  %v1321 = vld [vmem:[%s1168 + $0x2d1] sm:$0xff]
  %v1322 = vld [vmem:[%s1168 + $0x2d9] sm:$0xff]
  %v1323 = vld [vmem:[%s1168 + $0x2e9] sm:$0xff]
  %v1324 = vld [vmem:[%s1168 + $0x2f1] sm:$0xff]
  %v1325 = vld [vmem:[%s1168 + $0x301] sm:$0xff]
  %v1326 = vld [vmem:[%s1168 + $0x309] sm:$0xff]
  %v1327 = vld [vmem:[%s1168 + $0x319] sm:$0xff]
  %v1328 = vld [vmem:[%s1168 + $0x321] sm:$0xff]
  %v1329 = vpack.c.bf16 %v1266, %v1265
  %v1330 = vpack.c.bf16 %v1268, %v1267
  %v1331 = vpack.c.bf16 %v1270, %v1269
  %v1332 = vpack.c.bf16 %v1272, %v1271
  %v1333 = vpack.c.bf16 %v1274, %v1273
  %v1334 = vpack.c.bf16 %v1276, %v1275
  %v1335 = vpack.c.bf16 %v1278, %v1277
  %v1336 = vpack.c.bf16 %v1280, %v1279
  %v1337 = vpack.c.bf16 %v1282, %v1281
  %v1338 = vpack.c.bf16 %v1284, %v1283
  %v1339 = vpack.c.bf16 %v1286, %v1285
  %v1340 = vpack.c.bf16 %v1288, %v1287
  %v1341 = vpack.c.bf16 %v1290, %v1289
  %v1342 = vpack.c.bf16 %v1292, %v1291
  %v1343 = vpack.c.bf16 %v1294, %v1293
  %v1344 = vpack.c.bf16 %v1296, %v1295
  %v1345 = vpack.c.bf16 %v1298, %v1297
  %v1346 = vpack.c.bf16 %v1300, %v1299
  %v1347 = vpack.c.bf16 %v1302, %v1301
  %v1348 = vpack.c.bf16 %v1304, %v1303
  %v1349 = vpack.c.bf16 %v1306, %v1305
  %v1350 = vpack.c.bf16 %v1308, %v1307
  %v1351 = vpack.c.bf16 %v1310, %v1309
  %v1352 = vpack.c.bf16 %v1312, %v1311
  %v1353 = vpack.c.bf16 %v1314, %v1313
  %v1354 = vpack.c.bf16 %v1316, %v1315
  %v1355 = vpack.c.bf16 %v1318, %v1317
  %v1356 = vpack.c.bf16 %v1320, %v1319
  %v1357 = vpack.c.bf16 %v1322, %v1321
  %v1358 = vpack.c.bf16 %v1324, %v1323
  %v1359 = vpack.c.bf16 %v1326, %v1325
  %v1360 = vpack.c.bf16 %v1328, %v1327
  %v1361 = vld [vmem:[%s1168 + $0x2] sm:$0xff]
  %v1362 = vld [vmem:[%s1168 + $0xa] sm:$0xff]
  %v1363 = vld [vmem:[%s1168 + $0x1a] sm:$0xff]
  %v1364 = vld [vmem:[%s1168 + $0x22] sm:$0xff]
  %v1365 = vld [vmem:[%s1168 + $0x32] sm:$0xff]
  %v1366 = vld [vmem:[%s1168 + $0x3a] sm:$0xff]
  %v1367 = vld [vmem:[%s1168 + $0x4a] sm:$0xff]
  %v1368 = vld [vmem:[%s1168 + $0x52] sm:$0xff]
  %v1369 = vld [vmem:[%s1168 + $0x62] sm:$0xff]
  %v1370 = vld [vmem:[%s1168 + $0x6a] sm:$0xff]
  %v1371 = vld [vmem:[%s1168 + $0x7a] sm:$0xff]
  %v1372 = vld [vmem:[%s1168 + $0x82] sm:$0xff]
  %v1373 = vld [vmem:[%s1168 + $0x92] sm:$0xff]
  %v1374 = vld [vmem:[%s1168 + $0x9a] sm:$0xff]
  %v1375 = vld [vmem:[%s1168 + $0xaa] sm:$0xff]
  %v1376 = vld [vmem:[%s1168 + $0xb2] sm:$0xff]
  %v1377 = vld [vmem:[%s1168 + $0xc2] sm:$0xff]
  %v1378 = vld [vmem:[%s1168 + $0xca] sm:$0xff]
  %v1379 = vld [vmem:[%s1168 + $0xda] sm:$0xff]
  %v1380 = vld [vmem:[%s1168 + $0xe2] sm:$0xff]
  %v1381 = vld [vmem:[%s1168 + $0xf2] sm:$0xff]
  %v1382 = vld [vmem:[%s1168 + $0xfa] sm:$0xff]
  %v1383 = vld [vmem:[%s1168 + $0x10a] sm:$0xff]
  %v1384 = vld [vmem:[%s1168 + $0x112] sm:$0xff]
  %v1385 = vld [vmem:[%s1168 + $0x122] sm:$0xff]
  %v1386 = vld [vmem:[%s1168 + $0x12a] sm:$0xff]
  %v1387 = vld [vmem:[%s1168 + $0x13a] sm:$0xff]
  %v1388 = vld [vmem:[%s1168 + $0x142] sm:$0xff]
  %v1389 = vld [vmem:[%s1168 + $0x152] sm:$0xff]
  %v1390 = vld [vmem:[%s1168 + $0x15a] sm:$0xff]
  %v1391 = vld [vmem:[%s1168 + $0x16a] sm:$0xff]
  %v1392 = vld [vmem:[%s1168 + $0x172] sm:$0xff]
  %v1393 = vld [vmem:[%s1168 + $0x1b2] sm:$0xff]
  %v1394 = vld [vmem:[%s1168 + $0x1ba] sm:$0xff]
  %v1395 = vld [vmem:[%s1168 + $0x1ca] sm:$0xff]
  %v1396 = vld [vmem:[%s1168 + $0x1d2] sm:$0xff]
  %v1397 = vld [vmem:[%s1168 + $0x1e2] sm:$0xff]
  %v1398 = vld [vmem:[%s1168 + $0x1ea] sm:$0xff]
  %v1399 = vld [vmem:[%s1168 + $0x1fa] sm:$0xff]
  %v1400 = vld [vmem:[%s1168 + $0x202] sm:$0xff]
  %v1401 = vld [vmem:[%s1168 + $0x212] sm:$0xff]
  %v1402 = vld [vmem:[%s1168 + $0x21a] sm:$0xff]
  %v1403 = vld [vmem:[%s1168 + $0x22a] sm:$0xff]
  %v1404 = vld [vmem:[%s1168 + $0x232] sm:$0xff]
  %v1405 = vld [vmem:[%s1168 + $0x242] sm:$0xff]
  %v1406 = vld [vmem:[%s1168 + $0x24a] sm:$0xff]
  %v1407 = vld [vmem:[%s1168 + $0x25a] sm:$0xff]
  %v1408 = vld [vmem:[%s1168 + $0x262] sm:$0xff]
  %v1409 = vld [vmem:[%s1168 + $0x272] sm:$0xff]
  %v1410 = vld [vmem:[%s1168 + $0x27a] sm:$0xff]
  %v1411 = vld [vmem:[%s1168 + $0x28a] sm:$0xff]
  %v1412 = vld [vmem:[%s1168 + $0x292] sm:$0xff]
  %v1413 = vld [vmem:[%s1168 + $0x2a2] sm:$0xff]
  %v1414 = vld [vmem:[%s1168 + $0x2aa] sm:$0xff]
  %v1415 = vld [vmem:[%s1168 + $0x2ba] sm:$0xff]
  %v1416 = vld [vmem:[%s1168 + $0x2c2] sm:$0xff]
  %v1417 = vld [vmem:[%s1168 + $0x2d2] sm:$0xff]
  %v1418 = vld [vmem:[%s1168 + $0x2da] sm:$0xff]
  %v1419 = vld [vmem:[%s1168 + $0x2ea] sm:$0xff]
  %v1420 = vld [vmem:[%s1168 + $0x2f2] sm:$0xff]
  %v1421 = vld [vmem:[%s1168 + $0x302] sm:$0xff]
  %v1422 = vld [vmem:[%s1168 + $0x30a] sm:$0xff]
  %v1423 = vld [vmem:[%s1168 + $0x31a] sm:$0xff]
  %v1424 = vld [vmem:[%s1168 + $0x322] sm:$0xff]
  %v1425 = vpack.c.bf16 %v1362, %v1361
  %v1426 = vpack.c.bf16 %v1364, %v1363
  %v1427 = vpack.c.bf16 %v1366, %v1365
  %v1428 = vpack.c.bf16 %v1368, %v1367
  %v1429 = vpack.c.bf16 %v1370, %v1369
  %v1430 = vpack.c.bf16 %v1372, %v1371
  %v1431 = vpack.c.bf16 %v1374, %v1373
  %v1432 = vpack.c.bf16 %v1376, %v1375
  %v1433 = vpack.c.bf16 %v1378, %v1377
  %v1434 = vpack.c.bf16 %v1380, %v1379
  %v1435 = vpack.c.bf16 %v1382, %v1381
  %v1436 = vpack.c.bf16 %v1384, %v1383
  %v1437 = vpack.c.bf16 %v1386, %v1385
  %v1438 = vpack.c.bf16 %v1388, %v1387
  %v1439 = vpack.c.bf16 %v1390, %v1389
  %v1440 = vpack.c.bf16 %v1392, %v1391
  %v1441 = vpack.c.bf16 %v1394, %v1393
  %v1442 = vpack.c.bf16 %v1396, %v1395
  %v1443 = vpack.c.bf16 %v1398, %v1397
  %v1444 = vpack.c.bf16 %v1400, %v1399
  %v1445 = vpack.c.bf16 %v1402, %v1401
  %v1446 = vpack.c.bf16 %v1404, %v1403
  %v1447 = vpack.c.bf16 %v1406, %v1405
  %v1448 = vpack.c.bf16 %v1408, %v1407
  %v1449 = vpack.c.bf16 %v1410, %v1409
  %v1450 = vpack.c.bf16 %v1412, %v1411
  %v1451 = vpack.c.bf16 %v1414, %v1413
  %v1452 = vpack.c.bf16 %v1416, %v1415
  %v1453 = vpack.c.bf16 %v1418, %v1417
  %v1454 = vpack.c.bf16 %v1420, %v1419
  %v1455 = vpack.c.bf16 %v1422, %v1421
  %v1456 = vpack.c.bf16 %v1424, %v1423
  %v1457 = vld [vmem:[%s3] sm:$0xf]
  %v1458 = vld [vmem:[%s3 + $0x4] sm:$0xf]
  %v1459 = vld [vmem:[%s3 + $0x8] sm:$0xf]
  %v1460 = vld [vmem:[%s3 + $0xc] sm:$0xf]
  %v1461 = vld [vmem:[%s3 + $0x10] sm:$0xf]
  %v1462 = vld [vmem:[%s3 + $0x14] sm:$0xf]
  %v1463 = vld [vmem:[%s3 + $0x18] sm:$0xf]
  %v1464 = vld [vmem:[%s3 + $0x1c] sm:$0xf]
  %v1465 = vld [vmem:[%s3 + $0x20] sm:$0xf]
  %v1466 = vld [vmem:[%s3 + $0x24] sm:$0xf]
  %v1467 = vld [vmem:[%s3 + $0x28] sm:$0xf]
  %v1468 = vld [vmem:[%s3 + $0x2c] sm:$0xf]
  %v1469 = vld [vmem:[%s3 + $0x30] sm:$0xf]
  %v1470 = vld [vmem:[%s3 + $0x34] sm:$0xf]
  %v1471 = vld [vmem:[%s3 + $0x38] sm:$0xf]
  %v1472 = vld [vmem:[%s3 + $0x3c] sm:$0xf]
  %v1473 = vld [vmem:[%s3 + $0x40] sm:$0xf]
  %v1474 = vld [vmem:[%s3 + $0x44] sm:$0xf]
  %v1475 = vld [vmem:[%s3 + $0x48] sm:$0xf]
  %v1476 = vld [vmem:[%s3 + $0x4c] sm:$0xf]
  %v1477 = vld [vmem:[%s3 + $0x50] sm:$0xf]
  %v1478 = vld [vmem:[%s3 + $0x54] sm:$0xf]
  %v1479 = vld [vmem:[%s3 + $0x58] sm:$0xf]
  %v1480 = vld [vmem:[%s3 + $0x5c] sm:$0xf]
  %v1481 = vld [vmem:[%s3 + $0x60] sm:$0xf]
  %v1482 = vld [vmem:[%s3 + $0x64] sm:$0xf]
  %v1483 = vld [vmem:[%s3 + $0x68] sm:$0xf]
  %v1484 = vld [vmem:[%s3 + $0x6c] sm:$0xf]
  %v1485 = vld [vmem:[%s3 + $0x70] sm:$0xf]
  %v1486 = vld [vmem:[%s3 + $0x74] sm:$0xf]
  %v1487 = vld [vmem:[%s3 + $0x78] sm:$0xf]
  %v1488 = vld [vmem:[%s3 + $0x7c] sm:$0xf]
  %v1489 = vld [vmem:[%s3 + $0x80] sm:$0xf]
  %v1490 = vld [vmem:[%s3 + $0x84] sm:$0xf]
  %v1491 = vld [vmem:[%s3 + $0x88] sm:$0xf]
  %v1492 = vld [vmem:[%s3 + $0x8c] sm:$0xf]
  %v1493 = vld [vmem:[%s3 + $0x90] sm:$0xf]
  %v1494 = vld [vmem:[%s3 + $0x94] sm:$0xf]
  %v1495 = vld [vmem:[%s3 + $0x98] sm:$0xf]
  %v1496 = vld [vmem:[%s3 + $0x9c] sm:$0xf]
  %v1497 = vld [vmem:[%s3 + $0xa0] sm:$0xf]
  %v1498 = vld [vmem:[%s3 + $0xa4] sm:$0xf]
  %v1499 = vld [vmem:[%s3 + $0xa8] sm:$0xf]
  %v1500 = vld [vmem:[%s3 + $0xac] sm:$0xf]
  %v1501 = vld [vmem:[%s3 + $0xb0] sm:$0xf]
  %v1502 = vld [vmem:[%s3 + $0xb4] sm:$0xf]
  %v1503 = vld [vmem:[%s3 + $0xb8] sm:$0xf]
  %v1504 = vld [vmem:[%s3 + $0xbc] sm:$0xf]
  %v1505 = vld [vmem:[%s3 + $0xc0] sm:$0xf]
  %v1506 = vld [vmem:[%s3 + $0xc4] sm:$0xf]
  %v1507 = vld [vmem:[%s3 + $0xc8] sm:$0xf]
  %v1508 = vld [vmem:[%s3 + $0xcc] sm:$0xf]
  %v1509 = vld [vmem:[%s3 + $0xd0] sm:$0xf]
  %v1510 = vld [vmem:[%s3 + $0xd4] sm:$0xf]
  %v1511 = vld [vmem:[%s3 + $0xd8] sm:$0xf]
  %v1512 = vld [vmem:[%s3 + $0xdc] sm:$0xf]
  %v1513 = vld [vmem:[%s3 + $0xe0] sm:$0xf]
  %v1514 = vld [vmem:[%s3 + $0xe4] sm:$0xf]
  %v1515 = vld [vmem:[%s3 + $0xe8] sm:$0xf]
  %v1516 = vld [vmem:[%s3 + $0xec] sm:$0xf]
  %v1517 = vld [vmem:[%s3 + $0xf0] sm:$0xf]
  %v1518 = vld [vmem:[%s3 + $0xf4] sm:$0xf]
  %v1519 = vld [vmem:[%s3 + $0xf8] sm:$0xf]
  %v1520 = vld [vmem:[%s3 + $0xfc] sm:$0xf]
  %v1521 = vld [vmem:[%s3 + $0x100] sm:$0xf]
  %v1522 = vld [vmem:[%s3 + $0x104] sm:$0xf]
  %v1523 = vld [vmem:[%s3 + $0x108] sm:$0xf]
  %v1524 = vld [vmem:[%s3 + $0x10c] sm:$0xf]
  %v1525 = vld [vmem:[%s3 + $0x110] sm:$0xf]
  %v1526 = vld [vmem:[%s3 + $0x114] sm:$0xf]
  %v1527 = vld [vmem:[%s3 + $0x118] sm:$0xf]
  %v1528 = vld [vmem:[%s3 + $0x11c] sm:$0xf]
  %v1529 = vld [vmem:[%s3 + $0x120] sm:$0xf]
  %v1530 = vld [vmem:[%s3 + $0x124] sm:$0xf]
  %v1531 = vld [vmem:[%s3 + $0x128] sm:$0xf]
  %v1532 = vld [vmem:[%s3 + $0x12c] sm:$0xf]
  %v1533 = vld [vmem:[%s3 + $0x130] sm:$0xf]
  %v1534 = vld [vmem:[%s3 + $0x134] sm:$0xf]
  %v1535 = vld [vmem:[%s3 + $0x138] sm:$0xf]
  %v1536 = vld [vmem:[%s3 + $0x13c] sm:$0xf]
  %v1537 = vld [vmem:[%s3 + $0x140] sm:$0xf]
  %v1538 = vld [vmem:[%s3 + $0x144] sm:$0xf]
  %v1539 = vld [vmem:[%s3 + $0x148] sm:$0xf]
  %v1540 = vld [vmem:[%s3 + $0x14c] sm:$0xf]
  %v1541 = vld [vmem:[%s3 + $0x150] sm:$0xf]
  %v1542 = vld [vmem:[%s3 + $0x154] sm:$0xf]
  %v1543 = vld [vmem:[%s3 + $0x158] sm:$0xf]
  %v1544 = vld [vmem:[%s3 + $0x15c] sm:$0xf]
  %v1545 = vld [vmem:[%s3 + $0x160] sm:$0xf]
  %v1546 = vld [vmem:[%s3 + $0x164] sm:$0xf]
  %v1547 = vld [vmem:[%s3 + $0x168] sm:$0xf]
  %v1548 = vld [vmem:[%s3 + $0x16c] sm:$0xf]
  %v1549 = vld [vmem:[%s3 + $0x170] sm:$0xf]
  %v1550 = vld [vmem:[%s3 + $0x174] sm:$0xf]
  %v1551 = vld [vmem:[%s3 + $0x178] sm:$0xf]
  %v1552 = vld [vmem:[%s3 + $0x17c] sm:$0xf]
  %v1553 = vld [vmem:[%s3 + $0x180] sm:$0xf]
  %v1554 = vld [vmem:[%s3 + $0x184] sm:$0xf]
  %v1555 = vld [vmem:[%s3 + $0x188] sm:$0xf]
  %v1556 = vld [vmem:[%s3 + $0x18c] sm:$0xf]
  %v1557 = vld [vmem:[%s3 + $0x190] sm:$0xf]
  %v1558 = vld [vmem:[%s3 + $0x194] sm:$0xf]
  %v1559 = vld [vmem:[%s3 + $0x198] sm:$0xf]
  %v1560 = vld [vmem:[%s3 + $0x19c] sm:$0xf]
  %v1561 = vld [vmem:[%s3 + $0x1a0] sm:$0xf]
  %v1562 = vld [vmem:[%s3 + $0x1a4] sm:$0xf]
  %v1563 = vld [vmem:[%s3 + $0x1a8] sm:$0xf]
  %v1564 = vld [vmem:[%s3 + $0x1ac] sm:$0xf]
  %v1565 = vld [vmem:[%s3 + $0x1b0] sm:$0xf]
  %v1566 = vld [vmem:[%s3 + $0x1b4] sm:$0xf]
  %v1567 = vld [vmem:[%s3 + $0x1b8] sm:$0xf]
  %v1568 = vld [vmem:[%s3 + $0x1bc] sm:$0xf]
  %v1569 = vld [vmem:[%s3 + $0x1c0] sm:$0xf]
  %v1570 = vld [vmem:[%s3 + $0x1c4] sm:$0xf]
  %v1571 = vld [vmem:[%s3 + $0x1c8] sm:$0xf]
  %v1572 = vld [vmem:[%s3 + $0x1cc] sm:$0xf]
  %v1573 = vld [vmem:[%s3 + $0x1d0] sm:$0xf]
  %v1574 = vld [vmem:[%s3 + $0x1d4] sm:$0xf]
  %v1575 = vld [vmem:[%s3 + $0x1d8] sm:$0xf]
  %v1576 = vld [vmem:[%s3 + $0x1dc] sm:$0xf]
  %v1577 = vld [vmem:[%s3 + $0x1e0] sm:$0xf]
  %v1578 = vld [vmem:[%s3 + $0x1e4] sm:$0xf]
  %v1579 = vld [vmem:[%s3 + $0x1e8] sm:$0xf]
  %v1580 = vld [vmem:[%s3 + $0x1ec] sm:$0xf]
  %v1581 = vld [vmem:[%s3 + $0x1f0] sm:$0xf]
  %v1582 = vld [vmem:[%s3 + $0x1f4] sm:$0xf]
  %v1583 = vld [vmem:[%s3 + $0x1f8] sm:$0xf]
  %v1584 = vld [vmem:[%s3 + $0x1fc] sm:$0xf]
  %v1585 = vld [vmem:[%s3 + $0x200] sm:$0xf]
  %v1586 = vld [vmem:[%s3 + $0x204] sm:$0xf]
  %v1587 = vld [vmem:[%s3 + $0x208] sm:$0xf]
  %v1588 = vld [vmem:[%s3 + $0x20c] sm:$0xf]
  %v1589 = vld [vmem:[%s3 + $0x210] sm:$0xf]
  %v1590 = vld [vmem:[%s3 + $0x214] sm:$0xf]
  %v1591 = vld [vmem:[%s3 + $0x218] sm:$0xf]
  %v1592 = vld [vmem:[%s3 + $0x21c] sm:$0xf]
  %v1593 = vld [vmem:[%s3 + $0x220] sm:$0xf]
  %v1594 = vld [vmem:[%s3 + $0x224] sm:$0xf]
  %v1595 = vld [vmem:[%s3 + $0x228] sm:$0xf]
  %v1596 = vld [vmem:[%s3 + $0x22c] sm:$0xf]
  %v1597 = vld [vmem:[%s3 + $0x230] sm:$0xf]
  %v1598 = vld [vmem:[%s3 + $0x234] sm:$0xf]
  %v1599 = vld [vmem:[%s3 + $0x238] sm:$0xf]
  %v1600 = vld [vmem:[%s3 + $0x23c] sm:$0xf]
  %v1601 = vld [vmem:[%s4] sm:$0x1]
  %v1603 = vlaneseq
  %v1604 = vshrl.u32 %v1603, 7
  %v1605 = vsub.s32 0, %v1604
  %v1606 = vrot.slane %v1601, %v1605
  %v1752 = vunpack.c.l.b16 %v1457
  %v1753 = vunpack.c.l.b16 %v1458
  %v1754 = vunpack.c.l.b16 %v1459
  %v1755 = vunpack.c.l.b16 %v1460
  %v1756 = vunpack.c.l.b16 %v1461
  %v1757 = vunpack.c.l.b16 %v1462
  %v1758 = vunpack.c.l.b16 %v1463
  %v1759 = vunpack.c.l.b16 %v1464
  %v1760 = vunpack.c.l.b16 %v1465
  %v1761 = vunpack.c.l.b16 %v1466
  %v1762 = vunpack.c.l.b16 %v1467
  %v1763 = vunpack.c.l.b16 %v1468
  %v1764 = vunpack.c.l.b16 %v1469
  %v1765 = vunpack.c.l.b16 %v1470
  %v1766 = vunpack.c.l.b16 %v1471
  %v1767 = vunpack.c.l.b16 %v1472
  %v1768 = vunpack.c.l.b16 %v1473
  %v1769 = vunpack.c.l.b16 %v1474
  %v1770 = vunpack.c.l.b16 %v1475
  %v1771 = vunpack.c.l.b16 %v1476
  %v1772 = vunpack.c.l.b16 %v1477
  %v1773 = vunpack.c.l.b16 %v1478
  %v1774 = vunpack.c.l.b16 %v1479
  %v1775 = vunpack.c.l.b16 %v1480
  %v1776 = vunpack.c.l.b16 %v1481
  %v1777 = vunpack.c.l.b16 %v1482
  %v1778 = vunpack.c.l.b16 %v1483
  %v1779 = vunpack.c.l.b16 %v1484
  %v1780 = vunpack.c.l.b16 %v1485
  %v1781 = vunpack.c.l.b16 %v1486
  %v1782 = vunpack.c.l.b16 %v1487
  %v1783 = vunpack.c.l.b16 %v1488
  %v1784 = vunpack.c.l.b16 %v1489
  %v1785 = vunpack.c.l.b16 %v1490
  %v1786 = vunpack.c.l.b16 %v1491
  %v1787 = vunpack.c.l.b16 %v1492
  %v1788 = vunpack.c.l.b16 %v1493
  %v1789 = vunpack.c.l.b16 %v1494
  %v1790 = vunpack.c.l.b16 %v1495
  %v1791 = vunpack.c.l.b16 %v1496
  %v1792 = vunpack.c.l.b16 %v1497
  %v1793 = vunpack.c.l.b16 %v1498
  %v1794 = vunpack.c.l.b16 %v1499
  %v1795 = vunpack.c.l.b16 %v1500
  %v1796 = vunpack.c.l.b16 %v1501
  %v1797 = vunpack.c.l.b16 %v1502
  %v1798 = vunpack.c.l.b16 %v1503
  %v1799 = vunpack.c.l.b16 %v1504
  %v1800 = vunpack.c.l.b16 %v1505
  %v1801 = vunpack.c.l.b16 %v1506
  %v1802 = vunpack.c.l.b16 %v1507
  %v1803 = vunpack.c.l.b16 %v1508
  %v1804 = vunpack.c.l.b16 %v1509
  %v1805 = vunpack.c.l.b16 %v1510
  %v1806 = vunpack.c.l.b16 %v1511
  %v1807 = vunpack.c.l.b16 %v1512
  %v1808 = vunpack.c.l.b16 %v1513
  %v1809 = vunpack.c.l.b16 %v1514
  %v1810 = vunpack.c.l.b16 %v1515
  %v1811 = vunpack.c.l.b16 %v1516
  %v1812 = vunpack.c.l.b16 %v1517
  %v1813 = vunpack.c.l.b16 %v1518
  %v1814 = vunpack.c.l.b16 %v1519
  %v1815 = vunpack.c.l.b16 %v1520
  %v1816 = vunpack.c.l.b16 %v1521
  %v1817 = vunpack.c.l.b16 %v1522
  %v1818 = vunpack.c.l.b16 %v1523
  %v1819 = vunpack.c.l.b16 %v1524
  %v1820 = vunpack.c.l.b16 %v1525
  %v1821 = vunpack.c.l.b16 %v1526
  %v1822 = vunpack.c.l.b16 %v1527
  %v1823 = vunpack.c.l.b16 %v1528
  %v1824 = vunpack.c.l.b16 %v1529
  %v1825 = vunpack.c.l.b16 %v1530
  %v1826 = vunpack.c.l.b16 %v1531
  %v1827 = vunpack.c.l.b16 %v1532
  %v1828 = vunpack.c.l.b16 %v1533
  %v1829 = vunpack.c.l.b16 %v1534
  %v1830 = vunpack.c.l.b16 %v1535
  %v1831 = vunpack.c.l.b16 %v1536
  %v1832 = vunpack.c.l.b16 %v1537
  %v1833 = vunpack.c.l.b16 %v1538
  %v1834 = vunpack.c.l.b16 %v1539
  %v1835 = vunpack.c.l.b16 %v1540
  %v1836 = vunpack.c.l.b16 %v1541
  %v1837 = vunpack.c.l.b16 %v1542
  %v1838 = vunpack.c.l.b16 %v1543
  %v1839 = vunpack.c.l.b16 %v1544
  %v1840 = vunpack.c.l.b16 %v1545
  %v1841 = vunpack.c.l.b16 %v1546
  %v1842 = vunpack.c.l.b16 %v1547
  %v1843 = vunpack.c.l.b16 %v1548
  %v1844 = vunpack.c.l.b16 %v1549
  %v1845 = vunpack.c.l.b16 %v1550
  %v1846 = vunpack.c.l.b16 %v1551
  %v1847 = vunpack.c.l.b16 %v1552
  %v1848 = vunpack.c.l.b16 %v1553
  %v1849 = vunpack.c.l.b16 %v1554
  %v1850 = vunpack.c.l.b16 %v1555
  %v1851 = vunpack.c.l.b16 %v1556
  %v1852 = vunpack.c.l.b16 %v1557
  %v1853 = vunpack.c.l.b16 %v1558
  %v1854 = vunpack.c.l.b16 %v1559
  %v1855 = vunpack.c.l.b16 %v1560
  %v1856 = vunpack.c.l.b16 %v1561
  %v1857 = vunpack.c.l.b16 %v1562
  %v1858 = vunpack.c.l.b16 %v1563
  %v1859 = vunpack.c.l.b16 %v1564
  %v1860 = vunpack.c.l.b16 %v1565
  %v1861 = vunpack.c.l.b16 %v1566
  %v1862 = vunpack.c.l.b16 %v1567
  %v1863 = vunpack.c.l.b16 %v1568
  %v1864 = vunpack.c.l.b16 %v1569
  %v1865 = vunpack.c.l.b16 %v1570
  %v1866 = vunpack.c.l.b16 %v1571
  %v1867 = vunpack.c.l.b16 %v1572
  %v1868 = vunpack.c.l.b16 %v1573
  %v1869 = vunpack.c.l.b16 %v1574
  %v1870 = vunpack.c.l.b16 %v1575
  %v1871 = vunpack.c.l.b16 %v1576
  %v1872 = vunpack.c.l.b16 %v1577
  %v1873 = vunpack.c.l.b16 %v1578
  %v1874 = vunpack.c.l.b16 %v1579
  %v1875 = vunpack.c.l.b16 %v1580
  %v1876 = vunpack.c.l.b16 %v1581
  %v1877 = vunpack.c.l.b16 %v1582
  %v1878 = vunpack.c.l.b16 %v1583
  %v1879 = vunpack.c.l.b16 %v1584
  %v1880 = vunpack.c.l.b16 %v1585
  %v1881 = vunpack.c.l.b16 %v1586
  %v1882 = vunpack.c.l.b16 %v1587
  %v1883 = vunpack.c.l.b16 %v1588
  %v1884 = vunpack.c.l.b16 %v1589
  %v1885 = vunpack.c.l.b16 %v1590
  %v1886 = vunpack.c.l.b16 %v1591
  %v1887 = vunpack.c.l.b16 %v1592
  %v1888 = vunpack.c.l.b16 %v1593
  %v1889 = vunpack.c.l.b16 %v1594
  %v1890 = vunpack.c.l.b16 %v1595
  %v1891 = vunpack.c.l.b16 %v1596
  %v1892 = vunpack.c.l.b16 %v1597
  %v1893 = vunpack.c.l.b16 %v1598
  %v1894 = vunpack.c.l.b16 %v1599
  %v1895 = vunpack.c.l.b16 %v1600
  %v1896 = vpack.c.b16 %v1753, %v1752
  %v1897 = vpack.c.b16 %v1755, %v1754
  %v1898 = vpack.c.b16 %v1757, %v1756
  %v1899 = vpack.c.b16 %v1759, %v1758
  %v1900 = vpack.c.b16 %v1761, %v1760
  %v1901 = vpack.c.b16 %v1763, %v1762
  %v1902 = vpack.c.b16 %v1765, %v1764
  %v1903 = vpack.c.b16 %v1767, %v1766
  %v1904 = vpack.c.b16 %v1769, %v1768
  %v1905 = vpack.c.b16 %v1771, %v1770
  %v1906 = vpack.c.b16 %v1773, %v1772
  %v1907 = vpack.c.b16 %v1775, %v1774
  %v1908 = vpack.c.b16 %v1777, %v1776
  %v1909 = vpack.c.b16 %v1779, %v1778
  %v1910 = vpack.c.b16 %v1781, %v1780
  %v1911 = vpack.c.b16 %v1783, %v1782
  %v1912 = vpack.c.b16 %v1785, %v1784
  %v1913 = vpack.c.b16 %v1787, %v1786
  %v1914 = vpack.c.b16 %v1789, %v1788
  %v1915 = vpack.c.b16 %v1791, %v1790
  %v1916 = vpack.c.b16 %v1793, %v1792
  %v1917 = vpack.c.b16 %v1795, %v1794
  %v1918 = vpack.c.b16 %v1797, %v1796
  %v1919 = vpack.c.b16 %v1799, %v1798
  %v1920 = vpack.c.b16 %v1801, %v1800
  %v1921 = vpack.c.b16 %v1803, %v1802
  %v1922 = vpack.c.b16 %v1805, %v1804
  %v1923 = vpack.c.b16 %v1807, %v1806
  %v1924 = vpack.c.b16 %v1809, %v1808
  %v1925 = vpack.c.b16 %v1811, %v1810
  %v1926 = vpack.c.b16 %v1813, %v1812
  %v1927 = vpack.c.b16 %v1815, %v1814
  %v1928 = vpack.c.b16 %v1817, %v1816
  %v1929 = vpack.c.b16 %v1819, %v1818
  %v1930 = vpack.c.b16 %v1821, %v1820
  %v1931 = vpack.c.b16 %v1823, %v1822
  %v1932 = vpack.c.b16 %v1825, %v1824
  %v1933 = vpack.c.b16 %v1827, %v1826
  %v1934 = vpack.c.b16 %v1829, %v1828
  %v1935 = vpack.c.b16 %v1831, %v1830
  %v1936 = vpack.c.b16 %v1833, %v1832
  %v1937 = vpack.c.b16 %v1835, %v1834
  %v1938 = vpack.c.b16 %v1837, %v1836
  %v1939 = vpack.c.b16 %v1839, %v1838
  %v1940 = vpack.c.b16 %v1841, %v1840
  %v1941 = vpack.c.b16 %v1843, %v1842
  %v1942 = vpack.c.b16 %v1845, %v1844
  %v1943 = vpack.c.b16 %v1847, %v1846
  %v1944 = vpack.c.b16 %v1849, %v1848
  %v1945 = vpack.c.b16 %v1851, %v1850
  %v1946 = vpack.c.b16 %v1853, %v1852
  %v1947 = vpack.c.b16 %v1855, %v1854
  %v1948 = vpack.c.b16 %v1857, %v1856
  %v1949 = vpack.c.b16 %v1859, %v1858
  %v1950 = vpack.c.b16 %v1861, %v1860
  %v1951 = vpack.c.b16 %v1863, %v1862
  %v1952 = vpack.c.b16 %v1865, %v1864
  %v1953 = vpack.c.b16 %v1867, %v1866
  %v1954 = vpack.c.b16 %v1869, %v1868
  %v1955 = vpack.c.b16 %v1871, %v1870
  %v1956 = vpack.c.b16 %v1873, %v1872
  %v1957 = vpack.c.b16 %v1875, %v1874
  %v1958 = vpack.c.b16 %v1877, %v1876
  %v1959 = vpack.c.b16 %v1879, %v1878
  %v1960 = vpack.c.b16 %v1881, %v1880
  %v1961 = vpack.c.b16 %v1883, %v1882
  %v1962 = vpack.c.b16 %v1885, %v1884
  %v1963 = vpack.c.b16 %v1887, %v1886
  %v1964 = vpack.c.b16 %v1889, %v1888
  %v1965 = vpack.c.b16 %v1891, %v1890
  %v1966 = vpack.c.b16 %v1893, %v1892
  %v1967 = vpack.c.b16 %v1895, %v1894
  %2040 = vmatprep.subr.bf16.mxu0 0
  %2041 = vmatpush1.bf16.msra.mxu0 %v1896
  %2042 = vmatprep.subr.bf16.mxu0 0
  %2043 = vmatpush1.bf16.msra.mxu0 %v1897
  %2044 = vmatprep.subr.bf16.mxu0 0
  %2045 = vmatpush1.bf16.msra.mxu0 %v1898
  %2046 = vmatprep.subr.bf16.mxu0 0
  %2047 = vmatpush1.bf16.msra.mxu0 %v1899
  %2048 = vmatprep.subr.bf16.mxu0 0
  %2049 = vmatpush1.bf16.msra.mxu0 %v1900
  %2050 = vmatprep.subr.bf16.mxu0 0
  %2051 = vmatpush1.bf16.msra.mxu0 %v1901
  %2052 = vmatprep.subr.bf16.mxu0 0
  %2053 = vmatpush1.bf16.msra.mxu0 %v1902
  %2054 = vmatprep.subr.bf16.mxu0 0
  %2055 = vmatpush1.bf16.msra.mxu0 %v1903
  %2056 = vmatprep.subr.bf16.mxu0 0
  %2057 = vmatpush1.bf16.msra.mxu0 %v1904
  %2058 = vmatprep.subr.bf16.mxu0 0
  %2059 = vmatpush1.bf16.msra.mxu0 %v1905
  %2060 = vmatprep.subr.bf16.mxu0 0
  %2061 = vmatpush1.bf16.msra.mxu0 %v1906
  %2062 = vmatprep.subr.bf16.mxu0 0
  %2063 = vmatpush1.bf16.msra.mxu0 %v1907
  %2064 = vmatprep.subr.bf16.mxu0 0
  %2065 = vmatpush1.bf16.msra.mxu0 %v1908
  %2066 = vmatprep.subr.bf16.mxu0 0
  %2067 = vmatpush1.bf16.msra.mxu0 %v1909
  %2068 = vmatprep.subr.bf16.mxu0 0
  %2069 = vmatpush1.bf16.msra.mxu0 %v1910
  %2070 = vmatprep.subr.bf16.mxu0 0
  %2071 = vmatpush1.bf16.msra.mxu0 %v1911
  %2072 = vmatprep.mubr.bf16.mxu0 %v752
  %2073 = vmatmul.mubr.bf16.gmra.mrb[0].mxu0 %v656
  %v2074 = vpop.f32.mrb[0].mxu0
  %v2075 = vadd.f32 %v1606, %v2074
  %v2076 = vpop.f32.mrb[0].mxu0
  %v2077 = vpop.f32.mrb[0].mxu0
  %v2078 = vadd.f32 %v1606, %v2077
  %v2079 = vpop.f32.mrb[0].mxu0
  %2080 = vmatprep.mubr.bf16.mxu0 %v753
  %2081 = vmatmul.mubr.bf16.gmra.mrb[0].mxu0 %v657
  %v2082 = vpop.f32.mrb[0].mxu0
  %v2083 = vadd.f32 %v1606, %v2082
  %v2084 = vpop.f32.mrb[0].mxu0
  %v2085 = vpop.f32.mrb[0].mxu0
  %v2086 = vadd.f32 %v1606, %v2085
  %v2087 = vpop.f32.mrb[0].mxu0
  %2088 = vmatprep.mubr.bf16.mxu0 %v754
  %2089 = vmatmul.mubr.bf16.gmra.mrb[0].mxu0 %v658
  %v2090 = vpop.f32.mrb[0].mxu0
  %v2091 = vadd.f32 %v1606, %v2090
  %v2092 = vpop.f32.mrb[0].mxu0
  %v2093 = vpop.f32.mrb[0].mxu0
  %v2094 = vadd.f32 %v1606, %v2093
  %v2095 = vpop.f32.mrb[0].mxu0
  %2096 = vmatprep.mubr.bf16.mxu0 %v755
  %2097 = vmatmul.mubr.bf16.gmra.mrb[0].mxu0 %v659
  %v2098 = vpop.f32.mrb[0].mxu0
  %v2099 = vadd.f32 %v1606, %v2098
  %v2100 = vpop.f32.mrb[0].mxu0
  %v2101 = vpop.f32.mrb[0].mxu0
  %v2102 = vadd.f32 %v1606, %v2101
  %v2103 = vpop.f32.mrb[0].mxu0
  %2104 = vmatprep.mubr.bf16.mxu0 %v756
  %2105 = vmatmul.mubr.bf16.gmra.mrb[0].mxu0 %v660
  %v2106 = vpop.f32.mrb[0].mxu0
  %v2107 = vadd.f32 %v1606, %v2106
  %v2108 = vpop.f32.mrb[0].mxu0
  %v2109 = vpop.f32.mrb[0].mxu0
  %v2110 = vadd.f32 %v1606, %v2109
  %v2111 = vpop.f32.mrb[0].mxu0
  %2112 = vmatprep.mubr.bf16.mxu0 %v757
  %2113 = vmatmul.mubr.bf16.gmra.mrb[0].mxu0 %v661
  %v2114 = vpop.f32.mrb[0].mxu0
  %v2115 = vadd.f32 %v1606, %v2114
  %v2116 = vpop.f32.mrb[0].mxu0
  %v2117 = vpop.f32.mrb[0].mxu0
  %v2118 = vadd.f32 %v1606, %v2117
  %v2119 = vpop.f32.mrb[0].mxu0
  %2120 = vmatprep.mubr.bf16.mxu0 %v758
  %2121 = vmatmul.mubr.bf16.gmra.mrb[0].mxu0 %v662
  %v2122 = vpop.f32.mrb[0].mxu0
  %v2123 = vadd.f32 %v1606, %v2122
  %v2124 = vpop.f32.mrb[0].mxu0
  %v2125 = vpop.f32.mrb[0].mxu0
  %v2126 = vadd.f32 %v1606, %v2125
  %v2127 = vpop.f32.mrb[0].mxu0
  %2128 = vmatprep.mubr.bf16.mxu0 %v759
  %2129 = vmatmul.mubr.bf16.gmra.mrb[0].mxu0 %v663
  %v2130 = vpop.f32.mrb[0].mxu0
  %v2131 = vadd.f32 %v1606, %v2130
  %v2132 = vpop.f32.mrb[0].mxu0
  %v2133 = vpop.f32.mrb[0].mxu0
  %v2134 = vadd.f32 %v1606, %v2133
  %v2135 = vpop.f32.mrb[0].mxu0
  %2136 = vmatprep.mubr.bf16.mxu0 %v760
  %2137 = vmatmul.mubr.bf16.gmra.mrb[0].mxu0 %v664
  %v2138 = vpop.f32.mrb[0].mxu0
  %v2139 = vadd.f32 %v1606, %v2138
  %v2140 = vpop.f32.mrb[0].mxu0
  %v2141 = vpop.f32.mrb[0].mxu0
  %v2142 = vadd.f32 %v1606, %v2141
  %v2143 = vpop.f32.mrb[0].mxu0
  %2144 = vmatprep.mubr.bf16.mxu0 %v761
  %2145 = vmatmul.mubr.bf16.gmra.mrb[0].mxu0 %v665
  %v2146 = vpop.f32.mrb[0].mxu0
  %v2147 = vadd.f32 %v1606, %v2146
  %v2148 = vpop.f32.mrb[0].mxu0
  %v2149 = vpop.f32.mrb[0].mxu0
  %v2150 = vadd.f32 %v1606, %v2149
  %v2151 = vpop.f32.mrb[0].mxu0
  %2152 = vmatprep.mubr.bf16.mxu0 %v762
  %2153 = vmatmul.mubr.bf16.gmra.mrb[0].mxu0 %v666
  %v2154 = vpop.f32.mrb[0].mxu0
  %v2155 = vadd.f32 %v1606, %v2154
  %v2156 = vpop.f32.mrb[0].mxu0
  %v2157 = vpop.f32.mrb[0].mxu0
  %v2158 = vadd.f32 %v1606, %v2157
  %v2159 = vpop.f32.mrb[0].mxu0
  %2160 = vmatprep.mubr.bf16.mxu0 %v763
  %2161 = vmatmul.mubr.bf16.gmra.mrb[0].mxu0 %v667
  %v2162 = vpop.f32.mrb[0].mxu0
  %v2163 = vadd.f32 %v1606, %v2162
  %v2164 = vpop.f32.mrb[0].mxu0
  %v2165 = vpop.f32.mrb[0].mxu0
  %v2166 = vadd.f32 %v1606, %v2165
  %v2167 = vpop.f32.mrb[0].mxu0
  %2168 = vmatprep.mubr.bf16.mxu0 %v764
  %2169 = vmatmul.mubr.bf16.gmra.mrb[0].mxu0 %v668
  %v2170 = vpop.f32.mrb[0].mxu0
  %v2171 = vadd.f32 %v1606, %v2170
  %v2172 = vpop.f32.mrb[0].mxu0
  %v2173 = vpop.f32.mrb[0].mxu0
  %v2174 = vadd.f32 %v1606, %v2173
  %v2175 = vpop.f32.mrb[0].mxu0
  %2176 = vmatprep.mubr.bf16.mxu0 %v765
  %2177 = vmatmul.mubr.bf16.gmra.mrb[0].mxu0 %v669
  %v2178 = vpop.f32.mrb[0].mxu0
  %v2179 = vadd.f32 %v1606, %v2178
  %v2180 = vpop.f32.mrb[0].mxu0
  %v2181 = vpop.f32.mrb[0].mxu0
  %v2182 = vadd.f32 %v1606, %v2181
  %v2183 = vpop.f32.mrb[0].mxu0
  %2184 = vmatprep.mubr.bf16.mxu0 %v766
  %2185 = vmatmul.mubr.bf16.gmra.mrb[0].mxu0 %v670
  %v2186 = vpop.f32.mrb[0].mxu0
  %v2187 = vadd.f32 %v1606, %v2186
  %v2188 = vpop.f32.mrb[0].mxu0
  %v2189 = vpop.f32.mrb[0].mxu0
  %v2190 = vadd.f32 %v1606, %v2189
  %v2191 = vpop.f32.mrb[0].mxu0
  %2192 = vmatprep.mubr.bf16.mxu0 %v767
  %2193 = vmatmul.mubr.bf16.gmra.mrb[0].mxu0 %v671
  %v2194 = vpop.f32.mrb[0].mxu0
  %v2195 = vadd.f32 %v1606, %v2194
  %v2196 = vpop.f32.mrb[0].mxu0
  %v2197 = vpop.f32.mrb[0].mxu0
  %v2198 = vadd.f32 %v1606, %v2197
  %v2199 = vpop.f32.mrb[0].mxu0
  %2200 = vmatprep.mubr.bf16.mxu0 %v768
  %2201 = vmatmul.mubr.bf16.gmra.mrb[0].mxu0 %v672
  %v2202 = vpop.f32.mrb[0].mxu0
  %v2203 = vadd.f32 %v1606, %v2202
  %v2204 = vpop.f32.mrb[0].mxu0
  %v2205 = vpop.f32.mrb[0].mxu0
  %v2206 = vadd.f32 %v1606, %v2205
  %v2207 = vpop.f32.mrb[0].mxu0
  %2208 = vmatprep.mubr.bf16.mxu0 %v769
  %2209 = vmatmul.mubr.bf16.gmra.mrb[0].mxu0 %v673
  %v2210 = vpop.f32.mrb[0].mxu0
  %v2211 = vadd.f32 %v1606, %v2210
  %v2212 = vpop.f32.mrb[0].mxu0
  %v2213 = vpop.f32.mrb[0].mxu0
  %v2214 = vadd.f32 %v1606, %v2213
  %v2215 = vpop.f32.mrb[0].mxu0
  %2216 = vmatprep.mubr.bf16.mxu0 %v770
  %2217 = vmatmul.mubr.bf16.gmra.mrb[0].mxu0 %v674
  %v2218 = vpop.f32.mrb[0].mxu0
  %v2219 = vadd.f32 %v1606, %v2218
  %v2220 = vpop.f32.mrb[0].mxu0
  %v2221 = vpop.f32.mrb[0].mxu0
  %v2222 = vadd.f32 %v1606, %v2221
  %v2223 = vpop.f32.mrb[0].mxu0
  %2224 = vmatprep.mubr.bf16.mxu0 %v771
  %2225 = vmatmul.mubr.bf16.gmra.mrb[0].mxu0 %v675
  %v2226 = vpop.f32.mrb[0].mxu0
  %v2227 = vadd.f32 %v1606, %v2226
  %v2228 = vpop.f32.mrb[0].mxu0
  %v2229 = vpop.f32.mrb[0].mxu0
  %v2230 = vadd.f32 %v1606, %v2229
  %v2231 = vpop.f32.mrb[0].mxu0
  %2232 = vmatprep.mubr.bf16.mxu0 %v772
  %2233 = vmatmul.mubr.bf16.gmra.mrb[0].mxu0 %v676
  %v2234 = vpop.f32.mrb[0].mxu0
  %v2235 = vadd.f32 %v1606, %v2234
  %v2236 = vpop.f32.mrb[0].mxu0
  %v2237 = vpop.f32.mrb[0].mxu0
  %v2238 = vadd.f32 %v1606, %v2237
  %v2239 = vpop.f32.mrb[0].mxu0
  %2240 = vmatprep.mubr.bf16.mxu0 %v773
  %2241 = vmatmul.mubr.bf16.gmra.mrb[0].mxu0 %v677
  %v2242 = vpop.f32.mrb[0].mxu0
  %v2243 = vadd.f32 %v1606, %v2242
  %v2244 = vpop.f32.mrb[0].mxu0
  %v2245 = vpop.f32.mrb[0].mxu0
  %v2246 = vadd.f32 %v1606, %v2245
  %v2247 = vpop.f32.mrb[0].mxu0
  %2248 = vmatprep.mubr.bf16.mxu0 %v774
  %2249 = vmatmul.mubr.bf16.gmra.mrb[0].mxu0 %v678
  %v2250 = vpop.f32.mrb[0].mxu0
  %v2251 = vadd.f32 %v1606, %v2250
  %v2252 = vpop.f32.mrb[0].mxu0
  %v2253 = vpop.f32.mrb[0].mxu0
  %v2254 = vadd.f32 %v1606, %v2253
  %v2255 = vpop.f32.mrb[0].mxu0
  %2256 = vmatprep.mubr.bf16.mxu0 %v775
  %2257 = vmatmul.mubr.bf16.gmra.mrb[0].mxu0 %v679
  %v2258 = vpop.f32.mrb[0].mxu0
  %v2259 = vadd.f32 %v1606, %v2258
  %v2260 = vpop.f32.mrb[0].mxu0
  %v2261 = vpop.f32.mrb[0].mxu0
  %v2262 = vadd.f32 %v1606, %v2261
  %v2263 = vpop.f32.mrb[0].mxu0
  %2264 = vmatprep.mubr.bf16.mxu0 %v776
  %2265 = vmatmul.mubr.bf16.gmra.mrb[0].mxu0 %v680
  %v2266 = vpop.f32.mrb[0].mxu0
  %v2267 = vadd.f32 %v1606, %v2266
  %v2268 = vpop.f32.mrb[0].mxu0
  %v2269 = vpop.f32.mrb[0].mxu0
  %v2270 = vadd.f32 %v1606, %v2269
  %v2271 = vpop.f32.mrb[0].mxu0
  %2272 = vmatprep.mubr.bf16.mxu0 %v777
  %2273 = vmatmul.mubr.bf16.gmra.mrb[0].mxu0 %v681
  %v2274 = vpop.f32.mrb[0].mxu0
  %v2275 = vadd.f32 %v1606, %v2274
  %v2276 = vpop.f32.mrb[0].mxu0
  %v2277 = vpop.f32.mrb[0].mxu0
  %v2278 = vadd.f32 %v1606, %v2277
  %v2279 = vpop.f32.mrb[0].mxu0
  %2280 = vmatprep.mubr.bf16.mxu0 %v778
  %2281 = vmatmul.mubr.bf16.gmra.mrb[0].mxu0 %v682
  %v2282 = vpop.f32.mrb[0].mxu0
  %v2283 = vadd.f32 %v1606, %v2282
  %v2284 = vpop.f32.mrb[0].mxu0
  %v2285 = vpop.f32.mrb[0].mxu0
  %v2286 = vadd.f32 %v1606, %v2285
  %v2287 = vpop.f32.mrb[0].mxu0
  %2288 = vmatprep.mubr.bf16.mxu0 %v779
  %2289 = vmatmul.mubr.bf16.gmra.mrb[0].mxu0 %v683
  %v2290 = vpop.f32.mrb[0].mxu0
  %v2291 = vadd.f32 %v1606, %v2290
  %v2292 = vpop.f32.mrb[0].mxu0
  %v2293 = vpop.f32.mrb[0].mxu0
  %v2294 = vadd.f32 %v1606, %v2293
  %v2295 = vpop.f32.mrb[0].mxu0
  %2296 = vmatprep.mubr.bf16.mxu0 %v780
  %2297 = vmatmul.mubr.bf16.gmra.mrb[0].mxu0 %v684
  %v2298 = vpop.f32.mrb[0].mxu0
  %v2299 = vadd.f32 %v1606, %v2298
  %v2300 = vpop.f32.mrb[0].mxu0
  %v2301 = vpop.f32.mrb[0].mxu0
  %v2302 = vadd.f32 %v1606, %v2301
  %v2303 = vpop.f32.mrb[0].mxu0
  %2304 = vmatprep.mubr.bf16.mxu0 %v781
  %2305 = vmatmul.mubr.bf16.gmra.mrb[0].mxu0 %v685
  %v2306 = vpop.f32.mrb[0].mxu0
  %v2307 = vadd.f32 %v1606, %v2306
  %v2308 = vpop.f32.mrb[0].mxu0
  %v2309 = vpop.f32.mrb[0].mxu0
  %v2310 = vadd.f32 %v1606, %v2309
  %v2311 = vpop.f32.mrb[0].mxu0
  %2312 = vmatprep.mubr.bf16.mxu0 %v782
  %2313 = vmatmul.mubr.bf16.gmra.mrb[0].mxu0 %v686
  %v2314 = vpop.f32.mrb[0].mxu0
  %v2315 = vadd.f32 %v1606, %v2314
  %v2316 = vpop.f32.mrb[0].mxu0
  %v2317 = vpop.f32.mrb[0].mxu0
  %v2318 = vadd.f32 %v1606, %v2317
  %v2319 = vpop.f32.mrb[0].mxu0
  %2320 = vmatprep.mubr.bf16.mxu0 %v783
  %2321 = vmatmul.mubr.bf16.gmra.mrb[0].mxu0 %v687
  %v2322 = vpop.f32.mrb[0].mxu0
  %v2323 = vadd.f32 %v1606, %v2322
  %v2324 = vpop.f32.mrb[0].mxu0
  %v2325 = vpop.f32.mrb[0].mxu0
  %v2326 = vadd.f32 %v1606, %v2325
  %v2327 = vpop.f32.mrb[0].mxu0
  %2328 = vdwg.mxu0
  %2329 = vmatprep.subr.bf16.mxu0 0
  %2330 = vmatpush1.bf16.msra.mxu0 %v1912
  %2331 = vmatprep.subr.bf16.mxu0 0
  %2332 = vmatpush1.bf16.msra.mxu0 %v1913
  %2333 = vmatprep.subr.bf16.mxu0 0
  %2334 = vmatpush1.bf16.msra.mxu0 %v1914
  %2335 = vmatprep.subr.bf16.mxu0 0
  %2336 = vmatpush1.bf16.msra.mxu0 %v1915
  %2337 = vmatprep.subr.bf16.mxu0 0
  %2338 = vmatpush1.bf16.msra.mxu0 %v1916
  %2339 = vmatprep.subr.bf16.mxu0 0
  %2340 = vmatpush1.bf16.msra.mxu0 %v1917
  %2341 = vmatprep.subr.bf16.mxu0 0
  %2342 = vmatpush1.bf16.msra.mxu0 %v1918
  %2343 = vmatprep.subr.bf16.mxu0 0
  %2344 = vmatpush1.bf16.msra.mxu0 %v1919
  %2345 = vmatprep.subr.bf16.mxu0 0
  %2346 = vmatpush1.bf16.msra.mxu0 %v1920
  %2347 = vmatprep.subr.bf16.mxu0 0
  %2348 = vmatpush1.bf16.msra.mxu0 %v1921
  %2349 = vmatprep.subr.bf16.mxu0 0
  %2350 = vmatpush1.bf16.msra.mxu0 %v1922
  %2351 = vmatprep.subr.bf16.mxu0 0
  %2352 = vmatpush1.bf16.msra.mxu0 %v1923
  %2353 = vmatprep.subr.bf16.mxu0 0
  %2354 = vmatpush1.bf16.msra.mxu0 %v1924
  %2355 = vmatprep.subr.bf16.mxu0 0
  %2356 = vmatpush1.bf16.msra.mxu0 %v1925
  %2357 = vmatprep.subr.bf16.mxu0 0
  %2358 = vmatpush1.bf16.msra.mxu0 %v1926
  %2359 = vmatprep.subr.bf16.mxu0 0
  %2360 = vmatpush1.bf16.msra.mxu0 %v1927
  %2361 = vmatprep.mubr.bf16.mxu0 %v944
  %2362 = vmatmul.mubr.bf16.gmra.mrb[0].mxu0 %v848
  %v2363 = vpop.f32.mrb[0].mxu0
  %v2364 = vadd.f32 %v2075, %v2363
  %v2365 = vpop.f32.mrb[0].mxu0
  %v2366 = vpop.f32.mrb[0].mxu0
  %v2367 = vadd.f32 %v2078, %v2366
  %v2368 = vpop.f32.mrb[0].mxu0
  %2369 = vmatprep.mubr.bf16.mxu0 %v945
  %2370 = vmatmul.mubr.bf16.gmra.mrb[0].mxu0 %v849
  %v2371 = vpop.f32.mrb[0].mxu0
  %v2372 = vadd.f32 %v2083, %v2371
  %v2373 = vpop.f32.mrb[0].mxu0
  %v2374 = vpop.f32.mrb[0].mxu0
  %v2375 = vadd.f32 %v2086, %v2374
  %v2376 = vpop.f32.mrb[0].mxu0
  %2377 = vmatprep.mubr.bf16.mxu0 %v946
  %2378 = vmatmul.mubr.bf16.gmra.mrb[0].mxu0 %v850
  %v2379 = vpop.f32.mrb[0].mxu0
  %v2380 = vadd.f32 %v2091, %v2379
  %v2381 = vpop.f32.mrb[0].mxu0
  %v2382 = vpop.f32.mrb[0].mxu0
  %v2383 = vadd.f32 %v2094, %v2382
  %v2384 = vpop.f32.mrb[0].mxu0
  %2385 = vmatprep.mubr.bf16.mxu0 %v947
  %2386 = vmatmul.mubr.bf16.gmra.mrb[0].mxu0 %v851
  %v2387 = vpop.f32.mrb[0].mxu0
  %v2388 = vadd.f32 %v2099, %v2387
  %v2389 = vpop.f32.mrb[0].mxu0
  %v2390 = vpop.f32.mrb[0].mxu0
  %v2391 = vadd.f32 %v2102, %v2390
  %v2392 = vpop.f32.mrb[0].mxu0
  %2393 = vmatprep.mubr.bf16.mxu0 %v948
  %2394 = vmatmul.mubr.bf16.gmra.mrb[0].mxu0 %v852
  %v2395 = vpop.f32.mrb[0].mxu0
  %v2396 = vadd.f32 %v2107, %v2395
  %v2397 = vpop.f32.mrb[0].mxu0
  %v2398 = vpop.f32.mrb[0].mxu0
  %v2399 = vadd.f32 %v2110, %v2398
  %v2400 = vpop.f32.mrb[0].mxu0
  %2401 = vmatprep.mubr.bf16.mxu0 %v949
  %2402 = vmatmul.mubr.bf16.gmra.mrb[0].mxu0 %v853
  %v2403 = vpop.f32.mrb[0].mxu0
  %v2404 = vadd.f32 %v2115, %v2403
  %v2405 = vpop.f32.mrb[0].mxu0
  %v2406 = vpop.f32.mrb[0].mxu0
  %v2407 = vadd.f32 %v2118, %v2406
  %v2408 = vpop.f32.mrb[0].mxu0
  %2409 = vmatprep.mubr.bf16.mxu0 %v950
  %2410 = vmatmul.mubr.bf16.gmra.mrb[0].mxu0 %v854
  %v2411 = vpop.f32.mrb[0].mxu0
  %v2412 = vadd.f32 %v2123, %v2411
  %v2413 = vpop.f32.mrb[0].mxu0
  %v2414 = vpop.f32.mrb[0].mxu0
  %v2415 = vadd.f32 %v2126, %v2414
  %v2416 = vpop.f32.mrb[0].mxu0
  %2417 = vmatprep.mubr.bf16.mxu0 %v951
  %2418 = vmatmul.mubr.bf16.gmra.mrb[0].mxu0 %v855
  %v2419 = vpop.f32.mrb[0].mxu0
  %v2420 = vadd.f32 %v2131, %v2419
  %v2421 = vpop.f32.mrb[0].mxu0
  %v2422 = vpop.f32.mrb[0].mxu0
  %v2423 = vadd.f32 %v2134, %v2422
  %v2424 = vpop.f32.mrb[0].mxu0
  %2425 = vmatprep.mubr.bf16.mxu0 %v952
  %2426 = vmatmul.mubr.bf16.gmra.mrb[0].mxu0 %v856
  %v2427 = vpop.f32.mrb[0].mxu0
  %v2428 = vadd.f32 %v2139, %v2427
  %v2429 = vpop.f32.mrb[0].mxu0
  %v2430 = vpop.f32.mrb[0].mxu0
  %v2431 = vadd.f32 %v2142, %v2430
  %v2432 = vpop.f32.mrb[0].mxu0
  %2433 = vmatprep.mubr.bf16.mxu0 %v953
  %2434 = vmatmul.mubr.bf16.gmra.mrb[0].mxu0 %v857
  %v2435 = vpop.f32.mrb[0].mxu0
  %v2436 = vadd.f32 %v2147, %v2435
  %v2437 = vpop.f32.mrb[0].mxu0
  %v2438 = vpop.f32.mrb[0].mxu0
  %v2439 = vadd.f32 %v2150, %v2438
  %v2440 = vpop.f32.mrb[0].mxu0
  %2441 = vmatprep.mubr.bf16.mxu0 %v954
  %2442 = vmatmul.mubr.bf16.gmra.mrb[0].mxu0 %v858
  %v2443 = vpop.f32.mrb[0].mxu0
  %v2444 = vadd.f32 %v2155, %v2443
  %v2445 = vpop.f32.mrb[0].mxu0
  %v2446 = vpop.f32.mrb[0].mxu0
  %v2447 = vadd.f32 %v2158, %v2446
  %v2448 = vpop.f32.mrb[0].mxu0
  %2449 = vmatprep.mubr.bf16.mxu0 %v955
  %2450 = vmatmul.mubr.bf16.gmra.mrb[0].mxu0 %v859
  %v2451 = vpop.f32.mrb[0].mxu0
  %v2452 = vadd.f32 %v2163, %v2451
  %v2453 = vpop.f32.mrb[0].mxu0
  %v2454 = vpop.f32.mrb[0].mxu0
  %v2455 = vadd.f32 %v2166, %v2454
  %v2456 = vpop.f32.mrb[0].mxu0
  %2457 = vmatprep.mubr.bf16.mxu0 %v956
  %2458 = vmatmul.mubr.bf16.gmra.mrb[0].mxu0 %v860
  %v2459 = vpop.f32.mrb[0].mxu0
  %v2460 = vadd.f32 %v2171, %v2459
  %v2461 = vpop.f32.mrb[0].mxu0
  %v2462 = vpop.f32.mrb[0].mxu0
  %v2463 = vadd.f32 %v2174, %v2462
  %v2464 = vpop.f32.mrb[0].mxu0
  %2465 = vmatprep.mubr.bf16.mxu0 %v957
  %2466 = vmatmul.mubr.bf16.gmra.mrb[0].mxu0 %v861
  %v2467 = vpop.f32.mrb[0].mxu0
  %v2468 = vadd.f32 %v2179, %v2467
  %v2469 = vpop.f32.mrb[0].mxu0
  %v2470 = vpop.f32.mrb[0].mxu0
  %v2471 = vadd.f32 %v2182, %v2470
  %v2472 = vpop.f32.mrb[0].mxu0
  %2473 = vmatprep.mubr.bf16.mxu0 %v958
  %2474 = vmatmul.mubr.bf16.gmra.mrb[0].mxu0 %v862
  %v2475 = vpop.f32.mrb[0].mxu0
  %v2476 = vadd.f32 %v2187, %v2475
  %v2477 = vpop.f32.mrb[0].mxu0
  %v2478 = vpop.f32.mrb[0].mxu0
  %v2479 = vadd.f32 %v2190, %v2478
  %v2480 = vpop.f32.mrb[0].mxu0
  %2481 = vmatprep.mubr.bf16.mxu0 %v959
  %2482 = vmatmul.mubr.bf16.gmra.mrb[0].mxu0 %v863
  %v2483 = vpop.f32.mrb[0].mxu0
  %v2484 = vadd.f32 %v2195, %v2483
  %v2485 = vpop.f32.mrb[0].mxu0
  %v2486 = vpop.f32.mrb[0].mxu0
  %v2487 = vadd.f32 %v2198, %v2486
  %v2488 = vpop.f32.mrb[0].mxu0
  %2489 = vmatprep.mubr.bf16.mxu0 %v960
  %2490 = vmatmul.mubr.bf16.gmra.mrb[0].mxu0 %v864
  %v2491 = vpop.f32.mrb[0].mxu0
  %v2492 = vadd.f32 %v2203, %v2491
  %v2493 = vpop.f32.mrb[0].mxu0
  %v2494 = vpop.f32.mrb[0].mxu0
  %v2495 = vadd.f32 %v2206, %v2494
  %v2496 = vpop.f32.mrb[0].mxu0
  %2497 = vmatprep.mubr.bf16.mxu0 %v961
  %2498 = vmatmul.mubr.bf16.gmra.mrb[0].mxu0 %v865
  %v2499 = vpop.f32.mrb[0].mxu0
  %v2500 = vadd.f32 %v2211, %v2499
  %v2501 = vpop.f32.mrb[0].mxu0
  %v2502 = vpop.f32.mrb[0].mxu0
  %v2503 = vadd.f32 %v2214, %v2502
  %v2504 = vpop.f32.mrb[0].mxu0
  %2505 = vmatprep.mubr.bf16.mxu0 %v962
  %2506 = vmatmul.mubr.bf16.gmra.mrb[0].mxu0 %v866
  %v2507 = vpop.f32.mrb[0].mxu0
  %v2508 = vadd.f32 %v2219, %v2507
  %v2509 = vpop.f32.mrb[0].mxu0
  %v2510 = vpop.f32.mrb[0].mxu0
  %v2511 = vadd.f32 %v2222, %v2510
  %v2512 = vpop.f32.mrb[0].mxu0
  %2513 = vmatprep.mubr.bf16.mxu0 %v963
  %2514 = vmatmul.mubr.bf16.gmra.mrb[0].mxu0 %v867
  %v2515 = vpop.f32.mrb[0].mxu0
  %v2516 = vadd.f32 %v2227, %v2515
  %v2517 = vpop.f32.mrb[0].mxu0
  %v2518 = vpop.f32.mrb[0].mxu0
  %v2519 = vadd.f32 %v2230, %v2518
  %v2520 = vpop.f32.mrb[0].mxu0
  %2521 = vmatprep.mubr.bf16.mxu0 %v964
  %2522 = vmatmul.mubr.bf16.gmra.mrb[0].mxu0 %v868
  %v2523 = vpop.f32.mrb[0].mxu0
  %v2524 = vadd.f32 %v2235, %v2523
  %v2525 = vpop.f32.mrb[0].mxu0
  %v2526 = vpop.f32.mrb[0].mxu0
  %v2527 = vadd.f32 %v2238, %v2526
  %v2528 = vpop.f32.mrb[0].mxu0
  %2529 = vmatprep.mubr.bf16.mxu0 %v965
  %2530 = vmatmul.mubr.bf16.gmra.mrb[0].mxu0 %v869
  %v2531 = vpop.f32.mrb[0].mxu0
  %v2532 = vadd.f32 %v2243, %v2531
  %v2533 = vpop.f32.mrb[0].mxu0
  %v2534 = vpop.f32.mrb[0].mxu0
  %v2535 = vadd.f32 %v2246, %v2534
  %v2536 = vpop.f32.mrb[0].mxu0
  %2537 = vmatprep.mubr.bf16.mxu0 %v966
  %2538 = vmatmul.mubr.bf16.gmra.mrb[0].mxu0 %v870
  %v2539 = vpop.f32.mrb[0].mxu0
  %v2540 = vadd.f32 %v2251, %v2539
  %v2541 = vpop.f32.mrb[0].mxu0
  %v2542 = vpop.f32.mrb[0].mxu0
  %v2543 = vadd.f32 %v2254, %v2542
  %v2544 = vpop.f32.mrb[0].mxu0
  %2545 = vmatprep.mubr.bf16.mxu0 %v967
  %2546 = vmatmul.mubr.bf16.gmra.mrb[0].mxu0 %v871
  %v2547 = vpop.f32.mrb[0].mxu0
  %v2548 = vadd.f32 %v2259, %v2547
  %v2549 = vpop.f32.mrb[0].mxu0
  %v2550 = vpop.f32.mrb[0].mxu0
  %v2551 = vadd.f32 %v2262, %v2550
  %v2552 = vpop.f32.mrb[0].mxu0
  %2553 = vmatprep.mubr.bf16.mxu0 %v968
  %2554 = vmatmul.mubr.bf16.gmra.mrb[0].mxu0 %v872
  %v2555 = vpop.f32.mrb[0].mxu0
  %v2556 = vadd.f32 %v2267, %v2555
  %v2557 = vpop.f32.mrb[0].mxu0
  %v2558 = vpop.f32.mrb[0].mxu0
  %v2559 = vadd.f32 %v2270, %v2558
  %v2560 = vpop.f32.mrb[0].mxu0
  %2561 = vmatprep.mubr.bf16.mxu0 %v969
  %2562 = vmatmul.mubr.bf16.gmra.mrb[0].mxu0 %v873
  %v2563 = vpop.f32.mrb[0].mxu0
  %v2564 = vadd.f32 %v2275, %v2563
  %v2565 = vpop.f32.mrb[0].mxu0
  %v2566 = vpop.f32.mrb[0].mxu0
  %v2567 = vadd.f32 %v2278, %v2566
  %v2568 = vpop.f32.mrb[0].mxu0
  %2569 = vmatprep.mubr.bf16.mxu0 %v970
  %2570 = vmatmul.mubr.bf16.gmra.mrb[0].mxu0 %v874
  %v2571 = vpop.f32.mrb[0].mxu0
  %v2572 = vadd.f32 %v2283, %v2571
  %v2573 = vpop.f32.mrb[0].mxu0
  %v2574 = vpop.f32.mrb[0].mxu0
  %v2575 = vadd.f32 %v2286, %v2574
  %v2576 = vpop.f32.mrb[0].mxu0
  %2577 = vmatprep.mubr.bf16.mxu0 %v971
  %2578 = vmatmul.mubr.bf16.gmra.mrb[0].mxu0 %v875
  %v2579 = vpop.f32.mrb[0].mxu0
  %v2580 = vadd.f32 %v2291, %v2579
  %v2581 = vpop.f32.mrb[0].mxu0
  %v2582 = vpop.f32.mrb[0].mxu0
  %v2583 = vadd.f32 %v2294, %v2582
  %v2584 = vpop.f32.mrb[0].mxu0
  %2585 = vmatprep.mubr.bf16.mxu0 %v972
  %2586 = vmatmul.mubr.bf16.gmra.mrb[0].mxu0 %v876
  %v2587 = vpop.f32.mrb[0].mxu0
  %v2588 = vadd.f32 %v2299, %v2587
  %v2589 = vpop.f32.mrb[0].mxu0
  %v2590 = vpop.f32.mrb[0].mxu0
  %v2591 = vadd.f32 %v2302, %v2590
  %v2592 = vpop.f32.mrb[0].mxu0
  %2593 = vmatprep.mubr.bf16.mxu0 %v973
  %2594 = vmatmul.mubr.bf16.gmra.mrb[0].mxu0 %v877
  %v2595 = vpop.f32.mrb[0].mxu0
  %v2596 = vadd.f32 %v2307, %v2595
  %v2597 = vpop.f32.mrb[0].mxu0
  %v2598 = vpop.f32.mrb[0].mxu0
  %v2599 = vadd.f32 %v2310, %v2598
  %v2600 = vpop.f32.mrb[0].mxu0
  %2601 = vmatprep.mubr.bf16.mxu0 %v974
  %2602 = vmatmul.mubr.bf16.gmra.mrb[0].mxu0 %v878
  %v2603 = vpop.f32.mrb[0].mxu0
  %v2604 = vadd.f32 %v2315, %v2603
  %v2605 = vpop.f32.mrb[0].mxu0
  %v2606 = vpop.f32.mrb[0].mxu0
  %v2607 = vadd.f32 %v2318, %v2606
  %v2608 = vpop.f32.mrb[0].mxu0
  %2609 = vmatprep.mubr.bf16.mxu0 %v975
  %2610 = vmatmul.mubr.bf16.gmra.mrb[0].mxu0 %v879
  %v2611 = vpop.f32.mrb[0].mxu0
  %v2612 = vadd.f32 %v2323, %v2611
  %v2613 = vpop.f32.mrb[0].mxu0
  %v2614 = vpop.f32.mrb[0].mxu0
  %v2615 = vadd.f32 %v2326, %v2614
  %v2616 = vpop.f32.mrb[0].mxu0
  %2617 = vdwg.mxu0
  %2618 = vmatprep.subr.bf16.mxu0 0
  %2619 = vmatpush1.bf16.msra.mxu0 %v1928
  %2620 = vmatprep.subr.bf16.mxu0 0
  %2621 = vmatpush1.bf16.msra.mxu0 %v1929
  %2622 = vmatprep.subr.bf16.mxu0 0
  %2623 = vmatpush1.bf16.msra.mxu0 %v1930
  %2624 = vmatprep.subr.bf16.mxu0 0
  %2625 = vmatpush1.bf16.msra.mxu0 %v1931
  %2626 = vmatprep.subr.bf16.mxu0 0
  %2627 = vmatpush1.bf16.msra.mxu0 %v1932
  %2628 = vmatprep.subr.bf16.mxu0 0
  %2629 = vmatpush1.bf16.msra.mxu0 %v1933
  %2630 = vmatprep.subr.bf16.mxu0 0
  %2631 = vmatpush1.bf16.msra.mxu0 %v1934
  %2632 = vmatprep.subr.bf16.mxu0 0
  %2633 = vmatpush1.bf16.msra.mxu0 %v1935
  %2634 = vmatprep.subr.bf16.mxu0 0
  %2635 = vmatpush1.bf16.msra.mxu0 %v1936
  %2636 = vmatprep.subr.bf16.mxu0 0
  %2637 = vmatpush1.bf16.msra.mxu0 %v1937
  %2638 = vmatprep.subr.bf16.mxu0 0
  %2639 = vmatpush1.bf16.msra.mxu0 %v1938
  %2640 = vmatprep.subr.bf16.mxu0 0
  %2641 = vmatpush1.bf16.msra.mxu0 %v1939
  %2642 = vmatprep.subr.bf16.mxu0 0
  %2643 = vmatpush1.bf16.msra.mxu0 %v1940
  %2644 = vmatprep.subr.bf16.mxu0 0
  %2645 = vmatpush1.bf16.msra.mxu0 %v1941
  %2646 = vmatprep.subr.bf16.mxu0 0
  %2647 = vmatpush1.bf16.msra.mxu0 %v1942
  %2648 = vmatprep.subr.bf16.mxu0 0
  %2649 = vmatpush1.bf16.msra.mxu0 %v1943
  %2650 = vmatprep.mubr.bf16.mxu0 %v1136
  %2651 = vmatmul.mubr.bf16.gmra.mrb[0].mxu0 %v1040
  %v2652 = vpop.f32.mrb[0].mxu0
  %v2653 = vadd.f32 %v2364, %v2652
  %v2654 = vpop.f32.mrb[0].mxu0
  %v2655 = vpop.f32.mrb[0].mxu0
  %v2656 = vadd.f32 %v2367, %v2655
  %v2657 = vpop.f32.mrb[0].mxu0
  %2658 = vmatprep.mubr.bf16.mxu0 %v1137
  %2659 = vmatmul.mubr.bf16.gmra.mrb[0].mxu0 %v1041
  %v2660 = vpop.f32.mrb[0].mxu0
  %v2661 = vadd.f32 %v2372, %v2660
  %v2662 = vpop.f32.mrb[0].mxu0
  %v2663 = vpop.f32.mrb[0].mxu0
  %v2664 = vadd.f32 %v2375, %v2663
  %v2665 = vpop.f32.mrb[0].mxu0
  %2666 = vmatprep.mubr.bf16.mxu0 %v1138
  %2667 = vmatmul.mubr.bf16.gmra.mrb[0].mxu0 %v1042
  %v2668 = vpop.f32.mrb[0].mxu0
  %v2669 = vadd.f32 %v2380, %v2668
  %v2670 = vpop.f32.mrb[0].mxu0
  %v2671 = vpop.f32.mrb[0].mxu0
  %v2672 = vadd.f32 %v2383, %v2671
  %v2673 = vpop.f32.mrb[0].mxu0
  %2674 = vmatprep.mubr.bf16.mxu0 %v1139
  %2675 = vmatmul.mubr.bf16.gmra.mrb[0].mxu0 %v1043
  %v2676 = vpop.f32.mrb[0].mxu0
  %v2677 = vadd.f32 %v2388, %v2676
  %v2678 = vpop.f32.mrb[0].mxu0
  %v2679 = vpop.f32.mrb[0].mxu0
  %v2680 = vadd.f32 %v2391, %v2679
  %v2681 = vpop.f32.mrb[0].mxu0
  %2682 = vmatprep.mubr.bf16.mxu0 %v1140
  %2683 = vmatmul.mubr.bf16.gmra.mrb[0].mxu0 %v1044
  %v2684 = vpop.f32.mrb[0].mxu0
  %v2685 = vadd.f32 %v2396, %v2684
  %v2686 = vpop.f32.mrb[0].mxu0
  %v2687 = vpop.f32.mrb[0].mxu0
  %v2688 = vadd.f32 %v2399, %v2687
  %v2689 = vpop.f32.mrb[0].mxu0
  %2690 = vmatprep.mubr.bf16.mxu0 %v1141
  %2691 = vmatmul.mubr.bf16.gmra.mrb[0].mxu0 %v1045
  %v2692 = vpop.f32.mrb[0].mxu0
  %v2693 = vadd.f32 %v2404, %v2692
  %v2694 = vpop.f32.mrb[0].mxu0
  %v2695 = vpop.f32.mrb[0].mxu0
  %v2696 = vadd.f32 %v2407, %v2695
  %v2697 = vpop.f32.mrb[0].mxu0
  %2698 = vmatprep.mubr.bf16.mxu0 %v1142
  %2699 = vmatmul.mubr.bf16.gmra.mrb[0].mxu0 %v1046
  %v2700 = vpop.f32.mrb[0].mxu0
  %v2701 = vadd.f32 %v2412, %v2700
  %v2702 = vpop.f32.mrb[0].mxu0
  %v2703 = vpop.f32.mrb[0].mxu0
  %v2704 = vadd.f32 %v2415, %v2703
  %v2705 = vpop.f32.mrb[0].mxu0
  %2706 = vmatprep.mubr.bf16.mxu0 %v1143
  %2707 = vmatmul.mubr.bf16.gmra.mrb[0].mxu0 %v1047
  %v2708 = vpop.f32.mrb[0].mxu0
  %v2709 = vadd.f32 %v2420, %v2708
  %v2710 = vpop.f32.mrb[0].mxu0
  %v2711 = vpop.f32.mrb[0].mxu0
  %v2712 = vadd.f32 %v2423, %v2711
  %v2713 = vpop.f32.mrb[0].mxu0
  %2714 = vmatprep.mubr.bf16.mxu0 %v1144
  %2715 = vmatmul.mubr.bf16.gmra.mrb[0].mxu0 %v1048
  %v2716 = vpop.f32.mrb[0].mxu0
  %v2717 = vadd.f32 %v2428, %v2716
  %v2718 = vpop.f32.mrb[0].mxu0
  %v2719 = vpop.f32.mrb[0].mxu0
  %v2720 = vadd.f32 %v2431, %v2719
  %v2721 = vpop.f32.mrb[0].mxu0
  %2722 = vmatprep.mubr.bf16.mxu0 %v1145
  %2723 = vmatmul.mubr.bf16.gmra.mrb[0].mxu0 %v1049
  %v2724 = vpop.f32.mrb[0].mxu0
  %v2725 = vadd.f32 %v2436, %v2724
  %v2726 = vpop.f32.mrb[0].mxu0
  %v2727 = vpop.f32.mrb[0].mxu0
  %v2728 = vadd.f32 %v2439, %v2727
  %v2729 = vpop.f32.mrb[0].mxu0
  %2730 = vmatprep.mubr.bf16.mxu0 %v1146
  %2731 = vmatmul.mubr.bf16.gmra.mrb[0].mxu0 %v1050
  %v2732 = vpop.f32.mrb[0].mxu0
  %v2733 = vadd.f32 %v2444, %v2732
  %v2734 = vpop.f32.mrb[0].mxu0
  %v2735 = vpop.f32.mrb[0].mxu0
  %v2736 = vadd.f32 %v2447, %v2735
  %v2737 = vpop.f32.mrb[0].mxu0
  %2738 = vmatprep.mubr.bf16.mxu0 %v1147
  %2739 = vmatmul.mubr.bf16.gmra.mrb[0].mxu0 %v1051
  %v2740 = vpop.f32.mrb[0].mxu0
  %v2741 = vadd.f32 %v2452, %v2740
  %v2742 = vpop.f32.mrb[0].mxu0
  %v2743 = vpop.f32.mrb[0].mxu0
  %v2744 = vadd.f32 %v2455, %v2743
  %v2745 = vpop.f32.mrb[0].mxu0
  %2746 = vmatprep.mubr.bf16.mxu0 %v1148
  %2747 = vmatmul.mubr.bf16.gmra.mrb[0].mxu0 %v1052
  %v2748 = vpop.f32.mrb[0].mxu0
  %v2749 = vadd.f32 %v2460, %v2748
  %v2750 = vpop.f32.mrb[0].mxu0
  %v2751 = vpop.f32.mrb[0].mxu0
  %v2752 = vadd.f32 %v2463, %v2751
  %v2753 = vpop.f32.mrb[0].mxu0
  %2754 = vmatprep.mubr.bf16.mxu0 %v1149
  %2755 = vmatmul.mubr.bf16.gmra.mrb[0].mxu0 %v1053
  %v2756 = vpop.f32.mrb[0].mxu0
  %v2757 = vadd.f32 %v2468, %v2756
  %v2758 = vpop.f32.mrb[0].mxu0
  %v2759 = vpop.f32.mrb[0].mxu0
  %v2760 = vadd.f32 %v2471, %v2759
  %v2761 = vpop.f32.mrb[0].mxu0
  %2762 = vmatprep.mubr.bf16.mxu0 %v1150
  %2763 = vmatmul.mubr.bf16.gmra.mrb[0].mxu0 %v1054
  %v2764 = vpop.f32.mrb[0].mxu0
  %v2765 = vadd.f32 %v2476, %v2764
  %v2766 = vpop.f32.mrb[0].mxu0
  %v2767 = vpop.f32.mrb[0].mxu0
  %v2768 = vadd.f32 %v2479, %v2767
  %v2769 = vpop.f32.mrb[0].mxu0
  %2770 = vmatprep.mubr.bf16.mxu0 %v1151
  %2771 = vmatmul.mubr.bf16.gmra.mrb[0].mxu0 %v1055
  %v2772 = vpop.f32.mrb[0].mxu0
  %v2773 = vadd.f32 %v2484, %v2772
  %v2774 = vpop.f32.mrb[0].mxu0
  %v2775 = vpop.f32.mrb[0].mxu0
  %v2776 = vadd.f32 %v2487, %v2775
  %v2777 = vpop.f32.mrb[0].mxu0
  %2778 = vmatprep.mubr.bf16.mxu0 %v1152
  %2779 = vmatmul.mubr.bf16.gmra.mrb[0].mxu0 %v1056
  %v2780 = vpop.f32.mrb[0].mxu0
  %v2781 = vadd.f32 %v2492, %v2780
  %v2782 = vpop.f32.mrb[0].mxu0
  %v2783 = vpop.f32.mrb[0].mxu0
  %v2784 = vadd.f32 %v2495, %v2783
  %v2785 = vpop.f32.mrb[0].mxu0
  %2786 = vmatprep.mubr.bf16.mxu0 %v1153
  %2787 = vmatmul.mubr.bf16.gmra.mrb[0].mxu0 %v1057
  %v2788 = vpop.f32.mrb[0].mxu0
  %v2789 = vadd.f32 %v2500, %v2788
  %v2790 = vpop.f32.mrb[0].mxu0
  %v2791 = vpop.f32.mrb[0].mxu0
  %v2792 = vadd.f32 %v2503, %v2791
  %v2793 = vpop.f32.mrb[0].mxu0
  %2794 = vmatprep.mubr.bf16.mxu0 %v1154
  %2795 = vmatmul.mubr.bf16.gmra.mrb[0].mxu0 %v1058
  %v2796 = vpop.f32.mrb[0].mxu0
  %v2797 = vadd.f32 %v2508, %v2796
  %v2798 = vpop.f32.mrb[0].mxu0
  %v2799 = vpop.f32.mrb[0].mxu0
  %v2800 = vadd.f32 %v2511, %v2799
  %v2801 = vpop.f32.mrb[0].mxu0
  %2802 = vmatprep.mubr.bf16.mxu0 %v1155
  %2803 = vmatmul.mubr.bf16.gmra.mrb[0].mxu0 %v1059
  %v2804 = vpop.f32.mrb[0].mxu0
  %v2805 = vadd.f32 %v2516, %v2804
  %v2806 = vpop.f32.mrb[0].mxu0
  %v2807 = vpop.f32.mrb[0].mxu0
  %v2808 = vadd.f32 %v2519, %v2807
  %v2809 = vpop.f32.mrb[0].mxu0
  %2810 = vmatprep.mubr.bf16.mxu0 %v1156
  %2811 = vmatmul.mubr.bf16.gmra.mrb[0].mxu0 %v1060
  %v2812 = vpop.f32.mrb[0].mxu0
  %v2813 = vadd.f32 %v2524, %v2812
  %v2814 = vpop.f32.mrb[0].mxu0
  %v2815 = vpop.f32.mrb[0].mxu0
  %v2816 = vadd.f32 %v2527, %v2815
  %v2817 = vpop.f32.mrb[0].mxu0
  %2818 = vmatprep.mubr.bf16.mxu0 %v1157
  %2819 = vmatmul.mubr.bf16.gmra.mrb[0].mxu0 %v1061
  %v2820 = vpop.f32.mrb[0].mxu0
  %v2821 = vadd.f32 %v2532, %v2820
  %v2822 = vpop.f32.mrb[0].mxu0
  %v2823 = vpop.f32.mrb[0].mxu0
  %v2824 = vadd.f32 %v2535, %v2823
  %v2825 = vpop.f32.mrb[0].mxu0
  %2826 = vmatprep.mubr.bf16.mxu0 %v1158
  %2827 = vmatmul.mubr.bf16.gmra.mrb[0].mxu0 %v1062
  %v2828 = vpop.f32.mrb[0].mxu0
  %v2829 = vadd.f32 %v2540, %v2828
  %v2830 = vpop.f32.mrb[0].mxu0
  %v2831 = vpop.f32.mrb[0].mxu0
  %v2832 = vadd.f32 %v2543, %v2831
  %v2833 = vpop.f32.mrb[0].mxu0
  %2834 = vmatprep.mubr.bf16.mxu0 %v1159
  %2835 = vmatmul.mubr.bf16.gmra.mrb[0].mxu0 %v1063
  %v2836 = vpop.f32.mrb[0].mxu0
  %v2837 = vadd.f32 %v2548, %v2836
  %v2838 = vpop.f32.mrb[0].mxu0
  %v2839 = vpop.f32.mrb[0].mxu0
  %v2840 = vadd.f32 %v2551, %v2839
  %v2841 = vpop.f32.mrb[0].mxu0
  %2842 = vmatprep.mubr.bf16.mxu0 %v1160
  %2843 = vmatmul.mubr.bf16.gmra.mrb[0].mxu0 %v1064
  %v2844 = vpop.f32.mrb[0].mxu0
  %v2845 = vadd.f32 %v2556, %v2844
  %v2846 = vpop.f32.mrb[0].mxu0
  %v2847 = vpop.f32.mrb[0].mxu0
  %v2848 = vadd.f32 %v2559, %v2847
  %v2849 = vpop.f32.mrb[0].mxu0
  %2850 = vmatprep.mubr.bf16.mxu0 %v1161
  %2851 = vmatmul.mubr.bf16.gmra.mrb[0].mxu0 %v1065
  %v2852 = vpop.f32.mrb[0].mxu0
  %v2853 = vadd.f32 %v2564, %v2852
  %v2854 = vpop.f32.mrb[0].mxu0
  %v2855 = vpop.f32.mrb[0].mxu0
  %v2856 = vadd.f32 %v2567, %v2855
  %v2857 = vpop.f32.mrb[0].mxu0
  %2858 = vmatprep.mubr.bf16.mxu0 %v1162
  %2859 = vmatmul.mubr.bf16.gmra.mrb[0].mxu0 %v1066
  %v2860 = vpop.f32.mrb[0].mxu0
  %v2861 = vadd.f32 %v2572, %v2860
  %v2862 = vpop.f32.mrb[0].mxu0
  %v2863 = vpop.f32.mrb[0].mxu0
  %v2864 = vadd.f32 %v2575, %v2863
  %v2865 = vpop.f32.mrb[0].mxu0
  %2866 = vmatprep.mubr.bf16.mxu0 %v1163
  %2867 = vmatmul.mubr.bf16.gmra.mrb[0].mxu0 %v1067
  %v2868 = vpop.f32.mrb[0].mxu0
  %v2869 = vadd.f32 %v2580, %v2868
  %v2870 = vpop.f32.mrb[0].mxu0
  %v2871 = vpop.f32.mrb[0].mxu0
  %v2872 = vadd.f32 %v2583, %v2871
  %v2873 = vpop.f32.mrb[0].mxu0
  %2874 = vmatprep.mubr.bf16.mxu0 %v1164
  %2875 = vmatmul.mubr.bf16.gmra.mrb[0].mxu0 %v1068
  %v2876 = vpop.f32.mrb[0].mxu0
  %v2877 = vadd.f32 %v2588, %v2876
  %v2878 = vpop.f32.mrb[0].mxu0
  %v2879 = vpop.f32.mrb[0].mxu0
  %v2880 = vadd.f32 %v2591, %v2879
  %v2881 = vpop.f32.mrb[0].mxu0
  %2882 = vmatprep.mubr.bf16.mxu0 %v1165
  %2883 = vmatmul.mubr.bf16.gmra.mrb[0].mxu0 %v1069
  %v2884 = vpop.f32.mrb[0].mxu0
  %v2885 = vadd.f32 %v2596, %v2884
  %v2886 = vpop.f32.mrb[0].mxu0
  %v2887 = vpop.f32.mrb[0].mxu0
  %v2888 = vadd.f32 %v2599, %v2887
  %v2889 = vpop.f32.mrb[0].mxu0
  %2890 = vmatprep.mubr.bf16.mxu0 %v1166
  %2891 = vmatmul.mubr.bf16.gmra.mrb[0].mxu0 %v1070
  %v2892 = vpop.f32.mrb[0].mxu0
  %v2893 = vadd.f32 %v2604, %v2892
  %v2894 = vpop.f32.mrb[0].mxu0
  %v2895 = vpop.f32.mrb[0].mxu0
  %v2896 = vadd.f32 %v2607, %v2895
  %v2897 = vpop.f32.mrb[0].mxu0
  %2898 = vmatprep.mubr.bf16.mxu0 %v1167
  %2899 = vmatmul.mubr.bf16.gmra.mrb[0].mxu0 %v1071
  %v2900 = vpop.f32.mrb[0].mxu0
  %v2901 = vadd.f32 %v2612, %v2900
  %v2902 = vpop.f32.mrb[0].mxu0
  %v2903 = vpop.f32.mrb[0].mxu0
  %v2904 = vadd.f32 %v2615, %v2903
  %v2905 = vpop.f32.mrb[0].mxu0
  %2906 = vdwg.mxu0
  %2907 = vmatprep.subr.bf16.mxu0 0
  %2908 = vmatpush1.bf16.msra.mxu0 %v1944
  %2909 = vmatprep.subr.bf16.mxu0 0
  %2910 = vmatpush1.bf16.msra.mxu0 %v1945
  %2911 = vmatprep.subr.bf16.mxu0 0
  %2912 = vmatpush1.bf16.msra.mxu0 %v1946
  %2913 = vmatprep.subr.bf16.mxu0 0
  %2914 = vmatpush1.bf16.msra.mxu0 %v1947
  %2915 = vmatprep.subr.bf16.mxu0 0
  %2916 = vmatpush1.bf16.msra.mxu0 %v1948
  %2917 = vmatprep.subr.bf16.mxu0 0
  %2918 = vmatpush1.bf16.msra.mxu0 %v1949
  %2919 = vmatprep.subr.bf16.mxu0 0
  %2920 = vmatpush1.bf16.msra.mxu0 %v1950
  %2921 = vmatprep.subr.bf16.mxu0 0
  %2922 = vmatpush1.bf16.msra.mxu0 %v1951
  %2923 = vmatprep.subr.bf16.mxu0 0
  %2924 = vmatpush1.bf16.msra.mxu0 %v1952
  %2925 = vmatprep.subr.bf16.mxu0 0
  %2926 = vmatpush1.bf16.msra.mxu0 %v1953
  %2927 = vmatprep.subr.bf16.mxu0 0
  %2928 = vmatpush1.bf16.msra.mxu0 %v1954
  %2929 = vmatprep.subr.bf16.mxu0 0
  %2930 = vmatpush1.bf16.msra.mxu0 %v1955
  %2931 = vmatprep.subr.bf16.mxu0 0
  %2932 = vmatpush1.bf16.msra.mxu0 %v1956
  %2933 = vmatprep.subr.bf16.mxu0 0
  %2934 = vmatpush1.bf16.msra.mxu0 %v1957
  %2935 = vmatprep.subr.bf16.mxu0 0
  %2936 = vmatpush1.bf16.msra.mxu0 %v1958
  %2937 = vmatprep.subr.bf16.mxu0 0
  %2938 = vmatpush1.bf16.msra.mxu0 %v1959
  %2939 = vmatprep.mubr.bf16.mxu0 %v1329
  %2940 = vmatmul.mubr.bf16.gmra.mrb[0].mxu0 %v1233
  %v2941 = vpop.f32.mrb[0].mxu0
  %v2942 = vadd.f32 %v2653, %v2941
  %v2943 = vpop.f32.mrb[0].mxu0
  %v2944 = vpop.f32.mrb[0].mxu0
  %v2945 = vadd.f32 %v2656, %v2944
  %v2946 = vpop.f32.mrb[0].mxu0
  %2947 = vmatprep.mubr.bf16.mxu0 %v1330
  %2948 = vmatmul.mubr.bf16.gmra.mrb[0].mxu0 %v1234
  %v2949 = vpop.f32.mrb[0].mxu0
  %v2950 = vadd.f32 %v2661, %v2949
  %v2951 = vpop.f32.mrb[0].mxu0
  %v2952 = vpop.f32.mrb[0].mxu0
  %v2953 = vadd.f32 %v2664, %v2952
  %v2954 = vpop.f32.mrb[0].mxu0
  %2955 = vmatprep.mubr.bf16.mxu0 %v1331
  %2956 = vmatmul.mubr.bf16.gmra.mrb[0].mxu0 %v1235
  %v2957 = vpop.f32.mrb[0].mxu0
  %v2958 = vadd.f32 %v2669, %v2957
  %v2959 = vpop.f32.mrb[0].mxu0
  %v2960 = vpop.f32.mrb[0].mxu0
  %v2961 = vadd.f32 %v2672, %v2960
  %v2962 = vpop.f32.mrb[0].mxu0
  %2963 = vmatprep.mubr.bf16.mxu0 %v1332
  %2964 = vmatmul.mubr.bf16.gmra.mrb[0].mxu0 %v1236
  %v2965 = vpop.f32.mrb[0].mxu0
  %v2966 = vadd.f32 %v2677, %v2965
  %v2967 = vpop.f32.mrb[0].mxu0
  %v2968 = vpop.f32.mrb[0].mxu0
  %v2969 = vadd.f32 %v2680, %v2968
  %v2970 = vpop.f32.mrb[0].mxu0
  %2971 = vmatprep.mubr.bf16.mxu0 %v1333
  %2972 = vmatmul.mubr.bf16.gmra.mrb[0].mxu0 %v1237
  %v2973 = vpop.f32.mrb[0].mxu0
  %v2974 = vadd.f32 %v2685, %v2973
  %v2975 = vpop.f32.mrb[0].mxu0
  %v2976 = vpop.f32.mrb[0].mxu0
  %v2977 = vadd.f32 %v2688, %v2976
  %v2978 = vpop.f32.mrb[0].mxu0
  %2979 = vmatprep.mubr.bf16.mxu0 %v1334
  %2980 = vmatmul.mubr.bf16.gmra.mrb[0].mxu0 %v1238
  %v2981 = vpop.f32.mrb[0].mxu0
  %v2982 = vadd.f32 %v2693, %v2981
  %v2983 = vpop.f32.mrb[0].mxu0
  %v2984 = vpop.f32.mrb[0].mxu0
  %v2985 = vadd.f32 %v2696, %v2984
  %v2986 = vpop.f32.mrb[0].mxu0
  %2987 = vmatprep.mubr.bf16.mxu0 %v1335
  %2988 = vmatmul.mubr.bf16.gmra.mrb[0].mxu0 %v1239
  %v2989 = vpop.f32.mrb[0].mxu0
  %v2990 = vadd.f32 %v2701, %v2989
  %v2991 = vpop.f32.mrb[0].mxu0
  %v2992 = vpop.f32.mrb[0].mxu0
  %v2993 = vadd.f32 %v2704, %v2992
  %v2994 = vpop.f32.mrb[0].mxu0
  %2995 = vmatprep.mubr.bf16.mxu0 %v1336
  %2996 = vmatmul.mubr.bf16.gmra.mrb[0].mxu0 %v1240
  %v2997 = vpop.f32.mrb[0].mxu0
  %v2998 = vadd.f32 %v2709, %v2997
  %v2999 = vpop.f32.mrb[0].mxu0
  %v3000 = vpop.f32.mrb[0].mxu0
  %v3001 = vadd.f32 %v2712, %v3000
  %v3002 = vpop.f32.mrb[0].mxu0
  %3003 = vmatprep.mubr.bf16.mxu0 %v1337
  %3004 = vmatmul.mubr.bf16.gmra.mrb[0].mxu0 %v1241
  %v3005 = vpop.f32.mrb[0].mxu0
  %v3006 = vadd.f32 %v2717, %v3005
  %v3007 = vpop.f32.mrb[0].mxu0
  %v3008 = vpop.f32.mrb[0].mxu0
  %v3009 = vadd.f32 %v2720, %v3008
  %v3010 = vpop.f32.mrb[0].mxu0
  %3011 = vmatprep.mubr.bf16.mxu0 %v1338
  %3012 = vmatmul.mubr.bf16.gmra.mrb[0].mxu0 %v1242
  %v3013 = vpop.f32.mrb[0].mxu0
  %v3014 = vadd.f32 %v2725, %v3013
  %v3015 = vpop.f32.mrb[0].mxu0
  %v3016 = vpop.f32.mrb[0].mxu0
  %v3017 = vadd.f32 %v2728, %v3016
  %v3018 = vpop.f32.mrb[0].mxu0
  %3019 = vmatprep.mubr.bf16.mxu0 %v1339
  %3020 = vmatmul.mubr.bf16.gmra.mrb[0].mxu0 %v1243
  %v3021 = vpop.f32.mrb[0].mxu0
  %v3022 = vadd.f32 %v2733, %v3021
  %v3023 = vpop.f32.mrb[0].mxu0
  %v3024 = vpop.f32.mrb[0].mxu0
  %v3025 = vadd.f32 %v2736, %v3024
  %v3026 = vpop.f32.mrb[0].mxu0
  %3027 = vmatprep.mubr.bf16.mxu0 %v1340
  %3028 = vmatmul.mubr.bf16.gmra.mrb[0].mxu0 %v1244
  %v3029 = vpop.f32.mrb[0].mxu0
  %v3030 = vadd.f32 %v2741, %v3029
  %v3031 = vpop.f32.mrb[0].mxu0
  %v3032 = vpop.f32.mrb[0].mxu0
  %v3033 = vadd.f32 %v2744, %v3032
  %v3034 = vpop.f32.mrb[0].mxu0
  %3035 = vmatprep.mubr.bf16.mxu0 %v1341
  %3036 = vmatmul.mubr.bf16.gmra.mrb[0].mxu0 %v1245
  %v3037 = vpop.f32.mrb[0].mxu0
  %v3038 = vadd.f32 %v2749, %v3037
  %v3039 = vpop.f32.mrb[0].mxu0
  %v3040 = vpop.f32.mrb[0].mxu0
  %v3041 = vadd.f32 %v2752, %v3040
  %v3042 = vpop.f32.mrb[0].mxu0
  %3043 = vmatprep.mubr.bf16.mxu0 %v1342
  %3044 = vmatmul.mubr.bf16.gmra.mrb[0].mxu0 %v1246
  %v3045 = vpop.f32.mrb[0].mxu0
  %v3046 = vadd.f32 %v2757, %v3045
  %v3047 = vpop.f32.mrb[0].mxu0
  %v3048 = vpop.f32.mrb[0].mxu0
  %v3049 = vadd.f32 %v2760, %v3048
  %v3050 = vpop.f32.mrb[0].mxu0
  %3051 = vmatprep.mubr.bf16.mxu0 %v1343
  %3052 = vmatmul.mubr.bf16.gmra.mrb[0].mxu0 %v1247
  %v3053 = vpop.f32.mrb[0].mxu0
  %v3054 = vadd.f32 %v2765, %v3053
  %v3055 = vpop.f32.mrb[0].mxu0
  %v3056 = vpop.f32.mrb[0].mxu0
  %v3057 = vadd.f32 %v2768, %v3056
  %v3058 = vpop.f32.mrb[0].mxu0
  %3059 = vmatprep.mubr.bf16.mxu0 %v1344
  %3060 = vmatmul.mubr.bf16.gmra.mrb[0].mxu0 %v1248
  %v3061 = vpop.f32.mrb[0].mxu0
  %v3062 = vadd.f32 %v2773, %v3061
  %v3063 = vpop.f32.mrb[0].mxu0
  %v3064 = vpop.f32.mrb[0].mxu0
  %v3065 = vadd.f32 %v2776, %v3064
  %v3066 = vpop.f32.mrb[0].mxu0
  %3067 = vmatprep.mubr.bf16.mxu0 %v1345
  %3068 = vmatmul.mubr.bf16.gmra.mrb[0].mxu0 %v1249
  %v3069 = vpop.f32.mrb[0].mxu0
  %v3070 = vadd.f32 %v2781, %v3069
  %v3071 = vpop.f32.mrb[0].mxu0
  %v3072 = vpop.f32.mrb[0].mxu0
  %v3073 = vadd.f32 %v2784, %v3072
  %v3074 = vpop.f32.mrb[0].mxu0
  %3075 = vmatprep.mubr.bf16.mxu0 %v1346
  %3076 = vmatmul.mubr.bf16.gmra.mrb[0].mxu0 %v1250
  %v3077 = vpop.f32.mrb[0].mxu0
  %v3078 = vadd.f32 %v2789, %v3077
  %v3079 = vpop.f32.mrb[0].mxu0
  %v3080 = vpop.f32.mrb[0].mxu0
  %v3081 = vadd.f32 %v2792, %v3080
  %v3082 = vpop.f32.mrb[0].mxu0
  %3083 = vmatprep.mubr.bf16.mxu0 %v1347
  %3084 = vmatmul.mubr.bf16.gmra.mrb[0].mxu0 %v1251
  %v3085 = vpop.f32.mrb[0].mxu0
  %v3086 = vadd.f32 %v2797, %v3085
  %v3087 = vpop.f32.mrb[0].mxu0
  %v3088 = vpop.f32.mrb[0].mxu0
  %v3089 = vadd.f32 %v2800, %v3088
  %v3090 = vpop.f32.mrb[0].mxu0
  %3091 = vmatprep.mubr.bf16.mxu0 %v1348
  %3092 = vmatmul.mubr.bf16.gmra.mrb[0].mxu0 %v1252
  %v3093 = vpop.f32.mrb[0].mxu0
  %v3094 = vadd.f32 %v2805, %v3093
  %v3095 = vpop.f32.mrb[0].mxu0
  %v3096 = vpop.f32.mrb[0].mxu0
  %v3097 = vadd.f32 %v2808, %v3096
  %v3098 = vpop.f32.mrb[0].mxu0
  %3099 = vmatprep.mubr.bf16.mxu0 %v1349
  %3100 = vmatmul.mubr.bf16.gmra.mrb[0].mxu0 %v1253
  %v3101 = vpop.f32.mrb[0].mxu0
  %v3102 = vadd.f32 %v2813, %v3101
  %v3103 = vpop.f32.mrb[0].mxu0
  %v3104 = vpop.f32.mrb[0].mxu0
  %v3105 = vadd.f32 %v2816, %v3104
  %v3106 = vpop.f32.mrb[0].mxu0
  %3107 = vmatprep.mubr.bf16.mxu0 %v1350
  %3108 = vmatmul.mubr.bf16.gmra.mrb[0].mxu0 %v1254
  %v3109 = vpop.f32.mrb[0].mxu0
  %v3110 = vadd.f32 %v2821, %v3109
  %v3111 = vpop.f32.mrb[0].mxu0
  %v3112 = vpop.f32.mrb[0].mxu0
  %v3113 = vadd.f32 %v2824, %v3112
  %v3114 = vpop.f32.mrb[0].mxu0
  %3115 = vmatprep.mubr.bf16.mxu0 %v1351
  %3116 = vmatmul.mubr.bf16.gmra.mrb[0].mxu0 %v1255
  %v3117 = vpop.f32.mrb[0].mxu0
  %v3118 = vadd.f32 %v2829, %v3117
  %v3119 = vpop.f32.mrb[0].mxu0
  %v3120 = vpop.f32.mrb[0].mxu0
  %v3121 = vadd.f32 %v2832, %v3120
  %v3122 = vpop.f32.mrb[0].mxu0
  %3123 = vmatprep.mubr.bf16.mxu0 %v1352
  %3124 = vmatmul.mubr.bf16.gmra.mrb[0].mxu0 %v1256
  %v3125 = vpop.f32.mrb[0].mxu0
  %v3126 = vadd.f32 %v2837, %v3125
  %v3127 = vpop.f32.mrb[0].mxu0
  %v3128 = vpop.f32.mrb[0].mxu0
  %v3129 = vadd.f32 %v2840, %v3128
  %v3130 = vpop.f32.mrb[0].mxu0
  %3131 = vmatprep.mubr.bf16.mxu0 %v1353
  %3132 = vmatmul.mubr.bf16.gmra.mrb[0].mxu0 %v1257
  %v3133 = vpop.f32.mrb[0].mxu0
  %v3134 = vadd.f32 %v2845, %v3133
  %v3135 = vpop.f32.mrb[0].mxu0
  %v3136 = vpop.f32.mrb[0].mxu0
  %v3137 = vadd.f32 %v2848, %v3136
  %v3138 = vpop.f32.mrb[0].mxu0
  %3139 = vmatprep.mubr.bf16.mxu0 %v1354
  %3140 = vmatmul.mubr.bf16.gmra.mrb[0].mxu0 %v1258
  %v3141 = vpop.f32.mrb[0].mxu0
  %v3142 = vadd.f32 %v2853, %v3141
  %v3143 = vpop.f32.mrb[0].mxu0
  %v3144 = vpop.f32.mrb[0].mxu0
  %v3145 = vadd.f32 %v2856, %v3144
  %v3146 = vpop.f32.mrb[0].mxu0
  %3147 = vmatprep.mubr.bf16.mxu0 %v1355
  %3148 = vmatmul.mubr.bf16.gmra.mrb[0].mxu0 %v1259
  %v3149 = vpop.f32.mrb[0].mxu0
  %v3150 = vadd.f32 %v2861, %v3149
  %v3151 = vpop.f32.mrb[0].mxu0
  %v3152 = vpop.f32.mrb[0].mxu0
  %v3153 = vadd.f32 %v2864, %v3152
  %v3154 = vpop.f32.mrb[0].mxu0
  %3155 = vmatprep.mubr.bf16.mxu0 %v1356
  %3156 = vmatmul.mubr.bf16.gmra.mrb[0].mxu0 %v1260
  %v3157 = vpop.f32.mrb[0].mxu0
  %v3158 = vadd.f32 %v2869, %v3157
  %v3159 = vpop.f32.mrb[0].mxu0
  %v3160 = vpop.f32.mrb[0].mxu0
  %v3161 = vadd.f32 %v2872, %v3160
  %v3162 = vpop.f32.mrb[0].mxu0
  %3163 = vmatprep.mubr.bf16.mxu0 %v1357
  %3164 = vmatmul.mubr.bf16.gmra.mrb[0].mxu0 %v1261
  %v3165 = vpop.f32.mrb[0].mxu0
  %v3166 = vadd.f32 %v2877, %v3165
  %v3167 = vpop.f32.mrb[0].mxu0
  %v3168 = vpop.f32.mrb[0].mxu0
  %v3169 = vadd.f32 %v2880, %v3168
  %v3170 = vpop.f32.mrb[0].mxu0
  %3171 = vmatprep.mubr.bf16.mxu0 %v1358
  %3172 = vmatmul.mubr.bf16.gmra.mrb[0].mxu0 %v1262
  %v3173 = vpop.f32.mrb[0].mxu0
  %v3174 = vadd.f32 %v2885, %v3173
  %v3175 = vpop.f32.mrb[0].mxu0
  %v3176 = vpop.f32.mrb[0].mxu0
  %v3177 = vadd.f32 %v2888, %v3176
  %v3178 = vpop.f32.mrb[0].mxu0
  %3179 = vmatprep.mubr.bf16.mxu0 %v1359
  %3180 = vmatmul.mubr.bf16.gmra.mrb[0].mxu0 %v1263
  %v3181 = vpop.f32.mrb[0].mxu0
  %v3182 = vadd.f32 %v2893, %v3181
  %v3183 = vpop.f32.mrb[0].mxu0
  %v3184 = vpop.f32.mrb[0].mxu0
  %v3185 = vadd.f32 %v2896, %v3184
  %v3186 = vpop.f32.mrb[0].mxu0
  %3187 = vmatprep.mubr.bf16.mxu0 %v1360
  %3188 = vmatmul.mubr.bf16.gmra.mrb[0].mxu0 %v1264
  %v3189 = vpop.f32.mrb[0].mxu0
  %v3190 = vadd.f32 %v2901, %v3189
  %v3191 = vpop.f32.mrb[0].mxu0
  %v3192 = vpop.f32.mrb[0].mxu0
  %v3193 = vadd.f32 %v2904, %v3192
  %v3194 = vpop.f32.mrb[0].mxu0
  %3195 = vdwg.mxu0
  %3196 = vmatprep.subr.bf16.mxu0 0
  %3197 = vmatpush1.bf16.msra.mxu0 %v1960
  %3198 = vmatprep.subr.bf16.mxu0 0
  %3199 = vmatpush1.bf16.msra.mxu0 %v1961
  %3200 = vmatprep.subr.bf16.mxu0 0
  %3201 = vmatpush1.bf16.msra.mxu0 %v1962
  %3202 = vmatprep.subr.bf16.mxu0 0
  %3203 = vmatpush1.bf16.msra.mxu0 %v1963
  %3204 = vmatprep.subr.bf16.mxu0 0
  %3205 = vmatpush1.bf16.msra.mxu0 %v1964
  %3206 = vmatprep.subr.bf16.mxu0 0
  %3207 = vmatpush1.bf16.msra.mxu0 %v1965
  %3208 = vmatprep.subr.bf16.mxu0 0
  %3209 = vmatpush1.bf16.msra.mxu0 %v1966
  %3210 = vmatprep.subr.bf16.mxu0 0
  %3211 = vmatpush1.bf16.msra.mxu0 %v1967
  %3212 = vmatprep.subr.bf16.mxu0 0
  %3213 = vmatpush1.bf16.msra.mxu0 0
  %3214 = vmatprep.subr.bf16.mxu0 0
  %3215 = vmatpush1.bf16.msra.mxu0 0
  %3216 = vmatprep.subr.bf16.mxu0 0
  %3217 = vmatpush1.bf16.msra.mxu0 0
  %3218 = vmatprep.subr.bf16.mxu0 0
  %3219 = vmatpush1.bf16.msra.mxu0 0
  %3220 = vmatprep.subr.bf16.mxu0 0
  %3221 = vmatpush1.bf16.msra.mxu0 0
  %3222 = vmatprep.subr.bf16.mxu0 0
  %3223 = vmatpush1.bf16.msra.mxu0 0
  %3224 = vmatprep.subr.bf16.mxu0 0
  %3225 = vmatpush1.bf16.msra.mxu0 0
  %3226 = vmatprep.subr.bf16.mxu0 0
  %3227 = vmatpush1.bf16.msra.mxu0 0
  %3228 = vmatprep.mubr.bf16.mxu0 0
  %3229 = vmatmul.mubr.bf16.gmra.mrb[0].mxu0 %v1425
  %v3230 = vpop.f32.mrb[0].mxu0
  %v3231 = vadd.f32 %v2942, %v3230
  %v3232 = vpop.f32.mrb[0].mxu0
  %v3233 = vpop.f32.mrb[0].mxu0
  %v3234 = vadd.f32 %v2945, %v3233
  %v3235 = vpop.f32.mrb[0].mxu0
  %3236 = vmatprep.mubr.bf16.mxu0 0
  %3237 = vmatmul.mubr.bf16.gmra.mrb[0].mxu0 %v1426
  %v3238 = vpop.f32.mrb[0].mxu0
  %v3239 = vadd.f32 %v2950, %v3238
  %v3240 = vpop.f32.mrb[0].mxu0
  %v3241 = vpop.f32.mrb[0].mxu0
  %v3242 = vadd.f32 %v2953, %v3241
  %v3243 = vpop.f32.mrb[0].mxu0
  %3244 = vmatprep.mubr.bf16.mxu0 0
  %3245 = vmatmul.mubr.bf16.gmra.mrb[0].mxu0 %v1427
  %v3246 = vpop.f32.mrb[0].mxu0
  %v3247 = vadd.f32 %v2958, %v3246
  %v3248 = vpop.f32.mrb[0].mxu0
  %v3249 = vpop.f32.mrb[0].mxu0
  %v3250 = vadd.f32 %v2961, %v3249
  %v3251 = vpop.f32.mrb[0].mxu0
  %3252 = vmatprep.mubr.bf16.mxu0 0
  %3253 = vmatmul.mubr.bf16.gmra.mrb[0].mxu0 %v1428
  %v3254 = vpop.f32.mrb[0].mxu0
  %v3255 = vadd.f32 %v2966, %v3254
  %v3256 = vpop.f32.mrb[0].mxu0
  %v3257 = vpop.f32.mrb[0].mxu0
  %v3258 = vadd.f32 %v2969, %v3257
  %v3259 = vpop.f32.mrb[0].mxu0
  %3260 = vmatprep.mubr.bf16.mxu0 0
  %3261 = vmatmul.mubr.bf16.gmra.mrb[0].mxu0 %v1429
  %v3262 = vpop.f32.mrb[0].mxu0
  %v3263 = vadd.f32 %v2974, %v3262
  %v3264 = vpop.f32.mrb[0].mxu0
  %v3265 = vpop.f32.mrb[0].mxu0
  %v3266 = vadd.f32 %v2977, %v3265
  %v3267 = vpop.f32.mrb[0].mxu0
  %3268 = vmatprep.mubr.bf16.mxu0 0
  %3269 = vmatmul.mubr.bf16.gmra.mrb[0].mxu0 %v1430
  %v3270 = vpop.f32.mrb[0].mxu0
  %v3271 = vadd.f32 %v2982, %v3270
  %v3272 = vpop.f32.mrb[0].mxu0
  %v3273 = vpop.f32.mrb[0].mxu0
  %v3274 = vadd.f32 %v2985, %v3273
  %v3275 = vpop.f32.mrb[0].mxu0
  %3276 = vmatprep.mubr.bf16.mxu0 0
  %3277 = vmatmul.mubr.bf16.gmra.mrb[0].mxu0 %v1431
  %v3278 = vpop.f32.mrb[0].mxu0
  %v3279 = vadd.f32 %v2990, %v3278
  %v3280 = vpop.f32.mrb[0].mxu0
  %v3281 = vpop.f32.mrb[0].mxu0
  %v3282 = vadd.f32 %v2993, %v3281
  %v3283 = vpop.f32.mrb[0].mxu0
  %3284 = vmatprep.mubr.bf16.mxu0 0
  %3285 = vmatmul.mubr.bf16.gmra.mrb[0].mxu0 %v1432
  %v3286 = vpop.f32.mrb[0].mxu0
  %v3287 = vadd.f32 %v2998, %v3286
  %v3288 = vpop.f32.mrb[0].mxu0
  %v3289 = vpop.f32.mrb[0].mxu0
  %v3290 = vadd.f32 %v3001, %v3289
  %v3291 = vpop.f32.mrb[0].mxu0
  %3292 = vmatprep.mubr.bf16.mxu0 0
  %3293 = vmatmul.mubr.bf16.gmra.mrb[0].mxu0 %v1433
  %v3294 = vpop.f32.mrb[0].mxu0
  %v3295 = vadd.f32 %v3006, %v3294
  %v3296 = vpop.f32.mrb[0].mxu0
  %v3297 = vpop.f32.mrb[0].mxu0
  %v3298 = vadd.f32 %v3009, %v3297
  %v3299 = vpop.f32.mrb[0].mxu0
  %3300 = vmatprep.mubr.bf16.mxu0 0
  %3301 = vmatmul.mubr.bf16.gmra.mrb[0].mxu0 %v1434
  %v3302 = vpop.f32.mrb[0].mxu0
  %v3303 = vadd.f32 %v3014, %v3302
  %v3304 = vpop.f32.mrb[0].mxu0
  %v3305 = vpop.f32.mrb[0].mxu0
  %v3306 = vadd.f32 %v3017, %v3305
  %v3307 = vpop.f32.mrb[0].mxu0
  %3308 = vmatprep.mubr.bf16.mxu0 0
  %3309 = vmatmul.mubr.bf16.gmra.mrb[0].mxu0 %v1435
  %v3310 = vpop.f32.mrb[0].mxu0
  %v3311 = vadd.f32 %v3022, %v3310
  %v3312 = vpop.f32.mrb[0].mxu0
  %v3313 = vpop.f32.mrb[0].mxu0
  %v3314 = vadd.f32 %v3025, %v3313
  %v3315 = vpop.f32.mrb[0].mxu0
  %3316 = vmatprep.mubr.bf16.mxu0 0
  %3317 = vmatmul.mubr.bf16.gmra.mrb[0].mxu0 %v1436
  %v3318 = vpop.f32.mrb[0].mxu0
  %v3319 = vadd.f32 %v3030, %v3318
  %v3320 = vpop.f32.mrb[0].mxu0
  %v3321 = vpop.f32.mrb[0].mxu0
  %v3322 = vadd.f32 %v3033, %v3321
  %v3323 = vpop.f32.mrb[0].mxu0
  %3324 = vmatprep.mubr.bf16.mxu0 0
  %3325 = vmatmul.mubr.bf16.gmra.mrb[0].mxu0 %v1437
  %v3326 = vpop.f32.mrb[0].mxu0
  %v3327 = vadd.f32 %v3038, %v3326
  %v3328 = vpop.f32.mrb[0].mxu0
  %v3329 = vpop.f32.mrb[0].mxu0
  %v3330 = vadd.f32 %v3041, %v3329
  %v3331 = vpop.f32.mrb[0].mxu0
  %3332 = vmatprep.mubr.bf16.mxu0 0
  %3333 = vmatmul.mubr.bf16.gmra.mrb[0].mxu0 %v1438
  %v3334 = vpop.f32.mrb[0].mxu0
  %v3335 = vadd.f32 %v3046, %v3334
  %v3336 = vpop.f32.mrb[0].mxu0
  %v3337 = vpop.f32.mrb[0].mxu0
  %v3338 = vadd.f32 %v3049, %v3337
  %v3339 = vpop.f32.mrb[0].mxu0
  %3340 = vmatprep.mubr.bf16.mxu0 0
  %3341 = vmatmul.mubr.bf16.gmra.mrb[0].mxu0 %v1439
  %v3342 = vpop.f32.mrb[0].mxu0
  %v3343 = vadd.f32 %v3054, %v3342
  %v3344 = vpop.f32.mrb[0].mxu0
  %v3345 = vpop.f32.mrb[0].mxu0
  %v3346 = vadd.f32 %v3057, %v3345
  %v3347 = vpop.f32.mrb[0].mxu0
  %3348 = vmatprep.mubr.bf16.mxu0 0
  %3349 = vmatmul.mubr.bf16.gmra.mrb[0].mxu0 %v1440
  %v3350 = vpop.f32.mrb[0].mxu0
  %v3351 = vadd.f32 %v3062, %v3350
  %v3352 = vpop.f32.mrb[0].mxu0
  %v3353 = vpop.f32.mrb[0].mxu0
  %v3354 = vadd.f32 %v3065, %v3353
  %v3355 = vpop.f32.mrb[0].mxu0
  %3356 = vmatprep.mubr.bf16.mxu0 0
  %3357 = vmatmul.mubr.bf16.gmra.mrb[0].mxu0 %v1441
  %v3358 = vpop.f32.mrb[0].mxu0
  %v3359 = vadd.f32 %v3070, %v3358
  %v3360 = vpop.f32.mrb[0].mxu0
  %v3361 = vpop.f32.mrb[0].mxu0
  %v3362 = vadd.f32 %v3073, %v3361
  %v3363 = vpop.f32.mrb[0].mxu0
  %3364 = vmatprep.mubr.bf16.mxu0 0
  %3365 = vmatmul.mubr.bf16.gmra.mrb[0].mxu0 %v1442
  %v3366 = vpop.f32.mrb[0].mxu0
  %v3367 = vadd.f32 %v3078, %v3366
  %v3368 = vpop.f32.mrb[0].mxu0
  %v3369 = vpop.f32.mrb[0].mxu0
  %v3370 = vadd.f32 %v3081, %v3369
  %v3371 = vpop.f32.mrb[0].mxu0
  %3372 = vmatprep.mubr.bf16.mxu0 0
  %3373 = vmatmul.mubr.bf16.gmra.mrb[0].mxu0 %v1443
  %v3374 = vpop.f32.mrb[0].mxu0
  %v3375 = vadd.f32 %v3086, %v3374
  %v3376 = vpop.f32.mrb[0].mxu0
  %v3377 = vpop.f32.mrb[0].mxu0
  %v3378 = vadd.f32 %v3089, %v3377
  %v3379 = vpop.f32.mrb[0].mxu0
  %3380 = vmatprep.mubr.bf16.mxu0 0
  %3381 = vmatmul.mubr.bf16.gmra.mrb[0].mxu0 %v1444
  %v3382 = vpop.f32.mrb[0].mxu0
  %v3383 = vadd.f32 %v3094, %v3382
  %v3384 = vpop.f32.mrb[0].mxu0
  %v3385 = vpop.f32.mrb[0].mxu0
  %v3386 = vadd.f32 %v3097, %v3385
  %v3387 = vpop.f32.mrb[0].mxu0
  %3388 = vmatprep.mubr.bf16.mxu0 0
  %3389 = vmatmul.mubr.bf16.gmra.mrb[0].mxu0 %v1445
  %v3390 = vpop.f32.mrb[0].mxu0
  %v3391 = vadd.f32 %v3102, %v3390
  %v3392 = vpop.f32.mrb[0].mxu0
  %v3393 = vpop.f32.mrb[0].mxu0
  %v3394 = vadd.f32 %v3105, %v3393
  %v3395 = vpop.f32.mrb[0].mxu0
  %3396 = vmatprep.mubr.bf16.mxu0 0
  %3397 = vmatmul.mubr.bf16.gmra.mrb[0].mxu0 %v1446
  %v3398 = vpop.f32.mrb[0].mxu0
  %v3399 = vadd.f32 %v3110, %v3398
  %v3400 = vpop.f32.mrb[0].mxu0
  %v3401 = vpop.f32.mrb[0].mxu0
  %v3402 = vadd.f32 %v3113, %v3401
  %v3403 = vpop.f32.mrb[0].mxu0
  %3404 = vmatprep.mubr.bf16.mxu0 0
  %3405 = vmatmul.mubr.bf16.gmra.mrb[0].mxu0 %v1447
  %v3406 = vpop.f32.mrb[0].mxu0
  %v3407 = vadd.f32 %v3118, %v3406
  %v3408 = vpop.f32.mrb[0].mxu0
  %v3409 = vpop.f32.mrb[0].mxu0
  %v3410 = vadd.f32 %v3121, %v3409
  %v3411 = vpop.f32.mrb[0].mxu0
  %3412 = vmatprep.mubr.bf16.mxu0 0
  %3413 = vmatmul.mubr.bf16.gmra.mrb[0].mxu0 %v1448
  %v3414 = vpop.f32.mrb[0].mxu0
  %v3415 = vadd.f32 %v3126, %v3414
  %v3416 = vpop.f32.mrb[0].mxu0
  %v3417 = vpop.f32.mrb[0].mxu0
  %v3418 = vadd.f32 %v3129, %v3417
  %v3419 = vpop.f32.mrb[0].mxu0
  %3420 = vmatprep.mubr.bf16.mxu0 0
  %3421 = vmatmul.mubr.bf16.gmra.mrb[0].mxu0 %v1449
  %v3422 = vpop.f32.mrb[0].mxu0
  %v3423 = vadd.f32 %v3134, %v3422
  %v3424 = vpop.f32.mrb[0].mxu0
  %v3425 = vpop.f32.mrb[0].mxu0
  %v3426 = vadd.f32 %v3137, %v3425
  %v3427 = vpop.f32.mrb[0].mxu0
  %3428 = vmatprep.mubr.bf16.mxu0 0
  %3429 = vmatmul.mubr.bf16.gmra.mrb[0].mxu0 %v1450
  %v3430 = vpop.f32.mrb[0].mxu0
  %v3431 = vadd.f32 %v3142, %v3430
  %v3432 = vpop.f32.mrb[0].mxu0
  %v3433 = vpop.f32.mrb[0].mxu0
  %v3434 = vadd.f32 %v3145, %v3433
  %v3435 = vpop.f32.mrb[0].mxu0
  %3436 = vmatprep.mubr.bf16.mxu0 0
  %3437 = vmatmul.mubr.bf16.gmra.mrb[0].mxu0 %v1451
  %v3438 = vpop.f32.mrb[0].mxu0
  %v3439 = vadd.f32 %v3150, %v3438
  %v3440 = vpop.f32.mrb[0].mxu0
  %v3441 = vpop.f32.mrb[0].mxu0
  %v3442 = vadd.f32 %v3153, %v3441
  %v3443 = vpop.f32.mrb[0].mxu0
  %3444 = vmatprep.mubr.bf16.mxu0 0
  %3445 = vmatmul.mubr.bf16.gmra.mrb[0].mxu0 %v1452
  %v3446 = vpop.f32.mrb[0].mxu0
  %v3447 = vadd.f32 %v3158, %v3446
  %v3448 = vpop.f32.mrb[0].mxu0
  %v3449 = vpop.f32.mrb[0].mxu0
  %v3450 = vadd.f32 %v3161, %v3449
  %v3451 = vpop.f32.mrb[0].mxu0
  %3452 = vmatprep.mubr.bf16.mxu0 0
  %3453 = vmatmul.mubr.bf16.gmra.mrb[0].mxu0 %v1453
  %v3454 = vpop.f32.mrb[0].mxu0
  %v3455 = vadd.f32 %v3166, %v3454
  %v3456 = vpop.f32.mrb[0].mxu0
  %v3457 = vpop.f32.mrb[0].mxu0
  %v3458 = vadd.f32 %v3169, %v3457
  %v3459 = vpop.f32.mrb[0].mxu0
  %3460 = vmatprep.mubr.bf16.mxu0 0
  %3461 = vmatmul.mubr.bf16.gmra.mrb[0].mxu0 %v1454
  %v3462 = vpop.f32.mrb[0].mxu0
  %v3463 = vadd.f32 %v3174, %v3462
  %v3464 = vpop.f32.mrb[0].mxu0
  %v3465 = vpop.f32.mrb[0].mxu0
  %v3466 = vadd.f32 %v3177, %v3465
  %v3467 = vpop.f32.mrb[0].mxu0
  %3468 = vmatprep.mubr.bf16.mxu0 0
  %3469 = vmatmul.mubr.bf16.gmra.mrb[0].mxu0 %v1455
  %v3470 = vpop.f32.mrb[0].mxu0
  %v3471 = vadd.f32 %v3182, %v3470
  %v3472 = vpop.f32.mrb[0].mxu0
  %v3473 = vpop.f32.mrb[0].mxu0
  %v3474 = vadd.f32 %v3185, %v3473
  %v3475 = vpop.f32.mrb[0].mxu0
  %3476 = vmatprep.mubr.bf16.mxu0 0
  %3477 = vmatmul.mubr.bf16.gmra.mrb[0].mxu0 %v1456
  %v3478 = vpop.f32.mrb[0].mxu0
  %v3479 = vadd.f32 %v3190, %v3478
  %v3480 = vpop.f32.mrb[0].mxu0
  %v3481 = vpop.f32.mrb[0].mxu0
  %v3482 = vadd.f32 %v3193, %v3481
  %v3483 = vpop.f32.mrb[0].mxu0
  %3484 = vdwg.mxu0
  %v3485 = vtanh.pop %v3231
  %v3486 = vtanh.pop %v3234
  %v3487 = vtanh.pop %v3239
  %v3488 = vtanh.pop %v3242
  %v3489 = vtanh.pop %v3247
  %v3490 = vtanh.pop %v3250
  %v3491 = vtanh.pop %v3255
  %v3492 = vtanh.pop %v3258
  %v3493 = vtanh.pop %v3263
  %v3494 = vtanh.pop %v3266
  %v3495 = vtanh.pop %v3271
  %v3496 = vtanh.pop %v3274
  %v3497 = vtanh.pop %v3279
  %v3498 = vtanh.pop %v3282
  %v3499 = vtanh.pop %v3287
  %v3500 = vtanh.pop %v3290
  %v3501 = vtanh.pop %v3295
  %v3502 = vtanh.pop %v3298
  %v3503 = vtanh.pop %v3303
  %v3504 = vtanh.pop %v3306
  %v3505 = vtanh.pop %v3311
  %v3506 = vtanh.pop %v3314
  %v3507 = vtanh.pop %v3319
  %v3508 = vtanh.pop %v3322
  %v3509 = vtanh.pop %v3327
  %v3510 = vtanh.pop %v3330
  %v3511 = vtanh.pop %v3335
  %v3512 = vtanh.pop %v3338
  %v3513 = vtanh.pop %v3343
  %v3514 = vtanh.pop %v3346
  %v3515 = vtanh.pop %v3351
  %v3516 = vtanh.pop %v3354
  %v3517 = vtanh.pop %v3359
  %v3518 = vtanh.pop %v3362
  %v3519 = vtanh.pop %v3367
  %v3520 = vtanh.pop %v3370
  %v3521 = vtanh.pop %v3375
  %v3522 = vtanh.pop %v3378
  %v3523 = vtanh.pop %v3383
  %v3524 = vtanh.pop %v3386
  %v3525 = vtanh.pop %v3391
  %v3526 = vtanh.pop %v3394
  %v3527 = vtanh.pop %v3399
  %v3528 = vtanh.pop %v3402
  %v3529 = vtanh.pop %v3407
  %v3530 = vtanh.pop %v3410
  %v3531 = vtanh.pop %v3415
  %v3532 = vtanh.pop %v3418
  %v3533 = vtanh.pop %v3423
  %v3534 = vtanh.pop %v3426
  %v3535 = vtanh.pop %v3431
  %v3536 = vtanh.pop %v3434
  %v3537 = vtanh.pop %v3439
  %v3538 = vtanh.pop %v3442
  %v3539 = vtanh.pop %v3447
  %v3540 = vtanh.pop %v3450
  %v3541 = vtanh.pop %v3455
  %v3542 = vtanh.pop %v3458
  %v3543 = vtanh.pop %v3463
  %v3544 = vtanh.pop %v3466
  %v3545 = vtanh.pop %v3471
  %v3546 = vtanh.pop %v3474
  %v3547 = vtanh.pop %v3479
  %v3548 = vtanh.pop %v3482
  %3549 = vst [vmem:[%s5] sm:$0xff] %v3485
  %3550 = vst [vmem:[%s5 + $0x8] sm:$0xff] %v3486
  %3551 = vst [vmem:[%s5 + $0x10] sm:$0xff] %v3487
  %3552 = vst [vmem:[%s5 + $0x18] sm:$0xff] %v3488
  %3553 = vst [vmem:[%s5 + $0x20] sm:$0xff] %v3489
  %3554 = vst [vmem:[%s5 + $0x28] sm:$0xff] %v3490
  %3555 = vst [vmem:[%s5 + $0x30] sm:$0xff] %v3491
  %3556 = vst [vmem:[%s5 + $0x38] sm:$0xff] %v3492
  %3557 = vst [vmem:[%s5 + $0x40] sm:$0xff] %v3493
  %3558 = vst [vmem:[%s5 + $0x48] sm:$0xff] %v3494
  %3559 = vst [vmem:[%s5 + $0x50] sm:$0xff] %v3495
  %3560 = vst [vmem:[%s5 + $0x58] sm:$0xff] %v3496
  %3561 = vst [vmem:[%s5 + $0x60] sm:$0xff] %v3497
  %3562 = vst [vmem:[%s5 + $0x68] sm:$0xff] %v3498
  %3563 = vst [vmem:[%s5 + $0x70] sm:$0xff] %v3499
  %3564 = vst [vmem:[%s5 + $0x78] sm:$0xff] %v3500
  %3565 = vst [vmem:[%s5 + $0x80] sm:$0xff] %v3501
  %3566 = vst [vmem:[%s5 + $0x88] sm:$0xff] %v3502
  %3567 = vst [vmem:[%s5 + $0x90] sm:$0xff] %v3503
  %3568 = vst [vmem:[%s5 + $0x98] sm:$0xff] %v3504
  %3569 = vst [vmem:[%s5 + $0xa0] sm:$0xff] %v3505
  %3570 = vst [vmem:[%s5 + $0xa8] sm:$0xff] %v3506
  %3571 = vst [vmem:[%s5 + $0xb0] sm:$0xff] %v3507
  %3572 = vst [vmem:[%s5 + $0xb8] sm:$0xff] %v3508
  %3573 = vst [vmem:[%s5 + $0xc0] sm:$0xff] %v3509
  %3574 = vst [vmem:[%s5 + $0xc8] sm:$0xff] %v3510
  %3575 = vst [vmem:[%s5 + $0xd0] sm:$0xff] %v3511
  %3576 = vst [vmem:[%s5 + $0xd8] sm:$0xff] %v3512
  %3577 = vst [vmem:[%s5 + $0xe0] sm:$0xff] %v3513
  %3578 = vst [vmem:[%s5 + $0xe8] sm:$0xff] %v3514
  %3579 = vst [vmem:[%s5 + $0xf0] sm:$0xff] %v3515
  %3580 = vst [vmem:[%s5 + $0xf8] sm:$0xff] %v3516
  %3581 = vst [vmem:[%s5 + $0x100] sm:$0xff] %v3517
  %3582 = vst [vmem:[%s5 + $0x108] sm:$0xff] %v3518
  %3583 = vst [vmem:[%s5 + $0x110] sm:$0xff] %v3519
  %3584 = vst [vmem:[%s5 + $0x118] sm:$0xff] %v3520
  %3585 = vst [vmem:[%s5 + $0x120] sm:$0xff] %v3521
  %3586 = vst [vmem:[%s5 + $0x128] sm:$0xff] %v3522
  %3587 = vst [vmem:[%s5 + $0x130] sm:$0xff] %v3523
  %3588 = vst [vmem:[%s5 + $0x138] sm:$0xff] %v3524
  %3589 = vst [vmem:[%s5 + $0x140] sm:$0xff] %v3525
  %3590 = vst [vmem:[%s5 + $0x148] sm:$0xff] %v3526
  %3591 = vst [vmem:[%s5 + $0x150] sm:$0xff] %v3527
  %3592 = vst [vmem:[%s5 + $0x158] sm:$0xff] %v3528
  %3593 = vst [vmem:[%s5 + $0x160] sm:$0xff] %v3529
  %3594 = vst [vmem:[%s5 + $0x168] sm:$0xff] %v3530
  %3595 = vst [vmem:[%s5 + $0x170] sm:$0xff] %v3531
  %3596 = vst [vmem:[%s5 + $0x178] sm:$0xff] %v3532
  %3597 = vst [vmem:[%s5 + $0x180] sm:$0xff] %v3533
  %3598 = vst [vmem:[%s5 + $0x188] sm:$0xff] %v3534
  %3599 = vst [vmem:[%s5 + $0x190] sm:$0xff] %v3535
  %3600 = vst [vmem:[%s5 + $0x198] sm:$0xff] %v3536
  %3601 = vst [vmem:[%s5 + $0x1a0] sm:$0xff] %v3537
  %3602 = vst [vmem:[%s5 + $0x1a8] sm:$0xff] %v3538
  %3603 = vst [vmem:[%s5 + $0x1b0] sm:$0xff] %v3539
  %3604 = vst [vmem:[%s5 + $0x1b8] sm:$0xff] %v3540
  %3605 = vst [vmem:[%s5 + $0x1c0] sm:$0xff] %v3541
  %3606 = vst [vmem:[%s5 + $0x1c8] sm:$0xff] %v3542
  %3607 = vst [vmem:[%s5 + $0x1d0] sm:$0xff] %v3543
  %3608 = vst [vmem:[%s5 + $0x1d8] sm:$0xff] %v3544
  %3609 = vst [vmem:[%s5 + $0x1e0] sm:$0xff] %v3545
  %3610 = vst [vmem:[%s5 + $0x1e8] sm:$0xff] %v3546
  %3611 = vst [vmem:[%s5 + $0x1f0] sm:$0xff] %v3547
  %3612 = vst [vmem:[%s5 + $0x1f8] sm:$0xff] %v3548
  // Predicated region
  $region22: #{generator_forward.7} parent=0 // pred_check
    _
  $region23: #{generator_forward.7} parent=0 // pred_check_branch
    %3614 = sbr.rel (0) target = $region25
  $region24: #{generator_forward.7} parent=0 // pred_region
    _
  $region25: #{generator_forward.7} parent=0 // pred_fallthru
    _
  // Predicated region
  $region26: #{generator_forward.7} parent=0 // pred_check
    _
  $region27: #{generator_forward.7} parent=0 // pred_check_branch
    %3616 = sbr.rel (0) target = $region29
  $region28: #{generator_forward.7} parent=0 // pred_region
    _
  $region29: #{generator_forward.7} parent=0 // pred_fallthru
    _

</llo_original>
